<compile_context>
chip_gen: v6e
topology: v6e:2x2x1
jax: 0.10.0
libtpu: 0.0.40
codegen_flags: <defaults>
</compile_context>

<pallas_src>
import functools

import jax
import jax.numpy as jnp
from jax.experimental import pallas as pl
from jax.experimental.pallas import tpu as pltpu

TM_DEFAULT = 512  # rows (N*H*W) processed per grid step


# ---------------------------------------------------------------------------
# Kernels
# ---------------------------------------------------------------------------
def _pw_bn_relu_kernel(x_ref, w_ref, s_ref, b_ref, o_ref):
    """o = relu((x @ w) * scale + bias)   -- 1x1 conv + folded BN + ReLU."""
    acc = jnp.dot(x_ref[...], w_ref[...], preferred_element_type=jnp.float32)
    y = acc * s_ref[...] + b_ref[...]
    o_ref[...] = jnp.maximum(y, 0.0).astype(o_ref.dtype)


def _pw_bn_add_relu_kernel(x_ref, w_ref, s_ref, b_ref, res_ref, o_ref):
    """o = relu((x @ w) * scale + bias + res) -- conv3 + norm3 + identity + ReLU."""
    acc = jnp.dot(x_ref[...], w_ref[...], preferred_element_type=jnp.float32)
    y = acc * s_ref[...] + b_ref[...] + res_ref[...]
    o_ref[...] = jnp.maximum(y, 0.0).astype(o_ref.dtype)


def _g3x3_bn_relu_add_kernel(xt_ref, w_ref, s_ref, b_ref, spx_ref, o_ref):
    """Grouped 3x3 conv (9 block-diagonal tap matmuls) + BN + ReLU + spx residual."""
    acc = jnp.dot(xt_ref[0], w_ref[0], preferred_element_type=jnp.float32)
    for k in range(1, 9):  # static unroll: 9 taps
        acc = acc + jnp.dot(xt_ref[k], w_ref[k], preferred_element_type=jnp.float32)
    y = jnp.maximum(acc * s_ref[...] + b_ref[...], 0.0) + spx_ref[...]
    o_ref[...] = y.astype(o_ref.dtype)


# ---------------------------------------------------------------------------
# Pallas wrappers
# ---------------------------------------------------------------------------
def _pointwise_conv(x2d, w, scale, bias, res=None, tm=TM_DEFAULT):
    """y = relu((x2d @ w) * scale + bias [+ res]) with row tiling."""
    m, cin = x2d.shape
    cout = w.shape[1]
    tm = min(tm, max(8, m))
    m_pad = pl.cdiv(m, tm) * tm
    if m_pad != m:
        x2d = jnp.pad(x2d, ((0, m_pad - m), (0, 0)))
        if res is not None:
            res = jnp.pad(res, ((0, m_pad - m), (0, 0)))

    in_specs = [
        pl.BlockSpec((tm, cin), lambda i: (i, 0)),
        pl.BlockSpec((cin, cout), lambda i: (0, 0)),
        pl.BlockSpec((1, cout), lambda i: (0, 0)),
        pl.BlockSpec((1, cout), lambda i: (0, 0)),
    ]
    args = [x2d, w, scale, bias]
    if res is not None:
        in_specs.append(pl.BlockSpec((tm, cout), lambda i: (i, 0)))
        args.append(res)
        kern = _pw_bn_add_relu_kernel
    else:
        kern = _pw_bn_relu_kernel

    bytes_accessed = 4 * (m_pad * cin + cin * cout + m_pad * cout
                          + (m_pad * cout if res is not None else 0))
    out = pl.pallas_call(
        kern,
        out_shape=jax.ShapeDtypeStruct((m_pad, cout), jnp.float32),
        grid_spec=pltpu.PrefetchScalarGridSpec(
            num_scalar_prefetch=0,
            grid=(m_pad // tm,),
            in_specs=in_specs,
            out_specs=pl.BlockSpec((tm, cout), lambda i: (i, 0)),
        ),
        compiler_params=pltpu.CompilerParams(dimension_semantics=("parallel",)),
        cost_estimate=pl.CostEstimate(
            flops=2 * m_pad * cin * cout, transcendentals=0,
            bytes_accessed=bytes_accessed),
    )(*args)
    return out[:m]


def _grouped_conv3x3(taps, w_taps, scale, bias, spx, tm=TM_DEFAULT):
    """y = relu(sum_k taps[k] @ w_taps[k] * scale + bias) + spx, row tiled."""
    _, m, c = taps.shape
    tm = min(tm, max(8, m))
    m_pad = pl.cdiv(m, tm) * tm
    if m_pad != m:
        taps = jnp.pad(taps, ((0, 0), (0, m_pad - m), (0, 0)))
        spx = jnp.pad(spx, ((0, m_pad - m), (0, 0)))

    out = pl.pallas_call(
        _g3x3_bn_relu_add_kernel,
        out_shape=jax.ShapeDtypeStruct((m_pad, c), jnp.float32),
        grid_spec=pltpu.PrefetchScalarGridSpec(
            num_scalar_prefetch=0,
            grid=(m_pad // tm,),
            in_specs=[
                pl.BlockSpec((9, tm, c), lambda i: (0, i, 0)),
                pl.BlockSpec((9, c, c), lambda i: (0, 0, 0)),
                pl.BlockSpec((1, c), lambda i: (0, 0)),
                pl.BlockSpec((1, c), lambda i: (0, 0)),
                pl.BlockSpec((tm, c), lambda i: (i, 0)),
            ],
            out_specs=pl.BlockSpec((tm, c), lambda i: (i, 0)),
        ),
        compiler_params=pltpu.CompilerParams(dimension_semantics=("parallel",)),
        cost_estimate=pl.CostEstimate(
            flops=2 * 9 * m_pad * c * c, transcendentals=0,
            bytes_accessed=4 * (9 * m_pad * c + 9 * c * c + 2 * m_pad * c)),
    )(taps, w_taps, scale, bias, spx)
    return out[:m]


# ---------------------------------------------------------------------------
# Parameter / layout helpers
# ---------------------------------------------------------------------------
def _fold_bn(gamma, beta, mean, var, eps=1e-5):
    scale = (gamma / jnp.sqrt(var + eps)).astype(jnp.float32)
    bias = (beta - mean * scale).astype(jnp.float32)
    return scale.reshape(1, -1), bias.reshape(1, -1)


def _pw_weight(w_torch):  # (cout, cin, 1, 1) -> (cin, cout)
    return jnp.transpose(w_torch[:, :, 0, 0], (1, 0)).astype(jnp.float32)


def _grouped_weight_taps(w_torch, groups):  # (c, c//groups, 3, 3) -> (9, c, c) blockdiag
    c = w_torch.shape[0]
    gw = c // groups
    w_full = jnp.zeros((3, 3, c, c), jnp.float32)
    for g in range(groups):
        sl = slice(g * gw, (g + 1) * gw)
        blk = jnp.transpose(w_torch[sl], (2, 3, 1, 0)).astype(jnp.float32)
        w_full = w_full.at[:, :, sl, sl].set(blk)
    return w_full.reshape(9, c, c)


def _im2col_3x3(sp2d, n, h, w_sp, c):
    sp = sp2d.reshape(n, h, w_sp, c)
    spp = jnp.pad(sp, ((0, 0), (1, 1), (1, 1), (0, 0)))
    taps = [spp[:, dy:dy + h, dx:dx + w_sp, :].reshape(n * h * w_sp, c)
            for dy in range(3) for dx in range(3)]
    return jnp.stack(taps, axis=0)  # (9, M, C)


# ---------------------------------------------------------------------------
# Forward pass
# ---------------------------------------------------------------------------
def cml_forward(x, params, *, groups, scales, eps=1e-5, tm=TM_DEFAULT):
    n, c_in, h, w_sp = x.shape
    x = x.astype(jnp.float32)
    m = n * h * w_sp

    x2d = jnp.transpose(x, (0, 2, 3, 1)).reshape(m, c_in)  # channels-last rows

    w1 = _pw_weight(params["conv1_w"])
    w3 = _pw_weight(params["conv3_w"])
    c_mid = w1.shape[1]
    c_out = w3.shape[1]

    s1, b1 = _fold_bn(*params["norm1"], eps=eps)
    s3, b3 = _fold_bn(*params["norm3"], eps=eps)

    # conv1 + norm1 + relu
    out2d = _pointwise_conv(x2d, w1, s1, b1, res=None, tm=tm)

    spx = out2d
    sp = spx
    for i in range(scales - 1):
        taps = _im2col_3x3(sp, n, h, w_sp, c_mid)
        w_taps = _grouped_weight_taps(params["convs_w"][i], groups)
        si, bi = _fold_bn(*params["bns"][i], eps=eps)
        sp = _grouped_conv3x3(taps, w_taps, si, bi, spx, tm=tm)

    # conv3 + norm3 + identity + relu
    out2d = _pointwise_conv(sp, w3, s3, b3, res=x2d, tm=tm)

    return jnp.transpose(out2d.reshape(n, h, w_sp, c_out), (0, 3, 1, 2))


# ---------------------------------------------------------------------------
# Pure-JAX reference (eval-mode BN), for correctness checking
# ---------------------------------------------------------------------------
def _bn_eval(x, gamma, beta, mean, var, eps=1e-5):
    inv = gamma / jnp.sqrt(var + eps)
    return (x - mean[None, :, None, None]) * inv[None, :, None, None] \
        + beta[None, :, None, None]


def cml_reference(x, p, *, groups, scales, eps=1e-5):
    conv = functools.partial(jax.lax.conv_general_dilated,
                             dimension_numbers=("NCHW", "OIHW", "NCHW"),
                             precision=jax.lax.Precision.HIGHEST)
    out = conv(x, p["conv1_w"], (1, 1), "VALID")
    out = jax.nn.relu(_bn_eval(out, *p["norm1"], eps=eps))
    spx = out
    sp = spx
    for i in range(scales - 1):
        sp = conv(sp, p["convs_w"][i], (1, 1), ((1, 1), (1, 1)),
                  feature_group_count=groups)
        sp = jax.nn.relu(_bn_eval(sp, *p["bns"][i], eps=eps)) + spx
    out = conv(sp, p["conv3_w"], (1, 1), "VALID")
    out = _bn_eval(out, *p["norm3"], eps=eps)
    out = out + x
    return jax.nn.relu(out)


if __name__ == "__main__":
    # Module defaults: in=out=72, groups=18, width_per_group=4 -> mid=72, scales=4.
    in_channels = out_channels = 72
    groups, width_per_group, scales = 18, 4, 4
    mid = groups * width_per_group
    N, H, W = 2, 16, 16

    key = jax.random.PRNGKey(0)
    keys = iter(jax.random.split(key, 32))

    def nrm(shape, s=0.05):
        return jax.random.normal(next(keys), shape, jnp.float32) * s

    def bn_params(c):
        gamma = 0.5 + jax.random.uniform(next(keys), (c,), jnp.float32)
        beta = jax.random.normal(next(keys), (c,), jnp.float32) * 0.1
        mean = jax.random.normal(next(keys), (c,), jnp.float32) * 0.1
        var = 0.5 + jax.random.uniform(next(keys), (c,), jnp.float32)
        return (gamma, beta, mean, var)

    params = {
        "conv1_w": nrm((mid, in_channels, 1, 1)),
        "convs_w": [nrm((mid, mid // groups, 3, 3)) for _ in range(scales - 1)],
        "conv3_w": nrm((out_channels, mid, 1, 1)),
        "norm1": bn_params(mid),
        "bns": [bn_params(mid) for _ in range(scales - 1)],
        "norm3": bn_params(out_channels),
    }

    x = jax.random.normal(next(keys), (N, in_channels, H, W), jnp.float32)

    fwd = jax.jit(functools.partial(cml_forward, groups=groups, scales=scales))
    out = jax.block_until_ready(fwd(x, params))

    ref = jax.block_until_ready(
        cml_reference(x, params, groups=groups, scales=scales))

    assert out.shape == ref.shape, (out.shape, ref.shape)
    max_err = float(jnp.max(jnp.abs(out - ref)))
    # MXU f32 matmuls use reduced-precision passes; 2e-2 abs tolerance is ample
    # to catch structural errors at these magnitudes.
    assert max_err < 2e-2, f"max abs diff vs reference: {max_err}"

    print("KERNEL_OK")
</pallas_src>

<mosaic_0001>
module attributes {stable_mosaic.version = 11 : i64} {
  func.func @_pw_bn_relu_kernel(%arg0: i32, %arg1: memref<512x72xf32, #tpu.memory_space<vmem>>, %arg2: memref<72x72xf32, #tpu.memory_space<vmem>>, %arg3: memref<1x72xf32, #tpu.memory_space<vmem>>, %arg4: memref<1x72xf32, #tpu.memory_space<vmem>>, %arg5: memref<512x72xf32, #tpu.memory_space<vmem>>) attributes {dimension_semantics = [#tpu.dimension_semantics<parallel>], iteration_bounds = array<i64: 1>, scalar_prefetch = 0 : i64, scratch_operands = 0 : i64, tpu.core_type = #tpu.core_type<tc>, window_params = [{transform_indices = @transform_0, window_bounds = array<i64: 512, 72>}, {pipeline_mode = #tpu.pipeline_mode<synchronous>, transform_indices = @transform_1, window_bounds = array<i64: 72, 72>}, {pipeline_mode = #tpu.pipeline_mode<synchronous>, transform_indices = @transform_2, window_bounds = array<i64: 1, 72>}, {pipeline_mode = #tpu.pipeline_mode<synchronous>, transform_indices = @transform_3, window_bounds = array<i64: 1, 72>}, {transform_indices = @transform_4, window_bounds = array<i64: 512, 72>}]} {
    %c0 = arith.constant 0 : index
    %c0_0 = arith.constant 0 : index
    %0 = vector.load %arg1[%c0, %c0_0] : memref<512x72xf32, #tpu.memory_space<vmem>>, vector<512x72xf32>
    %c0_1 = arith.constant 0 : index
    %c0_2 = arith.constant 0 : index
    %1 = vector.load %arg2[%c0_1, %c0_2] : memref<72x72xf32, #tpu.memory_space<vmem>>, vector<72x72xf32>
    %cst = arith.constant dense<0.000000e+00> : vector<512x72xf32>
    %2 = tpu.matmul %0, %1, %cst {dimension_numbers = #tpu.dot_dimension_numbers<[1], [0], [0], [1], [0, 0, 1, 1], [], []>} : vector<512x72xf32>, vector<72x72xf32>, vector<512x72xf32> -> vector<512x72xf32>
    %c0_3 = arith.constant 0 : index
    %c0_4 = arith.constant 0 : index
    %3 = vector.load %arg3[%c0_3, %c0_4] : memref<1x72xf32, #tpu.memory_space<vmem>>, vector<1x72xf32>
    %4 = vector.broadcast %3 : vector<1x72xf32> to vector<512x72xf32>
    %5 = arith.mulf %2, %4 : vector<512x72xf32>
    %c0_5 = arith.constant 0 : index
    %c0_6 = arith.constant 0 : index
    %6 = vector.load %arg4[%c0_5, %c0_6] : memref<1x72xf32, #tpu.memory_space<vmem>>, vector<1x72xf32>
    %7 = vector.broadcast %6 : vector<1x72xf32> to vector<512x72xf32>
    %8 = arith.addf %5, %7 : vector<512x72xf32>
    %cst_7 = arith.constant 0.000000e+00 : f32
    %9 = vector.broadcast %cst_7 : f32 to vector<512x72xf32>
    %10 = arith.maximumf %8, %9 : vector<512x72xf32>
    %c0_8 = arith.constant 0 : index
    %c0_9 = arith.constant 0 : index
    %11 = vector.load %arg5[%c0_8, %c0_9] : memref<512x72xf32, #tpu.memory_space<vmem>>, vector<512x72xf32>
    tpu.vector_store %arg5[%c0_8, %c0_9], %10 {strides = array<i32>} : memref<512x72xf32, #tpu.memory_space<vmem>>, vector<512x72xf32>,
    return
  }
  func.func @transform_0(%arg0: i32) -> (i32, i32) {
    %c0_i32 = arith.constant 0 : i32
    %c0_i32_0 = arith.constant 0 : i32
    return %arg0, %c0_i32 : i32, i32
  }
  func.func @transform_1(%arg0: i32) -> (i32, i32) {
    %c0_i32 = arith.constant 0 : i32
    %c0_i32_0 = arith.constant 0 : i32
    %c0_i32_1 = arith.constant 0 : i32
    return %c0_i32, %c0_i32_0 : i32, i32
  }
  func.func @transform_2(%arg0: i32) -> (i32, i32) {
    %c0_i32 = arith.constant 0 : i32
    %c0_i32_0 = arith.constant 0 : i32
    %c0_i32_1 = arith.constant 0 : i32
    return %c0_i32, %c0_i32_0 : i32, i32
  }
  func.func @transform_3(%arg0: i32) -> (i32, i32) {
    %c0_i32 = arith.constant 0 : i32
    %c0_i32_0 = arith.constant 0 : i32
    %c0_i32_1 = arith.constant 0 : i32
    return %c0_i32, %c0_i32_0 : i32, i32
  }
  func.func @transform_4(%arg0: i32) -> (i32, i32) {
    %c0_i32 = arith.constant 0 : i32
    %c0_i32_0 = arith.constant 0 : i32
    return %arg0, %c0_i32 : i32, i32
  }
}

module attributes {stable_mosaic.version = 11 : i64} {
  func.func @_g3x3_bn_relu_add_kernel(%arg0: i32, %arg1: memref<9x512x72xf32, #tpu.memory_space<vmem>>, %arg2: memref<9x72x72xf32, #tpu.memory_space<vmem>>, %arg3: memref<1x72xf32, #tpu.memory_space<vmem>>, %arg4: memref<1x72xf32, #tpu.memory_space<vmem>>, %arg5: memref<512x72xf32, #tpu.memory_space<vmem>>, %arg6: memref<512x72xf32, #tpu.memory_space<vmem>>) attributes {dimension_semantics = [#tpu.dimension_semantics<parallel>], iteration_bounds = array<i64: 1>, scalar_prefetch = 0 : i64, scratch_operands = 0 : i64, tpu.core_type = #tpu.core_type<tc>, window_params = [{transform_indices = @transform_0, window_bounds = array<i64: 9, 512, 72>}, {pipeline_mode = #tpu.pipeline_mode<synchronous>, transform_indices = @transform_1, window_bounds = array<i64: 9, 72, 72>}, {pipeline_mode = #tpu.pipeline_mode<synchronous>, transform_indices = @transform_2, window_bounds = array<i64: 1, 72>}, {pipeline_mode = #tpu.pipeline_mode<synchronous>, transform_indices = @transform_3, window_bounds = array<i64: 1, 72>}, {transform_indices = @transform_4, window_bounds = array<i64: 512, 72>}, {transform_indices = @transform_5, window_bounds = array<i64: 512, 72>}]} {
    %c0 = arith.constant 0 : index
    %c0_0 = arith.constant 0 : index
    %c0_1 = arith.constant 0 : index
    %0 = vector.load %arg1[%c0, %c0_0, %c0_1] : memref<9x512x72xf32, #tpu.memory_space<vmem>>, vector<1x512x72xf32>
    %1 = vector.shape_cast %0 : vector<1x512x72xf32> to vector<512x72xf32>
    %c0_2 = arith.constant 0 : index
    %c0_3 = arith.constant 0 : index
    %c0_4 = arith.constant 0 : index
    %2 = vector.load %arg2[%c0_2, %c0_3, %c0_4] : memref<9x72x72xf32, #tpu.memory_space<vmem>>, vector<1x72x72xf32>
    %3 = vector.shape_cast %2 : vector<1x72x72xf32> to vector<72x72xf32>
    %cst = arith.constant dense<0.000000e+00> : vector<512x72xf32>
    %4 = tpu.matmul %1, %3, %cst {dimension_numbers = #tpu.dot_dimension_numbers<[1], [0], [0], [1], [0, 0, 1, 1], [], []>} : vector<512x72xf32>, vector<72x72xf32>, vector<512x72xf32> -> vector<512x72xf32>
    %c1 = arith.constant 1 : index
    %c0_5 = arith.constant 0 : index
    %c0_6 = arith.constant 0 : index
    %5 = vector.load %arg1[%c1, %c0_5, %c0_6] : memref<9x512x72xf32, #tpu.memory_space<vmem>>, vector<1x512x72xf32>
    %6 = vector.shape_cast %5 : vector<1x512x72xf32> to vector<512x72xf32>
    %c1_7 = arith.constant 1 : index
    %c0_8 = arith.constant 0 : index
    %c0_9 = arith.constant 0 : index
    %7 = vector.load %arg2[%c1_7, %c0_8, %c0_9] : memref<9x72x72xf32, #tpu.memory_space<vmem>>, vector<1x72x72xf32>
    %8 = vector.shape_cast %7 : vector<1x72x72xf32> to vector<72x72xf32>
    %cst_10 = arith.constant dense<0.000000e+00> : vector<512x72xf32>
    %9 = tpu.matmul %6, %8, %cst_10 {dimension_numbers = #tpu.dot_dimension_numbers<[1], [0], [0], [1], [0, 0, 1, 1], [], []>} : vector<512x72xf32>, vector<72x72xf32>, vector<512x72xf32> -> vector<512x72xf32>
    %10 = arith.addf %4, %9 : vector<512x72xf32>
    %c2 = arith.constant 2 : index
    %c0_11 = arith.constant 0 : index
    %c0_12 = arith.constant 0 : index
    %11 = vector.load %arg1[%c2, %c0_11, %c0_12] : memref<9x512x72xf32, #tpu.memory_space<vmem>>, vector<1x512x72xf32>
    %12 = vector.shape_cast %11 : vector<1x512x72xf32> to vector<512x72xf32>
    %c2_13 = arith.constant 2 : index
    %c0_14 = arith.constant 0 : index
    %c0_15 = arith.constant 0 : index
    %13 = vector.load %arg2[%c2_13, %c0_14, %c0_15] : memref<9x72x72xf32, #tpu.memory_space<vmem>>, vector<1x72x72xf32>
    %14 = vector.shape_cast %13 : vector<1x72x72xf32> to vector<72x72xf32>
    %cst_16 = arith.constant dense<0.000000e+00> : vector<512x72xf32>
    %15 = tpu.matmul %12, %14, %cst_16 {dimension_numbers = #tpu.dot_dimension_numbers<[1], [0], [0], [1], [0, 0, 1, 1], [], []>} : vector<512x72xf32>, vector<72x72xf32>, vector<512x72xf32> -> vector<512x72xf32>
    %16 = arith.addf %10, %15 : vector<512x72xf32>
    %c3 = arith.constant 3 : index
    %c0_17 = arith.constant 0 : index
    %c0_18 = arith.constant 0 : index
    %17 = vector.load %arg1[%c3, %c0_17, %c0_18] : memref<9x512x72xf32, #tpu.memory_space<vmem>>, vector<1x512x72xf32>
    %18 = vector.shape_cast %17 : vector<1x512x72xf32> to vector<512x72xf32>
    %c3_19 = arith.constant 3 : index
    %c0_20 = arith.constant 0 : index
    %c0_21 = arith.constant 0 : index
    %19 = vector.load %arg2[%c3_19, %c0_20, %c0_21] : memref<9x72x72xf32, #tpu.memory_space<vmem>>, vector<1x72x72xf32>
    %20 = vector.shape_cast %19 : vector<1x72x72xf32> to vector<72x72xf32>
    %cst_22 = arith.constant dense<0.000000e+00> : vector<512x72xf32>
    %21 = tpu.matmul %18, %20, %cst_22 {dimension_numbers = #tpu.dot_dimension_numbers<[1], [0], [0], [1], [0, 0, 1, 1], [], []>} : vector<512x72xf32>, vector<72x72xf32>, vector<512x72xf32> -> vector<512x72xf32>
    %22 = arith.addf %16, %21 : vector<512x72xf32>
    %c4 = arith.constant 4 : index
    %c0_23 = arith.constant 0 : index
    %c0_24 = arith.constant 0 : index
    %23 = vector.load %arg1[%c4, %c0_23, %c0_24] : memref<9x512x72xf32, #tpu.memory_space<vmem>>, vector<1x512x72xf32>
    %24 = vector.shape_cast %23 : vector<1x512x72xf32> to vector<512x72xf32>
    %c4_25 = arith.constant 4 : index
    %c0_26 = arith.constant 0 : index
    %c0_27 = arith.constant 0 : index
    %25 = vector.load %arg2[%c4_25, %c0_26, %c0_27] : memref<9x72x72xf32, #tpu.memory_space<vmem>>, vector<1x72x72xf32>
    %26 = vector.shape_cast %25 : vector<1x72x72xf32> to vector<72x72xf32>
    %cst_28 = arith.constant dense<0.000000e+00> : vector<512x72xf32>
    %27 = tpu.matmul %24, %26, %cst_28 {dimension_numbers = #tpu.dot_dimension_numbers<[1], [0], [0], [1], [0, 0, 1, 1], [], []>} : vector<512x72xf32>, vector<72x72xf32>, vector<512x72xf32> -> vector<512x72xf32>
    %28 = arith.addf %22, %27 : vector<512x72xf32>
    %c5 = arith.constant 5 : index
    %c0_29 = arith.constant 0 : index
    %c0_30 = arith.constant 0 : index
    %29 = vector.load %arg1[%c5, %c0_29, %c0_30] : memref<9x512x72xf32, #tpu.memory_space<vmem>>, vector<1x512x72xf32>
    %30 = vector.shape_cast %29 : vector<1x512x72xf32> to vector<512x72xf32>
    %c5_31 = arith.constant 5 : index
    %c0_32 = arith.constant 0 : index
    %c0_33 = arith.constant 0 : index
    %31 = vector.load %arg2[%c5_31, %c0_32, %c0_33] : memref<9x72x72xf32, #tpu.memory_space<vmem>>, vector<1x72x72xf32>
    %32 = vector.shape_cast %31 : vector<1x72x72xf32> to vector<72x72xf32>
    %cst_34 = arith.constant dense<0.000000e+00> : vector<512x72xf32>
    %33 = tpu.matmul %30, %32, %cst_34 {dimension_numbers = #tpu.dot_dimension_numbers<[1], [0], [0], [1], [0, 0, 1, 1], [], []>} : vector<512x72xf32>, vector<72x72xf32>, vector<512x72xf32> -> vector<512x72xf32>
    %34 = arith.addf %28, %33 : vector<512x72xf32>
    %c6 = arith.constant 6 : index
    %c0_35 = arith.constant 0 : index
    %c0_36 = arith.constant 0 : index
    %35 = vector.load %arg1[%c6, %c0_35, %c0_36] : memref<9x512x72xf32, #tpu.memory_space<vmem>>, vector<1x512x72xf32>
    %36 = vector.shape_cast %35 : vector<1x512x72xf32> to vector<512x72xf32>
    %c6_37 = arith.constant 6 : index
    %c0_38 = arith.constant 0 : index
    %c0_39 = arith.constant 0 : index
    %37 = vector.load %arg2[%c6_37, %c0_38, %c0_39] : memref<9x72x72xf32, #tpu.memory_space<vmem>>, vector<1x72x72xf32>
    %38 = vector.shape_cast %37 : vector<1x72x72xf32> to vector<72x72xf32>
    %cst_40 = arith.constant dense<0.000000e+00> : vector<512x72xf32>
    %39 = tpu.matmul %36, %38, %cst_40 {dimension_numbers = #tpu.dot_dimension_numbers<[1], [0], [0], [1], [0, 0, 1, 1], [], []>} : vector<512x72xf32>, vector<72x72xf32>, vector<512x72xf32> -> vector<512x72xf32>
    %40 = arith.addf %34, %39 : vector<512x72xf32>
    %c7 = arith.constant 7 : index
    %c0_41 = arith.constant 0 : index
    %c0_42 = arith.constant 0 : index
    %41 = vector.load %arg1[%c7, %c0_41, %c0_42] : memref<9x512x72xf32, #tpu.memory_space<vmem>>, vector<1x512x72xf32>
    %42 = vector.shape_cast %41 : vector<1x512x72xf32> to vector<512x72xf32>
    %c7_43 = arith.constant 7 : index
    %c0_44 = arith.constant 0 : index
    %c0_45 = arith.constant 0 : index
    %43 = vector.load %arg2[%c7_43, %c0_44, %c0_45] : memref<9x72x72xf32, #tpu.memory_space<vmem>>, vector<1x72x72xf32>
    %44 = vector.shape_cast %43 : vector<1x72x72xf32> to vector<72x72xf32>
    %cst_46 = arith.constant dense<0.000000e+00> : vector<512x72xf32>
    %45 = tpu.matmul %42, %44, %cst_46 {dimension_numbers = #tpu.dot_dimension_numbers<[1], [0], [0], [1], [0, 0, 1, 1], [], []>} : vector<512x72xf32>, vector<72x72xf32>, vector<512x72xf32> -> vector<512x72xf32>
    %46 = arith.addf %40, %45 : vector<512x72xf32>
    %c8 = arith.constant 8 : index
    %c0_47 = arith.constant 0 : index
    %c0_48 = arith.constant 0 : index
    %47 = vector.load %arg1[%c8, %c0_47, %c0_48] : memref<9x512x72xf32, #tpu.memory_space<vmem>>, vector<1x512x72xf32>
    %48 = vector.shape_cast %47 : vector<1x512x72xf32> to vector<512x72xf32>
    %c8_49 = arith.constant 8 : index
    %c0_50 = arith.constant 0 : index
    %c0_51 = arith.constant 0 : index
    %49 = vector.load %arg2[%c8_49, %c0_50, %c0_51] : memref<9x72x72xf32, #tpu.memory_space<vmem>>, vector<1x72x72xf32>
    %50 = vector.shape_cast %49 : vector<1x72x72xf32> to vector<72x72xf32>
    %cst_52 = arith.constant dense<0.000000e+00> : vector<512x72xf32>
    %51 = tpu.matmul %48, %50, %cst_52 {dimension_numbers = #tpu.dot_dimension_numbers<[1], [0], [0], [1], [0, 0, 1, 1], [], []>} : vector<512x72xf32>, vector<72x72xf32>, vector<512x72xf32> -> vector<512x72xf32>
    %52 = arith.addf %46, %51 : vector<512x72xf32>
    %c0_53 = arith.constant 0 : index
    %c0_54 = arith.constant 0 : index
    %53 = vector.load %arg3[%c0_53, %c0_54] : memref<1x72xf32, #tpu.memory_space<vmem>>, vector<1x72xf32>
    %54 = vector.broadcast %53 : vector<1x72xf32> to vector<512x72xf32>
    %55 = arith.mulf %52, %54 : vector<512x72xf32>
    %c0_55 = arith.constant 0 : index
    %c0_56 = arith.constant 0 : index
    %56 = vector.load %arg4[%c0_55, %c0_56] : memref<1x72xf32, #tpu.memory_space<vmem>>, vector<1x72xf32>
    %57 = vector.broadcast %56 : vector<1x72xf32> to vector<512x72xf32>
    %58 = arith.addf %55, %57 : vector<512x72xf32>
    %cst_57 = arith.constant 0.000000e+00 : f32
    %59 = vector.broadcast %cst_57 : f32 to vector<512x72xf32>
    %60 = arith.maximumf %58, %59 : vector<512x72xf32>
    %c0_58 = arith.constant 0 : index
    %c0_59 = arith.constant 0 : index
    %61 = vector.load %arg5[%c0_58, %c0_59] : memref<512x72xf32, #tpu.memory_space<vmem>>, vector<512x72xf32>
    %62 = arith.addf %60, %61 : vector<512x72xf32>
    %c0_60 = arith.constant 0 : index
    %c0_61 = arith.constant 0 : index
    %63 = vector.load %arg6[%c0_60, %c0_61] : memref<512x72xf32, #tpu.memory_space<vmem>>, vector<512x72xf32>
    tpu.vector_store %arg6[%c0_60, %c0_61], %62 {strides = array<i32>} : memref<512x72xf32, #tpu.memory_space<vmem>>, vector<512x72xf32>,
    return
  }
  func.func @transform_0(%arg0: i32) -> (i32, i32, i32) {
    %c0_i32 = arith.constant 0 : i32
    %c0_i32_0 = arith.constant 0 : i32
    %c0_i32_1 = arith.constant 0 : i32
    return %c0_i32, %arg0, %c0_i32_0 : i32, i32, i32
  }
  func.func @transform_1(%arg0: i32) -> (i32, i32, i32) {
    %c0_i32 = arith.constant 0 : i32
    %c0_i32_0 = arith.constant 0 : i32
    %c0_i32_1 = arith.constant 0 : i32
    %c0_i32_2 = arith.constant 0 : i32
    return %c0_i32, %c0_i32_0, %c0_i32_1 : i32, i32, i32
  }
  func.func @transform_2(%arg0: i32) -> (i32, i32) {
    %c0_i32 = arith.constant 0 : i32
    %c0_i32_0 = arith.constant 0 : i32
    %c0_i32_1 = arith.constant 0 : i32
    return %c0_i32, %c0_i32_0 : i32, i32
  }
  func.func @transform_3(%arg0: i32) -> (i32, i32) {
    %c0_i32 = arith.constant 0 : i32
    %c0_i32_0 = arith.constant 0 : i32
    %c0_i32_1 = arith.constant 0 : i32
    return %c0_i32, %c0_i32_0 : i32, i32
  }
  func.func @transform_4(%arg0: i32) -> (i32, i32) {
    %c0_i32 = arith.constant 0 : i32
    %c0_i32_0 = arith.constant 0 : i32
    return %arg0, %c0_i32 : i32, i32
  }
  func.func @transform_5(%arg0: i32) -> (i32, i32) {
    %c0_i32 = arith.constant 0 : i32
    %c0_i32_0 = arith.constant 0 : i32
    return %arg0, %c0_i32 : i32, i32
  }
}

module attributes {stable_mosaic.version = 11 : i64} {
  func.func @_pw_bn_add_relu_kernel(%arg0: i32, %arg1: memref<512x72xf32, #tpu.memory_space<vmem>>, %arg2: memref<72x72xf32, #tpu.memory_space<vmem>>, %arg3: memref<1x72xf32, #tpu.memory_space<vmem>>, %arg4: memref<1x72xf32, #tpu.memory_space<vmem>>, %arg5: memref<512x72xf32, #tpu.memory_space<vmem>>, %arg6: memref<512x72xf32, #tpu.memory_space<vmem>>) attributes {dimension_semantics = [#tpu.dimension_semantics<parallel>], iteration_bounds = array<i64: 1>, scalar_prefetch = 0 : i64, scratch_operands = 0 : i64, tpu.core_type = #tpu.core_type<tc>, window_params = [{transform_indices = @transform_0, window_bounds = array<i64: 512, 72>}, {pipeline_mode = #tpu.pipeline_mode<synchronous>, transform_indices = @transform_1, window_bounds = array<i64: 72, 72>}, {pipeline_mode = #tpu.pipeline_mode<synchronous>, transform_indices = @transform_2, window_bounds = array<i64: 1, 72>}, {pipeline_mode = #tpu.pipeline_mode<synchronous>, transform_indices = @transform_3, window_bounds = array<i64: 1, 72>}, {transform_indices = @transform_4, window_bounds = array<i64: 512, 72>}, {transform_indices = @transform_5, window_bounds = array<i64: 512, 72>}]} {
    %c0 = arith.constant 0 : index
    %c0_0 = arith.constant 0 : index
    %0 = vector.load %arg1[%c0, %c0_0] : memref<512x72xf32, #tpu.memory_space<vmem>>, vector<512x72xf32>
    %c0_1 = arith.constant 0 : index
    %c0_2 = arith.constant 0 : index
    %1 = vector.load %arg2[%c0_1, %c0_2] : memref<72x72xf32, #tpu.memory_space<vmem>>, vector<72x72xf32>
    %cst = arith.constant dense<0.000000e+00> : vector<512x72xf32>
    %2 = tpu.matmul %0, %1, %cst {dimension_numbers = #tpu.dot_dimension_numbers<[1], [0], [0], [1], [0, 0, 1, 1], [], []>} : vector<512x72xf32>, vector<72x72xf32>, vector<512x72xf32> -> vector<512x72xf32>
    %c0_3 = arith.constant 0 : index
    %c0_4 = arith.constant 0 : index
    %3 = vector.load %arg3[%c0_3, %c0_4] : memref<1x72xf32, #tpu.memory_space<vmem>>, vector<1x72xf32>
    %4 = vector.broadcast %3 : vector<1x72xf32> to vector<512x72xf32>
    %5 = arith.mulf %2, %4 : vector<512x72xf32>
    %c0_5 = arith.constant 0 : index
    %c0_6 = arith.constant 0 : index
    %6 = vector.load %arg4[%c0_5, %c0_6] : memref<1x72xf32, #tpu.memory_space<vmem>>, vector<1x72xf32>
    %7 = vector.broadcast %6 : vector<1x72xf32> to vector<512x72xf32>
    %8 = arith.addf %5, %7 : vector<512x72xf32>
    %c0_7 = arith.constant 0 : index
    %c0_8 = arith.constant 0 : index
    %9 = vector.load %arg5[%c0_7, %c0_8] : memref<512x72xf32, #tpu.memory_space<vmem>>, vector<512x72xf32>
    %10 = arith.addf %8, %9 : vector<512x72xf32>
    %cst_9 = arith.constant 0.000000e+00 : f32
    %11 = vector.broadcast %cst_9 : f32 to vector<512x72xf32>
    %12 = arith.maximumf %10, %11 : vector<512x72xf32>
    %c0_10 = arith.constant 0 : index
    %c0_11 = arith.constant 0 : index
    %13 = vector.load %arg6[%c0_10, %c0_11] : memref<512x72xf32, #tpu.memory_space<vmem>>, vector<512x72xf32>
    tpu.vector_store %arg6[%c0_10, %c0_11], %12 {strides = array<i32>} : memref<512x72xf32, #tpu.memory_space<vmem>>, vector<512x72xf32>,
    return
  }
  func.func @transform_0(%arg0: i32) -> (i32, i32) {
    %c0_i32 = arith.constant 0 : i32
    %c0_i32_0 = arith.constant 0 : i32
    return %arg0, %c0_i32 : i32, i32
  }
  func.func @transform_1(%arg0: i32) -> (i32, i32) {
    %c0_i32 = arith.constant 0 : i32
    %c0_i32_0 = arith.constant 0 : i32
    %c0_i32_1 = arith.constant 0 : i32
    return %c0_i32, %c0_i32_0 : i32, i32
  }
  func.func @transform_2(%arg0: i32) -> (i32, i32) {
    %c0_i32 = arith.constant 0 : i32
    %c0_i32_0 = arith.constant 0 : i32
    %c0_i32_1 = arith.constant 0 : i32
    return %c0_i32, %c0_i32_0 : i32, i32
  }
  func.func @transform_3(%arg0: i32) -> (i32, i32) {
    %c0_i32 = arith.constant 0 : i32
    %c0_i32_0 = arith.constant 0 : i32
    %c0_i32_1 = arith.constant 0 : i32
    return %c0_i32, %c0_i32_0 : i32, i32
  }
  func.func @transform_4(%arg0: i32) -> (i32, i32) {
    %c0_i32 = arith.constant 0 : i32
    %c0_i32_0 = arith.constant 0 : i32
    return %arg0, %c0_i32 : i32, i32
  }
  func.func @transform_5(%arg0: i32) -> (i32, i32) {
    %c0_i32 = arith.constant 0 : i32
    %c0_i32_0 = arith.constant 0 : i32
    return %arg0, %c0_i32 : i32, i32
  }
}

</mosaic_0001>

<llo_original>
// kernel: cml_forward.5
$region0: #{cml_forward.5}
  #allocation0 [shape = 'u32[]', space=smem, size = 0x4, offset = 0x4, fixed_abs, tag = 'smem constant byte address 0x4 - core index']
  #allocation1 [shape = 'u32[144,128]{1,0:T(1,128)}', space=vmem, size = 0x12000, scoped, tag = 'internal scratch']
  %s0 = inlined_call_operand.hbm [shape: f32[512,72], index: 0, kind: input, shape index: {}]
  %s1 = inlined_call_operand.vmem [shape: f32[72,72], index: 1, kind: input, shape index: {}]
  %s2 = inlined_call_operand.vmem [shape: f32[1,72], index: 2, kind: input, shape index: {}]
  %s3 = inlined_call_operand.vmem [shape: f32[1,72], index: 3, kind: input, shape index: {}]
  %s4 = inlined_call_operand.vmem [shape: f32[512,72], index: 4, kind: output, shape index: {}]
  %s5 = sld [smem:[#allocation0]]
  $region30: #{cml_forward.5} parent=0
    _
  %s7 = ssub.s32 1, %s5
  %s8 = scalar_select 0, %s7, %s5
  $region1: #{cml_forward.5} parent=0
    #allocation2 [shape = 'u8[262144]{0}', space=vmem, size = 0x40000, scoped, tag = 'input window, operand 0, single buffered']
    #allocation3 [shape = 's32[1]{0}', space=sflag, size = 0x4, scoped, tag = 'scoped memory for cml_forward.5']
    %9 = vsyncpa [#allocation3], 0
    // Predicated region
    $region2: #{cml_forward.5} parent=1 // pred_check
      _
    $region3: #{cml_forward.5} parent=1 // pred_check_branch
      %11 = sbr.rel (0) target = $region5
    $region4: #{cml_forward.5} parent=1 // pred_region
      %s13 = ssub.s32 8192, 8192
      %14 = vsyncadd [#allocation3], %s13
      %s15 = sshll.u32 [#allocation2], 4
      %s16 = int_to_ptr.vmem [resolvable:$true] %s15
      %21 = dma.hbm_to_vmem [thread:$0]  %s0, 8192, %s16, [#allocation3], 128, 128, 8
    $region5: #{cml_forward.5} parent=1 // pred_fallthru
      _
    // Predicated region
    $region6: #{cml_forward.5} parent=1 // pred_check
      _
    $region7: #{cml_forward.5} parent=1 // pred_check_branch
      %23 = sbr.rel (0) target = $region9
    $region8: #{cml_forward.5} parent=1 // pred_region
      _
    $region9: #{cml_forward.5} parent=1 // pred_fallthru
      _
    // Predicated region
    $region10: #{cml_forward.5} parent=1 // pred_check
      _
    $region11: #{cml_forward.5} parent=1 // pred_check_branch
      %25 = sbr.rel (0) target = $region13
    $region12: #{cml_forward.5} parent=1 // pred_region
      _
    $region13: #{cml_forward.5} parent=1 // pred_fallthru
      _
    // Predicated region
    $region14: #{cml_forward.5} parent=1 // pred_check
      _
    $region15: #{cml_forward.5} parent=1 // pred_check_branch
      %27 = sbr.rel (0) target = $region17
    $region16: #{cml_forward.5} parent=1 // pred_region
      _
    $region17: #{cml_forward.5} parent=1 // pred_fallthru
      _
    // Predicated region
    $region18: #{cml_forward.5} parent=1 // pred_check
      _
    $region19: #{cml_forward.5} parent=1 // pred_check_branch
      %29 = sbr.rel (0) target = $region21
    $region20: #{cml_forward.5} parent=1 // pred_region
      %30 = dma.done [#allocation3], 8192
    $region21: #{cml_forward.5} parent=1 // pred_fallthru
      _
    %v31 = vld [vmem:[#allocation2] sm:$0xff]
    %v32 = vld [vmem:[#allocation2 + $0x8] sm:$0xff]
    %v33 = vld [vmem:[#allocation2 + $0x10] sm:$0xff]
    %v34 = vld [vmem:[#allocation2 + $0x18] sm:$0xff]
    %v35 = vld [vmem:[#allocation2 + $0x20] sm:$0xff]
    %v36 = vld [vmem:[#allocation2 + $0x28] sm:$0xff]
    %v37 = vld [vmem:[#allocation2 + $0x30] sm:$0xff]
    %v38 = vld [vmem:[#allocation2 + $0x38] sm:$0xff]
    %v39 = vld [vmem:[#allocation2 + $0x40] sm:$0xff]
    %v40 = vld [vmem:[#allocation2 + $0x48] sm:$0xff]
    %v41 = vld [vmem:[#allocation2 + $0x50] sm:$0xff]
    %v42 = vld [vmem:[#allocation2 + $0x58] sm:$0xff]
    %v43 = vld [vmem:[#allocation2 + $0x60] sm:$0xff]
    %v44 = vld [vmem:[#allocation2 + $0x68] sm:$0xff]
    %v45 = vld [vmem:[#allocation2 + $0x70] sm:$0xff]
    %v46 = vld [vmem:[#allocation2 + $0x78] sm:$0xff]
    %v47 = vld [vmem:[#allocation2 + $0x80] sm:$0xff]
    %v48 = vld [vmem:[#allocation2 + $0x88] sm:$0xff]
    %v49 = vld [vmem:[#allocation2 + $0x90] sm:$0xff]
    %v50 = vld [vmem:[#allocation2 + $0x98] sm:$0xff]
    %v51 = vld [vmem:[#allocation2 + $0xa0] sm:$0xff]
    %v52 = vld [vmem:[#allocation2 + $0xa8] sm:$0xff]
    %v53 = vld [vmem:[#allocation2 + $0xb0] sm:$0xff]
    %v54 = vld [vmem:[#allocation2 + $0xb8] sm:$0xff]
    %v55 = vld [vmem:[#allocation2 + $0xc0] sm:$0xff]
    %v56 = vld [vmem:[#allocation2 + $0xc8] sm:$0xff]
    %v57 = vld [vmem:[#allocation2 + $0xd0] sm:$0xff]
    %v58 = vld [vmem:[#allocation2 + $0xd8] sm:$0xff]
    %v59 = vld [vmem:[#allocation2 + $0xe0] sm:$0xff]
    %v60 = vld [vmem:[#allocation2 + $0xe8] sm:$0xff]
    %v61 = vld [vmem:[#allocation2 + $0xf0] sm:$0xff]
    %v62 = vld [vmem:[#allocation2 + $0xf8] sm:$0xff]
    %v63 = vld [vmem:[#allocation2 + $0x100] sm:$0xff]
    %v64 = vld [vmem:[#allocation2 + $0x108] sm:$0xff]
    %v65 = vld [vmem:[#allocation2 + $0x110] sm:$0xff]
    %v66 = vld [vmem:[#allocation2 + $0x118] sm:$0xff]
    %v67 = vld [vmem:[#allocation2 + $0x120] sm:$0xff]
    %v68 = vld [vmem:[#allocation2 + $0x128] sm:$0xff]
    %v69 = vld [vmem:[#allocation2 + $0x130] sm:$0xff]
    %v70 = vld [vmem:[#allocation2 + $0x138] sm:$0xff]
    %v71 = vld [vmem:[#allocation2 + $0x140] sm:$0xff]
    %v72 = vld [vmem:[#allocation2 + $0x148] sm:$0xff]
    %v73 = vld [vmem:[#allocation2 + $0x150] sm:$0xff]
    %v74 = vld [vmem:[#allocation2 + $0x158] sm:$0xff]
    %v75 = vld [vmem:[#allocation2 + $0x160] sm:$0xff]
    %v76 = vld [vmem:[#allocation2 + $0x168] sm:$0xff]
    %v77 = vld [vmem:[#allocation2 + $0x170] sm:$0xff]
    %v78 = vld [vmem:[#allocation2 + $0x178] sm:$0xff]
    %v79 = vld [vmem:[#allocation2 + $0x180] sm:$0xff]
    %v80 = vld [vmem:[#allocation2 + $0x188] sm:$0xff]
    %v81 = vld [vmem:[#allocation2 + $0x190] sm:$0xff]
    %v82 = vld [vmem:[#allocation2 + $0x198] sm:$0xff]
    %v83 = vld [vmem:[#allocation2 + $0x1a0] sm:$0xff]
    %v84 = vld [vmem:[#allocation2 + $0x1a8] sm:$0xff]
    %v85 = vld [vmem:[#allocation2 + $0x1b0] sm:$0xff]
    %v86 = vld [vmem:[#allocation2 + $0x1b8] sm:$0xff]
    %v87 = vld [vmem:[#allocation2 + $0x1c0] sm:$0xff]
    %v88 = vld [vmem:[#allocation2 + $0x1c8] sm:$0xff]
    %v89 = vld [vmem:[#allocation2 + $0x1d0] sm:$0xff]
    %v90 = vld [vmem:[#allocation2 + $0x1d8] sm:$0xff]
    %v91 = vld [vmem:[#allocation2 + $0x1e0] sm:$0xff]
    %v92 = vld [vmem:[#allocation2 + $0x1e8] sm:$0xff]
    %v93 = vld [vmem:[#allocation2 + $0x1f0] sm:$0xff]
    %v94 = vld [vmem:[#allocation2 + $0x1f8] sm:$0xff]
    %v95 = vld [vmem:[%s1] sm:$0xff]
    %v96 = vld [vmem:[%s1 + $0x8] sm:$0xff]
    %v97 = vld [vmem:[%s1 + $0x10] sm:$0xff]
    %v98 = vld [vmem:[%s1 + $0x18] sm:$0xff]
    %v99 = vld [vmem:[%s1 + $0x20] sm:$0xff]
    %v100 = vld [vmem:[%s1 + $0x28] sm:$0xff]
    %v101 = vld [vmem:[%s1 + $0x30] sm:$0xff]
    %v102 = vld [vmem:[%s1 + $0x38] sm:$0xff]
    %v103 = vld [vmem:[%s1 + $0x40] sm:$0xff]
    %vm104 = vcmask 588800
    %v106 = vsel %vm104, %v31, 0
    %v109 = vsel %vm104, %v32, 0
    %v112 = vsel %vm104, %v33, 0
    %v115 = vsel %vm104, %v34, 0
    %v118 = vsel %vm104, %v35, 0
    %v121 = vsel %vm104, %v36, 0
    %v124 = vsel %vm104, %v37, 0
    %v127 = vsel %vm104, %v38, 0
    %v130 = vsel %vm104, %v39, 0
    %v133 = vsel %vm104, %v40, 0
    %v136 = vsel %vm104, %v41, 0
    %v139 = vsel %vm104, %v42, 0
    %v142 = vsel %vm104, %v43, 0
    %v145 = vsel %vm104, %v44, 0
    %v148 = vsel %vm104, %v45, 0
    %v151 = vsel %vm104, %v46, 0
    %v154 = vsel %vm104, %v47, 0
    %v157 = vsel %vm104, %v48, 0
    %v160 = vsel %vm104, %v49, 0
    %v163 = vsel %vm104, %v50, 0
    %v166 = vsel %vm104, %v51, 0
    %v169 = vsel %vm104, %v52, 0
    %v172 = vsel %vm104, %v53, 0
    %v175 = vsel %vm104, %v54, 0
    %v178 = vsel %vm104, %v55, 0
    %v181 = vsel %vm104, %v56, 0
    %v184 = vsel %vm104, %v57, 0
    %v187 = vsel %vm104, %v58, 0
    %v190 = vsel %vm104, %v59, 0
    %v193 = vsel %vm104, %v60, 0
    %v196 = vsel %vm104, %v61, 0
    %v199 = vsel %vm104, %v62, 0
    %v202 = vsel %vm104, %v63, 0
    %v205 = vsel %vm104, %v64, 0
    %v208 = vsel %vm104, %v65, 0
    %v211 = vsel %vm104, %v66, 0
    %v214 = vsel %vm104, %v67, 0
    %v217 = vsel %vm104, %v68, 0
    %v220 = vsel %vm104, %v69, 0
    %v223 = vsel %vm104, %v70, 0
    %v226 = vsel %vm104, %v71, 0
    %v229 = vsel %vm104, %v72, 0
    %v232 = vsel %vm104, %v73, 0
    %v235 = vsel %vm104, %v74, 0
    %v238 = vsel %vm104, %v75, 0
    %v241 = vsel %vm104, %v76, 0
    %v244 = vsel %vm104, %v77, 0
    %v247 = vsel %vm104, %v78, 0
    %v250 = vsel %vm104, %v79, 0
    %v253 = vsel %vm104, %v80, 0
    %v256 = vsel %vm104, %v81, 0
    %v259 = vsel %vm104, %v82, 0
    %v262 = vsel %vm104, %v83, 0
    %v265 = vsel %vm104, %v84, 0
    %v268 = vsel %vm104, %v85, 0
    %v271 = vsel %vm104, %v86, 0
    %v274 = vsel %vm104, %v87, 0
    %v277 = vsel %vm104, %v88, 0
    %v280 = vsel %vm104, %v89, 0
    %v283 = vsel %vm104, %v90, 0
    %v286 = vsel %vm104, %v91, 0
    %v289 = vsel %vm104, %v92, 0
    %v292 = vsel %vm104, %v93, 0
    %v295 = vsel %vm104, %v94, 0
    %297 = vmatprep.subr.mxu0 0.0
    %298 = vmatpush1.msra.mxu0 0.0
    %299 = vmatprep.subr.mxu0 0.0
    %300 = vmatpush1.msra.mxu0 0.0
    %301 = vmatprep.subr.mxu0 0.0
    %302 = vmatpush1.msra.mxu0 0.0
    %303 = vmatprep.subr.mxu0 0.0
    %304 = vmatpush1.msra.mxu0 0.0
    %305 = vmatprep.subr.mxu0 0.0
    %306 = vmatpush1.msra.mxu0 0.0
    %307 = vmatprep.subr.mxu0 0.0
    %308 = vmatpush1.msra.mxu0 0.0
    %309 = vmatprep.subr.mxu0 0.0
    %310 = vmatpush1.msra.mxu0 0.0
    %311 = vmatprep.subr.mxu0 0.0
    %312 = vmatpush1.msra.mxu0 %v103
    %313 = vmatprep.subr.mxu0 0.0
    %314 = vmatpush1.msra.mxu0 %v102
    %315 = vmatprep.subr.mxu0 0.0
    %316 = vmatpush1.msra.mxu0 %v101
    %317 = vmatprep.subr.mxu0 0.0
    %318 = vmatpush1.msra.mxu0 %v100
    %319 = vmatprep.subr.mxu0 0.0
    %320 = vmatpush1.msra.mxu0 %v99
    %321 = vmatprep.subr.mxu0 0.0
    %322 = vmatpush1.msra.mxu0 %v98
    %323 = vmatprep.subr.mxu0 0.0
    %324 = vmatpush1.msra.mxu0 %v97
    %325 = vmatprep.subr.mxu0 0.0
    %326 = vmatpush1.msra.mxu0 %v96
    %327 = vmatprep.subr.mxu0 0.0
    %328 = vmatpush1.msra.mxu0 %v95
    %329 = vmatprep.subr.mxu0 0.0
    %330 = vmatpush2.msra.mxu0 0.0
    %331 = vmatprep.subr.mxu0 0.0
    %332 = vmatpush2.msra.mxu0 0.0
    %333 = vmatprep.subr.mxu0 0.0
    %334 = vmatpush2.msra.mxu0 0.0
    %335 = vmatprep.subr.mxu0 0.0
    %336 = vmatpush2.msra.mxu0 0.0
    %337 = vmatprep.subr.mxu0 0.0
    %338 = vmatpush2.msra.mxu0 0.0
    %339 = vmatprep.subr.mxu0 0.0
    %340 = vmatpush2.msra.mxu0 0.0
    %341 = vmatprep.subr.mxu0 0.0
    %342 = vmatpush2.msra.mxu0 0.0
    %343 = vmatprep.subr.mxu0 0.0
    %344 = vmatpush2.msra.mxu0 0.0
    %345 = vmatprep.subr.mxu0 0.0
    %346 = vmatpush2.msra.mxu0 0.0
    %347 = vmatprep.subr.mxu0 0.0
    %348 = vmatpush2.msra.mxu0 0.0
    %349 = vmatprep.subr.mxu0 0.0
    %350 = vmatpush2.msra.mxu0 0.0
    %351 = vmatprep.subr.mxu0 0.0
    %352 = vmatpush2.msra.mxu0 0.0
    %353 = vmatprep.subr.mxu0 0.0
    %354 = vmatpush2.msra.mxu0 0.0
    %355 = vmatprep.subr.mxu0 0.0
    %356 = vmatpush2.msra.mxu0 0.0
    %357 = vmatprep.subr.mxu0 0.0
    %358 = vmatpush2.msra.mxu0 0.0
    %359 = vmatprep.subr.mxu0 0.0
    %360 = vmatpush2.msra.mxu0 0.0
    %361 = vmatprep.mubr.f32.mxu0 0.0
    %362 = vmatmul.mubr.f32.gmra.mxu0 %v106
    %v363 = vpop.f32.mrf.mxu0
    %v364 = vadd.f32 0.0, %v363
    %v365 = vpop.f32.mrf.mxu0
    %366 = vmatprep.mubr.f32.mxu0 0.0
    %367 = vmatmul.mubr.f32.gmra.mxu0 %v109
    %v368 = vpop.f32.mrf.mxu0
    %v369 = vadd.f32 0.0, %v368
    %v370 = vpop.f32.mrf.mxu0
    %371 = vmatprep.mubr.f32.mxu0 0.0
    %372 = vmatmul.mubr.f32.gmra.mxu0 %v112
    %v373 = vpop.f32.mrf.mxu0
    %v374 = vadd.f32 0.0, %v373
    %v375 = vpop.f32.mrf.mxu0
    %376 = vmatprep.mubr.f32.mxu0 0.0
    %377 = vmatmul.mubr.f32.gmra.mxu0 %v115
    %v378 = vpop.f32.mrf.mxu0
    %v379 = vadd.f32 0.0, %v378
    %v380 = vpop.f32.mrf.mxu0
    %381 = vmatprep.mubr.f32.mxu0 0.0
    %382 = vmatmul.mubr.f32.gmra.mxu0 %v118
    %v383 = vpop.f32.mrf.mxu0
    %v384 = vadd.f32 0.0, %v383
    %v385 = vpop.f32.mrf.mxu0
    %386 = vmatprep.mubr.f32.mxu0 0.0
    %387 = vmatmul.mubr.f32.gmra.mxu0 %v121
    %v388 = vpop.f32.mrf.mxu0
    %v389 = vadd.f32 0.0, %v388
    %v390 = vpop.f32.mrf.mxu0
    %391 = vmatprep.mubr.f32.mxu0 0.0
    %392 = vmatmul.mubr.f32.gmra.mxu0 %v124
    %v393 = vpop.f32.mrf.mxu0
    %v394 = vadd.f32 0.0, %v393
    %v395 = vpop.f32.mrf.mxu0
    %396 = vmatprep.mubr.f32.mxu0 0.0
    %397 = vmatmul.mubr.f32.gmra.mxu0 %v127
    %v398 = vpop.f32.mrf.mxu0
    %v399 = vadd.f32 0.0, %v398
    %v400 = vpop.f32.mrf.mxu0
    %401 = vmatprep.mubr.f32.mxu0 0.0
    %402 = vmatmul.mubr.f32.gmra.mxu0 %v130
    %v403 = vpop.f32.mrf.mxu0
    %v404 = vadd.f32 0.0, %v403
    %v405 = vpop.f32.mrf.mxu0
    %406 = vmatprep.mubr.f32.mxu0 0.0
    %407 = vmatmul.mubr.f32.gmra.mxu0 %v133
    %v408 = vpop.f32.mrf.mxu0
    %v409 = vadd.f32 0.0, %v408
    %v410 = vpop.f32.mrf.mxu0
    %411 = vmatprep.mubr.f32.mxu0 0.0
    %412 = vmatmul.mubr.f32.gmra.mxu0 %v136
    %v413 = vpop.f32.mrf.mxu0
    %v414 = vadd.f32 0.0, %v413
    %v415 = vpop.f32.mrf.mxu0
    %416 = vmatprep.mubr.f32.mxu0 0.0
    %417 = vmatmul.mubr.f32.gmra.mxu0 %v139
    %v418 = vpop.f32.mrf.mxu0
    %v419 = vadd.f32 0.0, %v418
    %v420 = vpop.f32.mrf.mxu0
    %421 = vmatprep.mubr.f32.mxu0 0.0
    %422 = vmatmul.mubr.f32.gmra.mxu0 %v142
    %v423 = vpop.f32.mrf.mxu0
    %v424 = vadd.f32 0.0, %v423
    %v425 = vpop.f32.mrf.mxu0
    %426 = vmatprep.mubr.f32.mxu0 0.0
    %427 = vmatmul.mubr.f32.gmra.mxu0 %v145
    %v428 = vpop.f32.mrf.mxu0
    %v429 = vadd.f32 0.0, %v428
    %v430 = vpop.f32.mrf.mxu0
    %431 = vmatprep.mubr.f32.mxu0 0.0
    %432 = vmatmul.mubr.f32.gmra.mxu0 %v148
    %v433 = vpop.f32.mrf.mxu0
    %v434 = vadd.f32 0.0, %v433
    %v435 = vpop.f32.mrf.mxu0
    %436 = vmatprep.mubr.f32.mxu0 0.0
    %437 = vmatmul.mubr.f32.gmra.mxu0 %v151
    %v438 = vpop.f32.mrf.mxu0
    %v439 = vadd.f32 0.0, %v438
    %v440 = vpop.f32.mrf.mxu0
    %441 = vmatprep.mubr.f32.mxu0 0.0
    %442 = vmatmul.mubr.f32.gmra.mxu0 %v154
    %v443 = vpop.f32.mrf.mxu0
    %v444 = vadd.f32 0.0, %v443
    %v445 = vpop.f32.mrf.mxu0
    %446 = vmatprep.mubr.f32.mxu0 0.0
    %447 = vmatmul.mubr.f32.gmra.mxu0 %v157
    %v448 = vpop.f32.mrf.mxu0
    %v449 = vadd.f32 0.0, %v448
    %v450 = vpop.f32.mrf.mxu0
    %451 = vmatprep.mubr.f32.mxu0 0.0
    %452 = vmatmul.mubr.f32.gmra.mxu0 %v160
    %v453 = vpop.f32.mrf.mxu0
    %v454 = vadd.f32 0.0, %v453
    %v455 = vpop.f32.mrf.mxu0
    %456 = vmatprep.mubr.f32.mxu0 0.0
    %457 = vmatmul.mubr.f32.gmra.mxu0 %v163
    %v458 = vpop.f32.mrf.mxu0
    %v459 = vadd.f32 0.0, %v458
    %v460 = vpop.f32.mrf.mxu0
    %461 = vmatprep.mubr.f32.mxu0 0.0
    %462 = vmatmul.mubr.f32.gmra.mxu0 %v166
    %v463 = vpop.f32.mrf.mxu0
    %v464 = vadd.f32 0.0, %v463
    %v465 = vpop.f32.mrf.mxu0
    %466 = vmatprep.mubr.f32.mxu0 0.0
    %467 = vmatmul.mubr.f32.gmra.mxu0 %v169
    %v468 = vpop.f32.mrf.mxu0
    %v469 = vadd.f32 0.0, %v468
    %v470 = vpop.f32.mrf.mxu0
    %471 = vmatprep.mubr.f32.mxu0 0.0
    %472 = vmatmul.mubr.f32.gmra.mxu0 %v172
    %v473 = vpop.f32.mrf.mxu0
    %v474 = vadd.f32 0.0, %v473
    %v475 = vpop.f32.mrf.mxu0
    %476 = vmatprep.mubr.f32.mxu0 0.0
    %477 = vmatmul.mubr.f32.gmra.mxu0 %v175
    %v478 = vpop.f32.mrf.mxu0
    %v479 = vadd.f32 0.0, %v478
    %v480 = vpop.f32.mrf.mxu0
    %481 = vmatprep.mubr.f32.mxu0 0.0
    %482 = vmatmul.mubr.f32.gmra.mxu0 %v178
    %v483 = vpop.f32.mrf.mxu0
    %v484 = vadd.f32 0.0, %v483
    %v485 = vpop.f32.mrf.mxu0
    %486 = vmatprep.mubr.f32.mxu0 0.0
    %487 = vmatmul.mubr.f32.gmra.mxu0 %v181
    %v488 = vpop.f32.mrf.mxu0
    %v489 = vadd.f32 0.0, %v488
    %v490 = vpop.f32.mrf.mxu0
    %491 = vmatprep.mubr.f32.mxu0 0.0
    %492 = vmatmul.mubr.f32.gmra.mxu0 %v184
    %v493 = vpop.f32.mrf.mxu0
    %v494 = vadd.f32 0.0, %v493
    %v495 = vpop.f32.mrf.mxu0
    %496 = vmatprep.mubr.f32.mxu0 0.0
    %497 = vmatmul.mubr.f32.gmra.mxu0 %v187
    %v498 = vpop.f32.mrf.mxu0
    %v499 = vadd.f32 0.0, %v498
    %v500 = vpop.f32.mrf.mxu0
    %501 = vmatprep.mubr.f32.mxu0 0.0
    %502 = vmatmul.mubr.f32.gmra.mxu0 %v190
    %v503 = vpop.f32.mrf.mxu0
    %v504 = vadd.f32 0.0, %v503
    %v505 = vpop.f32.mrf.mxu0
    %506 = vmatprep.mubr.f32.mxu0 0.0
    %507 = vmatmul.mubr.f32.gmra.mxu0 %v193
    %v508 = vpop.f32.mrf.mxu0
    %v509 = vadd.f32 0.0, %v508
    %v510 = vpop.f32.mrf.mxu0
    %511 = vmatprep.mubr.f32.mxu0 0.0
    %512 = vmatmul.mubr.f32.gmra.mxu0 %v196
    %v513 = vpop.f32.mrf.mxu0
    %v514 = vadd.f32 0.0, %v513
    %v515 = vpop.f32.mrf.mxu0
    %516 = vmatprep.mubr.f32.mxu0 0.0
    %517 = vmatmul.mubr.f32.gmra.mxu0 %v199
    %v518 = vpop.f32.mrf.mxu0
    %v519 = vadd.f32 0.0, %v518
    %v520 = vpop.f32.mrf.mxu0
    %521 = vmatprep.mubr.f32.mxu0 0.0
    %522 = vmatmul.mubr.f32.gmra.mxu0 %v202
    %v523 = vpop.f32.mrf.mxu0
    %v524 = vadd.f32 0.0, %v523
    %v525 = vpop.f32.mrf.mxu0
    %526 = vmatprep.mubr.f32.mxu0 0.0
    %527 = vmatmul.mubr.f32.gmra.mxu0 %v205
    %v528 = vpop.f32.mrf.mxu0
    %v529 = vadd.f32 0.0, %v528
    %v530 = vpop.f32.mrf.mxu0
    %531 = vmatprep.mubr.f32.mxu0 0.0
    %532 = vmatmul.mubr.f32.gmra.mxu0 %v208
    %v533 = vpop.f32.mrf.mxu0
    %v534 = vadd.f32 0.0, %v533
    %v535 = vpop.f32.mrf.mxu0
    %536 = vmatprep.mubr.f32.mxu0 0.0
    %537 = vmatmul.mubr.f32.gmra.mxu0 %v211
    %v538 = vpop.f32.mrf.mxu0
    %v539 = vadd.f32 0.0, %v538
    %v540 = vpop.f32.mrf.mxu0
    %541 = vmatprep.mubr.f32.mxu0 0.0
    %542 = vmatmul.mubr.f32.gmra.mxu0 %v214
    %v543 = vpop.f32.mrf.mxu0
    %v544 = vadd.f32 0.0, %v543
    %v545 = vpop.f32.mrf.mxu0
    %546 = vmatprep.mubr.f32.mxu0 0.0
    %547 = vmatmul.mubr.f32.gmra.mxu0 %v217
    %v548 = vpop.f32.mrf.mxu0
    %v549 = vadd.f32 0.0, %v548
    %v550 = vpop.f32.mrf.mxu0
    %551 = vmatprep.mubr.f32.mxu0 0.0
    %552 = vmatmul.mubr.f32.gmra.mxu0 %v220
    %v553 = vpop.f32.mrf.mxu0
    %v554 = vadd.f32 0.0, %v553
    %v555 = vpop.f32.mrf.mxu0
    %556 = vmatprep.mubr.f32.mxu0 0.0
    %557 = vmatmul.mubr.f32.gmra.mxu0 %v223
    %v558 = vpop.f32.mrf.mxu0
    %v559 = vadd.f32 0.0, %v558
    %v560 = vpop.f32.mrf.mxu0
    %561 = vmatprep.mubr.f32.mxu0 0.0
    %562 = vmatmul.mubr.f32.gmra.mxu0 %v226
    %v563 = vpop.f32.mrf.mxu0
    %v564 = vadd.f32 0.0, %v563
    %v565 = vpop.f32.mrf.mxu0
    %566 = vmatprep.mubr.f32.mxu0 0.0
    %567 = vmatmul.mubr.f32.gmra.mxu0 %v229
    %v568 = vpop.f32.mrf.mxu0
    %v569 = vadd.f32 0.0, %v568
    %v570 = vpop.f32.mrf.mxu0
    %571 = vmatprep.mubr.f32.mxu0 0.0
    %572 = vmatmul.mubr.f32.gmra.mxu0 %v232
    %v573 = vpop.f32.mrf.mxu0
    %v574 = vadd.f32 0.0, %v573
    %v575 = vpop.f32.mrf.mxu0
    %576 = vmatprep.mubr.f32.mxu0 0.0
    %577 = vmatmul.mubr.f32.gmra.mxu0 %v235
    %v578 = vpop.f32.mrf.mxu0
    %v579 = vadd.f32 0.0, %v578
    %v580 = vpop.f32.mrf.mxu0
    %581 = vmatprep.mubr.f32.mxu0 0.0
    %582 = vmatmul.mubr.f32.gmra.mxu0 %v238
    %v583 = vpop.f32.mrf.mxu0
    %v584 = vadd.f32 0.0, %v583
    %v585 = vpop.f32.mrf.mxu0
    %586 = vmatprep.mubr.f32.mxu0 0.0
    %587 = vmatmul.mubr.f32.gmra.mxu0 %v241
    %v588 = vpop.f32.mrf.mxu0
    %v589 = vadd.f32 0.0, %v588
    %v590 = vpop.f32.mrf.mxu0
    %591 = vmatprep.mubr.f32.mxu0 0.0
    %592 = vmatmul.mubr.f32.gmra.mxu0 %v244
    %v593 = vpop.f32.mrf.mxu0
    %v594 = vadd.f32 0.0, %v593
    %v595 = vpop.f32.mrf.mxu0
    %596 = vmatprep.mubr.f32.mxu0 0.0
    %597 = vmatmul.mubr.f32.gmra.mxu0 %v247
    %v598 = vpop.f32.mrf.mxu0
    %v599 = vadd.f32 0.0, %v598
    %v600 = vpop.f32.mrf.mxu0
    %601 = vmatprep.mubr.f32.mxu0 0.0
    %602 = vmatmul.mubr.f32.gmra.mxu0 %v250
    %v603 = vpop.f32.mrf.mxu0
    %v604 = vadd.f32 0.0, %v603
    %v605 = vpop.f32.mrf.mxu0
    %606 = vmatprep.mubr.f32.mxu0 0.0
    %607 = vmatmul.mubr.f32.gmra.mxu0 %v253
    %v608 = vpop.f32.mrf.mxu0
    %v609 = vadd.f32 0.0, %v608
    %v610 = vpop.f32.mrf.mxu0
    %611 = vmatprep.mubr.f32.mxu0 0.0
    %612 = vmatmul.mubr.f32.gmra.mxu0 %v256
    %v613 = vpop.f32.mrf.mxu0
    %v614 = vadd.f32 0.0, %v613
    %v615 = vpop.f32.mrf.mxu0
    %616 = vmatprep.mubr.f32.mxu0 0.0
    %617 = vmatmul.mubr.f32.gmra.mxu0 %v259
    %v618 = vpop.f32.mrf.mxu0
    %v619 = vadd.f32 0.0, %v618
    %v620 = vpop.f32.mrf.mxu0
    %621 = vmatprep.mubr.f32.mxu0 0.0
    %622 = vmatmul.mubr.f32.gmra.mxu0 %v262
    %v623 = vpop.f32.mrf.mxu0
    %v624 = vadd.f32 0.0, %v623
    %v625 = vpop.f32.mrf.mxu0
    %626 = vmatprep.mubr.f32.mxu0 0.0
    %627 = vmatmul.mubr.f32.gmra.mxu0 %v265
    %v628 = vpop.f32.mrf.mxu0
    %v629 = vadd.f32 0.0, %v628
    %v630 = vpop.f32.mrf.mxu0
    %631 = vmatprep.mubr.f32.mxu0 0.0
    %632 = vmatmul.mubr.f32.gmra.mxu0 %v268
    %v633 = vpop.f32.mrf.mxu0
    %v634 = vadd.f32 0.0, %v633
    %v635 = vpop.f32.mrf.mxu0
    %636 = vmatprep.mubr.f32.mxu0 0.0
    %637 = vmatmul.mubr.f32.gmra.mxu0 %v271
    %v638 = vpop.f32.mrf.mxu0
    %v639 = vadd.f32 0.0, %v638
    %v640 = vpop.f32.mrf.mxu0
    %641 = vmatprep.mubr.f32.mxu0 0.0
    %642 = vmatmul.mubr.f32.gmra.mxu0 %v274
    %v643 = vpop.f32.mrf.mxu0
    %v644 = vadd.f32 0.0, %v643
    %v645 = vpop.f32.mrf.mxu0
    %646 = vmatprep.mubr.f32.mxu0 0.0
    %647 = vmatmul.mubr.f32.gmra.mxu0 %v277
    %v648 = vpop.f32.mrf.mxu0
    %v649 = vadd.f32 0.0, %v648
    %v650 = vpop.f32.mrf.mxu0
    %651 = vmatprep.mubr.f32.mxu0 0.0
    %652 = vmatmul.mubr.f32.gmra.mxu0 %v280
    %v653 = vpop.f32.mrf.mxu0
    %v654 = vadd.f32 0.0, %v653
    %v655 = vpop.f32.mrf.mxu0
    %656 = vmatprep.mubr.f32.mxu0 0.0
    %657 = vmatmul.mubr.f32.gmra.mxu0 %v283
    %v658 = vpop.f32.mrf.mxu0
    %v659 = vadd.f32 0.0, %v658
    %v660 = vpop.f32.mrf.mxu0
    %661 = vmatprep.mubr.f32.mxu0 0.0
    %662 = vmatmul.mubr.f32.gmra.mxu0 %v286
    %v663 = vpop.f32.mrf.mxu0
    %v664 = vadd.f32 0.0, %v663
    %v665 = vpop.f32.mrf.mxu0
    %666 = vmatprep.mubr.f32.mxu0 0.0
    %667 = vmatmul.mubr.f32.gmra.mxu0 %v289
    %v668 = vpop.f32.mrf.mxu0
    %v669 = vadd.f32 0.0, %v668
    %v670 = vpop.f32.mrf.mxu0
    %671 = vmatprep.mubr.f32.mxu0 0.0
    %672 = vmatmul.mubr.f32.gmra.mxu0 %v292
    %v673 = vpop.f32.mrf.mxu0
    %v674 = vadd.f32 0.0, %v673
    %v675 = vpop.f32.mrf.mxu0
    %676 = vmatprep.mubr.f32.mxu0 0.0
    %677 = vmatmul.mubr.f32.gmra.mxu0 %v295
    %v678 = vpop.f32.mrf.mxu0
    %v679 = vadd.f32 0.0, %v678
    %v680 = vpop.f32.mrf.mxu0
    %681 = vdwg.mxu0
    %v682 = vld [vmem:[%s2] sm:$0x1]
    %v684 = vlaneseq
    %v685 = vshrl.u32 %v684, 7
    %v686 = vsub.s32 0, %v685
    %v687 = vrot.slane %v682, %v686
    %v689 = vmul.f32 %v364, %v687
    %v690 = vmul.f32 %v369, %v687
    %v691 = vmul.f32 %v374, %v687
    %v692 = vmul.f32 %v379, %v687
    %v693 = vmul.f32 %v384, %v687
    %v694 = vmul.f32 %v389, %v687
    %v695 = vmul.f32 %v394, %v687
    %v696 = vmul.f32 %v399, %v687
    %v697 = vmul.f32 %v404, %v687
    %v698 = vmul.f32 %v409, %v687
    %v699 = vmul.f32 %v414, %v687
    %v700 = vmul.f32 %v419, %v687
    %v701 = vmul.f32 %v424, %v687
    %v702 = vmul.f32 %v429, %v687
    %v703 = vmul.f32 %v434, %v687
    %v704 = vmul.f32 %v439, %v687
    %v705 = vmul.f32 %v444, %v687
    %v706 = vmul.f32 %v449, %v687
    %v707 = vmul.f32 %v454, %v687
    %v708 = vmul.f32 %v459, %v687
    %v709 = vmul.f32 %v464, %v687
    %v710 = vmul.f32 %v469, %v687
    %v711 = vmul.f32 %v474, %v687
    %v712 = vmul.f32 %v479, %v687
    %v713 = vmul.f32 %v484, %v687
    %v714 = vmul.f32 %v489, %v687
    %v715 = vmul.f32 %v494, %v687
    %v716 = vmul.f32 %v499, %v687
    %v717 = vmul.f32 %v504, %v687
    %v718 = vmul.f32 %v509, %v687
    %v719 = vmul.f32 %v514, %v687
    %v720 = vmul.f32 %v519, %v687
    %v721 = vmul.f32 %v524, %v687
    %v722 = vmul.f32 %v529, %v687
    %v723 = vmul.f32 %v534, %v687
    %v724 = vmul.f32 %v539, %v687
    %v725 = vmul.f32 %v544, %v687
    %v726 = vmul.f32 %v549, %v687
    %v727 = vmul.f32 %v554, %v687
    %v728 = vmul.f32 %v559, %v687
    %v729 = vmul.f32 %v564, %v687
    %v730 = vmul.f32 %v569, %v687
    %v731 = vmul.f32 %v574, %v687
    %v732 = vmul.f32 %v579, %v687
    %v733 = vmul.f32 %v584, %v687
    %v734 = vmul.f32 %v589, %v687
    %v735 = vmul.f32 %v594, %v687
    %v736 = vmul.f32 %v599, %v687
    %v737 = vmul.f32 %v604, %v687
    %v738 = vmul.f32 %v609, %v687
    %v739 = vmul.f32 %v614, %v687
    %v740 = vmul.f32 %v619, %v687
    %v741 = vmul.f32 %v624, %v687
    %v742 = vmul.f32 %v629, %v687
    %v743 = vmul.f32 %v634, %v687
    %v744 = vmul.f32 %v639, %v687
    %v745 = vmul.f32 %v644, %v687
    %v746 = vmul.f32 %v649, %v687
    %v747 = vmul.f32 %v654, %v687
    %v748 = vmul.f32 %v659, %v687
    %v749 = vmul.f32 %v664, %v687
    %v750 = vmul.f32 %v669, %v687
    %v751 = vmul.f32 %v674, %v687
    %v752 = vmul.f32 %v679, %v687
    %v753 = vld [vmem:[%s3] sm:$0x1]
    %v755 = vlaneseq
    %v756 = vshrl.u32 %v755, 7
    %v757 = vsub.s32 0, %v756
    %v758 = vrot.slane %v753, %v757
    %v760 = vadd.f32 %v689, %v758
    %v761 = vadd.f32 %v690, %v758
    %v762 = vadd.f32 %v691, %v758
    %v763 = vadd.f32 %v692, %v758
    %v764 = vadd.f32 %v693, %v758
    %v765 = vadd.f32 %v694, %v758
    %v766 = vadd.f32 %v695, %v758
    %v767 = vadd.f32 %v696, %v758
    %v768 = vadd.f32 %v697, %v758
    %v769 = vadd.f32 %v698, %v758
    %v770 = vadd.f32 %v699, %v758
    %v771 = vadd.f32 %v700, %v758
    %v772 = vadd.f32 %v701, %v758
    %v773 = vadd.f32 %v702, %v758
    %v774 = vadd.f32 %v703, %v758
    %v775 = vadd.f32 %v704, %v758
    %v776 = vadd.f32 %v705, %v758
    %v777 = vadd.f32 %v706, %v758
    %v778 = vadd.f32 %v707, %v758
    %v779 = vadd.f32 %v708, %v758
    %v780 = vadd.f32 %v709, %v758
    %v781 = vadd.f32 %v710, %v758
    %v782 = vadd.f32 %v711, %v758
    %v783 = vadd.f32 %v712, %v758
    %v784 = vadd.f32 %v713, %v758
    %v785 = vadd.f32 %v714, %v758
    %v786 = vadd.f32 %v715, %v758
    %v787 = vadd.f32 %v716, %v758
    %v788 = vadd.f32 %v717, %v758
    %v789 = vadd.f32 %v718, %v758
    %v790 = vadd.f32 %v719, %v758
    %v791 = vadd.f32 %v720, %v758
    %v792 = vadd.f32 %v721, %v758
    %v793 = vadd.f32 %v722, %v758
    %v794 = vadd.f32 %v723, %v758
    %v795 = vadd.f32 %v724, %v758
    %v796 = vadd.f32 %v725, %v758
    %v797 = vadd.f32 %v726, %v758
    %v798 = vadd.f32 %v727, %v758
    %v799 = vadd.f32 %v728, %v758
    %v800 = vadd.f32 %v729, %v758
    %v801 = vadd.f32 %v730, %v758
    %v802 = vadd.f32 %v731, %v758
    %v803 = vadd.f32 %v732, %v758
    %v804 = vadd.f32 %v733, %v758
    %v805 = vadd.f32 %v734, %v758
    %v806 = vadd.f32 %v735, %v758
    %v807 = vadd.f32 %v736, %v758
    %v808 = vadd.f32 %v737, %v758
    %v809 = vadd.f32 %v738, %v758
    %v810 = vadd.f32 %v739, %v758
    %v811 = vadd.f32 %v740, %v758
    %v812 = vadd.f32 %v741, %v758
    %v813 = vadd.f32 %v742, %v758
    %v814 = vadd.f32 %v743, %v758
    %v815 = vadd.f32 %v744, %v758
    %v816 = vadd.f32 %v745, %v758
    %v817 = vadd.f32 %v746, %v758
    %v818 = vadd.f32 %v747, %v758
    %v819 = vadd.f32 %v748, %v758
    %v820 = vadd.f32 %v749, %v758
    %v821 = vadd.f32 %v750, %v758
    %v822 = vadd.f32 %v751, %v758
    %v823 = vadd.f32 %v752, %v758
    %v824 = vmax.f32 %v760, 0.0
    %v825 = vmax.f32 %v761, 0.0
    %v826 = vmax.f32 %v762, 0.0
    %v827 = vmax.f32 %v763, 0.0
    %v828 = vmax.f32 %v764, 0.0
    %v829 = vmax.f32 %v765, 0.0
    %v830 = vmax.f32 %v766, 0.0
    %v831 = vmax.f32 %v767, 0.0
    %v832 = vmax.f32 %v768, 0.0
    %v833 = vmax.f32 %v769, 0.0
    %v834 = vmax.f32 %v770, 0.0
    %v835 = vmax.f32 %v771, 0.0
    %v836 = vmax.f32 %v772, 0.0
    %v837 = vmax.f32 %v773, 0.0
    %v838 = vmax.f32 %v774, 0.0
    %v839 = vmax.f32 %v775, 0.0
    %v840 = vmax.f32 %v776, 0.0
    %v841 = vmax.f32 %v777, 0.0
    %v842 = vmax.f32 %v778, 0.0
    %v843 = vmax.f32 %v779, 0.0
    %v844 = vmax.f32 %v780, 0.0
    %v845 = vmax.f32 %v781, 0.0
    %v846 = vmax.f32 %v782, 0.0
    %v847 = vmax.f32 %v783, 0.0
    %v848 = vmax.f32 %v784, 0.0
    %v849 = vmax.f32 %v785, 0.0
    %v850 = vmax.f32 %v786, 0.0
    %v851 = vmax.f32 %v787, 0.0
    %v852 = vmax.f32 %v788, 0.0
    %v853 = vmax.f32 %v789, 0.0
    %v854 = vmax.f32 %v790, 0.0
    %v855 = vmax.f32 %v791, 0.0
    %v856 = vmax.f32 %v792, 0.0
    %v857 = vmax.f32 %v793, 0.0
    %v858 = vmax.f32 %v794, 0.0
    %v859 = vmax.f32 %v795, 0.0
    %v860 = vmax.f32 %v796, 0.0
    %v861 = vmax.f32 %v797, 0.0
    %v862 = vmax.f32 %v798, 0.0
    %v863 = vmax.f32 %v799, 0.0
    %v864 = vmax.f32 %v800, 0.0
    %v865 = vmax.f32 %v801, 0.0
    %v866 = vmax.f32 %v802, 0.0
    %v867 = vmax.f32 %v803, 0.0
    %v868 = vmax.f32 %v804, 0.0
    %v869 = vmax.f32 %v805, 0.0
    %v870 = vmax.f32 %v806, 0.0
    %v871 = vmax.f32 %v807, 0.0
    %v872 = vmax.f32 %v808, 0.0
    %v873 = vmax.f32 %v809, 0.0
    %v874 = vmax.f32 %v810, 0.0
    %v875 = vmax.f32 %v811, 0.0
    %v876 = vmax.f32 %v812, 0.0
    %v877 = vmax.f32 %v813, 0.0
    %v878 = vmax.f32 %v814, 0.0
    %v879 = vmax.f32 %v815, 0.0
    %v880 = vmax.f32 %v816, 0.0
    %v881 = vmax.f32 %v817, 0.0
    %v882 = vmax.f32 %v818, 0.0
    %v883 = vmax.f32 %v819, 0.0
    %v884 = vmax.f32 %v820, 0.0
    %v885 = vmax.f32 %v821, 0.0
    %v886 = vmax.f32 %v822, 0.0
    %v887 = vmax.f32 %v823, 0.0
    %888 = vst.msk [vmem:[%s4] sm:$0xff] %vm104, %v824
    %889 = vst.msk [vmem:[%s4 + $0x8] sm:$0xff] %vm104, %v825
    %890 = vst.msk [vmem:[%s4 + $0x10] sm:$0xff] %vm104, %v826
    %891 = vst.msk [vmem:[%s4 + $0x18] sm:$0xff] %vm104, %v827
    %892 = vst.msk [vmem:[%s4 + $0x20] sm:$0xff] %vm104, %v828
    %893 = vst.msk [vmem:[%s4 + $0x28] sm:$0xff] %vm104, %v829
    %894 = vst.msk [vmem:[%s4 + $0x30] sm:$0xff] %vm104, %v830
    %895 = vst.msk [vmem:[%s4 + $0x38] sm:$0xff] %vm104, %v831
    %896 = vst.msk [vmem:[%s4 + $0x40] sm:$0xff] %vm104, %v832
    %897 = vst.msk [vmem:[%s4 + $0x48] sm:$0xff] %vm104, %v833
    %898 = vst.msk [vmem:[%s4 + $0x50] sm:$0xff] %vm104, %v834
    %899 = vst.msk [vmem:[%s4 + $0x58] sm:$0xff] %vm104, %v835
    %900 = vst.msk [vmem:[%s4 + $0x60] sm:$0xff] %vm104, %v836
    %901 = vst.msk [vmem:[%s4 + $0x68] sm:$0xff] %vm104, %v837
    %902 = vst.msk [vmem:[%s4 + $0x70] sm:$0xff] %vm104, %v838
    %903 = vst.msk [vmem:[%s4 + $0x78] sm:$0xff] %vm104, %v839
    %904 = vst.msk [vmem:[%s4 + $0x80] sm:$0xff] %vm104, %v840
    %905 = vst.msk [vmem:[%s4 + $0x88] sm:$0xff] %vm104, %v841
    %906 = vst.msk [vmem:[%s4 + $0x90] sm:$0xff] %vm104, %v842
    %907 = vst.msk [vmem:[%s4 + $0x98] sm:$0xff] %vm104, %v843
    %908 = vst.msk [vmem:[%s4 + $0xa0] sm:$0xff] %vm104, %v844
    %909 = vst.msk [vmem:[%s4 + $0xa8] sm:$0xff] %vm104, %v845
    %910 = vst.msk [vmem:[%s4 + $0xb0] sm:$0xff] %vm104, %v846
    %911 = vst.msk [vmem:[%s4 + $0xb8] sm:$0xff] %vm104, %v847
    %912 = vst.msk [vmem:[%s4 + $0xc0] sm:$0xff] %vm104, %v848
    %913 = vst.msk [vmem:[%s4 + $0xc8] sm:$0xff] %vm104, %v849
    %914 = vst.msk [vmem:[%s4 + $0xd0] sm:$0xff] %vm104, %v850
    %915 = vst.msk [vmem:[%s4 + $0xd8] sm:$0xff] %vm104, %v851
    %916 = vst.msk [vmem:[%s4 + $0xe0] sm:$0xff] %vm104, %v852
    %917 = vst.msk [vmem:[%s4 + $0xe8] sm:$0xff] %vm104, %v853
    %918 = vst.msk [vmem:[%s4 + $0xf0] sm:$0xff] %vm104, %v854
    %919 = vst.msk [vmem:[%s4 + $0xf8] sm:$0xff] %vm104, %v855
    %920 = vst.msk [vmem:[%s4 + $0x100] sm:$0xff] %vm104, %v856
    %921 = vst.msk [vmem:[%s4 + $0x108] sm:$0xff] %vm104, %v857
    %922 = vst.msk [vmem:[%s4 + $0x110] sm:$0xff] %vm104, %v858
    %923 = vst.msk [vmem:[%s4 + $0x118] sm:$0xff] %vm104, %v859
    %924 = vst.msk [vmem:[%s4 + $0x120] sm:$0xff] %vm104, %v860
    %925 = vst.msk [vmem:[%s4 + $0x128] sm:$0xff] %vm104, %v861
    %926 = vst.msk [vmem:[%s4 + $0x130] sm:$0xff] %vm104, %v862
    %927 = vst.msk [vmem:[%s4 + $0x138] sm:$0xff] %vm104, %v863
    %928 = vst.msk [vmem:[%s4 + $0x140] sm:$0xff] %vm104, %v864
    %929 = vst.msk [vmem:[%s4 + $0x148] sm:$0xff] %vm104, %v865
    %930 = vst.msk [vmem:[%s4 + $0x150] sm:$0xff] %vm104, %v866
    %931 = vst.msk [vmem:[%s4 + $0x158] sm:$0xff] %vm104, %v867
    %932 = vst.msk [vmem:[%s4 + $0x160] sm:$0xff] %vm104, %v868
    %933 = vst.msk [vmem:[%s4 + $0x168] sm:$0xff] %vm104, %v869
    %934 = vst.msk [vmem:[%s4 + $0x170] sm:$0xff] %vm104, %v870
    %935 = vst.msk [vmem:[%s4 + $0x178] sm:$0xff] %vm104, %v871
    %936 = vst.msk [vmem:[%s4 + $0x180] sm:$0xff] %vm104, %v872
    %937 = vst.msk [vmem:[%s4 + $0x188] sm:$0xff] %vm104, %v873
    %938 = vst.msk [vmem:[%s4 + $0x190] sm:$0xff] %vm104, %v874
    %939 = vst.msk [vmem:[%s4 + $0x198] sm:$0xff] %vm104, %v875
    %940 = vst.msk [vmem:[%s4 + $0x1a0] sm:$0xff] %vm104, %v876
    %941 = vst.msk [vmem:[%s4 + $0x1a8] sm:$0xff] %vm104, %v877
    %942 = vst.msk [vmem:[%s4 + $0x1b0] sm:$0xff] %vm104, %v878
    %943 = vst.msk [vmem:[%s4 + $0x1b8] sm:$0xff] %vm104, %v879
    %944 = vst.msk [vmem:[%s4 + $0x1c0] sm:$0xff] %vm104, %v880
    %945 = vst.msk [vmem:[%s4 + $0x1c8] sm:$0xff] %vm104, %v881
    %946 = vst.msk [vmem:[%s4 + $0x1d0] sm:$0xff] %vm104, %v882
    %947 = vst.msk [vmem:[%s4 + $0x1d8] sm:$0xff] %vm104, %v883
    %948 = vst.msk [vmem:[%s4 + $0x1e0] sm:$0xff] %vm104, %v884
    %949 = vst.msk [vmem:[%s4 + $0x1e8] sm:$0xff] %vm104, %v885
    %950 = vst.msk [vmem:[%s4 + $0x1f0] sm:$0xff] %vm104, %v886
    %951 = vst.msk [vmem:[%s4 + $0x1f8] sm:$0xff] %vm104, %v887
    // Predicated region
    $region22: #{cml_forward.5} parent=1 // pred_check
      _
    $region23: #{cml_forward.5} parent=1 // pred_check_branch
      %953 = sbr.rel (0) target = $region25
    $region24: #{cml_forward.5} parent=1 // pred_region
      _
    $region25: #{cml_forward.5} parent=1 // pred_fallthru
      _
    // Predicated region
    $region26: #{cml_forward.5} parent=1 // pred_check
      _
    $region27: #{cml_forward.5} parent=1 // pred_check_branch
      %955 = sbr.rel (0) target = $region29
    $region28: #{cml_forward.5} parent=1 // pred_region
      _
    $region29: #{cml_forward.5} parent=1 // pred_fallthru
      _
    %956 = vsyncpa [#allocation3], 1

// kernel: cml_forward.9
$region0: #{cml_forward.9}
  #allocation0 [shape = 'u32[]', space=smem, size = 0x4, offset = 0x4, fixed_abs, tag = 'smem constant byte address 0x4 - core index']
  #allocation1 [shape = 'u32[144,128]{1,0:T(1,128)}', space=vmem, size = 0x12000, scoped, tag = 'internal scratch']
  %s0 = inlined_call_operand.vmem [shape: f32[512,72], index: 0, kind: input, shape index: {}]
  %s1 = inlined_call_operand.vmem [shape: f32[72,72], index: 1, kind: input, shape index: {}]
  %s2 = inlined_call_operand.vmem [shape: f32[1,72], index: 2, kind: input, shape index: {}]
  %s3 = inlined_call_operand.vmem [shape: f32[1,72], index: 3, kind: input, shape index: {}]
  %s4 = inlined_call_operand.vmem [shape: f32[512,72], index: 4, kind: input, shape index: {}]
  %s5 = inlined_call_operand.hbm [shape: f32[512,72], index: 5, kind: output, shape index: {}]
  %s6 = sld [smem:[#allocation0]]
  $region30: #{cml_forward.9} parent=0
    _
  %s8 = ssub.s32 1, %s6
  %s9 = scalar_select 0, %s8, %s6
  $region1: #{cml_forward.9} parent=0
    #allocation2 [shape = 'u8[262144]{0}', space=vmem, size = 0x40000, scoped, tag = 'output window, operand 0, single buffered']
    #allocation3 [shape = 's32[1]{0}', space=sflag, size = 0x4, scoped, tag = 'scoped memory for cml_forward.9']
    %10 = vsyncpa [#allocation3], 0
    // Predicated region
    $region2: #{cml_forward.9} parent=1 // pred_check
      _
    $region3: #{cml_forward.9} parent=1 // pred_check_branch
      %12 = sbr.rel (0) target = $region5
    $region4: #{cml_forward.9} parent=1 // pred_region
      _
    $region5: #{cml_forward.9} parent=1 // pred_fallthru
      _
    // Predicated region
    $region6: #{cml_forward.9} parent=1 // pred_check
      _
    $region7: #{cml_forward.9} parent=1 // pred_check_branch
      %14 = sbr.rel (0) target = $region9
    $region8: #{cml_forward.9} parent=1 // pred_region
      _
    $region9: #{cml_forward.9} parent=1 // pred_fallthru
      _
    // Predicated region
    $region10: #{cml_forward.9} parent=1 // pred_check
      _
    $region11: #{cml_forward.9} parent=1 // pred_check_branch
      %16 = sbr.rel (0) target = $region13
    $region12: #{cml_forward.9} parent=1 // pred_region
      _
    $region13: #{cml_forward.9} parent=1 // pred_fallthru
      _
    // Predicated region
    $region14: #{cml_forward.9} parent=1 // pred_check
      _
    $region15: #{cml_forward.9} parent=1 // pred_check_branch
      %18 = sbr.rel (0) target = $region17
    $region16: #{cml_forward.9} parent=1 // pred_region
      _
    $region17: #{cml_forward.9} parent=1 // pred_fallthru
      _
    // Predicated region
    $region18: #{cml_forward.9} parent=1 // pred_check
      _
    $region19: #{cml_forward.9} parent=1 // pred_check_branch
      %20 = sbr.rel (0) target = $region21
    $region20: #{cml_forward.9} parent=1 // pred_region
      _
    $region21: #{cml_forward.9} parent=1 // pred_fallthru
      _
    %v21 = vld [vmem:[%s0] sm:$0xff]
    %v22 = vld [vmem:[%s0 + $0x8] sm:$0xff]
    %v23 = vld [vmem:[%s0 + $0x10] sm:$0xff]
    %v24 = vld [vmem:[%s0 + $0x18] sm:$0xff]
    %v25 = vld [vmem:[%s0 + $0x20] sm:$0xff]
    %v26 = vld [vmem:[%s0 + $0x28] sm:$0xff]
    %v27 = vld [vmem:[%s0 + $0x30] sm:$0xff]
    %v28 = vld [vmem:[%s0 + $0x38] sm:$0xff]
    %v29 = vld [vmem:[%s0 + $0x40] sm:$0xff]
    %v30 = vld [vmem:[%s0 + $0x48] sm:$0xff]
    %v31 = vld [vmem:[%s0 + $0x50] sm:$0xff]
    %v32 = vld [vmem:[%s0 + $0x58] sm:$0xff]
    %v33 = vld [vmem:[%s0 + $0x60] sm:$0xff]
    %v34 = vld [vmem:[%s0 + $0x68] sm:$0xff]
    %v35 = vld [vmem:[%s0 + $0x70] sm:$0xff]
    %v36 = vld [vmem:[%s0 + $0x78] sm:$0xff]
    %v37 = vld [vmem:[%s0 + $0x80] sm:$0xff]
    %v38 = vld [vmem:[%s0 + $0x88] sm:$0xff]
    %v39 = vld [vmem:[%s0 + $0x90] sm:$0xff]
    %v40 = vld [vmem:[%s0 + $0x98] sm:$0xff]
    %v41 = vld [vmem:[%s0 + $0xa0] sm:$0xff]
    %v42 = vld [vmem:[%s0 + $0xa8] sm:$0xff]
    %v43 = vld [vmem:[%s0 + $0xb0] sm:$0xff]
    %v44 = vld [vmem:[%s0 + $0xb8] sm:$0xff]
    %v45 = vld [vmem:[%s0 + $0xc0] sm:$0xff]
    %v46 = vld [vmem:[%s0 + $0xc8] sm:$0xff]
    %v47 = vld [vmem:[%s0 + $0xd0] sm:$0xff]
    %v48 = vld [vmem:[%s0 + $0xd8] sm:$0xff]
    %v49 = vld [vmem:[%s0 + $0xe0] sm:$0xff]
    %v50 = vld [vmem:[%s0 + $0xe8] sm:$0xff]
    %v51 = vld [vmem:[%s0 + $0xf0] sm:$0xff]
    %v52 = vld [vmem:[%s0 + $0xf8] sm:$0xff]
    %v53 = vld [vmem:[%s0 + $0x100] sm:$0xff]
    %v54 = vld [vmem:[%s0 + $0x108] sm:$0xff]
    %v55 = vld [vmem:[%s0 + $0x110] sm:$0xff]
    %v56 = vld [vmem:[%s0 + $0x118] sm:$0xff]
    %v57 = vld [vmem:[%s0 + $0x120] sm:$0xff]
    %v58 = vld [vmem:[%s0 + $0x128] sm:$0xff]
    %v59 = vld [vmem:[%s0 + $0x130] sm:$0xff]
    %v60 = vld [vmem:[%s0 + $0x138] sm:$0xff]
    %v61 = vld [vmem:[%s0 + $0x140] sm:$0xff]
    %v62 = vld [vmem:[%s0 + $0x148] sm:$0xff]
    %v63 = vld [vmem:[%s0 + $0x150] sm:$0xff]
    %v64 = vld [vmem:[%s0 + $0x158] sm:$0xff]
    %v65 = vld [vmem:[%s0 + $0x160] sm:$0xff]
    %v66 = vld [vmem:[%s0 + $0x168] sm:$0xff]
    %v67 = vld [vmem:[%s0 + $0x170] sm:$0xff]
    %v68 = vld [vmem:[%s0 + $0x178] sm:$0xff]
    %v69 = vld [vmem:[%s0 + $0x180] sm:$0xff]
    %v70 = vld [vmem:[%s0 + $0x188] sm:$0xff]
    %v71 = vld [vmem:[%s0 + $0x190] sm:$0xff]
    %v72 = vld [vmem:[%s0 + $0x198] sm:$0xff]
    %v73 = vld [vmem:[%s0 + $0x1a0] sm:$0xff]
    %v74 = vld [vmem:[%s0 + $0x1a8] sm:$0xff]
    %v75 = vld [vmem:[%s0 + $0x1b0] sm:$0xff]
    %v76 = vld [vmem:[%s0 + $0x1b8] sm:$0xff]
    %v77 = vld [vmem:[%s0 + $0x1c0] sm:$0xff]
    %v78 = vld [vmem:[%s0 + $0x1c8] sm:$0xff]
    %v79 = vld [vmem:[%s0 + $0x1d0] sm:$0xff]
    %v80 = vld [vmem:[%s0 + $0x1d8] sm:$0xff]
    %v81 = vld [vmem:[%s0 + $0x1e0] sm:$0xff]
    %v82 = vld [vmem:[%s0 + $0x1e8] sm:$0xff]
    %v83 = vld [vmem:[%s0 + $0x1f0] sm:$0xff]
    %v84 = vld [vmem:[%s0 + $0x1f8] sm:$0xff]
    %v85 = vld [vmem:[%s1] sm:$0xff]
    %v86 = vld [vmem:[%s1 + $0x8] sm:$0xff]
    %v87 = vld [vmem:[%s1 + $0x10] sm:$0xff]
    %v88 = vld [vmem:[%s1 + $0x18] sm:$0xff]
    %v89 = vld [vmem:[%s1 + $0x20] sm:$0xff]
    %v90 = vld [vmem:[%s1 + $0x28] sm:$0xff]
    %v91 = vld [vmem:[%s1 + $0x30] sm:$0xff]
    %v92 = vld [vmem:[%s1 + $0x38] sm:$0xff]
    %v93 = vld [vmem:[%s1 + $0x40] sm:$0xff]
    %vm94 = vcmask 588800
    %v96 = vsel %vm94, %v21, 0
    %v99 = vsel %vm94, %v22, 0
    %v102 = vsel %vm94, %v23, 0
    %v105 = vsel %vm94, %v24, 0
    %v108 = vsel %vm94, %v25, 0
    %v111 = vsel %vm94, %v26, 0
    %v114 = vsel %vm94, %v27, 0
    %v117 = vsel %vm94, %v28, 0
    %v120 = vsel %vm94, %v29, 0
    %v123 = vsel %vm94, %v30, 0
    %v126 = vsel %vm94, %v31, 0
    %v129 = vsel %vm94, %v32, 0
    %v132 = vsel %vm94, %v33, 0
    %v135 = vsel %vm94, %v34, 0
    %v138 = vsel %vm94, %v35, 0
    %v141 = vsel %vm94, %v36, 0
    %v144 = vsel %vm94, %v37, 0
    %v147 = vsel %vm94, %v38, 0
    %v150 = vsel %vm94, %v39, 0
    %v153 = vsel %vm94, %v40, 0
    %v156 = vsel %vm94, %v41, 0
    %v159 = vsel %vm94, %v42, 0
    %v162 = vsel %vm94, %v43, 0
    %v165 = vsel %vm94, %v44, 0
    %v168 = vsel %vm94, %v45, 0
    %v171 = vsel %vm94, %v46, 0
    %v174 = vsel %vm94, %v47, 0
    %v177 = vsel %vm94, %v48, 0
    %v180 = vsel %vm94, %v49, 0
    %v183 = vsel %vm94, %v50, 0
    %v186 = vsel %vm94, %v51, 0
    %v189 = vsel %vm94, %v52, 0
    %v192 = vsel %vm94, %v53, 0
    %v195 = vsel %vm94, %v54, 0
    %v198 = vsel %vm94, %v55, 0
    %v201 = vsel %vm94, %v56, 0
    %v204 = vsel %vm94, %v57, 0
    %v207 = vsel %vm94, %v58, 0
    %v210 = vsel %vm94, %v59, 0
    %v213 = vsel %vm94, %v60, 0
    %v216 = vsel %vm94, %v61, 0
    %v219 = vsel %vm94, %v62, 0
    %v222 = vsel %vm94, %v63, 0
    %v225 = vsel %vm94, %v64, 0
    %v228 = vsel %vm94, %v65, 0
    %v231 = vsel %vm94, %v66, 0
    %v234 = vsel %vm94, %v67, 0
    %v237 = vsel %vm94, %v68, 0
    %v240 = vsel %vm94, %v69, 0
    %v243 = vsel %vm94, %v70, 0
    %v246 = vsel %vm94, %v71, 0
    %v249 = vsel %vm94, %v72, 0
    %v252 = vsel %vm94, %v73, 0
    %v255 = vsel %vm94, %v74, 0
    %v258 = vsel %vm94, %v75, 0
    %v261 = vsel %vm94, %v76, 0
    %v264 = vsel %vm94, %v77, 0
    %v267 = vsel %vm94, %v78, 0
    %v270 = vsel %vm94, %v79, 0
    %v273 = vsel %vm94, %v80, 0
    %v276 = vsel %vm94, %v81, 0
    %v279 = vsel %vm94, %v82, 0
    %v282 = vsel %vm94, %v83, 0
    %v285 = vsel %vm94, %v84, 0
    %287 = vmatprep.subr.mxu0 0.0
    %288 = vmatpush1.msra.mxu0 0.0
    %289 = vmatprep.subr.mxu0 0.0
    %290 = vmatpush1.msra.mxu0 0.0
    %291 = vmatprep.subr.mxu0 0.0
    %292 = vmatpush1.msra.mxu0 0.0
    %293 = vmatprep.subr.mxu0 0.0
    %294 = vmatpush1.msra.mxu0 0.0
    %295 = vmatprep.subr.mxu0 0.0
    %296 = vmatpush1.msra.mxu0 0.0
    %297 = vmatprep.subr.mxu0 0.0
    %298 = vmatpush1.msra.mxu0 0.0
    %299 = vmatprep.subr.mxu0 0.0
    %300 = vmatpush1.msra.mxu0 0.0
    %301 = vmatprep.subr.mxu0 0.0
    %302 = vmatpush1.msra.mxu0 %v93
    %303 = vmatprep.subr.mxu0 0.0
    %304 = vmatpush1.msra.mxu0 %v92
    %305 = vmatprep.subr.mxu0 0.0
    %306 = vmatpush1.msra.mxu0 %v91
    %307 = vmatprep.subr.mxu0 0.0
    %308 = vmatpush1.msra.mxu0 %v90
    %309 = vmatprep.subr.mxu0 0.0
    %310 = vmatpush1.msra.mxu0 %v89
    %311 = vmatprep.subr.mxu0 0.0
    %312 = vmatpush1.msra.mxu0 %v88
    %313 = vmatprep.subr.mxu0 0.0
    %314 = vmatpush1.msra.mxu0 %v87
    %315 = vmatprep.subr.mxu0 0.0
    %316 = vmatpush1.msra.mxu0 %v86
    %317 = vmatprep.subr.mxu0 0.0
    %318 = vmatpush1.msra.mxu0 %v85
    %319 = vmatprep.subr.mxu0 0.0
    %320 = vmatpush2.msra.mxu0 0.0
    %321 = vmatprep.subr.mxu0 0.0
    %322 = vmatpush2.msra.mxu0 0.0
    %323 = vmatprep.subr.mxu0 0.0
    %324 = vmatpush2.msra.mxu0 0.0
    %325 = vmatprep.subr.mxu0 0.0
    %326 = vmatpush2.msra.mxu0 0.0
    %327 = vmatprep.subr.mxu0 0.0
    %328 = vmatpush2.msra.mxu0 0.0
    %329 = vmatprep.subr.mxu0 0.0
    %330 = vmatpush2.msra.mxu0 0.0
    %331 = vmatprep.subr.mxu0 0.0
    %332 = vmatpush2.msra.mxu0 0.0
    %333 = vmatprep.subr.mxu0 0.0
    %334 = vmatpush2.msra.mxu0 0.0
    %335 = vmatprep.subr.mxu0 0.0
    %336 = vmatpush2.msra.mxu0 0.0
    %337 = vmatprep.subr.mxu0 0.0
    %338 = vmatpush2.msra.mxu0 0.0
    %339 = vmatprep.subr.mxu0 0.0
    %340 = vmatpush2.msra.mxu0 0.0
    %341 = vmatprep.subr.mxu0 0.0
    %342 = vmatpush2.msra.mxu0 0.0
    %343 = vmatprep.subr.mxu0 0.0
    %344 = vmatpush2.msra.mxu0 0.0
    %345 = vmatprep.subr.mxu0 0.0
    %346 = vmatpush2.msra.mxu0 0.0
    %347 = vmatprep.subr.mxu0 0.0
    %348 = vmatpush2.msra.mxu0 0.0
    %349 = vmatprep.subr.mxu0 0.0
    %350 = vmatpush2.msra.mxu0 0.0
    %351 = vmatprep.mubr.f32.mxu0 0.0
    %352 = vmatmul.mubr.f32.gmra.mxu0 %v96
    %v353 = vpop.f32.mrf.mxu0
    %v354 = vadd.f32 0.0, %v353
    %v355 = vpop.f32.mrf.mxu0
    %356 = vmatprep.mubr.f32.mxu0 0.0
    %357 = vmatmul.mubr.f32.gmra.mxu0 %v99
    %v358 = vpop.f32.mrf.mxu0
    %v359 = vadd.f32 0.0, %v358
    %v360 = vpop.f32.mrf.mxu0
    %361 = vmatprep.mubr.f32.mxu0 0.0
    %362 = vmatmul.mubr.f32.gmra.mxu0 %v102
    %v363 = vpop.f32.mrf.mxu0
    %v364 = vadd.f32 0.0, %v363
    %v365 = vpop.f32.mrf.mxu0
    %366 = vmatprep.mubr.f32.mxu0 0.0
    %367 = vmatmul.mubr.f32.gmra.mxu0 %v105
    %v368 = vpop.f32.mrf.mxu0
    %v369 = vadd.f32 0.0, %v368
    %v370 = vpop.f32.mrf.mxu0
    %371 = vmatprep.mubr.f32.mxu0 0.0
    %372 = vmatmul.mubr.f32.gmra.mxu0 %v108
    %v373 = vpop.f32.mrf.mxu0
    %v374 = vadd.f32 0.0, %v373
    %v375 = vpop.f32.mrf.mxu0
    %376 = vmatprep.mubr.f32.mxu0 0.0
    %377 = vmatmul.mubr.f32.gmra.mxu0 %v111
    %v378 = vpop.f32.mrf.mxu0
    %v379 = vadd.f32 0.0, %v378
    %v380 = vpop.f32.mrf.mxu0
    %381 = vmatprep.mubr.f32.mxu0 0.0
    %382 = vmatmul.mubr.f32.gmra.mxu0 %v114
    %v383 = vpop.f32.mrf.mxu0
    %v384 = vadd.f32 0.0, %v383
    %v385 = vpop.f32.mrf.mxu0
    %386 = vmatprep.mubr.f32.mxu0 0.0
    %387 = vmatmul.mubr.f32.gmra.mxu0 %v117
    %v388 = vpop.f32.mrf.mxu0
    %v389 = vadd.f32 0.0, %v388
    %v390 = vpop.f32.mrf.mxu0
    %391 = vmatprep.mubr.f32.mxu0 0.0
    %392 = vmatmul.mubr.f32.gmra.mxu0 %v120
    %v393 = vpop.f32.mrf.mxu0
    %v394 = vadd.f32 0.0, %v393
    %v395 = vpop.f32.mrf.mxu0
    %396 = vmatprep.mubr.f32.mxu0 0.0
    %397 = vmatmul.mubr.f32.gmra.mxu0 %v123
    %v398 = vpop.f32.mrf.mxu0
    %v399 = vadd.f32 0.0, %v398
    %v400 = vpop.f32.mrf.mxu0
    %401 = vmatprep.mubr.f32.mxu0 0.0
    %402 = vmatmul.mubr.f32.gmra.mxu0 %v126
    %v403 = vpop.f32.mrf.mxu0
    %v404 = vadd.f32 0.0, %v403
    %v405 = vpop.f32.mrf.mxu0
    %406 = vmatprep.mubr.f32.mxu0 0.0
    %407 = vmatmul.mubr.f32.gmra.mxu0 %v129
    %v408 = vpop.f32.mrf.mxu0
    %v409 = vadd.f32 0.0, %v408
    %v410 = vpop.f32.mrf.mxu0
    %411 = vmatprep.mubr.f32.mxu0 0.0
    %412 = vmatmul.mubr.f32.gmra.mxu0 %v132
    %v413 = vpop.f32.mrf.mxu0
    %v414 = vadd.f32 0.0, %v413
    %v415 = vpop.f32.mrf.mxu0
    %416 = vmatprep.mubr.f32.mxu0 0.0
    %417 = vmatmul.mubr.f32.gmra.mxu0 %v135
    %v418 = vpop.f32.mrf.mxu0
    %v419 = vadd.f32 0.0, %v418
    %v420 = vpop.f32.mrf.mxu0
    %421 = vmatprep.mubr.f32.mxu0 0.0
    %422 = vmatmul.mubr.f32.gmra.mxu0 %v138
    %v423 = vpop.f32.mrf.mxu0
    %v424 = vadd.f32 0.0, %v423
    %v425 = vpop.f32.mrf.mxu0
    %426 = vmatprep.mubr.f32.mxu0 0.0
    %427 = vmatmul.mubr.f32.gmra.mxu0 %v141
    %v428 = vpop.f32.mrf.mxu0
    %v429 = vadd.f32 0.0, %v428
    %v430 = vpop.f32.mrf.mxu0
    %431 = vmatprep.mubr.f32.mxu0 0.0
    %432 = vmatmul.mubr.f32.gmra.mxu0 %v144
    %v433 = vpop.f32.mrf.mxu0
    %v434 = vadd.f32 0.0, %v433
    %v435 = vpop.f32.mrf.mxu0
    %436 = vmatprep.mubr.f32.mxu0 0.0
    %437 = vmatmul.mubr.f32.gmra.mxu0 %v147
    %v438 = vpop.f32.mrf.mxu0
    %v439 = vadd.f32 0.0, %v438
    %v440 = vpop.f32.mrf.mxu0
    %441 = vmatprep.mubr.f32.mxu0 0.0
    %442 = vmatmul.mubr.f32.gmra.mxu0 %v150
    %v443 = vpop.f32.mrf.mxu0
    %v444 = vadd.f32 0.0, %v443
    %v445 = vpop.f32.mrf.mxu0
    %446 = vmatprep.mubr.f32.mxu0 0.0
    %447 = vmatmul.mubr.f32.gmra.mxu0 %v153
    %v448 = vpop.f32.mrf.mxu0
    %v449 = vadd.f32 0.0, %v448
    %v450 = vpop.f32.mrf.mxu0
    %451 = vmatprep.mubr.f32.mxu0 0.0
    %452 = vmatmul.mubr.f32.gmra.mxu0 %v156
    %v453 = vpop.f32.mrf.mxu0
    %v454 = vadd.f32 0.0, %v453
    %v455 = vpop.f32.mrf.mxu0
    %456 = vmatprep.mubr.f32.mxu0 0.0
    %457 = vmatmul.mubr.f32.gmra.mxu0 %v159
    %v458 = vpop.f32.mrf.mxu0
    %v459 = vadd.f32 0.0, %v458
    %v460 = vpop.f32.mrf.mxu0
    %461 = vmatprep.mubr.f32.mxu0 0.0
    %462 = vmatmul.mubr.f32.gmra.mxu0 %v162
    %v463 = vpop.f32.mrf.mxu0
    %v464 = vadd.f32 0.0, %v463
    %v465 = vpop.f32.mrf.mxu0
    %466 = vmatprep.mubr.f32.mxu0 0.0
    %467 = vmatmul.mubr.f32.gmra.mxu0 %v165
    %v468 = vpop.f32.mrf.mxu0
    %v469 = vadd.f32 0.0, %v468
    %v470 = vpop.f32.mrf.mxu0
    %471 = vmatprep.mubr.f32.mxu0 0.0
    %472 = vmatmul.mubr.f32.gmra.mxu0 %v168
    %v473 = vpop.f32.mrf.mxu0
    %v474 = vadd.f32 0.0, %v473
    %v475 = vpop.f32.mrf.mxu0
    %476 = vmatprep.mubr.f32.mxu0 0.0
    %477 = vmatmul.mubr.f32.gmra.mxu0 %v171
    %v478 = vpop.f32.mrf.mxu0
    %v479 = vadd.f32 0.0, %v478
    %v480 = vpop.f32.mrf.mxu0
    %481 = vmatprep.mubr.f32.mxu0 0.0
    %482 = vmatmul.mubr.f32.gmra.mxu0 %v174
    %v483 = vpop.f32.mrf.mxu0
    %v484 = vadd.f32 0.0, %v483
    %v485 = vpop.f32.mrf.mxu0
    %486 = vmatprep.mubr.f32.mxu0 0.0
    %487 = vmatmul.mubr.f32.gmra.mxu0 %v177
    %v488 = vpop.f32.mrf.mxu0
    %v489 = vadd.f32 0.0, %v488
    %v490 = vpop.f32.mrf.mxu0
    %491 = vmatprep.mubr.f32.mxu0 0.0
    %492 = vmatmul.mubr.f32.gmra.mxu0 %v180
    %v493 = vpop.f32.mrf.mxu0
    %v494 = vadd.f32 0.0, %v493
    %v495 = vpop.f32.mrf.mxu0
    %496 = vmatprep.mubr.f32.mxu0 0.0
    %497 = vmatmul.mubr.f32.gmra.mxu0 %v183
    %v498 = vpop.f32.mrf.mxu0
    %v499 = vadd.f32 0.0, %v498
    %v500 = vpop.f32.mrf.mxu0
    %501 = vmatprep.mubr.f32.mxu0 0.0
    %502 = vmatmul.mubr.f32.gmra.mxu0 %v186
    %v503 = vpop.f32.mrf.mxu0
    %v504 = vadd.f32 0.0, %v503
    %v505 = vpop.f32.mrf.mxu0
    %506 = vmatprep.mubr.f32.mxu0 0.0
    %507 = vmatmul.mubr.f32.gmra.mxu0 %v189
    %v508 = vpop.f32.mrf.mxu0
    %v509 = vadd.f32 0.0, %v508
    %v510 = vpop.f32.mrf.mxu0
    %511 = vmatprep.mubr.f32.mxu0 0.0
    %512 = vmatmul.mubr.f32.gmra.mxu0 %v192
    %v513 = vpop.f32.mrf.mxu0
    %v514 = vadd.f32 0.0, %v513
    %v515 = vpop.f32.mrf.mxu0
    %516 = vmatprep.mubr.f32.mxu0 0.0
    %517 = vmatmul.mubr.f32.gmra.mxu0 %v195
    %v518 = vpop.f32.mrf.mxu0
    %v519 = vadd.f32 0.0, %v518
    %v520 = vpop.f32.mrf.mxu0
    %521 = vmatprep.mubr.f32.mxu0 0.0
    %522 = vmatmul.mubr.f32.gmra.mxu0 %v198
    %v523 = vpop.f32.mrf.mxu0
    %v524 = vadd.f32 0.0, %v523
    %v525 = vpop.f32.mrf.mxu0
    %526 = vmatprep.mubr.f32.mxu0 0.0
    %527 = vmatmul.mubr.f32.gmra.mxu0 %v201
    %v528 = vpop.f32.mrf.mxu0
    %v529 = vadd.f32 0.0, %v528
    %v530 = vpop.f32.mrf.mxu0
    %531 = vmatprep.mubr.f32.mxu0 0.0
    %532 = vmatmul.mubr.f32.gmra.mxu0 %v204
    %v533 = vpop.f32.mrf.mxu0
    %v534 = vadd.f32 0.0, %v533
    %v535 = vpop.f32.mrf.mxu0
    %536 = vmatprep.mubr.f32.mxu0 0.0
    %537 = vmatmul.mubr.f32.gmra.mxu0 %v207
    %v538 = vpop.f32.mrf.mxu0
    %v539 = vadd.f32 0.0, %v538
    %v540 = vpop.f32.mrf.mxu0
    %541 = vmatprep.mubr.f32.mxu0 0.0
    %542 = vmatmul.mubr.f32.gmra.mxu0 %v210
    %v543 = vpop.f32.mrf.mxu0
    %v544 = vadd.f32 0.0, %v543
    %v545 = vpop.f32.mrf.mxu0
    %546 = vmatprep.mubr.f32.mxu0 0.0
    %547 = vmatmul.mubr.f32.gmra.mxu0 %v213
    %v548 = vpop.f32.mrf.mxu0
    %v549 = vadd.f32 0.0, %v548
    %v550 = vpop.f32.mrf.mxu0
    %551 = vmatprep.mubr.f32.mxu0 0.0
    %552 = vmatmul.mubr.f32.gmra.mxu0 %v216
    %v553 = vpop.f32.mrf.mxu0
    %v554 = vadd.f32 0.0, %v553
    %v555 = vpop.f32.mrf.mxu0
    %556 = vmatprep.mubr.f32.mxu0 0.0
    %557 = vmatmul.mubr.f32.gmra.mxu0 %v219
    %v558 = vpop.f32.mrf.mxu0
    %v559 = vadd.f32 0.0, %v558
    %v560 = vpop.f32.mrf.mxu0
    %561 = vmatprep.mubr.f32.mxu0 0.0
    %562 = vmatmul.mubr.f32.gmra.mxu0 %v222
    %v563 = vpop.f32.mrf.mxu0
    %v564 = vadd.f32 0.0, %v563
    %v565 = vpop.f32.mrf.mxu0
    %566 = vmatprep.mubr.f32.mxu0 0.0
    %567 = vmatmul.mubr.f32.gmra.mxu0 %v225
    %v568 = vpop.f32.mrf.mxu0
    %v569 = vadd.f32 0.0, %v568
    %v570 = vpop.f32.mrf.mxu0
    %571 = vmatprep.mubr.f32.mxu0 0.0
    %572 = vmatmul.mubr.f32.gmra.mxu0 %v228
    %v573 = vpop.f32.mrf.mxu0
    %v574 = vadd.f32 0.0, %v573
    %v575 = vpop.f32.mrf.mxu0
    %576 = vmatprep.mubr.f32.mxu0 0.0
    %577 = vmatmul.mubr.f32.gmra.mxu0 %v231
    %v578 = vpop.f32.mrf.mxu0
    %v579 = vadd.f32 0.0, %v578
    %v580 = vpop.f32.mrf.mxu0
    %581 = vmatprep.mubr.f32.mxu0 0.0
    %582 = vmatmul.mubr.f32.gmra.mxu0 %v234
    %v583 = vpop.f32.mrf.mxu0
    %v584 = vadd.f32 0.0, %v583
    %v585 = vpop.f32.mrf.mxu0
    %586 = vmatprep.mubr.f32.mxu0 0.0
    %587 = vmatmul.mubr.f32.gmra.mxu0 %v237
    %v588 = vpop.f32.mrf.mxu0
    %v589 = vadd.f32 0.0, %v588
    %v590 = vpop.f32.mrf.mxu0
    %591 = vmatprep.mubr.f32.mxu0 0.0
    %592 = vmatmul.mubr.f32.gmra.mxu0 %v240
    %v593 = vpop.f32.mrf.mxu0
    %v594 = vadd.f32 0.0, %v593
    %v595 = vpop.f32.mrf.mxu0
    %596 = vmatprep.mubr.f32.mxu0 0.0
    %597 = vmatmul.mubr.f32.gmra.mxu0 %v243
    %v598 = vpop.f32.mrf.mxu0
    %v599 = vadd.f32 0.0, %v598
    %v600 = vpop.f32.mrf.mxu0
    %601 = vmatprep.mubr.f32.mxu0 0.0
    %602 = vmatmul.mubr.f32.gmra.mxu0 %v246
    %v603 = vpop.f32.mrf.mxu0
    %v604 = vadd.f32 0.0, %v603
    %v605 = vpop.f32.mrf.mxu0
    %606 = vmatprep.mubr.f32.mxu0 0.0
    %607 = vmatmul.mubr.f32.gmra.mxu0 %v249
    %v608 = vpop.f32.mrf.mxu0
    %v609 = vadd.f32 0.0, %v608
    %v610 = vpop.f32.mrf.mxu0
    %611 = vmatprep.mubr.f32.mxu0 0.0
    %612 = vmatmul.mubr.f32.gmra.mxu0 %v252
    %v613 = vpop.f32.mrf.mxu0
    %v614 = vadd.f32 0.0, %v613
    %v615 = vpop.f32.mrf.mxu0
    %616 = vmatprep.mubr.f32.mxu0 0.0
    %617 = vmatmul.mubr.f32.gmra.mxu0 %v255
    %v618 = vpop.f32.mrf.mxu0
    %v619 = vadd.f32 0.0, %v618
    %v620 = vpop.f32.mrf.mxu0
    %621 = vmatprep.mubr.f32.mxu0 0.0
    %622 = vmatmul.mubr.f32.gmra.mxu0 %v258
    %v623 = vpop.f32.mrf.mxu0
    %v624 = vadd.f32 0.0, %v623
    %v625 = vpop.f32.mrf.mxu0
    %626 = vmatprep.mubr.f32.mxu0 0.0
    %627 = vmatmul.mubr.f32.gmra.mxu0 %v261
    %v628 = vpop.f32.mrf.mxu0
    %v629 = vadd.f32 0.0, %v628
    %v630 = vpop.f32.mrf.mxu0
    %631 = vmatprep.mubr.f32.mxu0 0.0
    %632 = vmatmul.mubr.f32.gmra.mxu0 %v264
    %v633 = vpop.f32.mrf.mxu0
    %v634 = vadd.f32 0.0, %v633
    %v635 = vpop.f32.mrf.mxu0
    %636 = vmatprep.mubr.f32.mxu0 0.0
    %637 = vmatmul.mubr.f32.gmra.mxu0 %v267
    %v638 = vpop.f32.mrf.mxu0
    %v639 = vadd.f32 0.0, %v638
    %v640 = vpop.f32.mrf.mxu0
    %641 = vmatprep.mubr.f32.mxu0 0.0
    %642 = vmatmul.mubr.f32.gmra.mxu0 %v270
    %v643 = vpop.f32.mrf.mxu0
    %v644 = vadd.f32 0.0, %v643
    %v645 = vpop.f32.mrf.mxu0
    %646 = vmatprep.mubr.f32.mxu0 0.0
    %647 = vmatmul.mubr.f32.gmra.mxu0 %v273
    %v648 = vpop.f32.mrf.mxu0
    %v649 = vadd.f32 0.0, %v648
    %v650 = vpop.f32.mrf.mxu0
    %651 = vmatprep.mubr.f32.mxu0 0.0
    %652 = vmatmul.mubr.f32.gmra.mxu0 %v276
    %v653 = vpop.f32.mrf.mxu0
    %v654 = vadd.f32 0.0, %v653
    %v655 = vpop.f32.mrf.mxu0
    %656 = vmatprep.mubr.f32.mxu0 0.0
    %657 = vmatmul.mubr.f32.gmra.mxu0 %v279
    %v658 = vpop.f32.mrf.mxu0
    %v659 = vadd.f32 0.0, %v658
    %v660 = vpop.f32.mrf.mxu0
    %661 = vmatprep.mubr.f32.mxu0 0.0
    %662 = vmatmul.mubr.f32.gmra.mxu0 %v282
    %v663 = vpop.f32.mrf.mxu0
    %v664 = vadd.f32 0.0, %v663
    %v665 = vpop.f32.mrf.mxu0
    %666 = vmatprep.mubr.f32.mxu0 0.0
    %667 = vmatmul.mubr.f32.gmra.mxu0 %v285
    %v668 = vpop.f32.mrf.mxu0
    %v669 = vadd.f32 0.0, %v668
    %v670 = vpop.f32.mrf.mxu0
    %671 = vdwg.mxu0
    %v672 = vld [vmem:[%s2] sm:$0x1]
    %v674 = vlaneseq
    %v675 = vshrl.u32 %v674, 7
    %v676 = vsub.s32 0, %v675
    %v677 = vrot.slane %v672, %v676
    %v679 = vmul.f32 %v354, %v677
    %v680 = vmul.f32 %v359, %v677
    %v681 = vmul.f32 %v364, %v677
    %v682 = vmul.f32 %v369, %v677
    %v683 = vmul.f32 %v374, %v677
    %v684 = vmul.f32 %v379, %v677
    %v685 = vmul.f32 %v384, %v677
    %v686 = vmul.f32 %v389, %v677
    %v687 = vmul.f32 %v394, %v677
    %v688 = vmul.f32 %v399, %v677
    %v689 = vmul.f32 %v404, %v677
    %v690 = vmul.f32 %v409, %v677
    %v691 = vmul.f32 %v414, %v677
    %v692 = vmul.f32 %v419, %v677
    %v693 = vmul.f32 %v424, %v677
    %v694 = vmul.f32 %v429, %v677
    %v695 = vmul.f32 %v434, %v677
    %v696 = vmul.f32 %v439, %v677
    %v697 = vmul.f32 %v444, %v677
    %v698 = vmul.f32 %v449, %v677
    %v699 = vmul.f32 %v454, %v677
    %v700 = vmul.f32 %v459, %v677
    %v701 = vmul.f32 %v464, %v677
    %v702 = vmul.f32 %v469, %v677
    %v703 = vmul.f32 %v474, %v677
    %v704 = vmul.f32 %v479, %v677
    %v705 = vmul.f32 %v484, %v677
    %v706 = vmul.f32 %v489, %v677
    %v707 = vmul.f32 %v494, %v677
    %v708 = vmul.f32 %v499, %v677
    %v709 = vmul.f32 %v504, %v677
    %v710 = vmul.f32 %v509, %v677
    %v711 = vmul.f32 %v514, %v677
    %v712 = vmul.f32 %v519, %v677
    %v713 = vmul.f32 %v524, %v677
    %v714 = vmul.f32 %v529, %v677
    %v715 = vmul.f32 %v534, %v677
    %v716 = vmul.f32 %v539, %v677
    %v717 = vmul.f32 %v544, %v677
    %v718 = vmul.f32 %v549, %v677
    %v719 = vmul.f32 %v554, %v677
    %v720 = vmul.f32 %v559, %v677
    %v721 = vmul.f32 %v564, %v677
    %v722 = vmul.f32 %v569, %v677
    %v723 = vmul.f32 %v574, %v677
    %v724 = vmul.f32 %v579, %v677
    %v725 = vmul.f32 %v584, %v677
    %v726 = vmul.f32 %v589, %v677
    %v727 = vmul.f32 %v594, %v677
    %v728 = vmul.f32 %v599, %v677
    %v729 = vmul.f32 %v604, %v677
    %v730 = vmul.f32 %v609, %v677
    %v731 = vmul.f32 %v614, %v677
    %v732 = vmul.f32 %v619, %v677
    %v733 = vmul.f32 %v624, %v677
    %v734 = vmul.f32 %v629, %v677
    %v735 = vmul.f32 %v634, %v677
    %v736 = vmul.f32 %v639, %v677
    %v737 = vmul.f32 %v644, %v677
    %v738 = vmul.f32 %v649, %v677
    %v739 = vmul.f32 %v654, %v677
    %v740 = vmul.f32 %v659, %v677
    %v741 = vmul.f32 %v664, %v677
    %v742 = vmul.f32 %v669, %v677
    %v743 = vld [vmem:[%s3] sm:$0x1]
    %v745 = vlaneseq
    %v746 = vshrl.u32 %v745, 7
    %v747 = vsub.s32 0, %v746
    %v748 = vrot.slane %v743, %v747
    %v750 = vadd.f32 %v679, %v748
    %v751 = vadd.f32 %v680, %v748
    %v752 = vadd.f32 %v681, %v748
    %v753 = vadd.f32 %v682, %v748
    %v754 = vadd.f32 %v683, %v748
    %v755 = vadd.f32 %v684, %v748
    %v756 = vadd.f32 %v685, %v748
    %v757 = vadd.f32 %v686, %v748
    %v758 = vadd.f32 %v687, %v748
    %v759 = vadd.f32 %v688, %v748
    %v760 = vadd.f32 %v689, %v748
    %v761 = vadd.f32 %v690, %v748
    %v762 = vadd.f32 %v691, %v748
    %v763 = vadd.f32 %v692, %v748
    %v764 = vadd.f32 %v693, %v748
    %v765 = vadd.f32 %v694, %v748
    %v766 = vadd.f32 %v695, %v748
    %v767 = vadd.f32 %v696, %v748
    %v768 = vadd.f32 %v697, %v748
    %v769 = vadd.f32 %v698, %v748
    %v770 = vadd.f32 %v699, %v748
    %v771 = vadd.f32 %v700, %v748
    %v772 = vadd.f32 %v701, %v748
    %v773 = vadd.f32 %v702, %v748
    %v774 = vadd.f32 %v703, %v748
    %v775 = vadd.f32 %v704, %v748
    %v776 = vadd.f32 %v705, %v748
    %v777 = vadd.f32 %v706, %v748
    %v778 = vadd.f32 %v707, %v748
    %v779 = vadd.f32 %v708, %v748
    %v780 = vadd.f32 %v709, %v748
    %v781 = vadd.f32 %v710, %v748
    %v782 = vadd.f32 %v711, %v748
    %v783 = vadd.f32 %v712, %v748
    %v784 = vadd.f32 %v713, %v748
    %v785 = vadd.f32 %v714, %v748
    %v786 = vadd.f32 %v715, %v748
    %v787 = vadd.f32 %v716, %v748
    %v788 = vadd.f32 %v717, %v748
    %v789 = vadd.f32 %v718, %v748
    %v790 = vadd.f32 %v719, %v748
    %v791 = vadd.f32 %v720, %v748
    %v792 = vadd.f32 %v721, %v748
    %v793 = vadd.f32 %v722, %v748
    %v794 = vadd.f32 %v723, %v748
    %v795 = vadd.f32 %v724, %v748
    %v796 = vadd.f32 %v725, %v748
    %v797 = vadd.f32 %v726, %v748
    %v798 = vadd.f32 %v727, %v748
    %v799 = vadd.f32 %v728, %v748
    %v800 = vadd.f32 %v729, %v748
    %v801 = vadd.f32 %v730, %v748
    %v802 = vadd.f32 %v731, %v748
    %v803 = vadd.f32 %v732, %v748
    %v804 = vadd.f32 %v733, %v748
    %v805 = vadd.f32 %v734, %v748
    %v806 = vadd.f32 %v735, %v748
    %v807 = vadd.f32 %v736, %v748
    %v808 = vadd.f32 %v737, %v748
    %v809 = vadd.f32 %v738, %v748
    %v810 = vadd.f32 %v739, %v748
    %v811 = vadd.f32 %v740, %v748
    %v812 = vadd.f32 %v741, %v748
    %v813 = vadd.f32 %v742, %v748
    %v814 = vld [vmem:[%s4] sm:$0xff]
    %v815 = vld [vmem:[%s4 + $0x8] sm:$0xff]
    %v816 = vld [vmem:[%s4 + $0x10] sm:$0xff]
    %v817 = vld [vmem:[%s4 + $0x18] sm:$0xff]
    %v818 = vld [vmem:[%s4 + $0x20] sm:$0xff]
    %v819 = vld [vmem:[%s4 + $0x28] sm:$0xff]
    %v820 = vld [vmem:[%s4 + $0x30] sm:$0xff]
    %v821 = vld [vmem:[%s4 + $0x38] sm:$0xff]
    %v822 = vld [vmem:[%s4 + $0x40] sm:$0xff]
    %v823 = vld [vmem:[%s4 + $0x48] sm:$0xff]
    %v824 = vld [vmem:[%s4 + $0x50] sm:$0xff]
    %v825 = vld [vmem:[%s4 + $0x58] sm:$0xff]
    %v826 = vld [vmem:[%s4 + $0x60] sm:$0xff]
    %v827 = vld [vmem:[%s4 + $0x68] sm:$0xff]
    %v828 = vld [vmem:[%s4 + $0x70] sm:$0xff]
    %v829 = vld [vmem:[%s4 + $0x78] sm:$0xff]
    %v830 = vld [vmem:[%s4 + $0x80] sm:$0xff]
    %v831 = vld [vmem:[%s4 + $0x88] sm:$0xff]
    %v832 = vld [vmem:[%s4 + $0x90] sm:$0xff]
    %v833 = vld [vmem:[%s4 + $0x98] sm:$0xff]
    %v834 = vld [vmem:[%s4 + $0xa0] sm:$0xff]
    %v835 = vld [vmem:[%s4 + $0xa8] sm:$0xff]
    %v836 = vld [vmem:[%s4 + $0xb0] sm:$0xff]
    %v837 = vld [vmem:[%s4 + $0xb8] sm:$0xff]
    %v838 = vld [vmem:[%s4 + $0xc0] sm:$0xff]
    %v839 = vld [vmem:[%s4 + $0xc8] sm:$0xff]
    %v840 = vld [vmem:[%s4 + $0xd0] sm:$0xff]
    %v841 = vld [vmem:[%s4 + $0xd8] sm:$0xff]
    %v842 = vld [vmem:[%s4 + $0xe0] sm:$0xff]
    %v843 = vld [vmem:[%s4 + $0xe8] sm:$0xff]
    %v844 = vld [vmem:[%s4 + $0xf0] sm:$0xff]
    %v845 = vld [vmem:[%s4 + $0xf8] sm:$0xff]
    %v846 = vld [vmem:[%s4 + $0x100] sm:$0xff]
    %v847 = vld [vmem:[%s4 + $0x108] sm:$0xff]
    %v848 = vld [vmem:[%s4 + $0x110] sm:$0xff]
    %v849 = vld [vmem:[%s4 + $0x118] sm:$0xff]
    %v850 = vld [vmem:[%s4 + $0x120] sm:$0xff]
    %v851 = vld [vmem:[%s4 + $0x128] sm:$0xff]
    %v852 = vld [vmem:[%s4 + $0x130] sm:$0xff]
    %v853 = vld [vmem:[%s4 + $0x138] sm:$0xff]
    %v854 = vld [vmem:[%s4 + $0x140] sm:$0xff]
    %v855 = vld [vmem:[%s4 + $0x148] sm:$0xff]
    %v856 = vld [vmem:[%s4 + $0x150] sm:$0xff]
    %v857 = vld [vmem:[%s4 + $0x158] sm:$0xff]
    %v858 = vld [vmem:[%s4 + $0x160] sm:$0xff]
    %v859 = vld [vmem:[%s4 + $0x168] sm:$0xff]
    %v860 = vld [vmem:[%s4 + $0x170] sm:$0xff]
    %v861 = vld [vmem:[%s4 + $0x178] sm:$0xff]
    %v862 = vld [vmem:[%s4 + $0x180] sm:$0xff]
    %v863 = vld [vmem:[%s4 + $0x188] sm:$0xff]
    %v864 = vld [vmem:[%s4 + $0x190] sm:$0xff]
    %v865 = vld [vmem:[%s4 + $0x198] sm:$0xff]
    %v866 = vld [vmem:[%s4 + $0x1a0] sm:$0xff]
    %v867 = vld [vmem:[%s4 + $0x1a8] sm:$0xff]
    %v868 = vld [vmem:[%s4 + $0x1b0] sm:$0xff]
    %v869 = vld [vmem:[%s4 + $0x1b8] sm:$0xff]
    %v870 = vld [vmem:[%s4 + $0x1c0] sm:$0xff]
    %v871 = vld [vmem:[%s4 + $0x1c8] sm:$0xff]
    %v872 = vld [vmem:[%s4 + $0x1d0] sm:$0xff]
    %v873 = vld [vmem:[%s4 + $0x1d8] sm:$0xff]
    %v874 = vld [vmem:[%s4 + $0x1e0] sm:$0xff]
    %v875 = vld [vmem:[%s4 + $0x1e8] sm:$0xff]
    %v876 = vld [vmem:[%s4 + $0x1f0] sm:$0xff]
    %v877 = vld [vmem:[%s4 + $0x1f8] sm:$0xff]
    %v878 = vadd.f32 %v750, %v814
    %v879 = vadd.f32 %v751, %v815
    %v880 = vadd.f32 %v752, %v816
    %v881 = vadd.f32 %v753, %v817
    %v882 = vadd.f32 %v754, %v818
    %v883 = vadd.f32 %v755, %v819
    %v884 = vadd.f32 %v756, %v820
    %v885 = vadd.f32 %v757, %v821
    %v886 = vadd.f32 %v758, %v822
    %v887 = vadd.f32 %v759, %v823
    %v888 = vadd.f32 %v760, %v824
    %v889 = vadd.f32 %v761, %v825
    %v890 = vadd.f32 %v762, %v826
    %v891 = vadd.f32 %v763, %v827
    %v892 = vadd.f32 %v764, %v828
    %v893 = vadd.f32 %v765, %v829
    %v894 = vadd.f32 %v766, %v830
    %v895 = vadd.f32 %v767, %v831
    %v896 = vadd.f32 %v768, %v832
    %v897 = vadd.f32 %v769, %v833
    %v898 = vadd.f32 %v770, %v834
    %v899 = vadd.f32 %v771, %v835
    %v900 = vadd.f32 %v772, %v836
    %v901 = vadd.f32 %v773, %v837
    %v902 = vadd.f32 %v774, %v838
    %v903 = vadd.f32 %v775, %v839
    %v904 = vadd.f32 %v776, %v840
    %v905 = vadd.f32 %v777, %v841
    %v906 = vadd.f32 %v778, %v842
    %v907 = vadd.f32 %v779, %v843
    %v908 = vadd.f32 %v780, %v844
    %v909 = vadd.f32 %v781, %v845
    %v910 = vadd.f32 %v782, %v846
    %v911 = vadd.f32 %v783, %v847
    %v912 = vadd.f32 %v784, %v848
    %v913 = vadd.f32 %v785, %v849
    %v914 = vadd.f32 %v786, %v850
    %v915 = vadd.f32 %v787, %v851
    %v916 = vadd.f32 %v788, %v852
    %v917 = vadd.f32 %v789, %v853
    %v918 = vadd.f32 %v790, %v854
    %v919 = vadd.f32 %v791, %v855
    %v920 = vadd.f32 %v792, %v856
    %v921 = vadd.f32 %v793, %v857
    %v922 = vadd.f32 %v794, %v858
    %v923 = vadd.f32 %v795, %v859
    %v924 = vadd.f32 %v796, %v860
    %v925 = vadd.f32 %v797, %v861
    %v926 = vadd.f32 %v798, %v862
    %v927 = vadd.f32 %v799, %v863
    %v928 = vadd.f32 %v800, %v864
    %v929 = vadd.f32 %v801, %v865
    %v930 = vadd.f32 %v802, %v866
    %v931 = vadd.f32 %v803, %v867
    %v932 = vadd.f32 %v804, %v868
    %v933 = vadd.f32 %v805, %v869
    %v934 = vadd.f32 %v806, %v870
    %v935 = vadd.f32 %v807, %v871
    %v936 = vadd.f32 %v808, %v872
    %v937 = vadd.f32 %v809, %v873
    %v938 = vadd.f32 %v810, %v874
    %v939 = vadd.f32 %v811, %v875
    %v940 = vadd.f32 %v812, %v876
    %v941 = vadd.f32 %v813, %v877
    %v942 = vmax.f32 %v878, 0.0
    %v943 = vmax.f32 %v879, 0.0
    %v944 = vmax.f32 %v880, 0.0
    %v945 = vmax.f32 %v881, 0.0
    %v946 = vmax.f32 %v882, 0.0
    %v947 = vmax.f32 %v883, 0.0
    %v948 = vmax.f32 %v884, 0.0
    %v949 = vmax.f32 %v885, 0.0
    %v950 = vmax.f32 %v886, 0.0
    %v951 = vmax.f32 %v887, 0.0
    %v952 = vmax.f32 %v888, 0.0
    %v953 = vmax.f32 %v889, 0.0
    %v954 = vmax.f32 %v890, 0.0
    %v955 = vmax.f32 %v891, 0.0
    %v956 = vmax.f32 %v892, 0.0
    %v957 = vmax.f32 %v893, 0.0
    %v958 = vmax.f32 %v894, 0.0
    %v959 = vmax.f32 %v895, 0.0
    %v960 = vmax.f32 %v896, 0.0
    %v961 = vmax.f32 %v897, 0.0
    %v962 = vmax.f32 %v898, 0.0
    %v963 = vmax.f32 %v899, 0.0
    %v964 = vmax.f32 %v900, 0.0
    %v965 = vmax.f32 %v901, 0.0
    %v966 = vmax.f32 %v902, 0.0
    %v967 = vmax.f32 %v903, 0.0
    %v968 = vmax.f32 %v904, 0.0
    %v969 = vmax.f32 %v905, 0.0
    %v970 = vmax.f32 %v906, 0.0
    %v971 = vmax.f32 %v907, 0.0
    %v972 = vmax.f32 %v908, 0.0
    %v973 = vmax.f32 %v909, 0.0
    %v974 = vmax.f32 %v910, 0.0
    %v975 = vmax.f32 %v911, 0.0
    %v976 = vmax.f32 %v912, 0.0
    %v977 = vmax.f32 %v913, 0.0
    %v978 = vmax.f32 %v914, 0.0
    %v979 = vmax.f32 %v915, 0.0
    %v980 = vmax.f32 %v916, 0.0
    %v981 = vmax.f32 %v917, 0.0
    %v982 = vmax.f32 %v918, 0.0
    %v983 = vmax.f32 %v919, 0.0
    %v984 = vmax.f32 %v920, 0.0
    %v985 = vmax.f32 %v921, 0.0
    %v986 = vmax.f32 %v922, 0.0
    %v987 = vmax.f32 %v923, 0.0
    %v988 = vmax.f32 %v924, 0.0
    %v989 = vmax.f32 %v925, 0.0
    %v990 = vmax.f32 %v926, 0.0
    %v991 = vmax.f32 %v927, 0.0
    %v992 = vmax.f32 %v928, 0.0
    %v993 = vmax.f32 %v929, 0.0
    %v994 = vmax.f32 %v930, 0.0
    %v995 = vmax.f32 %v931, 0.0
    %v996 = vmax.f32 %v932, 0.0
    %v997 = vmax.f32 %v933, 0.0
    %v998 = vmax.f32 %v934, 0.0
    %v999 = vmax.f32 %v935, 0.0
    %v1000 = vmax.f32 %v936, 0.0
    %v1001 = vmax.f32 %v937, 0.0
    %v1002 = vmax.f32 %v938, 0.0
    %v1003 = vmax.f32 %v939, 0.0
    %v1004 = vmax.f32 %v940, 0.0
    %v1005 = vmax.f32 %v941, 0.0
    %1006 = vst.msk [vmem:[#allocation2] sm:$0xff] %vm94, %v942
    %1007 = vst.msk [vmem:[#allocation2 + $0x8] sm:$0xff] %vm94, %v943
    %1008 = vst.msk [vmem:[#allocation2 + $0x10] sm:$0xff] %vm94, %v944
    %1009 = vst.msk [vmem:[#allocation2 + $0x18] sm:$0xff] %vm94, %v945
    %1010 = vst.msk [vmem:[#allocation2 + $0x20] sm:$0xff] %vm94, %v946
    %1011 = vst.msk [vmem:[#allocation2 + $0x28] sm:$0xff] %vm94, %v947
    %1012 = vst.msk [vmem:[#allocation2 + $0x30] sm:$0xff] %vm94, %v948
    %1013 = vst.msk [vmem:[#allocation2 + $0x38] sm:$0xff] %vm94, %v949
    %1014 = vst.msk [vmem:[#allocation2 + $0x40] sm:$0xff] %vm94, %v950
    %1015 = vst.msk [vmem:[#allocation2 + $0x48] sm:$0xff] %vm94, %v951
    %1016 = vst.msk [vmem:[#allocation2 + $0x50] sm:$0xff] %vm94, %v952
    %1017 = vst.msk [vmem:[#allocation2 + $0x58] sm:$0xff] %vm94, %v953
    %1018 = vst.msk [vmem:[#allocation2 + $0x60] sm:$0xff] %vm94, %v954
    %1019 = vst.msk [vmem:[#allocation2 + $0x68] sm:$0xff] %vm94, %v955
    %1020 = vst.msk [vmem:[#allocation2 + $0x70] sm:$0xff] %vm94, %v956
    %1021 = vst.msk [vmem:[#allocation2 + $0x78] sm:$0xff] %vm94, %v957
    %1022 = vst.msk [vmem:[#allocation2 + $0x80] sm:$0xff] %vm94, %v958
    %1023 = vst.msk [vmem:[#allocation2 + $0x88] sm:$0xff] %vm94, %v959
    %1024 = vst.msk [vmem:[#allocation2 + $0x90] sm:$0xff] %vm94, %v960
    %1025 = vst.msk [vmem:[#allocation2 + $0x98] sm:$0xff] %vm94, %v961
    %1026 = vst.msk [vmem:[#allocation2 + $0xa0] sm:$0xff] %vm94, %v962
    %1027 = vst.msk [vmem:[#allocation2 + $0xa8] sm:$0xff] %vm94, %v963
    %1028 = vst.msk [vmem:[#allocation2 + $0xb0] sm:$0xff] %vm94, %v964
    %1029 = vst.msk [vmem:[#allocation2 + $0xb8] sm:$0xff] %vm94, %v965
    %1030 = vst.msk [vmem:[#allocation2 + $0xc0] sm:$0xff] %vm94, %v966
    %1031 = vst.msk [vmem:[#allocation2 + $0xc8] sm:$0xff] %vm94, %v967
    %1032 = vst.msk [vmem:[#allocation2 + $0xd0] sm:$0xff] %vm94, %v968
    %1033 = vst.msk [vmem:[#allocation2 + $0xd8] sm:$0xff] %vm94, %v969
    %1034 = vst.msk [vmem:[#allocation2 + $0xe0] sm:$0xff] %vm94, %v970
    %1035 = vst.msk [vmem:[#allocation2 + $0xe8] sm:$0xff] %vm94, %v971
    %1036 = vst.msk [vmem:[#allocation2 + $0xf0] sm:$0xff] %vm94, %v972
    %1037 = vst.msk [vmem:[#allocation2 + $0xf8] sm:$0xff] %vm94, %v973
    %1038 = vst.msk [vmem:[#allocation2 + $0x100] sm:$0xff] %vm94, %v974
    %1039 = vst.msk [vmem:[#allocation2 + $0x108] sm:$0xff] %vm94, %v975
    %1040 = vst.msk [vmem:[#allocation2 + $0x110] sm:$0xff] %vm94, %v976
    %1041 = vst.msk [vmem:[#allocation2 + $0x118] sm:$0xff] %vm94, %v977
    %1042 = vst.msk [vmem:[#allocation2 + $0x120] sm:$0xff] %vm94, %v978
    %1043 = vst.msk [vmem:[#allocation2 + $0x128] sm:$0xff] %vm94, %v979
    %1044 = vst.msk [vmem:[#allocation2 + $0x130] sm:$0xff] %vm94, %v980
    %1045 = vst.msk [vmem:[#allocation2 + $0x138] sm:$0xff] %vm94, %v981
    %1046 = vst.msk [vmem:[#allocation2 + $0x140] sm:$0xff] %vm94, %v982
    %1047 = vst.msk [vmem:[#allocation2 + $0x148] sm:$0xff] %vm94, %v983
    %1048 = vst.msk [vmem:[#allocation2 + $0x150] sm:$0xff] %vm94, %v984
    %1049 = vst.msk [vmem:[#allocation2 + $0x158] sm:$0xff] %vm94, %v985
    %1050 = vst.msk [vmem:[#allocation2 + $0x160] sm:$0xff] %vm94, %v986
    %1051 = vst.msk [vmem:[#allocation2 + $0x168] sm:$0xff] %vm94, %v987
    %1052 = vst.msk [vmem:[#allocation2 + $0x170] sm:$0xff] %vm94, %v988
    %1053 = vst.msk [vmem:[#allocation2 + $0x178] sm:$0xff] %vm94, %v989
    %1054 = vst.msk [vmem:[#allocation2 + $0x180] sm:$0xff] %vm94, %v990
    %1055 = vst.msk [vmem:[#allocation2 + $0x188] sm:$0xff] %vm94, %v991
    %1056 = vst.msk [vmem:[#allocation2 + $0x190] sm:$0xff] %vm94, %v992
    %1057 = vst.msk [vmem:[#allocation2 + $0x198] sm:$0xff] %vm94, %v993
    %1058 = vst.msk [vmem:[#allocation2 + $0x1a0] sm:$0xff] %vm94, %v994
    %1059 = vst.msk [vmem:[#allocation2 + $0x1a8] sm:$0xff] %vm94, %v995
    %1060 = vst.msk [vmem:[#allocation2 + $0x1b0] sm:$0xff] %vm94, %v996
    %1061 = vst.msk [vmem:[#allocation2 + $0x1b8] sm:$0xff] %vm94, %v997
    %1062 = vst.msk [vmem:[#allocation2 + $0x1c0] sm:$0xff] %vm94, %v998
    %1063 = vst.msk [vmem:[#allocation2 + $0x1c8] sm:$0xff] %vm94, %v999
    %1064 = vst.msk [vmem:[#allocation2 + $0x1d0] sm:$0xff] %vm94, %v1000
    %1065 = vst.msk [vmem:[#allocation2 + $0x1d8] sm:$0xff] %vm94, %v1001
    %1066 = vst.msk [vmem:[#allocation2 + $0x1e0] sm:$0xff] %vm94, %v1002
    %1067 = vst.msk [vmem:[#allocation2 + $0x1e8] sm:$0xff] %vm94, %v1003
    %1068 = vst.msk [vmem:[#allocation2 + $0x1f0] sm:$0xff] %vm94, %v1004
    %1069 = vst.msk [vmem:[#allocation2 + $0x1f8] sm:$0xff] %vm94, %v1005
    // Predicated region
    $region22: #{cml_forward.9} parent=1 // pred_check
      _
    $region23: #{cml_forward.9} parent=1 // pred_check_branch
      %1071 = sbr.rel (0) target = $region25
    $region24: #{cml_forward.9} parent=1 // pred_region
      %s1073 = ssub.s32 8192, 8192
      %1074 = vsyncadd [#allocation3], %s1073
      %s1075 = sshll.u32 [#allocation2], 4
      %s1076 = int_to_ptr.vmem [resolvable:$true] %s1075
      %1081 = dma.vmem_to_hbm [thread:$0]  %s1076, 8192, %s5, [#allocation3], 128, 128, 8
    $region25: #{cml_forward.9} parent=1 // pred_fallthru
      _
    // Predicated region
    $region26: #{cml_forward.9} parent=1 // pred_check
      _
    $region27: #{cml_forward.9} parent=1 // pred_check_branch
      %1083 = sbr.rel (0) target = $region29
    $region28: #{cml_forward.9} parent=1 // pred_region
      %1084 = dma.done [#allocation3], 8192
    $region29: #{cml_forward.9} parent=1 // pred_fallthru
      _
    %1085 = vsyncpa [#allocation3], 1

// kernel: cml_forward.6
$region0: #{cml_forward.6}
  #allocation0 [shape = 'u32[]', space=smem, size = 0x4, offset = 0x4, fixed_abs, tag = 'smem constant byte address 0x4 - core index']
  #allocation1 [shape = 'u32[144,128]{1,0:T(1,128)}', space=vmem, size = 0x12000, scoped, tag = 'internal scratch']
  %s0 = inlined_call_operand.vmem [shape: f32[9,512,72], index: 0, kind: input, shape index: {}]
  %s1 = inlined_call_operand.vmem [shape: f32[9,72,72], index: 1, kind: input, shape index: {}]
  %s2 = inlined_call_operand.vmem [shape: f32[1,72], index: 2, kind: input, shape index: {}]
  %s3 = inlined_call_operand.vmem [shape: f32[1,72], index: 3, kind: input, shape index: {}]
  %s4 = inlined_call_operand.vmem [shape: f32[512,72], index: 4, kind: input, shape index: {}]
  %s5 = inlined_call_operand.vmem [shape: f32[512,72], index: 5, kind: output, shape index: {}]
  %s6 = sld [smem:[#allocation0]]
  $region30: #{cml_forward.6} parent=0
    _
  %s8 = ssub.s32 1, %s6
  %s9 = scalar_select 0, %s8, %s6
  // Predicated region
  $region2: #{cml_forward.6} parent=0 // pred_check
    _
  $region3: #{cml_forward.6} parent=0 // pred_check_branch
    %11 = sbr.rel (0) target = $region5
  $region4: #{cml_forward.6} parent=0 // pred_region
    _
  $region5: #{cml_forward.6} parent=0 // pred_fallthru
    _
  // Predicated region
  $region6: #{cml_forward.6} parent=0 // pred_check
    _
  $region7: #{cml_forward.6} parent=0 // pred_check_branch
    %13 = sbr.rel (0) target = $region9
  $region8: #{cml_forward.6} parent=0 // pred_region
    _
  $region9: #{cml_forward.6} parent=0 // pred_fallthru
    _
  // Predicated region
  $region10: #{cml_forward.6} parent=0 // pred_check
    _
  $region11: #{cml_forward.6} parent=0 // pred_check_branch
    %15 = sbr.rel (0) target = $region13
  $region12: #{cml_forward.6} parent=0 // pred_region
    _
  $region13: #{cml_forward.6} parent=0 // pred_fallthru
    _
  // Predicated region
  $region14: #{cml_forward.6} parent=0 // pred_check
    _
  $region15: #{cml_forward.6} parent=0 // pred_check_branch
    %17 = sbr.rel (0) target = $region17
  $region16: #{cml_forward.6} parent=0 // pred_region
    _
  $region17: #{cml_forward.6} parent=0 // pred_fallthru
    _
  // Predicated region
  $region18: #{cml_forward.6} parent=0 // pred_check
    _
  $region19: #{cml_forward.6} parent=0 // pred_check_branch
    %19 = sbr.rel (0) target = $region21
  $region20: #{cml_forward.6} parent=0 // pred_region
    _
  $region21: #{cml_forward.6} parent=0 // pred_fallthru
    _
  %v20 = vld [vmem:[%s0] sm:$0xff]
  %v21 = vld [vmem:[%s0 + $0x8] sm:$0xff]
  %v22 = vld [vmem:[%s0 + $0x10] sm:$0xff]
  %v23 = vld [vmem:[%s0 + $0x18] sm:$0xff]
  %v24 = vld [vmem:[%s0 + $0x20] sm:$0xff]
  %v25 = vld [vmem:[%s0 + $0x28] sm:$0xff]
  %v26 = vld [vmem:[%s0 + $0x30] sm:$0xff]
  %v27 = vld [vmem:[%s0 + $0x38] sm:$0xff]
  %v28 = vld [vmem:[%s0 + $0x40] sm:$0xff]
  %v29 = vld [vmem:[%s0 + $0x48] sm:$0xff]
  %v30 = vld [vmem:[%s0 + $0x50] sm:$0xff]
  %v31 = vld [vmem:[%s0 + $0x58] sm:$0xff]
  %v32 = vld [vmem:[%s0 + $0x60] sm:$0xff]
  %v33 = vld [vmem:[%s0 + $0x68] sm:$0xff]
  %v34 = vld [vmem:[%s0 + $0x70] sm:$0xff]
  %v35 = vld [vmem:[%s0 + $0x78] sm:$0xff]
  %v36 = vld [vmem:[%s0 + $0x80] sm:$0xff]
  %v37 = vld [vmem:[%s0 + $0x88] sm:$0xff]
  %v38 = vld [vmem:[%s0 + $0x90] sm:$0xff]
  %v39 = vld [vmem:[%s0 + $0x98] sm:$0xff]
  %v40 = vld [vmem:[%s0 + $0xa0] sm:$0xff]
  %v41 = vld [vmem:[%s0 + $0xa8] sm:$0xff]
  %v42 = vld [vmem:[%s0 + $0xb0] sm:$0xff]
  %v43 = vld [vmem:[%s0 + $0xb8] sm:$0xff]
  %v44 = vld [vmem:[%s0 + $0xc0] sm:$0xff]
  %v45 = vld [vmem:[%s0 + $0xc8] sm:$0xff]
  %v46 = vld [vmem:[%s0 + $0xd0] sm:$0xff]
  %v47 = vld [vmem:[%s0 + $0xd8] sm:$0xff]
  %v48 = vld [vmem:[%s0 + $0xe0] sm:$0xff]
  %v49 = vld [vmem:[%s0 + $0xe8] sm:$0xff]
  %v50 = vld [vmem:[%s0 + $0xf0] sm:$0xff]
  %v51 = vld [vmem:[%s0 + $0xf8] sm:$0xff]
  %v52 = vld [vmem:[%s0 + $0x100] sm:$0xff]
  %v53 = vld [vmem:[%s0 + $0x108] sm:$0xff]
  %v54 = vld [vmem:[%s0 + $0x110] sm:$0xff]
  %v55 = vld [vmem:[%s0 + $0x118] sm:$0xff]
  %v56 = vld [vmem:[%s0 + $0x120] sm:$0xff]
  %v57 = vld [vmem:[%s0 + $0x128] sm:$0xff]
  %v58 = vld [vmem:[%s0 + $0x130] sm:$0xff]
  %v59 = vld [vmem:[%s0 + $0x138] sm:$0xff]
  %v60 = vld [vmem:[%s0 + $0x140] sm:$0xff]
  %v61 = vld [vmem:[%s0 + $0x148] sm:$0xff]
  %v62 = vld [vmem:[%s0 + $0x150] sm:$0xff]
  %v63 = vld [vmem:[%s0 + $0x158] sm:$0xff]
  %v64 = vld [vmem:[%s0 + $0x160] sm:$0xff]
  %v65 = vld [vmem:[%s0 + $0x168] sm:$0xff]
  %v66 = vld [vmem:[%s0 + $0x170] sm:$0xff]
  %v67 = vld [vmem:[%s0 + $0x178] sm:$0xff]
  %v68 = vld [vmem:[%s0 + $0x180] sm:$0xff]
  %v69 = vld [vmem:[%s0 + $0x188] sm:$0xff]
  %v70 = vld [vmem:[%s0 + $0x190] sm:$0xff]
  %v71 = vld [vmem:[%s0 + $0x198] sm:$0xff]
  %v72 = vld [vmem:[%s0 + $0x1a0] sm:$0xff]
  %v73 = vld [vmem:[%s0 + $0x1a8] sm:$0xff]
  %v74 = vld [vmem:[%s0 + $0x1b0] sm:$0xff]
  %v75 = vld [vmem:[%s0 + $0x1b8] sm:$0xff]
  %v76 = vld [vmem:[%s0 + $0x1c0] sm:$0xff]
  %v77 = vld [vmem:[%s0 + $0x1c8] sm:$0xff]
  %v78 = vld [vmem:[%s0 + $0x1d0] sm:$0xff]
  %v79 = vld [vmem:[%s0 + $0x1d8] sm:$0xff]
  %v80 = vld [vmem:[%s0 + $0x1e0] sm:$0xff]
  %v81 = vld [vmem:[%s0 + $0x1e8] sm:$0xff]
  %v82 = vld [vmem:[%s0 + $0x1f0] sm:$0xff]
  %v83 = vld [vmem:[%s0 + $0x1f8] sm:$0xff]
  %v84 = vld [vmem:[%s1] sm:$0xff]
  %v85 = vld [vmem:[%s1 + $0x8] sm:$0xff]
  %v86 = vld [vmem:[%s1 + $0x10] sm:$0xff]
  %v87 = vld [vmem:[%s1 + $0x18] sm:$0xff]
  %v88 = vld [vmem:[%s1 + $0x20] sm:$0xff]
  %v89 = vld [vmem:[%s1 + $0x28] sm:$0xff]
  %v90 = vld [vmem:[%s1 + $0x30] sm:$0xff]
  %v91 = vld [vmem:[%s1 + $0x38] sm:$0xff]
  %v92 = vld [vmem:[%s1 + $0x40] sm:$0xff]
  %s93 = scalar_lea.vmem %s0, 512
  %v94 = vld [vmem:[%s93] sm:$0xff]
  %v95 = vld [vmem:[%s93 + $0x8] sm:$0xff]
  %v96 = vld [vmem:[%s93 + $0x10] sm:$0xff]
  %v97 = vld [vmem:[%s93 + $0x18] sm:$0xff]
  %v98 = vld [vmem:[%s93 + $0x20] sm:$0xff]
  %v99 = vld [vmem:[%s93 + $0x28] sm:$0xff]
  %v100 = vld [vmem:[%s93 + $0x30] sm:$0xff]
  %v101 = vld [vmem:[%s93 + $0x38] sm:$0xff]
  %v102 = vld [vmem:[%s93 + $0x40] sm:$0xff]
  %v103 = vld [vmem:[%s93 + $0x48] sm:$0xff]
  %v104 = vld [vmem:[%s93 + $0x50] sm:$0xff]
  %v105 = vld [vmem:[%s93 + $0x58] sm:$0xff]
  %v106 = vld [vmem:[%s93 + $0x60] sm:$0xff]
  %v107 = vld [vmem:[%s93 + $0x68] sm:$0xff]
  %v108 = vld [vmem:[%s93 + $0x70] sm:$0xff]
  %v109 = vld [vmem:[%s93 + $0x78] sm:$0xff]
  %v110 = vld [vmem:[%s93 + $0x80] sm:$0xff]
  %v111 = vld [vmem:[%s93 + $0x88] sm:$0xff]
  %v112 = vld [vmem:[%s93 + $0x90] sm:$0xff]
  %v113 = vld [vmem:[%s93 + $0x98] sm:$0xff]
  %v114 = vld [vmem:[%s93 + $0xa0] sm:$0xff]
  %v115 = vld [vmem:[%s93 + $0xa8] sm:$0xff]
  %v116 = vld [vmem:[%s93 + $0xb0] sm:$0xff]
  %v117 = vld [vmem:[%s93 + $0xb8] sm:$0xff]
  %v118 = vld [vmem:[%s93 + $0xc0] sm:$0xff]
  %v119 = vld [vmem:[%s93 + $0xc8] sm:$0xff]
  %v120 = vld [vmem:[%s93 + $0xd0] sm:$0xff]
  %v121 = vld [vmem:[%s93 + $0xd8] sm:$0xff]
  %v122 = vld [vmem:[%s93 + $0xe0] sm:$0xff]
  %v123 = vld [vmem:[%s93 + $0xe8] sm:$0xff]
  %v124 = vld [vmem:[%s93 + $0xf0] sm:$0xff]
  %v125 = vld [vmem:[%s93 + $0xf8] sm:$0xff]
  %v126 = vld [vmem:[%s93 + $0x100] sm:$0xff]
  %v127 = vld [vmem:[%s93 + $0x108] sm:$0xff]
  %v128 = vld [vmem:[%s93 + $0x110] sm:$0xff]
  %v129 = vld [vmem:[%s93 + $0x118] sm:$0xff]
  %v130 = vld [vmem:[%s93 + $0x120] sm:$0xff]
  %v131 = vld [vmem:[%s93 + $0x128] sm:$0xff]
  %v132 = vld [vmem:[%s93 + $0x130] sm:$0xff]
  %v133 = vld [vmem:[%s93 + $0x138] sm:$0xff]
  %v134 = vld [vmem:[%s93 + $0x140] sm:$0xff]
  %v135 = vld [vmem:[%s93 + $0x148] sm:$0xff]
  %v136 = vld [vmem:[%s93 + $0x150] sm:$0xff]
  %v137 = vld [vmem:[%s93 + $0x158] sm:$0xff]
  %v138 = vld [vmem:[%s93 + $0x160] sm:$0xff]
  %v139 = vld [vmem:[%s93 + $0x168] sm:$0xff]
  %v140 = vld [vmem:[%s93 + $0x170] sm:$0xff]
  %v141 = vld [vmem:[%s93 + $0x178] sm:$0xff]
  %v142 = vld [vmem:[%s93 + $0x180] sm:$0xff]
  %v143 = vld [vmem:[%s93 + $0x188] sm:$0xff]
  %v144 = vld [vmem:[%s93 + $0x190] sm:$0xff]
  %v145 = vld [vmem:[%s93 + $0x198] sm:$0xff]
  %v146 = vld [vmem:[%s93 + $0x1a0] sm:$0xff]
  %v147 = vld [vmem:[%s93 + $0x1a8] sm:$0xff]
  %v148 = vld [vmem:[%s93 + $0x1b0] sm:$0xff]
  %v149 = vld [vmem:[%s93 + $0x1b8] sm:$0xff]
  %v150 = vld [vmem:[%s93 + $0x1c0] sm:$0xff]
  %v151 = vld [vmem:[%s93 + $0x1c8] sm:$0xff]
  %v152 = vld [vmem:[%s93 + $0x1d0] sm:$0xff]
  %v153 = vld [vmem:[%s93 + $0x1d8] sm:$0xff]
  %v154 = vld [vmem:[%s93 + $0x1e0] sm:$0xff]
  %v155 = vld [vmem:[%s93 + $0x1e8] sm:$0xff]
  %v156 = vld [vmem:[%s93 + $0x1f0] sm:$0xff]
  %v157 = vld [vmem:[%s93 + $0x1f8] sm:$0xff]
  %s158 = scalar_lea.vmem %s1, 72
  %v159 = vld [vmem:[%s158] sm:$0xff]
  %v160 = vld [vmem:[%s158 + $0x8] sm:$0xff]
  %v161 = vld [vmem:[%s158 + $0x10] sm:$0xff]
  %v162 = vld [vmem:[%s158 + $0x18] sm:$0xff]
  %v163 = vld [vmem:[%s158 + $0x20] sm:$0xff]
  %v164 = vld [vmem:[%s158 + $0x28] sm:$0xff]
  %v165 = vld [vmem:[%s158 + $0x30] sm:$0xff]
  %v166 = vld [vmem:[%s158 + $0x38] sm:$0xff]
  %v167 = vld [vmem:[%s158 + $0x40] sm:$0xff]
  %vm168 = vcmask 588800
  %v170 = vsel %vm168, %v94, 0
  %v173 = vsel %vm168, %v95, 0
  %v176 = vsel %vm168, %v96, 0
  %v179 = vsel %vm168, %v97, 0
  %v182 = vsel %vm168, %v98, 0
  %v185 = vsel %vm168, %v99, 0
  %v188 = vsel %vm168, %v100, 0
  %v191 = vsel %vm168, %v101, 0
  %v194 = vsel %vm168, %v102, 0
  %v197 = vsel %vm168, %v103, 0
  %v200 = vsel %vm168, %v104, 0
  %v203 = vsel %vm168, %v105, 0
  %v206 = vsel %vm168, %v106, 0
  %v209 = vsel %vm168, %v107, 0
  %v212 = vsel %vm168, %v108, 0
  %v215 = vsel %vm168, %v109, 0
  %v218 = vsel %vm168, %v110, 0
  %v221 = vsel %vm168, %v111, 0
  %v224 = vsel %vm168, %v112, 0
  %v227 = vsel %vm168, %v113, 0
  %v230 = vsel %vm168, %v114, 0
  %v233 = vsel %vm168, %v115, 0
  %v236 = vsel %vm168, %v116, 0
  %v239 = vsel %vm168, %v117, 0
  %v242 = vsel %vm168, %v118, 0
  %v245 = vsel %vm168, %v119, 0
  %v248 = vsel %vm168, %v120, 0
  %v251 = vsel %vm168, %v121, 0
  %v254 = vsel %vm168, %v122, 0
  %v257 = vsel %vm168, %v123, 0
  %v260 = vsel %vm168, %v124, 0
  %v263 = vsel %vm168, %v125, 0
  %v266 = vsel %vm168, %v126, 0
  %v269 = vsel %vm168, %v127, 0
  %v272 = vsel %vm168, %v128, 0
  %v275 = vsel %vm168, %v129, 0
  %v278 = vsel %vm168, %v130, 0
  %v281 = vsel %vm168, %v131, 0
  %v284 = vsel %vm168, %v132, 0
  %v287 = vsel %vm168, %v133, 0
  %v290 = vsel %vm168, %v134, 0
  %v293 = vsel %vm168, %v135, 0
  %v296 = vsel %vm168, %v136, 0
  %v299 = vsel %vm168, %v137, 0
  %v302 = vsel %vm168, %v138, 0
  %v305 = vsel %vm168, %v139, 0
  %v308 = vsel %vm168, %v140, 0
  %v311 = vsel %vm168, %v141, 0
  %v314 = vsel %vm168, %v142, 0
  %v317 = vsel %vm168, %v143, 0
  %v320 = vsel %vm168, %v144, 0
  %v323 = vsel %vm168, %v145, 0
  %v326 = vsel %vm168, %v146, 0
  %v329 = vsel %vm168, %v147, 0
  %v332 = vsel %vm168, %v148, 0
  %v335 = vsel %vm168, %v149, 0
  %v338 = vsel %vm168, %v150, 0
  %v341 = vsel %vm168, %v151, 0
  %v344 = vsel %vm168, %v152, 0
  %v347 = vsel %vm168, %v153, 0
  %v350 = vsel %vm168, %v154, 0
  %v353 = vsel %vm168, %v155, 0
  %v356 = vsel %vm168, %v156, 0
  %v359 = vsel %vm168, %v157, 0
  %361 = vmatprep.subr.mxu0 0.0
  %362 = vmatpush1.msra.mxu0 0.0
  %363 = vmatprep.subr.mxu0 0.0
  %364 = vmatpush1.msra.mxu0 0.0
  %365 = vmatprep.subr.mxu0 0.0
  %366 = vmatpush1.msra.mxu0 0.0
  %367 = vmatprep.subr.mxu0 0.0
  %368 = vmatpush1.msra.mxu0 0.0
  %369 = vmatprep.subr.mxu0 0.0
  %370 = vmatpush1.msra.mxu0 0.0
  %371 = vmatprep.subr.mxu0 0.0
  %372 = vmatpush1.msra.mxu0 0.0
  %373 = vmatprep.subr.mxu0 0.0
  %374 = vmatpush1.msra.mxu0 0.0
  %375 = vmatprep.subr.mxu0 0.0
  %376 = vmatpush1.msra.mxu0 %v167
  %377 = vmatprep.subr.mxu0 0.0
  %378 = vmatpush1.msra.mxu0 %v166
  %379 = vmatprep.subr.mxu0 0.0
  %380 = vmatpush1.msra.mxu0 %v165
  %381 = vmatprep.subr.mxu0 0.0
  %382 = vmatpush1.msra.mxu0 %v164
  %383 = vmatprep.subr.mxu0 0.0
  %384 = vmatpush1.msra.mxu0 %v163
  %385 = vmatprep.subr.mxu0 0.0
  %386 = vmatpush1.msra.mxu0 %v162
  %387 = vmatprep.subr.mxu0 0.0
  %388 = vmatpush1.msra.mxu0 %v161
  %389 = vmatprep.subr.mxu0 0.0
  %390 = vmatpush1.msra.mxu0 %v160
  %391 = vmatprep.subr.mxu0 0.0
  %392 = vmatpush1.msra.mxu0 %v159
  %393 = vmatprep.subr.mxu0 0.0
  %394 = vmatpush2.msra.mxu0 0.0
  %395 = vmatprep.subr.mxu0 0.0
  %396 = vmatpush2.msra.mxu0 0.0
  %397 = vmatprep.subr.mxu0 0.0
  %398 = vmatpush2.msra.mxu0 0.0
  %399 = vmatprep.subr.mxu0 0.0
  %400 = vmatpush2.msra.mxu0 0.0
  %401 = vmatprep.subr.mxu0 0.0
  %402 = vmatpush2.msra.mxu0 0.0
  %403 = vmatprep.subr.mxu0 0.0
  %404 = vmatpush2.msra.mxu0 0.0
  %405 = vmatprep.subr.mxu0 0.0
  %406 = vmatpush2.msra.mxu0 0.0
  %407 = vmatprep.subr.mxu0 0.0
  %408 = vmatpush2.msra.mxu0 0.0
  %409 = vmatprep.subr.mxu0 0.0
  %410 = vmatpush2.msra.mxu0 0.0
  %411 = vmatprep.subr.mxu0 0.0
  %412 = vmatpush2.msra.mxu0 0.0
  %413 = vmatprep.subr.mxu0 0.0
  %414 = vmatpush2.msra.mxu0 0.0
  %415 = vmatprep.subr.mxu0 0.0
  %416 = vmatpush2.msra.mxu0 0.0
  %417 = vmatprep.subr.mxu0 0.0
  %418 = vmatpush2.msra.mxu0 0.0
  %419 = vmatprep.subr.mxu0 0.0
  %420 = vmatpush2.msra.mxu0 0.0
  %421 = vmatprep.subr.mxu0 0.0
  %422 = vmatpush2.msra.mxu0 0.0
  %423 = vmatprep.subr.mxu0 0.0
  %424 = vmatpush2.msra.mxu0 0.0
  %425 = vmatprep.mubr.f32.mxu0 0.0
  %426 = vmatmul.mubr.f32.gmra.mxu0 %v170
  %v427 = vpop.f32.mrf.mxu0
  %v428 = vadd.f32 0.0, %v427
  %v429 = vpop.f32.mrf.mxu0
  %430 = vmatprep.mubr.f32.mxu0 0.0
  %431 = vmatmul.mubr.f32.gmra.mxu0 %v173
  %v432 = vpop.f32.mrf.mxu0
  %v433 = vadd.f32 0.0, %v432
  %v434 = vpop.f32.mrf.mxu0
  %435 = vmatprep.mubr.f32.mxu0 0.0
  %436 = vmatmul.mubr.f32.gmra.mxu0 %v176
  %v437 = vpop.f32.mrf.mxu0
  %v438 = vadd.f32 0.0, %v437
  %v439 = vpop.f32.mrf.mxu0
  %440 = vmatprep.mubr.f32.mxu0 0.0
  %441 = vmatmul.mubr.f32.gmra.mxu0 %v179
  %v442 = vpop.f32.mrf.mxu0
  %v443 = vadd.f32 0.0, %v442
  %v444 = vpop.f32.mrf.mxu0
  %445 = vmatprep.mubr.f32.mxu0 0.0
  %446 = vmatmul.mubr.f32.gmra.mxu0 %v182
  %v447 = vpop.f32.mrf.mxu0
  %v448 = vadd.f32 0.0, %v447
  %v449 = vpop.f32.mrf.mxu0
  %450 = vmatprep.mubr.f32.mxu0 0.0
  %451 = vmatmul.mubr.f32.gmra.mxu0 %v185
  %v452 = vpop.f32.mrf.mxu0
  %v453 = vadd.f32 0.0, %v452
  %v454 = vpop.f32.mrf.mxu0
  %455 = vmatprep.mubr.f32.mxu0 0.0
  %456 = vmatmul.mubr.f32.gmra.mxu0 %v188
  %v457 = vpop.f32.mrf.mxu0
  %v458 = vadd.f32 0.0, %v457
  %v459 = vpop.f32.mrf.mxu0
  %460 = vmatprep.mubr.f32.mxu0 0.0
  %461 = vmatmul.mubr.f32.gmra.mxu0 %v191
  %v462 = vpop.f32.mrf.mxu0
  %v463 = vadd.f32 0.0, %v462
  %v464 = vpop.f32.mrf.mxu0
  %465 = vmatprep.mubr.f32.mxu0 0.0
  %466 = vmatmul.mubr.f32.gmra.mxu0 %v194
  %v467 = vpop.f32.mrf.mxu0
  %v468 = vadd.f32 0.0, %v467
  %v469 = vpop.f32.mrf.mxu0
  %470 = vmatprep.mubr.f32.mxu0 0.0
  %471 = vmatmul.mubr.f32.gmra.mxu0 %v197
  %v472 = vpop.f32.mrf.mxu0
  %v473 = vadd.f32 0.0, %v472
  %v474 = vpop.f32.mrf.mxu0
  %475 = vmatprep.mubr.f32.mxu0 0.0
  %476 = vmatmul.mubr.f32.gmra.mxu0 %v200
  %v477 = vpop.f32.mrf.mxu0
  %v478 = vadd.f32 0.0, %v477
  %v479 = vpop.f32.mrf.mxu0
  %480 = vmatprep.mubr.f32.mxu0 0.0
  %481 = vmatmul.mubr.f32.gmra.mxu0 %v203
  %v482 = vpop.f32.mrf.mxu0
  %v483 = vadd.f32 0.0, %v482
  %v484 = vpop.f32.mrf.mxu0
  %485 = vmatprep.mubr.f32.mxu0 0.0
  %486 = vmatmul.mubr.f32.gmra.mxu0 %v206
  %v487 = vpop.f32.mrf.mxu0
  %v488 = vadd.f32 0.0, %v487
  %v489 = vpop.f32.mrf.mxu0
  %490 = vmatprep.mubr.f32.mxu0 0.0
  %491 = vmatmul.mubr.f32.gmra.mxu0 %v209
  %v492 = vpop.f32.mrf.mxu0
  %v493 = vadd.f32 0.0, %v492
  %v494 = vpop.f32.mrf.mxu0
  %495 = vmatprep.mubr.f32.mxu0 0.0
  %496 = vmatmul.mubr.f32.gmra.mxu0 %v212
  %v497 = vpop.f32.mrf.mxu0
  %v498 = vadd.f32 0.0, %v497
  %v499 = vpop.f32.mrf.mxu0
  %500 = vmatprep.mubr.f32.mxu0 0.0
  %501 = vmatmul.mubr.f32.gmra.mxu0 %v215
  %v502 = vpop.f32.mrf.mxu0
  %v503 = vadd.f32 0.0, %v502
  %v504 = vpop.f32.mrf.mxu0
  %505 = vmatprep.mubr.f32.mxu0 0.0
  %506 = vmatmul.mubr.f32.gmra.mxu0 %v218
  %v507 = vpop.f32.mrf.mxu0
  %v508 = vadd.f32 0.0, %v507
  %v509 = vpop.f32.mrf.mxu0
  %510 = vmatprep.mubr.f32.mxu0 0.0
  %511 = vmatmul.mubr.f32.gmra.mxu0 %v221
  %v512 = vpop.f32.mrf.mxu0
  %v513 = vadd.f32 0.0, %v512
  %v514 = vpop.f32.mrf.mxu0
  %515 = vmatprep.mubr.f32.mxu0 0.0
  %516 = vmatmul.mubr.f32.gmra.mxu0 %v224
  %v517 = vpop.f32.mrf.mxu0
  %v518 = vadd.f32 0.0, %v517
  %v519 = vpop.f32.mrf.mxu0
  %520 = vmatprep.mubr.f32.mxu0 0.0
  %521 = vmatmul.mubr.f32.gmra.mxu0 %v227
  %v522 = vpop.f32.mrf.mxu0
  %v523 = vadd.f32 0.0, %v522
  %v524 = vpop.f32.mrf.mxu0
  %525 = vmatprep.mubr.f32.mxu0 0.0
  %526 = vmatmul.mubr.f32.gmra.mxu0 %v230
  %v527 = vpop.f32.mrf.mxu0
  %v528 = vadd.f32 0.0, %v527
  %v529 = vpop.f32.mrf.mxu0
  %530 = vmatprep.mubr.f32.mxu0 0.0
  %531 = vmatmul.mubr.f32.gmra.mxu0 %v233
  %v532 = vpop.f32.mrf.mxu0
  %v533 = vadd.f32 0.0, %v532
  %v534 = vpop.f32.mrf.mxu0
  %535 = vmatprep.mubr.f32.mxu0 0.0
  %536 = vmatmul.mubr.f32.gmra.mxu0 %v236
  %v537 = vpop.f32.mrf.mxu0
  %v538 = vadd.f32 0.0, %v537
  %v539 = vpop.f32.mrf.mxu0
  %540 = vmatprep.mubr.f32.mxu0 0.0
  %541 = vmatmul.mubr.f32.gmra.mxu0 %v239
  %v542 = vpop.f32.mrf.mxu0
  %v543 = vadd.f32 0.0, %v542
  %v544 = vpop.f32.mrf.mxu0
  %545 = vmatprep.mubr.f32.mxu0 0.0
  %546 = vmatmul.mubr.f32.gmra.mxu0 %v242
  %v547 = vpop.f32.mrf.mxu0
  %v548 = vadd.f32 0.0, %v547
  %v549 = vpop.f32.mrf.mxu0
  %550 = vmatprep.mubr.f32.mxu0 0.0
  %551 = vmatmul.mubr.f32.gmra.mxu0 %v245
  %v552 = vpop.f32.mrf.mxu0
  %v553 = vadd.f32 0.0, %v552
  %v554 = vpop.f32.mrf.mxu0
  %555 = vmatprep.mubr.f32.mxu0 0.0
  %556 = vmatmul.mubr.f32.gmra.mxu0 %v248
  %v557 = vpop.f32.mrf.mxu0
  %v558 = vadd.f32 0.0, %v557
  %v559 = vpop.f32.mrf.mxu0
  %560 = vmatprep.mubr.f32.mxu0 0.0
  %561 = vmatmul.mubr.f32.gmra.mxu0 %v251
  %v562 = vpop.f32.mrf.mxu0
  %v563 = vadd.f32 0.0, %v562
  %v564 = vpop.f32.mrf.mxu0
  %565 = vmatprep.mubr.f32.mxu0 0.0
  %566 = vmatmul.mubr.f32.gmra.mxu0 %v254
  %v567 = vpop.f32.mrf.mxu0
  %v568 = vadd.f32 0.0, %v567
  %v569 = vpop.f32.mrf.mxu0
  %570 = vmatprep.mubr.f32.mxu0 0.0
  %571 = vmatmul.mubr.f32.gmra.mxu0 %v257
  %v572 = vpop.f32.mrf.mxu0
  %v573 = vadd.f32 0.0, %v572
  %v574 = vpop.f32.mrf.mxu0
  %575 = vmatprep.mubr.f32.mxu0 0.0
  %576 = vmatmul.mubr.f32.gmra.mxu0 %v260
  %v577 = vpop.f32.mrf.mxu0
  %v578 = vadd.f32 0.0, %v577
  %v579 = vpop.f32.mrf.mxu0
  %580 = vmatprep.mubr.f32.mxu0 0.0
  %581 = vmatmul.mubr.f32.gmra.mxu0 %v263
  %v582 = vpop.f32.mrf.mxu0
  %v583 = vadd.f32 0.0, %v582
  %v584 = vpop.f32.mrf.mxu0
  %585 = vmatprep.mubr.f32.mxu0 0.0
  %586 = vmatmul.mubr.f32.gmra.mxu0 %v266
  %v587 = vpop.f32.mrf.mxu0
  %v588 = vadd.f32 0.0, %v587
  %v589 = vpop.f32.mrf.mxu0
  %590 = vmatprep.mubr.f32.mxu0 0.0
  %591 = vmatmul.mubr.f32.gmra.mxu0 %v269
  %v592 = vpop.f32.mrf.mxu0
  %v593 = vadd.f32 0.0, %v592
  %v594 = vpop.f32.mrf.mxu0
  %595 = vmatprep.mubr.f32.mxu0 0.0
  %596 = vmatmul.mubr.f32.gmra.mxu0 %v272
  %v597 = vpop.f32.mrf.mxu0
  %v598 = vadd.f32 0.0, %v597
  %v599 = vpop.f32.mrf.mxu0
  %600 = vmatprep.mubr.f32.mxu0 0.0
  %601 = vmatmul.mubr.f32.gmra.mxu0 %v275
  %v602 = vpop.f32.mrf.mxu0
  %v603 = vadd.f32 0.0, %v602
  %v604 = vpop.f32.mrf.mxu0
  %605 = vmatprep.mubr.f32.mxu0 0.0
  %606 = vmatmul.mubr.f32.gmra.mxu0 %v278
  %v607 = vpop.f32.mrf.mxu0
  %v608 = vadd.f32 0.0, %v607
  %v609 = vpop.f32.mrf.mxu0
  %610 = vmatprep.mubr.f32.mxu0 0.0
  %611 = vmatmul.mubr.f32.gmra.mxu0 %v281
  %v612 = vpop.f32.mrf.mxu0
  %v613 = vadd.f32 0.0, %v612
  %v614 = vpop.f32.mrf.mxu0
  %615 = vmatprep.mubr.f32.mxu0 0.0
  %616 = vmatmul.mubr.f32.gmra.mxu0 %v284
  %v617 = vpop.f32.mrf.mxu0
  %v618 = vadd.f32 0.0, %v617
  %v619 = vpop.f32.mrf.mxu0
  %620 = vmatprep.mubr.f32.mxu0 0.0
  %621 = vmatmul.mubr.f32.gmra.mxu0 %v287
  %v622 = vpop.f32.mrf.mxu0
  %v623 = vadd.f32 0.0, %v622
  %v624 = vpop.f32.mrf.mxu0
  %625 = vmatprep.mubr.f32.mxu0 0.0
  %626 = vmatmul.mubr.f32.gmra.mxu0 %v290
  %v627 = vpop.f32.mrf.mxu0
  %v628 = vadd.f32 0.0, %v627
  %v629 = vpop.f32.mrf.mxu0
  %630 = vmatprep.mubr.f32.mxu0 0.0
  %631 = vmatmul.mubr.f32.gmra.mxu0 %v293
  %v632 = vpop.f32.mrf.mxu0
  %v633 = vadd.f32 0.0, %v632
  %v634 = vpop.f32.mrf.mxu0
  %635 = vmatprep.mubr.f32.mxu0 0.0
  %636 = vmatmul.mubr.f32.gmra.mxu0 %v296
  %v637 = vpop.f32.mrf.mxu0
  %v638 = vadd.f32 0.0, %v637
  %v639 = vpop.f32.mrf.mxu0
  %640 = vmatprep.mubr.f32.mxu0 0.0
  %641 = vmatmul.mubr.f32.gmra.mxu0 %v299
  %v642 = vpop.f32.mrf.mxu0
  %v643 = vadd.f32 0.0, %v642
  %v644 = vpop.f32.mrf.mxu0
  %645 = vmatprep.mubr.f32.mxu0 0.0
  %646 = vmatmul.mubr.f32.gmra.mxu0 %v302
  %v647 = vpop.f32.mrf.mxu0
  %v648 = vadd.f32 0.0, %v647
  %v649 = vpop.f32.mrf.mxu0
  %650 = vmatprep.mubr.f32.mxu0 0.0
  %651 = vmatmul.mubr.f32.gmra.mxu0 %v305
  %v652 = vpop.f32.mrf.mxu0
  %v653 = vadd.f32 0.0, %v652
  %v654 = vpop.f32.mrf.mxu0
  %655 = vmatprep.mubr.f32.mxu0 0.0
  %656 = vmatmul.mubr.f32.gmra.mxu0 %v308
  %v657 = vpop.f32.mrf.mxu0
  %v658 = vadd.f32 0.0, %v657
  %v659 = vpop.f32.mrf.mxu0
  %660 = vmatprep.mubr.f32.mxu0 0.0
  %661 = vmatmul.mubr.f32.gmra.mxu0 %v311
  %v662 = vpop.f32.mrf.mxu0
  %v663 = vadd.f32 0.0, %v662
  %v664 = vpop.f32.mrf.mxu0
  %665 = vmatprep.mubr.f32.mxu0 0.0
  %666 = vmatmul.mubr.f32.gmra.mxu0 %v314
  %v667 = vpop.f32.mrf.mxu0
  %v668 = vadd.f32 0.0, %v667
  %v669 = vpop.f32.mrf.mxu0
  %670 = vmatprep.mubr.f32.mxu0 0.0
  %671 = vmatmul.mubr.f32.gmra.mxu0 %v317
  %v672 = vpop.f32.mrf.mxu0
  %v673 = vadd.f32 0.0, %v672
  %v674 = vpop.f32.mrf.mxu0
  %675 = vmatprep.mubr.f32.mxu0 0.0
  %676 = vmatmul.mubr.f32.gmra.mxu0 %v320
  %v677 = vpop.f32.mrf.mxu0
  %v678 = vadd.f32 0.0, %v677
  %v679 = vpop.f32.mrf.mxu0
  %680 = vmatprep.mubr.f32.mxu0 0.0
  %681 = vmatmul.mubr.f32.gmra.mxu0 %v323
  %v682 = vpop.f32.mrf.mxu0
  %v683 = vadd.f32 0.0, %v682
  %v684 = vpop.f32.mrf.mxu0
  %685 = vmatprep.mubr.f32.mxu0 0.0
  %686 = vmatmul.mubr.f32.gmra.mxu0 %v326
  %v687 = vpop.f32.mrf.mxu0
  %v688 = vadd.f32 0.0, %v687
  %v689 = vpop.f32.mrf.mxu0
  %690 = vmatprep.mubr.f32.mxu0 0.0
  %691 = vmatmul.mubr.f32.gmra.mxu0 %v329
  %v692 = vpop.f32.mrf.mxu0
  %v693 = vadd.f32 0.0, %v692
  %v694 = vpop.f32.mrf.mxu0
  %695 = vmatprep.mubr.f32.mxu0 0.0
  %696 = vmatmul.mubr.f32.gmra.mxu0 %v332
  %v697 = vpop.f32.mrf.mxu0
  %v698 = vadd.f32 0.0, %v697
  %v699 = vpop.f32.mrf.mxu0
  %700 = vmatprep.mubr.f32.mxu0 0.0
  %701 = vmatmul.mubr.f32.gmra.mxu0 %v335
  %v702 = vpop.f32.mrf.mxu0
  %v703 = vadd.f32 0.0, %v702
  %v704 = vpop.f32.mrf.mxu0
  %705 = vmatprep.mubr.f32.mxu0 0.0
  %706 = vmatmul.mubr.f32.gmra.mxu0 %v338
  %v707 = vpop.f32.mrf.mxu0
  %v708 = vadd.f32 0.0, %v707
  %v709 = vpop.f32.mrf.mxu0
  %710 = vmatprep.mubr.f32.mxu0 0.0
  %711 = vmatmul.mubr.f32.gmra.mxu0 %v341
  %v712 = vpop.f32.mrf.mxu0
  %v713 = vadd.f32 0.0, %v712
  %v714 = vpop.f32.mrf.mxu0
  %715 = vmatprep.mubr.f32.mxu0 0.0
  %716 = vmatmul.mubr.f32.gmra.mxu0 %v344
  %v717 = vpop.f32.mrf.mxu0
  %v718 = vadd.f32 0.0, %v717
  %v719 = vpop.f32.mrf.mxu0
  %720 = vmatprep.mubr.f32.mxu0 0.0
  %721 = vmatmul.mubr.f32.gmra.mxu0 %v347
  %v722 = vpop.f32.mrf.mxu0
  %v723 = vadd.f32 0.0, %v722
  %v724 = vpop.f32.mrf.mxu0
  %725 = vmatprep.mubr.f32.mxu0 0.0
  %726 = vmatmul.mubr.f32.gmra.mxu0 %v350
  %v727 = vpop.f32.mrf.mxu0
  %v728 = vadd.f32 0.0, %v727
  %v729 = vpop.f32.mrf.mxu0
  %730 = vmatprep.mubr.f32.mxu0 0.0
  %731 = vmatmul.mubr.f32.gmra.mxu0 %v353
  %v732 = vpop.f32.mrf.mxu0
  %v733 = vadd.f32 0.0, %v732
  %v734 = vpop.f32.mrf.mxu0
  %735 = vmatprep.mubr.f32.mxu0 0.0
  %736 = vmatmul.mubr.f32.gmra.mxu0 %v356
  %v737 = vpop.f32.mrf.mxu0
  %v738 = vadd.f32 0.0, %v737
  %v739 = vpop.f32.mrf.mxu0
  %740 = vmatprep.mubr.f32.mxu0 0.0
  %741 = vmatmul.mubr.f32.gmra.mxu0 %v359
  %v742 = vpop.f32.mrf.mxu0
  %v743 = vadd.f32 0.0, %v742
  %v744 = vpop.f32.mrf.mxu0
  %745 = vdwg.mxu0
  %v747 = vsel %vm168, %v20, 0
  %v750 = vsel %vm168, %v21, 0
  %v753 = vsel %vm168, %v22, 0
  %v756 = vsel %vm168, %v23, 0
  %v759 = vsel %vm168, %v24, 0
  %v762 = vsel %vm168, %v25, 0
  %v765 = vsel %vm168, %v26, 0
  %v768 = vsel %vm168, %v27, 0
  %v771 = vsel %vm168, %v28, 0
  %v774 = vsel %vm168, %v29, 0
  %v777 = vsel %vm168, %v30, 0
  %v780 = vsel %vm168, %v31, 0
  %v783 = vsel %vm168, %v32, 0
  %v786 = vsel %vm168, %v33, 0
  %v789 = vsel %vm168, %v34, 0
  %v792 = vsel %vm168, %v35, 0
  %v795 = vsel %vm168, %v36, 0
  %v798 = vsel %vm168, %v37, 0
  %v801 = vsel %vm168, %v38, 0
  %v804 = vsel %vm168, %v39, 0
  %v807 = vsel %vm168, %v40, 0
  %v810 = vsel %vm168, %v41, 0
  %v813 = vsel %vm168, %v42, 0
  %v816 = vsel %vm168, %v43, 0
  %v819 = vsel %vm168, %v44, 0
  %v822 = vsel %vm168, %v45, 0
  %v825 = vsel %vm168, %v46, 0
  %v828 = vsel %vm168, %v47, 0
  %v831 = vsel %vm168, %v48, 0
  %v834 = vsel %vm168, %v49, 0
  %v837 = vsel %vm168, %v50, 0
  %v840 = vsel %vm168, %v51, 0
  %v843 = vsel %vm168, %v52, 0
  %v846 = vsel %vm168, %v53, 0
  %v849 = vsel %vm168, %v54, 0
  %v852 = vsel %vm168, %v55, 0
  %v855 = vsel %vm168, %v56, 0
  %v858 = vsel %vm168, %v57, 0
  %v861 = vsel %vm168, %v58, 0
  %v864 = vsel %vm168, %v59, 0
  %v867 = vsel %vm168, %v60, 0
  %v870 = vsel %vm168, %v61, 0
  %v873 = vsel %vm168, %v62, 0
  %v876 = vsel %vm168, %v63, 0
  %v879 = vsel %vm168, %v64, 0
  %v882 = vsel %vm168, %v65, 0
  %v885 = vsel %vm168, %v66, 0
  %v888 = vsel %vm168, %v67, 0
  %v891 = vsel %vm168, %v68, 0
  %v894 = vsel %vm168, %v69, 0
  %v897 = vsel %vm168, %v70, 0
  %v900 = vsel %vm168, %v71, 0
  %v903 = vsel %vm168, %v72, 0
  %v906 = vsel %vm168, %v73, 0
  %v909 = vsel %vm168, %v74, 0
  %v912 = vsel %vm168, %v75, 0
  %v915 = vsel %vm168, %v76, 0
  %v918 = vsel %vm168, %v77, 0
  %v921 = vsel %vm168, %v78, 0
  %v924 = vsel %vm168, %v79, 0
  %v927 = vsel %vm168, %v80, 0
  %v930 = vsel %vm168, %v81, 0
  %v933 = vsel %vm168, %v82, 0
  %v936 = vsel %vm168, %v83, 0
  %938 = vmatprep.subr.mxu0 0.0
  %939 = vmatpush1.msra.mxu0 0.0
  %940 = vmatprep.subr.mxu0 0.0
  %941 = vmatpush1.msra.mxu0 0.0
  %942 = vmatprep.subr.mxu0 0.0
  %943 = vmatpush1.msra.mxu0 0.0
  %944 = vmatprep.subr.mxu0 0.0
  %945 = vmatpush1.msra.mxu0 0.0
  %946 = vmatprep.subr.mxu0 0.0
  %947 = vmatpush1.msra.mxu0 0.0
  %948 = vmatprep.subr.mxu0 0.0
  %949 = vmatpush1.msra.mxu0 0.0
  %950 = vmatprep.subr.mxu0 0.0
  %951 = vmatpush1.msra.mxu0 0.0
  %952 = vmatprep.subr.mxu0 0.0
  %953 = vmatpush1.msra.mxu0 %v92
  %954 = vmatprep.subr.mxu0 0.0
  %955 = vmatpush1.msra.mxu0 %v91
  %956 = vmatprep.subr.mxu0 0.0
  %957 = vmatpush1.msra.mxu0 %v90
  %958 = vmatprep.subr.mxu0 0.0
  %959 = vmatpush1.msra.mxu0 %v89
  %960 = vmatprep.subr.mxu0 0.0
  %961 = vmatpush1.msra.mxu0 %v88
  %962 = vmatprep.subr.mxu0 0.0
  %963 = vmatpush1.msra.mxu0 %v87
  %964 = vmatprep.subr.mxu0 0.0
  %965 = vmatpush1.msra.mxu0 %v86
  %966 = vmatprep.subr.mxu0 0.0
  %967 = vmatpush1.msra.mxu0 %v85
  %968 = vmatprep.subr.mxu0 0.0
  %969 = vmatpush1.msra.mxu0 %v84
  %970 = vmatprep.subr.mxu0 0.0
  %971 = vmatpush2.msra.mxu0 0.0
  %972 = vmatprep.subr.mxu0 0.0
  %973 = vmatpush2.msra.mxu0 0.0
  %974 = vmatprep.subr.mxu0 0.0
  %975 = vmatpush2.msra.mxu0 0.0
  %976 = vmatprep.subr.mxu0 0.0
  %977 = vmatpush2.msra.mxu0 0.0
  %978 = vmatprep.subr.mxu0 0.0
  %979 = vmatpush2.msra.mxu0 0.0
  %980 = vmatprep.subr.mxu0 0.0
  %981 = vmatpush2.msra.mxu0 0.0
  %982 = vmatprep.subr.mxu0 0.0
  %983 = vmatpush2.msra.mxu0 0.0
  %984 = vmatprep.subr.mxu0 0.0
  %985 = vmatpush2.msra.mxu0 0.0
  %986 = vmatprep.subr.mxu0 0.0
  %987 = vmatpush2.msra.mxu0 0.0
  %988 = vmatprep.subr.mxu0 0.0
  %989 = vmatpush2.msra.mxu0 0.0
  %990 = vmatprep.subr.mxu0 0.0
  %991 = vmatpush2.msra.mxu0 0.0
  %992 = vmatprep.subr.mxu0 0.0
  %993 = vmatpush2.msra.mxu0 0.0
  %994 = vmatprep.subr.mxu0 0.0
  %995 = vmatpush2.msra.mxu0 0.0
  %996 = vmatprep.subr.mxu0 0.0
  %997 = vmatpush2.msra.mxu0 0.0
  %998 = vmatprep.subr.mxu0 0.0
  %999 = vmatpush2.msra.mxu0 0.0
  %1000 = vmatprep.subr.mxu0 0.0
  %1001 = vmatpush2.msra.mxu0 0.0
  %1002 = vmatprep.mubr.f32.mxu0 0.0
  %1003 = vmatmul.mubr.f32.gmra.mxu0 %v747
  %v1004 = vpop.f32.mrf.mxu0
  %v1005 = vadd.f32 %v428, %v1004
  %v1006 = vpop.f32.mrf.mxu0
  %1007 = vmatprep.mubr.f32.mxu0 0.0
  %1008 = vmatmul.mubr.f32.gmra.mxu0 %v750
  %v1009 = vpop.f32.mrf.mxu0
  %v1010 = vadd.f32 %v433, %v1009
  %v1011 = vpop.f32.mrf.mxu0
  %1012 = vmatprep.mubr.f32.mxu0 0.0
  %1013 = vmatmul.mubr.f32.gmra.mxu0 %v753
  %v1014 = vpop.f32.mrf.mxu0
  %v1015 = vadd.f32 %v438, %v1014
  %v1016 = vpop.f32.mrf.mxu0
  %1017 = vmatprep.mubr.f32.mxu0 0.0
  %1018 = vmatmul.mubr.f32.gmra.mxu0 %v756
  %v1019 = vpop.f32.mrf.mxu0
  %v1020 = vadd.f32 %v443, %v1019
  %v1021 = vpop.f32.mrf.mxu0
  %1022 = vmatprep.mubr.f32.mxu0 0.0
  %1023 = vmatmul.mubr.f32.gmra.mxu0 %v759
  %v1024 = vpop.f32.mrf.mxu0
  %v1025 = vadd.f32 %v448, %v1024
  %v1026 = vpop.f32.mrf.mxu0
  %1027 = vmatprep.mubr.f32.mxu0 0.0
  %1028 = vmatmul.mubr.f32.gmra.mxu0 %v762
  %v1029 = vpop.f32.mrf.mxu0
  %v1030 = vadd.f32 %v453, %v1029
  %v1031 = vpop.f32.mrf.mxu0
  %1032 = vmatprep.mubr.f32.mxu0 0.0
  %1033 = vmatmul.mubr.f32.gmra.mxu0 %v765
  %v1034 = vpop.f32.mrf.mxu0
  %v1035 = vadd.f32 %v458, %v1034
  %v1036 = vpop.f32.mrf.mxu0
  %1037 = vmatprep.mubr.f32.mxu0 0.0
  %1038 = vmatmul.mubr.f32.gmra.mxu0 %v768
  %v1039 = vpop.f32.mrf.mxu0
  %v1040 = vadd.f32 %v463, %v1039
  %v1041 = vpop.f32.mrf.mxu0
  %1042 = vmatprep.mubr.f32.mxu0 0.0
  %1043 = vmatmul.mubr.f32.gmra.mxu0 %v771
  %v1044 = vpop.f32.mrf.mxu0
  %v1045 = vadd.f32 %v468, %v1044
  %v1046 = vpop.f32.mrf.mxu0
  %1047 = vmatprep.mubr.f32.mxu0 0.0
  %1048 = vmatmul.mubr.f32.gmra.mxu0 %v774
  %v1049 = vpop.f32.mrf.mxu0
  %v1050 = vadd.f32 %v473, %v1049
  %v1051 = vpop.f32.mrf.mxu0
  %1052 = vmatprep.mubr.f32.mxu0 0.0
  %1053 = vmatmul.mubr.f32.gmra.mxu0 %v777
  %v1054 = vpop.f32.mrf.mxu0
  %v1055 = vadd.f32 %v478, %v1054
  %v1056 = vpop.f32.mrf.mxu0
  %1057 = vmatprep.mubr.f32.mxu0 0.0
  %1058 = vmatmul.mubr.f32.gmra.mxu0 %v780
  %v1059 = vpop.f32.mrf.mxu0
  %v1060 = vadd.f32 %v483, %v1059
  %v1061 = vpop.f32.mrf.mxu0
  %1062 = vmatprep.mubr.f32.mxu0 0.0
  %1063 = vmatmul.mubr.f32.gmra.mxu0 %v783
  %v1064 = vpop.f32.mrf.mxu0
  %v1065 = vadd.f32 %v488, %v1064
  %v1066 = vpop.f32.mrf.mxu0
  %1067 = vmatprep.mubr.f32.mxu0 0.0
  %1068 = vmatmul.mubr.f32.gmra.mxu0 %v786
  %v1069 = vpop.f32.mrf.mxu0
  %v1070 = vadd.f32 %v493, %v1069
  %v1071 = vpop.f32.mrf.mxu0
  %1072 = vmatprep.mubr.f32.mxu0 0.0
  %1073 = vmatmul.mubr.f32.gmra.mxu0 %v789
  %v1074 = vpop.f32.mrf.mxu0
  %v1075 = vadd.f32 %v498, %v1074
  %v1076 = vpop.f32.mrf.mxu0
  %1077 = vmatprep.mubr.f32.mxu0 0.0
  %1078 = vmatmul.mubr.f32.gmra.mxu0 %v792
  %v1079 = vpop.f32.mrf.mxu0
  %v1080 = vadd.f32 %v503, %v1079
  %v1081 = vpop.f32.mrf.mxu0
  %1082 = vmatprep.mubr.f32.mxu0 0.0
  %1083 = vmatmul.mubr.f32.gmra.mxu0 %v795
  %v1084 = vpop.f32.mrf.mxu0
  %v1085 = vadd.f32 %v508, %v1084
  %v1086 = vpop.f32.mrf.mxu0
  %1087 = vmatprep.mubr.f32.mxu0 0.0
  %1088 = vmatmul.mubr.f32.gmra.mxu0 %v798
  %v1089 = vpop.f32.mrf.mxu0
  %v1090 = vadd.f32 %v513, %v1089
  %v1091 = vpop.f32.mrf.mxu0
  %1092 = vmatprep.mubr.f32.mxu0 0.0
  %1093 = vmatmul.mubr.f32.gmra.mxu0 %v801
  %v1094 = vpop.f32.mrf.mxu0
  %v1095 = vadd.f32 %v518, %v1094
  %v1096 = vpop.f32.mrf.mxu0
  %1097 = vmatprep.mubr.f32.mxu0 0.0
  %1098 = vmatmul.mubr.f32.gmra.mxu0 %v804
  %v1099 = vpop.f32.mrf.mxu0
  %v1100 = vadd.f32 %v523, %v1099
  %v1101 = vpop.f32.mrf.mxu0
  %1102 = vmatprep.mubr.f32.mxu0 0.0
  %1103 = vmatmul.mubr.f32.gmra.mxu0 %v807
  %v1104 = vpop.f32.mrf.mxu0
  %v1105 = vadd.f32 %v528, %v1104
  %v1106 = vpop.f32.mrf.mxu0
  %1107 = vmatprep.mubr.f32.mxu0 0.0
  %1108 = vmatmul.mubr.f32.gmra.mxu0 %v810
  %v1109 = vpop.f32.mrf.mxu0
  %v1110 = vadd.f32 %v533, %v1109
  %v1111 = vpop.f32.mrf.mxu0
  %1112 = vmatprep.mubr.f32.mxu0 0.0
  %1113 = vmatmul.mubr.f32.gmra.mxu0 %v813
  %v1114 = vpop.f32.mrf.mxu0
  %v1115 = vadd.f32 %v538, %v1114
  %v1116 = vpop.f32.mrf.mxu0
  %1117 = vmatprep.mubr.f32.mxu0 0.0
  %1118 = vmatmul.mubr.f32.gmra.mxu0 %v816
  %v1119 = vpop.f32.mrf.mxu0
  %v1120 = vadd.f32 %v543, %v1119
  %v1121 = vpop.f32.mrf.mxu0
  %1122 = vmatprep.mubr.f32.mxu0 0.0
  %1123 = vmatmul.mubr.f32.gmra.mxu0 %v819
  %v1124 = vpop.f32.mrf.mxu0
  %v1125 = vadd.f32 %v548, %v1124
  %v1126 = vpop.f32.mrf.mxu0
  %1127 = vmatprep.mubr.f32.mxu0 0.0
  %1128 = vmatmul.mubr.f32.gmra.mxu0 %v822
  %v1129 = vpop.f32.mrf.mxu0
  %v1130 = vadd.f32 %v553, %v1129
  %v1131 = vpop.f32.mrf.mxu0
  %1132 = vmatprep.mubr.f32.mxu0 0.0
  %1133 = vmatmul.mubr.f32.gmra.mxu0 %v825
  %v1134 = vpop.f32.mrf.mxu0
  %v1135 = vadd.f32 %v558, %v1134
  %v1136 = vpop.f32.mrf.mxu0
  %1137 = vmatprep.mubr.f32.mxu0 0.0
  %1138 = vmatmul.mubr.f32.gmra.mxu0 %v828
  %v1139 = vpop.f32.mrf.mxu0
  %v1140 = vadd.f32 %v563, %v1139
  %v1141 = vpop.f32.mrf.mxu0
  %1142 = vmatprep.mubr.f32.mxu0 0.0
  %1143 = vmatmul.mubr.f32.gmra.mxu0 %v831
  %v1144 = vpop.f32.mrf.mxu0
  %v1145 = vadd.f32 %v568, %v1144
  %v1146 = vpop.f32.mrf.mxu0
  %1147 = vmatprep.mubr.f32.mxu0 0.0
  %1148 = vmatmul.mubr.f32.gmra.mxu0 %v834
  %v1149 = vpop.f32.mrf.mxu0
  %v1150 = vadd.f32 %v573, %v1149
  %v1151 = vpop.f32.mrf.mxu0
  %1152 = vmatprep.mubr.f32.mxu0 0.0
  %1153 = vmatmul.mubr.f32.gmra.mxu0 %v837
  %v1154 = vpop.f32.mrf.mxu0
  %v1155 = vadd.f32 %v578, %v1154
  %v1156 = vpop.f32.mrf.mxu0
  %1157 = vmatprep.mubr.f32.mxu0 0.0
  %1158 = vmatmul.mubr.f32.gmra.mxu0 %v840
  %v1159 = vpop.f32.mrf.mxu0
  %v1160 = vadd.f32 %v583, %v1159
  %v1161 = vpop.f32.mrf.mxu0
  %1162 = vmatprep.mubr.f32.mxu0 0.0
  %1163 = vmatmul.mubr.f32.gmra.mxu0 %v843
  %v1164 = vpop.f32.mrf.mxu0
  %v1165 = vadd.f32 %v588, %v1164
  %v1166 = vpop.f32.mrf.mxu0
  %1167 = vmatprep.mubr.f32.mxu0 0.0
  %1168 = vmatmul.mubr.f32.gmra.mxu0 %v846
  %v1169 = vpop.f32.mrf.mxu0
  %v1170 = vadd.f32 %v593, %v1169
  %v1171 = vpop.f32.mrf.mxu0
  %1172 = vmatprep.mubr.f32.mxu0 0.0
  %1173 = vmatmul.mubr.f32.gmra.mxu0 %v849
  %v1174 = vpop.f32.mrf.mxu0
  %v1175 = vadd.f32 %v598, %v1174
  %v1176 = vpop.f32.mrf.mxu0
  %1177 = vmatprep.mubr.f32.mxu0 0.0
  %1178 = vmatmul.mubr.f32.gmra.mxu0 %v852
  %v1179 = vpop.f32.mrf.mxu0
  %v1180 = vadd.f32 %v603, %v1179
  %v1181 = vpop.f32.mrf.mxu0
  %1182 = vmatprep.mubr.f32.mxu0 0.0
  %1183 = vmatmul.mubr.f32.gmra.mxu0 %v855
  %v1184 = vpop.f32.mrf.mxu0
  %v1185 = vadd.f32 %v608, %v1184
  %v1186 = vpop.f32.mrf.mxu0
  %1187 = vmatprep.mubr.f32.mxu0 0.0
  %1188 = vmatmul.mubr.f32.gmra.mxu0 %v858
  %v1189 = vpop.f32.mrf.mxu0
  %v1190 = vadd.f32 %v613, %v1189
  %v1191 = vpop.f32.mrf.mxu0
  %1192 = vmatprep.mubr.f32.mxu0 0.0
  %1193 = vmatmul.mubr.f32.gmra.mxu0 %v861
  %v1194 = vpop.f32.mrf.mxu0
  %v1195 = vadd.f32 %v618, %v1194
  %v1196 = vpop.f32.mrf.mxu0
  %1197 = vmatprep.mubr.f32.mxu0 0.0
  %1198 = vmatmul.mubr.f32.gmra.mxu0 %v864
  %v1199 = vpop.f32.mrf.mxu0
  %v1200 = vadd.f32 %v623, %v1199
  %v1201 = vpop.f32.mrf.mxu0
  %1202 = vmatprep.mubr.f32.mxu0 0.0
  %1203 = vmatmul.mubr.f32.gmra.mxu0 %v867
  %v1204 = vpop.f32.mrf.mxu0
  %v1205 = vadd.f32 %v628, %v1204
  %v1206 = vpop.f32.mrf.mxu0
  %1207 = vmatprep.mubr.f32.mxu0 0.0
  %1208 = vmatmul.mubr.f32.gmra.mxu0 %v870
  %v1209 = vpop.f32.mrf.mxu0
  %v1210 = vadd.f32 %v633, %v1209
  %v1211 = vpop.f32.mrf.mxu0
  %1212 = vmatprep.mubr.f32.mxu0 0.0
  %1213 = vmatmul.mubr.f32.gmra.mxu0 %v873
  %v1214 = vpop.f32.mrf.mxu0
  %v1215 = vadd.f32 %v638, %v1214
  %v1216 = vpop.f32.mrf.mxu0
  %1217 = vmatprep.mubr.f32.mxu0 0.0
  %1218 = vmatmul.mubr.f32.gmra.mxu0 %v876
  %v1219 = vpop.f32.mrf.mxu0
  %v1220 = vadd.f32 %v643, %v1219
  %v1221 = vpop.f32.mrf.mxu0
  %1222 = vmatprep.mubr.f32.mxu0 0.0
  %1223 = vmatmul.mubr.f32.gmra.mxu0 %v879
  %v1224 = vpop.f32.mrf.mxu0
  %v1225 = vadd.f32 %v648, %v1224
  %v1226 = vpop.f32.mrf.mxu0
  %1227 = vmatprep.mubr.f32.mxu0 0.0
  %1228 = vmatmul.mubr.f32.gmra.mxu0 %v882
  %v1229 = vpop.f32.mrf.mxu0
  %v1230 = vadd.f32 %v653, %v1229
  %v1231 = vpop.f32.mrf.mxu0
  %1232 = vmatprep.mubr.f32.mxu0 0.0
  %1233 = vmatmul.mubr.f32.gmra.mxu0 %v885
  %v1234 = vpop.f32.mrf.mxu0
  %v1235 = vadd.f32 %v658, %v1234
  %v1236 = vpop.f32.mrf.mxu0
  %1237 = vmatprep.mubr.f32.mxu0 0.0
  %1238 = vmatmul.mubr.f32.gmra.mxu0 %v888
  %v1239 = vpop.f32.mrf.mxu0
  %v1240 = vadd.f32 %v663, %v1239
  %v1241 = vpop.f32.mrf.mxu0
  %1242 = vmatprep.mubr.f32.mxu0 0.0
  %1243 = vmatmul.mubr.f32.gmra.mxu0 %v891
  %v1244 = vpop.f32.mrf.mxu0
  %v1245 = vadd.f32 %v668, %v1244
  %v1246 = vpop.f32.mrf.mxu0
  %1247 = vmatprep.mubr.f32.mxu0 0.0
  %1248 = vmatmul.mubr.f32.gmra.mxu0 %v894
  %v1249 = vpop.f32.mrf.mxu0
  %v1250 = vadd.f32 %v673, %v1249
  %v1251 = vpop.f32.mrf.mxu0
  %1252 = vmatprep.mubr.f32.mxu0 0.0
  %1253 = vmatmul.mubr.f32.gmra.mxu0 %v897
  %v1254 = vpop.f32.mrf.mxu0
  %v1255 = vadd.f32 %v678, %v1254
  %v1256 = vpop.f32.mrf.mxu0
  %1257 = vmatprep.mubr.f32.mxu0 0.0
  %1258 = vmatmul.mubr.f32.gmra.mxu0 %v900
  %v1259 = vpop.f32.mrf.mxu0
  %v1260 = vadd.f32 %v683, %v1259
  %v1261 = vpop.f32.mrf.mxu0
  %1262 = vmatprep.mubr.f32.mxu0 0.0
  %1263 = vmatmul.mubr.f32.gmra.mxu0 %v903
  %v1264 = vpop.f32.mrf.mxu0
  %v1265 = vadd.f32 %v688, %v1264
  %v1266 = vpop.f32.mrf.mxu0
  %1267 = vmatprep.mubr.f32.mxu0 0.0
  %1268 = vmatmul.mubr.f32.gmra.mxu0 %v906
  %v1269 = vpop.f32.mrf.mxu0
  %v1270 = vadd.f32 %v693, %v1269
  %v1271 = vpop.f32.mrf.mxu0
  %1272 = vmatprep.mubr.f32.mxu0 0.0
  %1273 = vmatmul.mubr.f32.gmra.mxu0 %v909
  %v1274 = vpop.f32.mrf.mxu0
  %v1275 = vadd.f32 %v698, %v1274
  %v1276 = vpop.f32.mrf.mxu0
  %1277 = vmatprep.mubr.f32.mxu0 0.0
  %1278 = vmatmul.mubr.f32.gmra.mxu0 %v912
  %v1279 = vpop.f32.mrf.mxu0
  %v1280 = vadd.f32 %v703, %v1279
  %v1281 = vpop.f32.mrf.mxu0
  %1282 = vmatprep.mubr.f32.mxu0 0.0
  %1283 = vmatmul.mubr.f32.gmra.mxu0 %v915
  %v1284 = vpop.f32.mrf.mxu0
  %v1285 = vadd.f32 %v708, %v1284
  %v1286 = vpop.f32.mrf.mxu0
  %1287 = vmatprep.mubr.f32.mxu0 0.0
  %1288 = vmatmul.mubr.f32.gmra.mxu0 %v918
  %v1289 = vpop.f32.mrf.mxu0
  %v1290 = vadd.f32 %v713, %v1289
  %v1291 = vpop.f32.mrf.mxu0
  %1292 = vmatprep.mubr.f32.mxu0 0.0
  %1293 = vmatmul.mubr.f32.gmra.mxu0 %v921
  %v1294 = vpop.f32.mrf.mxu0
  %v1295 = vadd.f32 %v718, %v1294
  %v1296 = vpop.f32.mrf.mxu0
  %1297 = vmatprep.mubr.f32.mxu0 0.0
  %1298 = vmatmul.mubr.f32.gmra.mxu0 %v924
  %v1299 = vpop.f32.mrf.mxu0
  %v1300 = vadd.f32 %v723, %v1299
  %v1301 = vpop.f32.mrf.mxu0
  %1302 = vmatprep.mubr.f32.mxu0 0.0
  %1303 = vmatmul.mubr.f32.gmra.mxu0 %v927
  %v1304 = vpop.f32.mrf.mxu0
  %v1305 = vadd.f32 %v728, %v1304
  %v1306 = vpop.f32.mrf.mxu0
  %1307 = vmatprep.mubr.f32.mxu0 0.0
  %1308 = vmatmul.mubr.f32.gmra.mxu0 %v930
  %v1309 = vpop.f32.mrf.mxu0
  %v1310 = vadd.f32 %v733, %v1309
  %v1311 = vpop.f32.mrf.mxu0
  %1312 = vmatprep.mubr.f32.mxu0 0.0
  %1313 = vmatmul.mubr.f32.gmra.mxu0 %v933
  %v1314 = vpop.f32.mrf.mxu0
  %v1315 = vadd.f32 %v738, %v1314
  %v1316 = vpop.f32.mrf.mxu0
  %1317 = vmatprep.mubr.f32.mxu0 0.0
  %1318 = vmatmul.mubr.f32.gmra.mxu0 %v936
  %v1319 = vpop.f32.mrf.mxu0
  %v1320 = vadd.f32 %v743, %v1319
  %v1321 = vpop.f32.mrf.mxu0
  %1322 = vdwg.mxu0
  %s1323 = scalar_lea.vmem %s0, 1024
  %v1324 = vld [vmem:[%s1323] sm:$0xff]
  %v1325 = vld [vmem:[%s1323 + $0x8] sm:$0xff]
  %v1326 = vld [vmem:[%s1323 + $0x10] sm:$0xff]
  %v1327 = vld [vmem:[%s1323 + $0x18] sm:$0xff]
  %v1328 = vld [vmem:[%s1323 + $0x20] sm:$0xff]
  %v1329 = vld [vmem:[%s1323 + $0x28] sm:$0xff]
  %v1330 = vld [vmem:[%s1323 + $0x30] sm:$0xff]
  %v1331 = vld [vmem:[%s1323 + $0x38] sm:$0xff]
  %v1332 = vld [vmem:[%s1323 + $0x40] sm:$0xff]
  %v1333 = vld [vmem:[%s1323 + $0x48] sm:$0xff]
  %v1334 = vld [vmem:[%s1323 + $0x50] sm:$0xff]
  %v1335 = vld [vmem:[%s1323 + $0x58] sm:$0xff]
  %v1336 = vld [vmem:[%s1323 + $0x60] sm:$0xff]
  %v1337 = vld [vmem:[%s1323 + $0x68] sm:$0xff]
  %v1338 = vld [vmem:[%s1323 + $0x70] sm:$0xff]
  %v1339 = vld [vmem:[%s1323 + $0x78] sm:$0xff]
  %v1340 = vld [vmem:[%s1323 + $0x80] sm:$0xff]
  %v1341 = vld [vmem:[%s1323 + $0x88] sm:$0xff]
  %v1342 = vld [vmem:[%s1323 + $0x90] sm:$0xff]
  %v1343 = vld [vmem:[%s1323 + $0x98] sm:$0xff]
  %v1344 = vld [vmem:[%s1323 + $0xa0] sm:$0xff]
  %v1345 = vld [vmem:[%s1323 + $0xa8] sm:$0xff]
  %v1346 = vld [vmem:[%s1323 + $0xb0] sm:$0xff]
  %v1347 = vld [vmem:[%s1323 + $0xb8] sm:$0xff]
  %v1348 = vld [vmem:[%s1323 + $0xc0] sm:$0xff]
  %v1349 = vld [vmem:[%s1323 + $0xc8] sm:$0xff]
  %v1350 = vld [vmem:[%s1323 + $0xd0] sm:$0xff]
  %v1351 = vld [vmem:[%s1323 + $0xd8] sm:$0xff]
  %v1352 = vld [vmem:[%s1323 + $0xe0] sm:$0xff]
  %v1353 = vld [vmem:[%s1323 + $0xe8] sm:$0xff]
  %v1354 = vld [vmem:[%s1323 + $0xf0] sm:$0xff]
  %v1355 = vld [vmem:[%s1323 + $0xf8] sm:$0xff]
  %v1356 = vld [vmem:[%s1323 + $0x100] sm:$0xff]
  %v1357 = vld [vmem:[%s1323 + $0x108] sm:$0xff]
  %v1358 = vld [vmem:[%s1323 + $0x110] sm:$0xff]
  %v1359 = vld [vmem:[%s1323 + $0x118] sm:$0xff]
  %v1360 = vld [vmem:[%s1323 + $0x120] sm:$0xff]
  %v1361 = vld [vmem:[%s1323 + $0x128] sm:$0xff]
  %v1362 = vld [vmem:[%s1323 + $0x130] sm:$0xff]
  %v1363 = vld [vmem:[%s1323 + $0x138] sm:$0xff]
  %v1364 = vld [vmem:[%s1323 + $0x140] sm:$0xff]
  %v1365 = vld [vmem:[%s1323 + $0x148] sm:$0xff]
  %v1366 = vld [vmem:[%s1323 + $0x150] sm:$0xff]
  %v1367 = vld [vmem:[%s1323 + $0x158] sm:$0xff]
  %v1368 = vld [vmem:[%s1323 + $0x160] sm:$0xff]
  %v1369 = vld [vmem:[%s1323 + $0x168] sm:$0xff]
  %v1370 = vld [vmem:[%s1323 + $0x170] sm:$0xff]
  %v1371 = vld [vmem:[%s1323 + $0x178] sm:$0xff]
  %v1372 = vld [vmem:[%s1323 + $0x180] sm:$0xff]
  %v1373 = vld [vmem:[%s1323 + $0x188] sm:$0xff]
  %v1374 = vld [vmem:[%s1323 + $0x190] sm:$0xff]
  %v1375 = vld [vmem:[%s1323 + $0x198] sm:$0xff]
  %v1376 = vld [vmem:[%s1323 + $0x1a0] sm:$0xff]
  %v1377 = vld [vmem:[%s1323 + $0x1a8] sm:$0xff]
  %v1378 = vld [vmem:[%s1323 + $0x1b0] sm:$0xff]
  %v1379 = vld [vmem:[%s1323 + $0x1b8] sm:$0xff]
  %v1380 = vld [vmem:[%s1323 + $0x1c0] sm:$0xff]
  %v1381 = vld [vmem:[%s1323 + $0x1c8] sm:$0xff]
  %v1382 = vld [vmem:[%s1323 + $0x1d0] sm:$0xff]
  %v1383 = vld [vmem:[%s1323 + $0x1d8] sm:$0xff]
  %v1384 = vld [vmem:[%s1323 + $0x1e0] sm:$0xff]
  %v1385 = vld [vmem:[%s1323 + $0x1e8] sm:$0xff]
  %v1386 = vld [vmem:[%s1323 + $0x1f0] sm:$0xff]
  %v1387 = vld [vmem:[%s1323 + $0x1f8] sm:$0xff]
  %s1388 = scalar_lea.vmem %s1, 144
  %v1389 = vld [vmem:[%s1388] sm:$0xff]
  %v1390 = vld [vmem:[%s1388 + $0x8] sm:$0xff]
  %v1391 = vld [vmem:[%s1388 + $0x10] sm:$0xff]
  %v1392 = vld [vmem:[%s1388 + $0x18] sm:$0xff]
  %v1393 = vld [vmem:[%s1388 + $0x20] sm:$0xff]
  %v1394 = vld [vmem:[%s1388 + $0x28] sm:$0xff]
  %v1395 = vld [vmem:[%s1388 + $0x30] sm:$0xff]
  %v1396 = vld [vmem:[%s1388 + $0x38] sm:$0xff]
  %v1397 = vld [vmem:[%s1388 + $0x40] sm:$0xff]
  %v1399 = vsel %vm168, %v1324, 0
  %v1402 = vsel %vm168, %v1325, 0
  %v1405 = vsel %vm168, %v1326, 0
  %v1408 = vsel %vm168, %v1327, 0
  %v1411 = vsel %vm168, %v1328, 0
  %v1414 = vsel %vm168, %v1329, 0
  %v1417 = vsel %vm168, %v1330, 0
  %v1420 = vsel %vm168, %v1331, 0
  %v1423 = vsel %vm168, %v1332, 0
  %v1426 = vsel %vm168, %v1333, 0
  %v1429 = vsel %vm168, %v1334, 0
  %v1432 = vsel %vm168, %v1335, 0
  %v1435 = vsel %vm168, %v1336, 0
  %v1438 = vsel %vm168, %v1337, 0
  %v1441 = vsel %vm168, %v1338, 0
  %v1444 = vsel %vm168, %v1339, 0
  %v1447 = vsel %vm168, %v1340, 0
  %v1450 = vsel %vm168, %v1341, 0
  %v1453 = vsel %vm168, %v1342, 0
  %v1456 = vsel %vm168, %v1343, 0
  %v1459 = vsel %vm168, %v1344, 0
  %v1462 = vsel %vm168, %v1345, 0
  %v1465 = vsel %vm168, %v1346, 0
  %v1468 = vsel %vm168, %v1347, 0
  %v1471 = vsel %vm168, %v1348, 0
  %v1474 = vsel %vm168, %v1349, 0
  %v1477 = vsel %vm168, %v1350, 0
  %v1480 = vsel %vm168, %v1351, 0
  %v1483 = vsel %vm168, %v1352, 0
  %v1486 = vsel %vm168, %v1353, 0
  %v1489 = vsel %vm168, %v1354, 0
  %v1492 = vsel %vm168, %v1355, 0
  %v1495 = vsel %vm168, %v1356, 0
  %v1498 = vsel %vm168, %v1357, 0
  %v1501 = vsel %vm168, %v1358, 0
  %v1504 = vsel %vm168, %v1359, 0
  %v1507 = vsel %vm168, %v1360, 0
  %v1510 = vsel %vm168, %v1361, 0
  %v1513 = vsel %vm168, %v1362, 0
  %v1516 = vsel %vm168, %v1363, 0
  %v1519 = vsel %vm168, %v1364, 0
  %v1522 = vsel %vm168, %v1365, 0
  %v1525 = vsel %vm168, %v1366, 0
  %v1528 = vsel %vm168, %v1367, 0
  %v1531 = vsel %vm168, %v1368, 0
  %v1534 = vsel %vm168, %v1369, 0
  %v1537 = vsel %vm168, %v1370, 0
  %v1540 = vsel %vm168, %v1371, 0
  %v1543 = vsel %vm168, %v1372, 0
  %v1546 = vsel %vm168, %v1373, 0
  %v1549 = vsel %vm168, %v1374, 0
  %v1552 = vsel %vm168, %v1375, 0
  %v1555 = vsel %vm168, %v1376, 0
  %v1558 = vsel %vm168, %v1377, 0
  %v1561 = vsel %vm168, %v1378, 0
  %v1564 = vsel %vm168, %v1379, 0
  %v1567 = vsel %vm168, %v1380, 0
  %v1570 = vsel %vm168, %v1381, 0
  %v1573 = vsel %vm168, %v1382, 0
  %v1576 = vsel %vm168, %v1383, 0
  %v1579 = vsel %vm168, %v1384, 0
  %v1582 = vsel %vm168, %v1385, 0
  %v1585 = vsel %vm168, %v1386, 0
  %v1588 = vsel %vm168, %v1387, 0
  %1590 = vmatprep.subr.mxu0 0.0
  %1591 = vmatpush1.msra.mxu0 0.0
  %1592 = vmatprep.subr.mxu0 0.0
  %1593 = vmatpush1.msra.mxu0 0.0
  %1594 = vmatprep.subr.mxu0 0.0
  %1595 = vmatpush1.msra.mxu0 0.0
  %1596 = vmatprep.subr.mxu0 0.0
  %1597 = vmatpush1.msra.mxu0 0.0
  %1598 = vmatprep.subr.mxu0 0.0
  %1599 = vmatpush1.msra.mxu0 0.0
  %1600 = vmatprep.subr.mxu0 0.0
  %1601 = vmatpush1.msra.mxu0 0.0
  %1602 = vmatprep.subr.mxu0 0.0
  %1603 = vmatpush1.msra.mxu0 0.0
  %1604 = vmatprep.subr.mxu0 0.0
  %1605 = vmatpush1.msra.mxu0 %v1397
  %1606 = vmatprep.subr.mxu0 0.0
  %1607 = vmatpush1.msra.mxu0 %v1396
  %1608 = vmatprep.subr.mxu0 0.0
  %1609 = vmatpush1.msra.mxu0 %v1395
  %1610 = vmatprep.subr.mxu0 0.0
  %1611 = vmatpush1.msra.mxu0 %v1394
  %1612 = vmatprep.subr.mxu0 0.0
  %1613 = vmatpush1.msra.mxu0 %v1393
  %1614 = vmatprep.subr.mxu0 0.0
  %1615 = vmatpush1.msra.mxu0 %v1392
  %1616 = vmatprep.subr.mxu0 0.0
  %1617 = vmatpush1.msra.mxu0 %v1391
  %1618 = vmatprep.subr.mxu0 0.0
  %1619 = vmatpush1.msra.mxu0 %v1390
  %1620 = vmatprep.subr.mxu0 0.0
  %1621 = vmatpush1.msra.mxu0 %v1389
  %1622 = vmatprep.subr.mxu0 0.0
  %1623 = vmatpush2.msra.mxu0 0.0
  %1624 = vmatprep.subr.mxu0 0.0
  %1625 = vmatpush2.msra.mxu0 0.0
  %1626 = vmatprep.subr.mxu0 0.0
  %1627 = vmatpush2.msra.mxu0 0.0
  %1628 = vmatprep.subr.mxu0 0.0
  %1629 = vmatpush2.msra.mxu0 0.0
  %1630 = vmatprep.subr.mxu0 0.0
  %1631 = vmatpush2.msra.mxu0 0.0
  %1632 = vmatprep.subr.mxu0 0.0
  %1633 = vmatpush2.msra.mxu0 0.0
  %1634 = vmatprep.subr.mxu0 0.0
  %1635 = vmatpush2.msra.mxu0 0.0
  %1636 = vmatprep.subr.mxu0 0.0
  %1637 = vmatpush2.msra.mxu0 0.0
  %1638 = vmatprep.subr.mxu0 0.0
  %1639 = vmatpush2.msra.mxu0 0.0
  %1640 = vmatprep.subr.mxu0 0.0
  %1641 = vmatpush2.msra.mxu0 0.0
  %1642 = vmatprep.subr.mxu0 0.0
  %1643 = vmatpush2.msra.mxu0 0.0
  %1644 = vmatprep.subr.mxu0 0.0
  %1645 = vmatpush2.msra.mxu0 0.0
  %1646 = vmatprep.subr.mxu0 0.0
  %1647 = vmatpush2.msra.mxu0 0.0
  %1648 = vmatprep.subr.mxu0 0.0
  %1649 = vmatpush2.msra.mxu0 0.0
  %1650 = vmatprep.subr.mxu0 0.0
  %1651 = vmatpush2.msra.mxu0 0.0
  %1652 = vmatprep.subr.mxu0 0.0
  %1653 = vmatpush2.msra.mxu0 0.0
  %1654 = vmatprep.mubr.f32.mxu0 0.0
  %1655 = vmatmul.mubr.f32.gmra.mxu0 %v1399
  %v1656 = vpop.f32.mrf.mxu0
  %v1657 = vadd.f32 0.0, %v1656
  %v1658 = vpop.f32.mrf.mxu0
  %1659 = vmatprep.mubr.f32.mxu0 0.0
  %1660 = vmatmul.mubr.f32.gmra.mxu0 %v1402
  %v1661 = vpop.f32.mrf.mxu0
  %v1662 = vadd.f32 0.0, %v1661
  %v1663 = vpop.f32.mrf.mxu0
  %1664 = vmatprep.mubr.f32.mxu0 0.0
  %1665 = vmatmul.mubr.f32.gmra.mxu0 %v1405
  %v1666 = vpop.f32.mrf.mxu0
  %v1667 = vadd.f32 0.0, %v1666
  %v1668 = vpop.f32.mrf.mxu0
  %1669 = vmatprep.mubr.f32.mxu0 0.0
  %1670 = vmatmul.mubr.f32.gmra.mxu0 %v1408
  %v1671 = vpop.f32.mrf.mxu0
  %v1672 = vadd.f32 0.0, %v1671
  %v1673 = vpop.f32.mrf.mxu0
  %1674 = vmatprep.mubr.f32.mxu0 0.0
  %1675 = vmatmul.mubr.f32.gmra.mxu0 %v1411
  %v1676 = vpop.f32.mrf.mxu0
  %v1677 = vadd.f32 0.0, %v1676
  %v1678 = vpop.f32.mrf.mxu0
  %1679 = vmatprep.mubr.f32.mxu0 0.0
  %1680 = vmatmul.mubr.f32.gmra.mxu0 %v1414
  %v1681 = vpop.f32.mrf.mxu0
  %v1682 = vadd.f32 0.0, %v1681
  %v1683 = vpop.f32.mrf.mxu0
  %1684 = vmatprep.mubr.f32.mxu0 0.0
  %1685 = vmatmul.mubr.f32.gmra.mxu0 %v1417
  %v1686 = vpop.f32.mrf.mxu0
  %v1687 = vadd.f32 0.0, %v1686
  %v1688 = vpop.f32.mrf.mxu0
  %1689 = vmatprep.mubr.f32.mxu0 0.0
  %1690 = vmatmul.mubr.f32.gmra.mxu0 %v1420
  %v1691 = vpop.f32.mrf.mxu0
  %v1692 = vadd.f32 0.0, %v1691
  %v1693 = vpop.f32.mrf.mxu0
  %1694 = vmatprep.mubr.f32.mxu0 0.0
  %1695 = vmatmul.mubr.f32.gmra.mxu0 %v1423
  %v1696 = vpop.f32.mrf.mxu0
  %v1697 = vadd.f32 0.0, %v1696
  %v1698 = vpop.f32.mrf.mxu0
  %1699 = vmatprep.mubr.f32.mxu0 0.0
  %1700 = vmatmul.mubr.f32.gmra.mxu0 %v1426
  %v1701 = vpop.f32.mrf.mxu0
  %v1702 = vadd.f32 0.0, %v1701
  %v1703 = vpop.f32.mrf.mxu0
  %1704 = vmatprep.mubr.f32.mxu0 0.0
  %1705 = vmatmul.mubr.f32.gmra.mxu0 %v1429
  %v1706 = vpop.f32.mrf.mxu0
  %v1707 = vadd.f32 0.0, %v1706
  %v1708 = vpop.f32.mrf.mxu0
  %1709 = vmatprep.mubr.f32.mxu0 0.0
  %1710 = vmatmul.mubr.f32.gmra.mxu0 %v1432
  %v1711 = vpop.f32.mrf.mxu0
  %v1712 = vadd.f32 0.0, %v1711
  %v1713 = vpop.f32.mrf.mxu0
  %1714 = vmatprep.mubr.f32.mxu0 0.0
  %1715 = vmatmul.mubr.f32.gmra.mxu0 %v1435
  %v1716 = vpop.f32.mrf.mxu0
  %v1717 = vadd.f32 0.0, %v1716
  %v1718 = vpop.f32.mrf.mxu0
  %1719 = vmatprep.mubr.f32.mxu0 0.0
  %1720 = vmatmul.mubr.f32.gmra.mxu0 %v1438
  %v1721 = vpop.f32.mrf.mxu0
  %v1722 = vadd.f32 0.0, %v1721
  %v1723 = vpop.f32.mrf.mxu0
  %1724 = vmatprep.mubr.f32.mxu0 0.0
  %1725 = vmatmul.mubr.f32.gmra.mxu0 %v1441
  %v1726 = vpop.f32.mrf.mxu0
  %v1727 = vadd.f32 0.0, %v1726
  %v1728 = vpop.f32.mrf.mxu0
  %1729 = vmatprep.mubr.f32.mxu0 0.0
  %1730 = vmatmul.mubr.f32.gmra.mxu0 %v1444
  %v1731 = vpop.f32.mrf.mxu0
  %v1732 = vadd.f32 0.0, %v1731
  %v1733 = vpop.f32.mrf.mxu0
  %1734 = vmatprep.mubr.f32.mxu0 0.0
  %1735 = vmatmul.mubr.f32.gmra.mxu0 %v1447
  %v1736 = vpop.f32.mrf.mxu0
  %v1737 = vadd.f32 0.0, %v1736
  %v1738 = vpop.f32.mrf.mxu0
  %1739 = vmatprep.mubr.f32.mxu0 0.0
  %1740 = vmatmul.mubr.f32.gmra.mxu0 %v1450
  %v1741 = vpop.f32.mrf.mxu0
  %v1742 = vadd.f32 0.0, %v1741
  %v1743 = vpop.f32.mrf.mxu0
  %1744 = vmatprep.mubr.f32.mxu0 0.0
  %1745 = vmatmul.mubr.f32.gmra.mxu0 %v1453
  %v1746 = vpop.f32.mrf.mxu0
  %v1747 = vadd.f32 0.0, %v1746
  %v1748 = vpop.f32.mrf.mxu0
  %1749 = vmatprep.mubr.f32.mxu0 0.0
  %1750 = vmatmul.mubr.f32.gmra.mxu0 %v1456
  %v1751 = vpop.f32.mrf.mxu0
  %v1752 = vadd.f32 0.0, %v1751
  %v1753 = vpop.f32.mrf.mxu0
  %1754 = vmatprep.mubr.f32.mxu0 0.0
  %1755 = vmatmul.mubr.f32.gmra.mxu0 %v1459
  %v1756 = vpop.f32.mrf.mxu0
  %v1757 = vadd.f32 0.0, %v1756
  %v1758 = vpop.f32.mrf.mxu0
  %1759 = vmatprep.mubr.f32.mxu0 0.0
  %1760 = vmatmul.mubr.f32.gmra.mxu0 %v1462
  %v1761 = vpop.f32.mrf.mxu0
  %v1762 = vadd.f32 0.0, %v1761
  %v1763 = vpop.f32.mrf.mxu0
  %1764 = vmatprep.mubr.f32.mxu0 0.0
  %1765 = vmatmul.mubr.f32.gmra.mxu0 %v1465
  %v1766 = vpop.f32.mrf.mxu0
  %v1767 = vadd.f32 0.0, %v1766
  %v1768 = vpop.f32.mrf.mxu0
  %1769 = vmatprep.mubr.f32.mxu0 0.0
  %1770 = vmatmul.mubr.f32.gmra.mxu0 %v1468
  %v1771 = vpop.f32.mrf.mxu0
  %v1772 = vadd.f32 0.0, %v1771
  %v1773 = vpop.f32.mrf.mxu0
  %1774 = vmatprep.mubr.f32.mxu0 0.0
  %1775 = vmatmul.mubr.f32.gmra.mxu0 %v1471
  %v1776 = vpop.f32.mrf.mxu0
  %v1777 = vadd.f32 0.0, %v1776
  %v1778 = vpop.f32.mrf.mxu0
  %1779 = vmatprep.mubr.f32.mxu0 0.0
  %1780 = vmatmul.mubr.f32.gmra.mxu0 %v1474
  %v1781 = vpop.f32.mrf.mxu0
  %v1782 = vadd.f32 0.0, %v1781
  %v1783 = vpop.f32.mrf.mxu0
  %1784 = vmatprep.mubr.f32.mxu0 0.0
  %1785 = vmatmul.mubr.f32.gmra.mxu0 %v1477
  %v1786 = vpop.f32.mrf.mxu0
  %v1787 = vadd.f32 0.0, %v1786
  %v1788 = vpop.f32.mrf.mxu0
  %1789 = vmatprep.mubr.f32.mxu0 0.0
  %1790 = vmatmul.mubr.f32.gmra.mxu0 %v1480
  %v1791 = vpop.f32.mrf.mxu0
  %v1792 = vadd.f32 0.0, %v1791
  %v1793 = vpop.f32.mrf.mxu0
  %1794 = vmatprep.mubr.f32.mxu0 0.0
  %1795 = vmatmul.mubr.f32.gmra.mxu0 %v1483
  %v1796 = vpop.f32.mrf.mxu0
  %v1797 = vadd.f32 0.0, %v1796
  %v1798 = vpop.f32.mrf.mxu0
  %1799 = vmatprep.mubr.f32.mxu0 0.0
  %1800 = vmatmul.mubr.f32.gmra.mxu0 %v1486
  %v1801 = vpop.f32.mrf.mxu0
  %v1802 = vadd.f32 0.0, %v1801
  %v1803 = vpop.f32.mrf.mxu0
  %1804 = vmatprep.mubr.f32.mxu0 0.0
  %1805 = vmatmul.mubr.f32.gmra.mxu0 %v1489
  %v1806 = vpop.f32.mrf.mxu0
  %v1807 = vadd.f32 0.0, %v1806
  %v1808 = vpop.f32.mrf.mxu0
  %1809 = vmatprep.mubr.f32.mxu0 0.0
  %1810 = vmatmul.mubr.f32.gmra.mxu0 %v1492
  %v1811 = vpop.f32.mrf.mxu0
  %v1812 = vadd.f32 0.0, %v1811
  %v1813 = vpop.f32.mrf.mxu0
  %1814 = vmatprep.mubr.f32.mxu0 0.0
  %1815 = vmatmul.mubr.f32.gmra.mxu0 %v1495
  %v1816 = vpop.f32.mrf.mxu0
  %v1817 = vadd.f32 0.0, %v1816
  %v1818 = vpop.f32.mrf.mxu0
  %1819 = vmatprep.mubr.f32.mxu0 0.0
  %1820 = vmatmul.mubr.f32.gmra.mxu0 %v1498
  %v1821 = vpop.f32.mrf.mxu0
  %v1822 = vadd.f32 0.0, %v1821
  %v1823 = vpop.f32.mrf.mxu0
  %1824 = vmatprep.mubr.f32.mxu0 0.0
  %1825 = vmatmul.mubr.f32.gmra.mxu0 %v1501
  %v1826 = vpop.f32.mrf.mxu0
  %v1827 = vadd.f32 0.0, %v1826
  %v1828 = vpop.f32.mrf.mxu0
  %1829 = vmatprep.mubr.f32.mxu0 0.0
  %1830 = vmatmul.mubr.f32.gmra.mxu0 %v1504
  %v1831 = vpop.f32.mrf.mxu0
  %v1832 = vadd.f32 0.0, %v1831
  %v1833 = vpop.f32.mrf.mxu0
  %1834 = vmatprep.mubr.f32.mxu0 0.0
  %1835 = vmatmul.mubr.f32.gmra.mxu0 %v1507
  %v1836 = vpop.f32.mrf.mxu0
  %v1837 = vadd.f32 0.0, %v1836
  %v1838 = vpop.f32.mrf.mxu0
  %1839 = vmatprep.mubr.f32.mxu0 0.0
  %1840 = vmatmul.mubr.f32.gmra.mxu0 %v1510
  %v1841 = vpop.f32.mrf.mxu0
  %v1842 = vadd.f32 0.0, %v1841
  %v1843 = vpop.f32.mrf.mxu0
  %1844 = vmatprep.mubr.f32.mxu0 0.0
  %1845 = vmatmul.mubr.f32.gmra.mxu0 %v1513
  %v1846 = vpop.f32.mrf.mxu0
  %v1847 = vadd.f32 0.0, %v1846
  %v1848 = vpop.f32.mrf.mxu0
  %1849 = vmatprep.mubr.f32.mxu0 0.0
  %1850 = vmatmul.mubr.f32.gmra.mxu0 %v1516
  %v1851 = vpop.f32.mrf.mxu0
  %v1852 = vadd.f32 0.0, %v1851
  %v1853 = vpop.f32.mrf.mxu0
  %1854 = vmatprep.mubr.f32.mxu0 0.0
  %1855 = vmatmul.mubr.f32.gmra.mxu0 %v1519
  %v1856 = vpop.f32.mrf.mxu0
  %v1857 = vadd.f32 0.0, %v1856
  %v1858 = vpop.f32.mrf.mxu0
  %1859 = vmatprep.mubr.f32.mxu0 0.0
  %1860 = vmatmul.mubr.f32.gmra.mxu0 %v1522
  %v1861 = vpop.f32.mrf.mxu0
  %v1862 = vadd.f32 0.0, %v1861
  %v1863 = vpop.f32.mrf.mxu0
  %1864 = vmatprep.mubr.f32.mxu0 0.0
  %1865 = vmatmul.mubr.f32.gmra.mxu0 %v1525
  %v1866 = vpop.f32.mrf.mxu0
  %v1867 = vadd.f32 0.0, %v1866
  %v1868 = vpop.f32.mrf.mxu0
  %1869 = vmatprep.mubr.f32.mxu0 0.0
  %1870 = vmatmul.mubr.f32.gmra.mxu0 %v1528
  %v1871 = vpop.f32.mrf.mxu0
  %v1872 = vadd.f32 0.0, %v1871
  %v1873 = vpop.f32.mrf.mxu0
  %1874 = vmatprep.mubr.f32.mxu0 0.0
  %1875 = vmatmul.mubr.f32.gmra.mxu0 %v1531
  %v1876 = vpop.f32.mrf.mxu0
  %v1877 = vadd.f32 0.0, %v1876
  %v1878 = vpop.f32.mrf.mxu0
  %1879 = vmatprep.mubr.f32.mxu0 0.0
  %1880 = vmatmul.mubr.f32.gmra.mxu0 %v1534
  %v1881 = vpop.f32.mrf.mxu0
  %v1882 = vadd.f32 0.0, %v1881
  %v1883 = vpop.f32.mrf.mxu0
  %1884 = vmatprep.mubr.f32.mxu0 0.0
  %1885 = vmatmul.mubr.f32.gmra.mxu0 %v1537
  %v1886 = vpop.f32.mrf.mxu0
  %v1887 = vadd.f32 0.0, %v1886
  %v1888 = vpop.f32.mrf.mxu0
  %1889 = vmatprep.mubr.f32.mxu0 0.0
  %1890 = vmatmul.mubr.f32.gmra.mxu0 %v1540
  %v1891 = vpop.f32.mrf.mxu0
  %v1892 = vadd.f32 0.0, %v1891
  %v1893 = vpop.f32.mrf.mxu0
  %1894 = vmatprep.mubr.f32.mxu0 0.0
  %1895 = vmatmul.mubr.f32.gmra.mxu0 %v1543
  %v1896 = vpop.f32.mrf.mxu0
  %v1897 = vadd.f32 0.0, %v1896
  %v1898 = vpop.f32.mrf.mxu0
  %1899 = vmatprep.mubr.f32.mxu0 0.0
  %1900 = vmatmul.mubr.f32.gmra.mxu0 %v1546
  %v1901 = vpop.f32.mrf.mxu0
  %v1902 = vadd.f32 0.0, %v1901
  %v1903 = vpop.f32.mrf.mxu0
  %1904 = vmatprep.mubr.f32.mxu0 0.0
  %1905 = vmatmul.mubr.f32.gmra.mxu0 %v1549
  %v1906 = vpop.f32.mrf.mxu0
  %v1907 = vadd.f32 0.0, %v1906
  %v1908 = vpop.f32.mrf.mxu0
  %1909 = vmatprep.mubr.f32.mxu0 0.0
  %1910 = vmatmul.mubr.f32.gmra.mxu0 %v1552
  %v1911 = vpop.f32.mrf.mxu0
  %v1912 = vadd.f32 0.0, %v1911
  %v1913 = vpop.f32.mrf.mxu0
  %1914 = vmatprep.mubr.f32.mxu0 0.0
  %1915 = vmatmul.mubr.f32.gmra.mxu0 %v1555
  %v1916 = vpop.f32.mrf.mxu0
  %v1917 = vadd.f32 0.0, %v1916
  %v1918 = vpop.f32.mrf.mxu0
  %1919 = vmatprep.mubr.f32.mxu0 0.0
  %1920 = vmatmul.mubr.f32.gmra.mxu0 %v1558
  %v1921 = vpop.f32.mrf.mxu0
  %v1922 = vadd.f32 0.0, %v1921
  %v1923 = vpop.f32.mrf.mxu0
  %1924 = vmatprep.mubr.f32.mxu0 0.0
  %1925 = vmatmul.mubr.f32.gmra.mxu0 %v1561
  %v1926 = vpop.f32.mrf.mxu0
  %v1927 = vadd.f32 0.0, %v1926
  %v1928 = vpop.f32.mrf.mxu0
  %1929 = vmatprep.mubr.f32.mxu0 0.0
  %1930 = vmatmul.mubr.f32.gmra.mxu0 %v1564
  %v1931 = vpop.f32.mrf.mxu0
  %v1932 = vadd.f32 0.0, %v1931
  %v1933 = vpop.f32.mrf.mxu0
  %1934 = vmatprep.mubr.f32.mxu0 0.0
  %1935 = vmatmul.mubr.f32.gmra.mxu0 %v1567
  %v1936 = vpop.f32.mrf.mxu0
  %v1937 = vadd.f32 0.0, %v1936
  %v1938 = vpop.f32.mrf.mxu0
  %1939 = vmatprep.mubr.f32.mxu0 0.0
  %1940 = vmatmul.mubr.f32.gmra.mxu0 %v1570
  %v1941 = vpop.f32.mrf.mxu0
  %v1942 = vadd.f32 0.0, %v1941
  %v1943 = vpop.f32.mrf.mxu0
  %1944 = vmatprep.mubr.f32.mxu0 0.0
  %1945 = vmatmul.mubr.f32.gmra.mxu0 %v1573
  %v1946 = vpop.f32.mrf.mxu0
  %v1947 = vadd.f32 0.0, %v1946
  %v1948 = vpop.f32.mrf.mxu0
  %1949 = vmatprep.mubr.f32.mxu0 0.0
  %1950 = vmatmul.mubr.f32.gmra.mxu0 %v1576
  %v1951 = vpop.f32.mrf.mxu0
  %v1952 = vadd.f32 0.0, %v1951
  %v1953 = vpop.f32.mrf.mxu0
  %1954 = vmatprep.mubr.f32.mxu0 0.0
  %1955 = vmatmul.mubr.f32.gmra.mxu0 %v1579
  %v1956 = vpop.f32.mrf.mxu0
  %v1957 = vadd.f32 0.0, %v1956
  %v1958 = vpop.f32.mrf.mxu0
  %1959 = vmatprep.mubr.f32.mxu0 0.0
  %1960 = vmatmul.mubr.f32.gmra.mxu0 %v1582
  %v1961 = vpop.f32.mrf.mxu0
  %v1962 = vadd.f32 0.0, %v1961
  %v1963 = vpop.f32.mrf.mxu0
  %1964 = vmatprep.mubr.f32.mxu0 0.0
  %1965 = vmatmul.mubr.f32.gmra.mxu0 %v1585
  %v1966 = vpop.f32.mrf.mxu0
  %v1967 = vadd.f32 0.0, %v1966
  %v1968 = vpop.f32.mrf.mxu0
  %1969 = vmatprep.mubr.f32.mxu0 0.0
  %1970 = vmatmul.mubr.f32.gmra.mxu0 %v1588
  %v1971 = vpop.f32.mrf.mxu0
  %v1972 = vadd.f32 0.0, %v1971
  %v1973 = vpop.f32.mrf.mxu0
  %1974 = vdwg.mxu0
  %v1975 = vadd.f32 %v1005, %v1657
  %v1976 = vadd.f32 %v1010, %v1662
  %v1977 = vadd.f32 %v1015, %v1667
  %v1978 = vadd.f32 %v1020, %v1672
  %v1979 = vadd.f32 %v1025, %v1677
  %v1980 = vadd.f32 %v1030, %v1682
  %v1981 = vadd.f32 %v1035, %v1687
  %v1982 = vadd.f32 %v1040, %v1692
  %v1983 = vadd.f32 %v1045, %v1697
  %v1984 = vadd.f32 %v1050, %v1702
  %v1985 = vadd.f32 %v1055, %v1707
  %v1986 = vadd.f32 %v1060, %v1712
  %v1987 = vadd.f32 %v1065, %v1717
  %v1988 = vadd.f32 %v1070, %v1722
  %v1989 = vadd.f32 %v1075, %v1727
  %v1990 = vadd.f32 %v1080, %v1732
  %v1991 = vadd.f32 %v1085, %v1737
  %v1992 = vadd.f32 %v1090, %v1742
  %v1993 = vadd.f32 %v1095, %v1747
  %v1994 = vadd.f32 %v1100, %v1752
  %v1995 = vadd.f32 %v1105, %v1757
  %v1996 = vadd.f32 %v1110, %v1762
  %v1997 = vadd.f32 %v1115, %v1767
  %v1998 = vadd.f32 %v1120, %v1772
  %v1999 = vadd.f32 %v1125, %v1777
  %v2000 = vadd.f32 %v1130, %v1782
  %v2001 = vadd.f32 %v1135, %v1787
  %v2002 = vadd.f32 %v1140, %v1792
  %v2003 = vadd.f32 %v1145, %v1797
  %v2004 = vadd.f32 %v1150, %v1802
  %v2005 = vadd.f32 %v1155, %v1807
  %v2006 = vadd.f32 %v1160, %v1812
  %v2007 = vadd.f32 %v1165, %v1817
  %v2008 = vadd.f32 %v1170, %v1822
  %v2009 = vadd.f32 %v1175, %v1827
  %v2010 = vadd.f32 %v1180, %v1832
  %v2011 = vadd.f32 %v1185, %v1837
  %v2012 = vadd.f32 %v1190, %v1842
  %v2013 = vadd.f32 %v1195, %v1847
  %v2014 = vadd.f32 %v1200, %v1852
  %v2015 = vadd.f32 %v1205, %v1857
  %v2016 = vadd.f32 %v1210, %v1862
  %v2017 = vadd.f32 %v1215, %v1867
  %v2018 = vadd.f32 %v1220, %v1872
  %v2019 = vadd.f32 %v1225, %v1877
  %v2020 = vadd.f32 %v1230, %v1882
  %v2021 = vadd.f32 %v1235, %v1887
  %v2022 = vadd.f32 %v1240, %v1892
  %v2023 = vadd.f32 %v1245, %v1897
  %v2024 = vadd.f32 %v1250, %v1902
  %v2025 = vadd.f32 %v1255, %v1907
  %v2026 = vadd.f32 %v1260, %v1912
  %v2027 = vadd.f32 %v1265, %v1917
  %v2028 = vadd.f32 %v1270, %v1922
  %v2029 = vadd.f32 %v1275, %v1927
  %v2030 = vadd.f32 %v1280, %v1932
  %v2031 = vadd.f32 %v1285, %v1937
  %v2032 = vadd.f32 %v1290, %v1942
  %v2033 = vadd.f32 %v1295, %v1947
  %v2034 = vadd.f32 %v1300, %v1952
  %v2035 = vadd.f32 %v1305, %v1957
  %v2036 = vadd.f32 %v1310, %v1962
  %v2037 = vadd.f32 %v1315, %v1967
  %v2038 = vadd.f32 %v1320, %v1972
  %s2039 = scalar_lea.vmem %s0, 1536
  %v2040 = vld [vmem:[%s2039] sm:$0xff]
  %v2041 = vld [vmem:[%s2039 + $0x8] sm:$0xff]
  %v2042 = vld [vmem:[%s2039 + $0x10] sm:$0xff]
  %v2043 = vld [vmem:[%s2039 + $0x18] sm:$0xff]
  %v2044 = vld [vmem:[%s2039 + $0x20] sm:$0xff]
  %v2045 = vld [vmem:[%s2039 + $0x28] sm:$0xff]
  %v2046 = vld [vmem:[%s2039 + $0x30] sm:$0xff]
  %v2047 = vld [vmem:[%s2039 + $0x38] sm:$0xff]
  %v2048 = vld [vmem:[%s2039 + $0x40] sm:$0xff]
  %v2049 = vld [vmem:[%s2039 + $0x48] sm:$0xff]
  %v2050 = vld [vmem:[%s2039 + $0x50] sm:$0xff]
  %v2051 = vld [vmem:[%s2039 + $0x58] sm:$0xff]
  %v2052 = vld [vmem:[%s2039 + $0x60] sm:$0xff]
  %v2053 = vld [vmem:[%s2039 + $0x68] sm:$0xff]
  %v2054 = vld [vmem:[%s2039 + $0x70] sm:$0xff]
  %v2055 = vld [vmem:[%s2039 + $0x78] sm:$0xff]
  %v2056 = vld [vmem:[%s2039 + $0x80] sm:$0xff]
  %v2057 = vld [vmem:[%s2039 + $0x88] sm:$0xff]
  %v2058 = vld [vmem:[%s2039 + $0x90] sm:$0xff]
  %v2059 = vld [vmem:[%s2039 + $0x98] sm:$0xff]
  %v2060 = vld [vmem:[%s2039 + $0xa0] sm:$0xff]
  %v2061 = vld [vmem:[%s2039 + $0xa8] sm:$0xff]
  %v2062 = vld [vmem:[%s2039 + $0xb0] sm:$0xff]
  %v2063 = vld [vmem:[%s2039 + $0xb8] sm:$0xff]
  %v2064 = vld [vmem:[%s2039 + $0xc0] sm:$0xff]
  %v2065 = vld [vmem:[%s2039 + $0xc8] sm:$0xff]
  %v2066 = vld [vmem:[%s2039 + $0xd0] sm:$0xff]
  %v2067 = vld [vmem:[%s2039 + $0xd8] sm:$0xff]
  %v2068 = vld [vmem:[%s2039 + $0xe0] sm:$0xff]
  %v2069 = vld [vmem:[%s2039 + $0xe8] sm:$0xff]
  %v2070 = vld [vmem:[%s2039 + $0xf0] sm:$0xff]
  %v2071 = vld [vmem:[%s2039 + $0xf8] sm:$0xff]
  %v2072 = vld [vmem:[%s2039 + $0x100] sm:$0xff]
  %v2073 = vld [vmem:[%s2039 + $0x108] sm:$0xff]
  %v2074 = vld [vmem:[%s2039 + $0x110] sm:$0xff]
  %v2075 = vld [vmem:[%s2039 + $0x118] sm:$0xff]
  %v2076 = vld [vmem:[%s2039 + $0x120] sm:$0xff]
  %v2077 = vld [vmem:[%s2039 + $0x128] sm:$0xff]
  %v2078 = vld [vmem:[%s2039 + $0x130] sm:$0xff]
  %v2079 = vld [vmem:[%s2039 + $0x138] sm:$0xff]
  %v2080 = vld [vmem:[%s2039 + $0x140] sm:$0xff]
  %v2081 = vld [vmem:[%s2039 + $0x148] sm:$0xff]
  %v2082 = vld [vmem:[%s2039 + $0x150] sm:$0xff]
  %v2083 = vld [vmem:[%s2039 + $0x158] sm:$0xff]
  %v2084 = vld [vmem:[%s2039 + $0x160] sm:$0xff]
  %v2085 = vld [vmem:[%s2039 + $0x168] sm:$0xff]
  %v2086 = vld [vmem:[%s2039 + $0x170] sm:$0xff]
  %v2087 = vld [vmem:[%s2039 + $0x178] sm:$0xff]
  %v2088 = vld [vmem:[%s2039 + $0x180] sm:$0xff]
  %v2089 = vld [vmem:[%s2039 + $0x188] sm:$0xff]
  %v2090 = vld [vmem:[%s2039 + $0x190] sm:$0xff]
  %v2091 = vld [vmem:[%s2039 + $0x198] sm:$0xff]
  %v2092 = vld [vmem:[%s2039 + $0x1a0] sm:$0xff]
  %v2093 = vld [vmem:[%s2039 + $0x1a8] sm:$0xff]
  %v2094 = vld [vmem:[%s2039 + $0x1b0] sm:$0xff]
  %v2095 = vld [vmem:[%s2039 + $0x1b8] sm:$0xff]
  %v2096 = vld [vmem:[%s2039 + $0x1c0] sm:$0xff]
  %v2097 = vld [vmem:[%s2039 + $0x1c8] sm:$0xff]
  %v2098 = vld [vmem:[%s2039 + $0x1d0] sm:$0xff]
  %v2099 = vld [vmem:[%s2039 + $0x1d8] sm:$0xff]
  %v2100 = vld [vmem:[%s2039 + $0x1e0] sm:$0xff]
  %v2101 = vld [vmem:[%s2039 + $0x1e8] sm:$0xff]
  %v2102 = vld [vmem:[%s2039 + $0x1f0] sm:$0xff]
  %v2103 = vld [vmem:[%s2039 + $0x1f8] sm:$0xff]
  %s2104 = scalar_lea.vmem %s1, 216
  %v2105 = vld [vmem:[%s2104] sm:$0xff]
  %v2106 = vld [vmem:[%s2104 + $0x8] sm:$0xff]
  %v2107 = vld [vmem:[%s2104 + $0x10] sm:$0xff]
  %v2108 = vld [vmem:[%s2104 + $0x18] sm:$0xff]
  %v2109 = vld [vmem:[%s2104 + $0x20] sm:$0xff]
  %v2110 = vld [vmem:[%s2104 + $0x28] sm:$0xff]
  %v2111 = vld [vmem:[%s2104 + $0x30] sm:$0xff]
  %v2112 = vld [vmem:[%s2104 + $0x38] sm:$0xff]
  %v2113 = vld [vmem:[%s2104 + $0x40] sm:$0xff]
  %v2115 = vsel %vm168, %v2040, 0
  %v2118 = vsel %vm168, %v2041, 0
  %v2121 = vsel %vm168, %v2042, 0
  %v2124 = vsel %vm168, %v2043, 0
  %v2127 = vsel %vm168, %v2044, 0
  %v2130 = vsel %vm168, %v2045, 0
  %v2133 = vsel %vm168, %v2046, 0
  %v2136 = vsel %vm168, %v2047, 0
  %v2139 = vsel %vm168, %v2048, 0
  %v2142 = vsel %vm168, %v2049, 0
  %v2145 = vsel %vm168, %v2050, 0
  %v2148 = vsel %vm168, %v2051, 0
  %v2151 = vsel %vm168, %v2052, 0
  %v2154 = vsel %vm168, %v2053, 0
  %v2157 = vsel %vm168, %v2054, 0
  %v2160 = vsel %vm168, %v2055, 0
  %v2163 = vsel %vm168, %v2056, 0
  %v2166 = vsel %vm168, %v2057, 0
  %v2169 = vsel %vm168, %v2058, 0
  %v2172 = vsel %vm168, %v2059, 0
  %v2175 = vsel %vm168, %v2060, 0
  %v2178 = vsel %vm168, %v2061, 0
  %v2181 = vsel %vm168, %v2062, 0
  %v2184 = vsel %vm168, %v2063, 0
  %v2187 = vsel %vm168, %v2064, 0
  %v2190 = vsel %vm168, %v2065, 0
  %v2193 = vsel %vm168, %v2066, 0
  %v2196 = vsel %vm168, %v2067, 0
  %v2199 = vsel %vm168, %v2068, 0
  %v2202 = vsel %vm168, %v2069, 0
  %v2205 = vsel %vm168, %v2070, 0
  %v2208 = vsel %vm168, %v2071, 0
  %v2211 = vsel %vm168, %v2072, 0
  %v2214 = vsel %vm168, %v2073, 0
  %v2217 = vsel %vm168, %v2074, 0
  %v2220 = vsel %vm168, %v2075, 0
  %v2223 = vsel %vm168, %v2076, 0
  %v2226 = vsel %vm168, %v2077, 0
  %v2229 = vsel %vm168, %v2078, 0
  %v2232 = vsel %vm168, %v2079, 0
  %v2235 = vsel %vm168, %v2080, 0
  %v2238 = vsel %vm168, %v2081, 0
  %v2241 = vsel %vm168, %v2082, 0
  %v2244 = vsel %vm168, %v2083, 0
  %v2247 = vsel %vm168, %v2084, 0
  %v2250 = vsel %vm168, %v2085, 0
  %v2253 = vsel %vm168, %v2086, 0
  %v2256 = vsel %vm168, %v2087, 0
  %v2259 = vsel %vm168, %v2088, 0
  %v2262 = vsel %vm168, %v2089, 0
  %v2265 = vsel %vm168, %v2090, 0
  %v2268 = vsel %vm168, %v2091, 0
  %v2271 = vsel %vm168, %v2092, 0
  %v2274 = vsel %vm168, %v2093, 0
  %v2277 = vsel %vm168, %v2094, 0
  %v2280 = vsel %vm168, %v2095, 0
  %v2283 = vsel %vm168, %v2096, 0
  %v2286 = vsel %vm168, %v2097, 0
  %v2289 = vsel %vm168, %v2098, 0
  %v2292 = vsel %vm168, %v2099, 0
  %v2295 = vsel %vm168, %v2100, 0
  %v2298 = vsel %vm168, %v2101, 0
  %v2301 = vsel %vm168, %v2102, 0
  %v2304 = vsel %vm168, %v2103, 0
  %2306 = vmatprep.subr.mxu0 0.0
  %2307 = vmatpush1.msra.mxu0 0.0
  %2308 = vmatprep.subr.mxu0 0.0
  %2309 = vmatpush1.msra.mxu0 0.0
  %2310 = vmatprep.subr.mxu0 0.0
  %2311 = vmatpush1.msra.mxu0 0.0
  %2312 = vmatprep.subr.mxu0 0.0
  %2313 = vmatpush1.msra.mxu0 0.0
  %2314 = vmatprep.subr.mxu0 0.0
  %2315 = vmatpush1.msra.mxu0 0.0
  %2316 = vmatprep.subr.mxu0 0.0
  %2317 = vmatpush1.msra.mxu0 0.0
  %2318 = vmatprep.subr.mxu0 0.0
  %2319 = vmatpush1.msra.mxu0 0.0
  %2320 = vmatprep.subr.mxu0 0.0
  %2321 = vmatpush1.msra.mxu0 %v2113
  %2322 = vmatprep.subr.mxu0 0.0
  %2323 = vmatpush1.msra.mxu0 %v2112
  %2324 = vmatprep.subr.mxu0 0.0
  %2325 = vmatpush1.msra.mxu0 %v2111
  %2326 = vmatprep.subr.mxu0 0.0
  %2327 = vmatpush1.msra.mxu0 %v2110
  %2328 = vmatprep.subr.mxu0 0.0
  %2329 = vmatpush1.msra.mxu0 %v2109
  %2330 = vmatprep.subr.mxu0 0.0
  %2331 = vmatpush1.msra.mxu0 %v2108
  %2332 = vmatprep.subr.mxu0 0.0
  %2333 = vmatpush1.msra.mxu0 %v2107
  %2334 = vmatprep.subr.mxu0 0.0
  %2335 = vmatpush1.msra.mxu0 %v2106
  %2336 = vmatprep.subr.mxu0 0.0
  %2337 = vmatpush1.msra.mxu0 %v2105
  %2338 = vmatprep.subr.mxu0 0.0
  %2339 = vmatpush2.msra.mxu0 0.0
  %2340 = vmatprep.subr.mxu0 0.0
  %2341 = vmatpush2.msra.mxu0 0.0
  %2342 = vmatprep.subr.mxu0 0.0
  %2343 = vmatpush2.msra.mxu0 0.0
  %2344 = vmatprep.subr.mxu0 0.0
  %2345 = vmatpush2.msra.mxu0 0.0
  %2346 = vmatprep.subr.mxu0 0.0
  %2347 = vmatpush2.msra.mxu0 0.0
  %2348 = vmatprep.subr.mxu0 0.0
  %2349 = vmatpush2.msra.mxu0 0.0
  %2350 = vmatprep.subr.mxu0 0.0
  %2351 = vmatpush2.msra.mxu0 0.0
  %2352 = vmatprep.subr.mxu0 0.0
  %2353 = vmatpush2.msra.mxu0 0.0
  %2354 = vmatprep.subr.mxu0 0.0
  %2355 = vmatpush2.msra.mxu0 0.0
  %2356 = vmatprep.subr.mxu0 0.0
  %2357 = vmatpush2.msra.mxu0 0.0
  %2358 = vmatprep.subr.mxu0 0.0
  %2359 = vmatpush2.msra.mxu0 0.0
  %2360 = vmatprep.subr.mxu0 0.0
  %2361 = vmatpush2.msra.mxu0 0.0
  %2362 = vmatprep.subr.mxu0 0.0
  %2363 = vmatpush2.msra.mxu0 0.0
  %2364 = vmatprep.subr.mxu0 0.0
  %2365 = vmatpush2.msra.mxu0 0.0
  %2366 = vmatprep.subr.mxu0 0.0
  %2367 = vmatpush2.msra.mxu0 0.0
  %2368 = vmatprep.subr.mxu0 0.0
  %2369 = vmatpush2.msra.mxu0 0.0
  %2370 = vmatprep.mubr.f32.mxu0 0.0
  %2371 = vmatmul.mubr.f32.gmra.mxu0 %v2115
  %v2372 = vpop.f32.mrf.mxu0
  %v2373 = vadd.f32 0.0, %v2372
  %v2374 = vpop.f32.mrf.mxu0
  %2375 = vmatprep.mubr.f32.mxu0 0.0
  %2376 = vmatmul.mubr.f32.gmra.mxu0 %v2118
  %v2377 = vpop.f32.mrf.mxu0
  %v2378 = vadd.f32 0.0, %v2377
  %v2379 = vpop.f32.mrf.mxu0
  %2380 = vmatprep.mubr.f32.mxu0 0.0
  %2381 = vmatmul.mubr.f32.gmra.mxu0 %v2121
  %v2382 = vpop.f32.mrf.mxu0
  %v2383 = vadd.f32 0.0, %v2382
  %v2384 = vpop.f32.mrf.mxu0
  %2385 = vmatprep.mubr.f32.mxu0 0.0
  %2386 = vmatmul.mubr.f32.gmra.mxu0 %v2124
  %v2387 = vpop.f32.mrf.mxu0
  %v2388 = vadd.f32 0.0, %v2387
  %v2389 = vpop.f32.mrf.mxu0
  %2390 = vmatprep.mubr.f32.mxu0 0.0
  %2391 = vmatmul.mubr.f32.gmra.mxu0 %v2127
  %v2392 = vpop.f32.mrf.mxu0
  %v2393 = vadd.f32 0.0, %v2392
  %v2394 = vpop.f32.mrf.mxu0
  %2395 = vmatprep.mubr.f32.mxu0 0.0
  %2396 = vmatmul.mubr.f32.gmra.mxu0 %v2130
  %v2397 = vpop.f32.mrf.mxu0
  %v2398 = vadd.f32 0.0, %v2397
  %v2399 = vpop.f32.mrf.mxu0
  %2400 = vmatprep.mubr.f32.mxu0 0.0
  %2401 = vmatmul.mubr.f32.gmra.mxu0 %v2133
  %v2402 = vpop.f32.mrf.mxu0
  %v2403 = vadd.f32 0.0, %v2402
  %v2404 = vpop.f32.mrf.mxu0
  %2405 = vmatprep.mubr.f32.mxu0 0.0
  %2406 = vmatmul.mubr.f32.gmra.mxu0 %v2136
  %v2407 = vpop.f32.mrf.mxu0
  %v2408 = vadd.f32 0.0, %v2407
  %v2409 = vpop.f32.mrf.mxu0
  %2410 = vmatprep.mubr.f32.mxu0 0.0
  %2411 = vmatmul.mubr.f32.gmra.mxu0 %v2139
  %v2412 = vpop.f32.mrf.mxu0
  %v2413 = vadd.f32 0.0, %v2412
  %v2414 = vpop.f32.mrf.mxu0
  %2415 = vmatprep.mubr.f32.mxu0 0.0
  %2416 = vmatmul.mubr.f32.gmra.mxu0 %v2142
  %v2417 = vpop.f32.mrf.mxu0
  %v2418 = vadd.f32 0.0, %v2417
  %v2419 = vpop.f32.mrf.mxu0
  %2420 = vmatprep.mubr.f32.mxu0 0.0
  %2421 = vmatmul.mubr.f32.gmra.mxu0 %v2145
  %v2422 = vpop.f32.mrf.mxu0
  %v2423 = vadd.f32 0.0, %v2422
  %v2424 = vpop.f32.mrf.mxu0
  %2425 = vmatprep.mubr.f32.mxu0 0.0
  %2426 = vmatmul.mubr.f32.gmra.mxu0 %v2148
  %v2427 = vpop.f32.mrf.mxu0
  %v2428 = vadd.f32 0.0, %v2427
  %v2429 = vpop.f32.mrf.mxu0
  %2430 = vmatprep.mubr.f32.mxu0 0.0
  %2431 = vmatmul.mubr.f32.gmra.mxu0 %v2151
  %v2432 = vpop.f32.mrf.mxu0
  %v2433 = vadd.f32 0.0, %v2432
  %v2434 = vpop.f32.mrf.mxu0
  %2435 = vmatprep.mubr.f32.mxu0 0.0
  %2436 = vmatmul.mubr.f32.gmra.mxu0 %v2154
  %v2437 = vpop.f32.mrf.mxu0
  %v2438 = vadd.f32 0.0, %v2437
  %v2439 = vpop.f32.mrf.mxu0
  %2440 = vmatprep.mubr.f32.mxu0 0.0
  %2441 = vmatmul.mubr.f32.gmra.mxu0 %v2157
  %v2442 = vpop.f32.mrf.mxu0
  %v2443 = vadd.f32 0.0, %v2442
  %v2444 = vpop.f32.mrf.mxu0
  %2445 = vmatprep.mubr.f32.mxu0 0.0
  %2446 = vmatmul.mubr.f32.gmra.mxu0 %v2160
  %v2447 = vpop.f32.mrf.mxu0
  %v2448 = vadd.f32 0.0, %v2447
  %v2449 = vpop.f32.mrf.mxu0
  %2450 = vmatprep.mubr.f32.mxu0 0.0
  %2451 = vmatmul.mubr.f32.gmra.mxu0 %v2163
  %v2452 = vpop.f32.mrf.mxu0
  %v2453 = vadd.f32 0.0, %v2452
  %v2454 = vpop.f32.mrf.mxu0
  %2455 = vmatprep.mubr.f32.mxu0 0.0
  %2456 = vmatmul.mubr.f32.gmra.mxu0 %v2166
  %v2457 = vpop.f32.mrf.mxu0
  %v2458 = vadd.f32 0.0, %v2457
  %v2459 = vpop.f32.mrf.mxu0
  %2460 = vmatprep.mubr.f32.mxu0 0.0
  %2461 = vmatmul.mubr.f32.gmra.mxu0 %v2169
  %v2462 = vpop.f32.mrf.mxu0
  %v2463 = vadd.f32 0.0, %v2462
  %v2464 = vpop.f32.mrf.mxu0
  %2465 = vmatprep.mubr.f32.mxu0 0.0
  %2466 = vmatmul.mubr.f32.gmra.mxu0 %v2172
  %v2467 = vpop.f32.mrf.mxu0
  %v2468 = vadd.f32 0.0, %v2467
  %v2469 = vpop.f32.mrf.mxu0
  %2470 = vmatprep.mubr.f32.mxu0 0.0
  %2471 = vmatmul.mubr.f32.gmra.mxu0 %v2175
  %v2472 = vpop.f32.mrf.mxu0
  %v2473 = vadd.f32 0.0, %v2472
  %v2474 = vpop.f32.mrf.mxu0
  %2475 = vmatprep.mubr.f32.mxu0 0.0
  %2476 = vmatmul.mubr.f32.gmra.mxu0 %v2178
  %v2477 = vpop.f32.mrf.mxu0
  %v2478 = vadd.f32 0.0, %v2477
  %v2479 = vpop.f32.mrf.mxu0
  %2480 = vmatprep.mubr.f32.mxu0 0.0
  %2481 = vmatmul.mubr.f32.gmra.mxu0 %v2181
  %v2482 = vpop.f32.mrf.mxu0
  %v2483 = vadd.f32 0.0, %v2482
  %v2484 = vpop.f32.mrf.mxu0
  %2485 = vmatprep.mubr.f32.mxu0 0.0
  %2486 = vmatmul.mubr.f32.gmra.mxu0 %v2184
  %v2487 = vpop.f32.mrf.mxu0
  %v2488 = vadd.f32 0.0, %v2487
  %v2489 = vpop.f32.mrf.mxu0
  %2490 = vmatprep.mubr.f32.mxu0 0.0
  %2491 = vmatmul.mubr.f32.gmra.mxu0 %v2187
  %v2492 = vpop.f32.mrf.mxu0
  %v2493 = vadd.f32 0.0, %v2492
  %v2494 = vpop.f32.mrf.mxu0
  %2495 = vmatprep.mubr.f32.mxu0 0.0
  %2496 = vmatmul.mubr.f32.gmra.mxu0 %v2190
  %v2497 = vpop.f32.mrf.mxu0
  %v2498 = vadd.f32 0.0, %v2497
  %v2499 = vpop.f32.mrf.mxu0
  %2500 = vmatprep.mubr.f32.mxu0 0.0
  %2501 = vmatmul.mubr.f32.gmra.mxu0 %v2193
  %v2502 = vpop.f32.mrf.mxu0
  %v2503 = vadd.f32 0.0, %v2502
  %v2504 = vpop.f32.mrf.mxu0
  %2505 = vmatprep.mubr.f32.mxu0 0.0
  %2506 = vmatmul.mubr.f32.gmra.mxu0 %v2196
  %v2507 = vpop.f32.mrf.mxu0
  %v2508 = vadd.f32 0.0, %v2507
  %v2509 = vpop.f32.mrf.mxu0
  %2510 = vmatprep.mubr.f32.mxu0 0.0
  %2511 = vmatmul.mubr.f32.gmra.mxu0 %v2199
  %v2512 = vpop.f32.mrf.mxu0
  %v2513 = vadd.f32 0.0, %v2512
  %v2514 = vpop.f32.mrf.mxu0
  %2515 = vmatprep.mubr.f32.mxu0 0.0
  %2516 = vmatmul.mubr.f32.gmra.mxu0 %v2202
  %v2517 = vpop.f32.mrf.mxu0
  %v2518 = vadd.f32 0.0, %v2517
  %v2519 = vpop.f32.mrf.mxu0
  %2520 = vmatprep.mubr.f32.mxu0 0.0
  %2521 = vmatmul.mubr.f32.gmra.mxu0 %v2205
  %v2522 = vpop.f32.mrf.mxu0
  %v2523 = vadd.f32 0.0, %v2522
  %v2524 = vpop.f32.mrf.mxu0
  %2525 = vmatprep.mubr.f32.mxu0 0.0
  %2526 = vmatmul.mubr.f32.gmra.mxu0 %v2208
  %v2527 = vpop.f32.mrf.mxu0
  %v2528 = vadd.f32 0.0, %v2527
  %v2529 = vpop.f32.mrf.mxu0
  %2530 = vmatprep.mubr.f32.mxu0 0.0
  %2531 = vmatmul.mubr.f32.gmra.mxu0 %v2211
  %v2532 = vpop.f32.mrf.mxu0
  %v2533 = vadd.f32 0.0, %v2532
  %v2534 = vpop.f32.mrf.mxu0
  %2535 = vmatprep.mubr.f32.mxu0 0.0
  %2536 = vmatmul.mubr.f32.gmra.mxu0 %v2214
  %v2537 = vpop.f32.mrf.mxu0
  %v2538 = vadd.f32 0.0, %v2537
  %v2539 = vpop.f32.mrf.mxu0
  %2540 = vmatprep.mubr.f32.mxu0 0.0
  %2541 = vmatmul.mubr.f32.gmra.mxu0 %v2217
  %v2542 = vpop.f32.mrf.mxu0
  %v2543 = vadd.f32 0.0, %v2542
  %v2544 = vpop.f32.mrf.mxu0
  %2545 = vmatprep.mubr.f32.mxu0 0.0
  %2546 = vmatmul.mubr.f32.gmra.mxu0 %v2220
  %v2547 = vpop.f32.mrf.mxu0
  %v2548 = vadd.f32 0.0, %v2547
  %v2549 = vpop.f32.mrf.mxu0
  %2550 = vmatprep.mubr.f32.mxu0 0.0
  %2551 = vmatmul.mubr.f32.gmra.mxu0 %v2223
  %v2552 = vpop.f32.mrf.mxu0
  %v2553 = vadd.f32 0.0, %v2552
  %v2554 = vpop.f32.mrf.mxu0
  %2555 = vmatprep.mubr.f32.mxu0 0.0
  %2556 = vmatmul.mubr.f32.gmra.mxu0 %v2226
  %v2557 = vpop.f32.mrf.mxu0
  %v2558 = vadd.f32 0.0, %v2557
  %v2559 = vpop.f32.mrf.mxu0
  %2560 = vmatprep.mubr.f32.mxu0 0.0
  %2561 = vmatmul.mubr.f32.gmra.mxu0 %v2229
  %v2562 = vpop.f32.mrf.mxu0
  %v2563 = vadd.f32 0.0, %v2562
  %v2564 = vpop.f32.mrf.mxu0
  %2565 = vmatprep.mubr.f32.mxu0 0.0
  %2566 = vmatmul.mubr.f32.gmra.mxu0 %v2232
  %v2567 = vpop.f32.mrf.mxu0
  %v2568 = vadd.f32 0.0, %v2567
  %v2569 = vpop.f32.mrf.mxu0
  %2570 = vmatprep.mubr.f32.mxu0 0.0
  %2571 = vmatmul.mubr.f32.gmra.mxu0 %v2235
  %v2572 = vpop.f32.mrf.mxu0
  %v2573 = vadd.f32 0.0, %v2572
  %v2574 = vpop.f32.mrf.mxu0
  %2575 = vmatprep.mubr.f32.mxu0 0.0
  %2576 = vmatmul.mubr.f32.gmra.mxu0 %v2238
  %v2577 = vpop.f32.mrf.mxu0
  %v2578 = vadd.f32 0.0, %v2577
  %v2579 = vpop.f32.mrf.mxu0
  %2580 = vmatprep.mubr.f32.mxu0 0.0
  %2581 = vmatmul.mubr.f32.gmra.mxu0 %v2241
  %v2582 = vpop.f32.mrf.mxu0
  %v2583 = vadd.f32 0.0, %v2582
  %v2584 = vpop.f32.mrf.mxu0
  %2585 = vmatprep.mubr.f32.mxu0 0.0
  %2586 = vmatmul.mubr.f32.gmra.mxu0 %v2244
  %v2587 = vpop.f32.mrf.mxu0
  %v2588 = vadd.f32 0.0, %v2587
  %v2589 = vpop.f32.mrf.mxu0
  %2590 = vmatprep.mubr.f32.mxu0 0.0
  %2591 = vmatmul.mubr.f32.gmra.mxu0 %v2247
  %v2592 = vpop.f32.mrf.mxu0
  %v2593 = vadd.f32 0.0, %v2592
  %v2594 = vpop.f32.mrf.mxu0
  %2595 = vmatprep.mubr.f32.mxu0 0.0
  %2596 = vmatmul.mubr.f32.gmra.mxu0 %v2250
  %v2597 = vpop.f32.mrf.mxu0
  %v2598 = vadd.f32 0.0, %v2597
  %v2599 = vpop.f32.mrf.mxu0
  %2600 = vmatprep.mubr.f32.mxu0 0.0
  %2601 = vmatmul.mubr.f32.gmra.mxu0 %v2253
  %v2602 = vpop.f32.mrf.mxu0
  %v2603 = vadd.f32 0.0, %v2602
  %v2604 = vpop.f32.mrf.mxu0
  %2605 = vmatprep.mubr.f32.mxu0 0.0
  %2606 = vmatmul.mubr.f32.gmra.mxu0 %v2256
  %v2607 = vpop.f32.mrf.mxu0
  %v2608 = vadd.f32 0.0, %v2607
  %v2609 = vpop.f32.mrf.mxu0
  %2610 = vmatprep.mubr.f32.mxu0 0.0
  %2611 = vmatmul.mubr.f32.gmra.mxu0 %v2259
  %v2612 = vpop.f32.mrf.mxu0
  %v2613 = vadd.f32 0.0, %v2612
  %v2614 = vpop.f32.mrf.mxu0
  %2615 = vmatprep.mubr.f32.mxu0 0.0
  %2616 = vmatmul.mubr.f32.gmra.mxu0 %v2262
  %v2617 = vpop.f32.mrf.mxu0
  %v2618 = vadd.f32 0.0, %v2617
  %v2619 = vpop.f32.mrf.mxu0
  %2620 = vmatprep.mubr.f32.mxu0 0.0
  %2621 = vmatmul.mubr.f32.gmra.mxu0 %v2265
  %v2622 = vpop.f32.mrf.mxu0
  %v2623 = vadd.f32 0.0, %v2622
  %v2624 = vpop.f32.mrf.mxu0
  %2625 = vmatprep.mubr.f32.mxu0 0.0
  %2626 = vmatmul.mubr.f32.gmra.mxu0 %v2268
  %v2627 = vpop.f32.mrf.mxu0
  %v2628 = vadd.f32 0.0, %v2627
  %v2629 = vpop.f32.mrf.mxu0
  %2630 = vmatprep.mubr.f32.mxu0 0.0
  %2631 = vmatmul.mubr.f32.gmra.mxu0 %v2271
  %v2632 = vpop.f32.mrf.mxu0
  %v2633 = vadd.f32 0.0, %v2632
  %v2634 = vpop.f32.mrf.mxu0
  %2635 = vmatprep.mubr.f32.mxu0 0.0
  %2636 = vmatmul.mubr.f32.gmra.mxu0 %v2274
  %v2637 = vpop.f32.mrf.mxu0
  %v2638 = vadd.f32 0.0, %v2637
  %v2639 = vpop.f32.mrf.mxu0
  %2640 = vmatprep.mubr.f32.mxu0 0.0
  %2641 = vmatmul.mubr.f32.gmra.mxu0 %v2277
  %v2642 = vpop.f32.mrf.mxu0
  %v2643 = vadd.f32 0.0, %v2642
  %v2644 = vpop.f32.mrf.mxu0
  %2645 = vmatprep.mubr.f32.mxu0 0.0
  %2646 = vmatmul.mubr.f32.gmra.mxu0 %v2280
  %v2647 = vpop.f32.mrf.mxu0
  %v2648 = vadd.f32 0.0, %v2647
  %v2649 = vpop.f32.mrf.mxu0
  %2650 = vmatprep.mubr.f32.mxu0 0.0
  %2651 = vmatmul.mubr.f32.gmra.mxu0 %v2283
  %v2652 = vpop.f32.mrf.mxu0
  %v2653 = vadd.f32 0.0, %v2652
  %v2654 = vpop.f32.mrf.mxu0
  %2655 = vmatprep.mubr.f32.mxu0 0.0
  %2656 = vmatmul.mubr.f32.gmra.mxu0 %v2286
  %v2657 = vpop.f32.mrf.mxu0
  %v2658 = vadd.f32 0.0, %v2657
  %v2659 = vpop.f32.mrf.mxu0
  %2660 = vmatprep.mubr.f32.mxu0 0.0
  %2661 = vmatmul.mubr.f32.gmra.mxu0 %v2289
  %v2662 = vpop.f32.mrf.mxu0
  %v2663 = vadd.f32 0.0, %v2662
  %v2664 = vpop.f32.mrf.mxu0
  %2665 = vmatprep.mubr.f32.mxu0 0.0
  %2666 = vmatmul.mubr.f32.gmra.mxu0 %v2292
  %v2667 = vpop.f32.mrf.mxu0
  %v2668 = vadd.f32 0.0, %v2667
  %v2669 = vpop.f32.mrf.mxu0
  %2670 = vmatprep.mubr.f32.mxu0 0.0
  %2671 = vmatmul.mubr.f32.gmra.mxu0 %v2295
  %v2672 = vpop.f32.mrf.mxu0
  %v2673 = vadd.f32 0.0, %v2672
  %v2674 = vpop.f32.mrf.mxu0
  %2675 = vmatprep.mubr.f32.mxu0 0.0
  %2676 = vmatmul.mubr.f32.gmra.mxu0 %v2298
  %v2677 = vpop.f32.mrf.mxu0
  %v2678 = vadd.f32 0.0, %v2677
  %v2679 = vpop.f32.mrf.mxu0
  %2680 = vmatprep.mubr.f32.mxu0 0.0
  %2681 = vmatmul.mubr.f32.gmra.mxu0 %v2301
  %v2682 = vpop.f32.mrf.mxu0
  %v2683 = vadd.f32 0.0, %v2682
  %v2684 = vpop.f32.mrf.mxu0
  %2685 = vmatprep.mubr.f32.mxu0 0.0
  %2686 = vmatmul.mubr.f32.gmra.mxu0 %v2304
  %v2687 = vpop.f32.mrf.mxu0
  %v2688 = vadd.f32 0.0, %v2687
  %v2689 = vpop.f32.mrf.mxu0
  %2690 = vdwg.mxu0
  %v2691 = vadd.f32 %v1975, %v2373
  %v2692 = vadd.f32 %v1976, %v2378
  %v2693 = vadd.f32 %v1977, %v2383
  %v2694 = vadd.f32 %v1978, %v2388
  %v2695 = vadd.f32 %v1979, %v2393
  %v2696 = vadd.f32 %v1980, %v2398
  %v2697 = vadd.f32 %v1981, %v2403
  %v2698 = vadd.f32 %v1982, %v2408
  %v2699 = vadd.f32 %v1983, %v2413
  %v2700 = vadd.f32 %v1984, %v2418
  %v2701 = vadd.f32 %v1985, %v2423
  %v2702 = vadd.f32 %v1986, %v2428
  %v2703 = vadd.f32 %v1987, %v2433
  %v2704 = vadd.f32 %v1988, %v2438
  %v2705 = vadd.f32 %v1989, %v2443
  %v2706 = vadd.f32 %v1990, %v2448
  %v2707 = vadd.f32 %v1991, %v2453
  %v2708 = vadd.f32 %v1992, %v2458
  %v2709 = vadd.f32 %v1993, %v2463
  %v2710 = vadd.f32 %v1994, %v2468
  %v2711 = vadd.f32 %v1995, %v2473
  %v2712 = vadd.f32 %v1996, %v2478
  %v2713 = vadd.f32 %v1997, %v2483
  %v2714 = vadd.f32 %v1998, %v2488
  %v2715 = vadd.f32 %v1999, %v2493
  %v2716 = vadd.f32 %v2000, %v2498
  %v2717 = vadd.f32 %v2001, %v2503
  %v2718 = vadd.f32 %v2002, %v2508
  %v2719 = vadd.f32 %v2003, %v2513
  %v2720 = vadd.f32 %v2004, %v2518
  %v2721 = vadd.f32 %v2005, %v2523
  %v2722 = vadd.f32 %v2006, %v2528
  %v2723 = vadd.f32 %v2007, %v2533
  %v2724 = vadd.f32 %v2008, %v2538
  %v2725 = vadd.f32 %v2009, %v2543
  %v2726 = vadd.f32 %v2010, %v2548
  %v2727 = vadd.f32 %v2011, %v2553
  %v2728 = vadd.f32 %v2012, %v2558
  %v2729 = vadd.f32 %v2013, %v2563
  %v2730 = vadd.f32 %v2014, %v2568
  %v2731 = vadd.f32 %v2015, %v2573
  %v2732 = vadd.f32 %v2016, %v2578
  %v2733 = vadd.f32 %v2017, %v2583
  %v2734 = vadd.f32 %v2018, %v2588
  %v2735 = vadd.f32 %v2019, %v2593
  %v2736 = vadd.f32 %v2020, %v2598
  %v2737 = vadd.f32 %v2021, %v2603
  %v2738 = vadd.f32 %v2022, %v2608
  %v2739 = vadd.f32 %v2023, %v2613
  %v2740 = vadd.f32 %v2024, %v2618
  %v2741 = vadd.f32 %v2025, %v2623
  %v2742 = vadd.f32 %v2026, %v2628
  %v2743 = vadd.f32 %v2027, %v2633
  %v2744 = vadd.f32 %v2028, %v2638
  %v2745 = vadd.f32 %v2029, %v2643
  %v2746 = vadd.f32 %v2030, %v2648
  %v2747 = vadd.f32 %v2031, %v2653
  %v2748 = vadd.f32 %v2032, %v2658
  %v2749 = vadd.f32 %v2033, %v2663
  %v2750 = vadd.f32 %v2034, %v2668
  %v2751 = vadd.f32 %v2035, %v2673
  %v2752 = vadd.f32 %v2036, %v2678
  %v2753 = vadd.f32 %v2037, %v2683
  %v2754 = vadd.f32 %v2038, %v2688
  %s2755 = scalar_lea.vmem %s0, 2048
  %v2756 = vld [vmem:[%s2755] sm:$0xff]
  %v2757 = vld [vmem:[%s2755 + $0x8] sm:$0xff]
  %v2758 = vld [vmem:[%s2755 + $0x10] sm:$0xff]
  %v2759 = vld [vmem:[%s2755 + $0x18] sm:$0xff]
  %v2760 = vld [vmem:[%s2755 + $0x20] sm:$0xff]
  %v2761 = vld [vmem:[%s2755 + $0x28] sm:$0xff]
  %v2762 = vld [vmem:[%s2755 + $0x30] sm:$0xff]
  %v2763 = vld [vmem:[%s2755 + $0x38] sm:$0xff]
  %v2764 = vld [vmem:[%s2755 + $0x40] sm:$0xff]
  %v2765 = vld [vmem:[%s2755 + $0x48] sm:$0xff]
  %v2766 = vld [vmem:[%s2755 + $0x50] sm:$0xff]
  %v2767 = vld [vmem:[%s2755 + $0x58] sm:$0xff]
  %v2768 = vld [vmem:[%s2755 + $0x60] sm:$0xff]
  %v2769 = vld [vmem:[%s2755 + $0x68] sm:$0xff]
  %v2770 = vld [vmem:[%s2755 + $0x70] sm:$0xff]
  %v2771 = vld [vmem:[%s2755 + $0x78] sm:$0xff]
  %v2772 = vld [vmem:[%s2755 + $0x80] sm:$0xff]
  %v2773 = vld [vmem:[%s2755 + $0x88] sm:$0xff]
  %v2774 = vld [vmem:[%s2755 + $0x90] sm:$0xff]
  %v2775 = vld [vmem:[%s2755 + $0x98] sm:$0xff]
  %v2776 = vld [vmem:[%s2755 + $0xa0] sm:$0xff]
  %v2777 = vld [vmem:[%s2755 + $0xa8] sm:$0xff]
  %v2778 = vld [vmem:[%s2755 + $0xb0] sm:$0xff]
  %v2779 = vld [vmem:[%s2755 + $0xb8] sm:$0xff]
  %v2780 = vld [vmem:[%s2755 + $0xc0] sm:$0xff]
  %v2781 = vld [vmem:[%s2755 + $0xc8] sm:$0xff]
  %v2782 = vld [vmem:[%s2755 + $0xd0] sm:$0xff]
  %v2783 = vld [vmem:[%s2755 + $0xd8] sm:$0xff]
  %v2784 = vld [vmem:[%s2755 + $0xe0] sm:$0xff]
  %v2785 = vld [vmem:[%s2755 + $0xe8] sm:$0xff]
  %v2786 = vld [vmem:[%s2755 + $0xf0] sm:$0xff]
  %v2787 = vld [vmem:[%s2755 + $0xf8] sm:$0xff]
  %v2788 = vld [vmem:[%s2755 + $0x100] sm:$0xff]
  %v2789 = vld [vmem:[%s2755 + $0x108] sm:$0xff]
  %v2790 = vld [vmem:[%s2755 + $0x110] sm:$0xff]
  %v2791 = vld [vmem:[%s2755 + $0x118] sm:$0xff]
  %v2792 = vld [vmem:[%s2755 + $0x120] sm:$0xff]
  %v2793 = vld [vmem:[%s2755 + $0x128] sm:$0xff]
  %v2794 = vld [vmem:[%s2755 + $0x130] sm:$0xff]
  %v2795 = vld [vmem:[%s2755 + $0x138] sm:$0xff]
  %v2796 = vld [vmem:[%s2755 + $0x140] sm:$0xff]
  %v2797 = vld [vmem:[%s2755 + $0x148] sm:$0xff]
  %v2798 = vld [vmem:[%s2755 + $0x150] sm:$0xff]
  %v2799 = vld [vmem:[%s2755 + $0x158] sm:$0xff]
  %v2800 = vld [vmem:[%s2755 + $0x160] sm:$0xff]
  %v2801 = vld [vmem:[%s2755 + $0x168] sm:$0xff]
  %v2802 = vld [vmem:[%s2755 + $0x170] sm:$0xff]
  %v2803 = vld [vmem:[%s2755 + $0x178] sm:$0xff]
  %v2804 = vld [vmem:[%s2755 + $0x180] sm:$0xff]
  %v2805 = vld [vmem:[%s2755 + $0x188] sm:$0xff]
  %v2806 = vld [vmem:[%s2755 + $0x190] sm:$0xff]
  %v2807 = vld [vmem:[%s2755 + $0x198] sm:$0xff]
  %v2808 = vld [vmem:[%s2755 + $0x1a0] sm:$0xff]
  %v2809 = vld [vmem:[%s2755 + $0x1a8] sm:$0xff]
  %v2810 = vld [vmem:[%s2755 + $0x1b0] sm:$0xff]
  %v2811 = vld [vmem:[%s2755 + $0x1b8] sm:$0xff]
  %v2812 = vld [vmem:[%s2755 + $0x1c0] sm:$0xff]
  %v2813 = vld [vmem:[%s2755 + $0x1c8] sm:$0xff]
  %v2814 = vld [vmem:[%s2755 + $0x1d0] sm:$0xff]
  %v2815 = vld [vmem:[%s2755 + $0x1d8] sm:$0xff]
  %v2816 = vld [vmem:[%s2755 + $0x1e0] sm:$0xff]
  %v2817 = vld [vmem:[%s2755 + $0x1e8] sm:$0xff]
  %v2818 = vld [vmem:[%s2755 + $0x1f0] sm:$0xff]
  %v2819 = vld [vmem:[%s2755 + $0x1f8] sm:$0xff]
  %s2820 = scalar_lea.vmem %s1, 288
  %v2821 = vld [vmem:[%s2820] sm:$0xff]
  %v2822 = vld [vmem:[%s2820 + $0x8] sm:$0xff]
  %v2823 = vld [vmem:[%s2820 + $0x10] sm:$0xff]
  %v2824 = vld [vmem:[%s2820 + $0x18] sm:$0xff]
  %v2825 = vld [vmem:[%s2820 + $0x20] sm:$0xff]
  %v2826 = vld [vmem:[%s2820 + $0x28] sm:$0xff]
  %v2827 = vld [vmem:[%s2820 + $0x30] sm:$0xff]
  %v2828 = vld [vmem:[%s2820 + $0x38] sm:$0xff]
  %v2829 = vld [vmem:[%s2820 + $0x40] sm:$0xff]
  %v2831 = vsel %vm168, %v2756, 0
  %v2834 = vsel %vm168, %v2757, 0
  %v2837 = vsel %vm168, %v2758, 0
  %v2840 = vsel %vm168, %v2759, 0
  %v2843 = vsel %vm168, %v2760, 0
  %v2846 = vsel %vm168, %v2761, 0
  %v2849 = vsel %vm168, %v2762, 0
  %v2852 = vsel %vm168, %v2763, 0
  %v2855 = vsel %vm168, %v2764, 0
  %v2858 = vsel %vm168, %v2765, 0
  %v2861 = vsel %vm168, %v2766, 0
  %v2864 = vsel %vm168, %v2767, 0
  %v2867 = vsel %vm168, %v2768, 0
  %v2870 = vsel %vm168, %v2769, 0
  %v2873 = vsel %vm168, %v2770, 0
  %v2876 = vsel %vm168, %v2771, 0
  %v2879 = vsel %vm168, %v2772, 0
  %v2882 = vsel %vm168, %v2773, 0
  %v2885 = vsel %vm168, %v2774, 0
  %v2888 = vsel %vm168, %v2775, 0
  %v2891 = vsel %vm168, %v2776, 0
  %v2894 = vsel %vm168, %v2777, 0
  %v2897 = vsel %vm168, %v2778, 0
  %v2900 = vsel %vm168, %v2779, 0
  %v2903 = vsel %vm168, %v2780, 0
  %v2906 = vsel %vm168, %v2781, 0
  %v2909 = vsel %vm168, %v2782, 0
  %v2912 = vsel %vm168, %v2783, 0
  %v2915 = vsel %vm168, %v2784, 0
  %v2918 = vsel %vm168, %v2785, 0
  %v2921 = vsel %vm168, %v2786, 0
  %v2924 = vsel %vm168, %v2787, 0
  %v2927 = vsel %vm168, %v2788, 0
  %v2930 = vsel %vm168, %v2789, 0
  %v2933 = vsel %vm168, %v2790, 0
  %v2936 = vsel %vm168, %v2791, 0
  %v2939 = vsel %vm168, %v2792, 0
  %v2942 = vsel %vm168, %v2793, 0
  %v2945 = vsel %vm168, %v2794, 0
  %v2948 = vsel %vm168, %v2795, 0
  %v2951 = vsel %vm168, %v2796, 0
  %v2954 = vsel %vm168, %v2797, 0
  %v2957 = vsel %vm168, %v2798, 0
  %v2960 = vsel %vm168, %v2799, 0
  %v2963 = vsel %vm168, %v2800, 0
  %v2966 = vsel %vm168, %v2801, 0
  %v2969 = vsel %vm168, %v2802, 0
  %v2972 = vsel %vm168, %v2803, 0
  %v2975 = vsel %vm168, %v2804, 0
  %v2978 = vsel %vm168, %v2805, 0
  %v2981 = vsel %vm168, %v2806, 0
  %v2984 = vsel %vm168, %v2807, 0
  %v2987 = vsel %vm168, %v2808, 0
  %v2990 = vsel %vm168, %v2809, 0
  %v2993 = vsel %vm168, %v2810, 0
  %v2996 = vsel %vm168, %v2811, 0
  %v2999 = vsel %vm168, %v2812, 0
  %v3002 = vsel %vm168, %v2813, 0
  %v3005 = vsel %vm168, %v2814, 0
  %v3008 = vsel %vm168, %v2815, 0
  %v3011 = vsel %vm168, %v2816, 0
  %v3014 = vsel %vm168, %v2817, 0
  %v3017 = vsel %vm168, %v2818, 0
  %v3020 = vsel %vm168, %v2819, 0
  %3022 = vmatprep.subr.mxu0 0.0
  %3023 = vmatpush1.msra.mxu0 0.0
  %3024 = vmatprep.subr.mxu0 0.0
  %3025 = vmatpush1.msra.mxu0 0.0
  %3026 = vmatprep.subr.mxu0 0.0
  %3027 = vmatpush1.msra.mxu0 0.0
  %3028 = vmatprep.subr.mxu0 0.0
  %3029 = vmatpush1.msra.mxu0 0.0
  %3030 = vmatprep.subr.mxu0 0.0
  %3031 = vmatpush1.msra.mxu0 0.0
  %3032 = vmatprep.subr.mxu0 0.0
  %3033 = vmatpush1.msra.mxu0 0.0
  %3034 = vmatprep.subr.mxu0 0.0
  %3035 = vmatpush1.msra.mxu0 0.0
  %3036 = vmatprep.subr.mxu0 0.0
  %3037 = vmatpush1.msra.mxu0 %v2829
  %3038 = vmatprep.subr.mxu0 0.0
  %3039 = vmatpush1.msra.mxu0 %v2828
  %3040 = vmatprep.subr.mxu0 0.0
  %3041 = vmatpush1.msra.mxu0 %v2827
  %3042 = vmatprep.subr.mxu0 0.0
  %3043 = vmatpush1.msra.mxu0 %v2826
  %3044 = vmatprep.subr.mxu0 0.0
  %3045 = vmatpush1.msra.mxu0 %v2825
  %3046 = vmatprep.subr.mxu0 0.0
  %3047 = vmatpush1.msra.mxu0 %v2824
  %3048 = vmatprep.subr.mxu0 0.0
  %3049 = vmatpush1.msra.mxu0 %v2823
  %3050 = vmatprep.subr.mxu0 0.0
  %3051 = vmatpush1.msra.mxu0 %v2822
  %3052 = vmatprep.subr.mxu0 0.0
  %3053 = vmatpush1.msra.mxu0 %v2821
  %3054 = vmatprep.subr.mxu0 0.0
  %3055 = vmatpush2.msra.mxu0 0.0
  %3056 = vmatprep.subr.mxu0 0.0
  %3057 = vmatpush2.msra.mxu0 0.0
  %3058 = vmatprep.subr.mxu0 0.0
  %3059 = vmatpush2.msra.mxu0 0.0
  %3060 = vmatprep.subr.mxu0 0.0
  %3061 = vmatpush2.msra.mxu0 0.0
  %3062 = vmatprep.subr.mxu0 0.0
  %3063 = vmatpush2.msra.mxu0 0.0
  %3064 = vmatprep.subr.mxu0 0.0
  %3065 = vmatpush2.msra.mxu0 0.0
  %3066 = vmatprep.subr.mxu0 0.0
  %3067 = vmatpush2.msra.mxu0 0.0
  %3068 = vmatprep.subr.mxu0 0.0
  %3069 = vmatpush2.msra.mxu0 0.0
  %3070 = vmatprep.subr.mxu0 0.0
  %3071 = vmatpush2.msra.mxu0 0.0
  %3072 = vmatprep.subr.mxu0 0.0
  %3073 = vmatpush2.msra.mxu0 0.0
  %3074 = vmatprep.subr.mxu0 0.0
  %3075 = vmatpush2.msra.mxu0 0.0
  %3076 = vmatprep.subr.mxu0 0.0
  %3077 = vmatpush2.msra.mxu0 0.0
  %3078 = vmatprep.subr.mxu0 0.0
  %3079 = vmatpush2.msra.mxu0 0.0
  %3080 = vmatprep.subr.mxu0 0.0
  %3081 = vmatpush2.msra.mxu0 0.0
  %3082 = vmatprep.subr.mxu0 0.0
  %3083 = vmatpush2.msra.mxu0 0.0
  %3084 = vmatprep.subr.mxu0 0.0
  %3085 = vmatpush2.msra.mxu0 0.0
  %3086 = vmatprep.mubr.f32.mxu0 0.0
  %3087 = vmatmul.mubr.f32.gmra.mxu0 %v2831
  %v3088 = vpop.f32.mrf.mxu0
  %v3089 = vadd.f32 0.0, %v3088
  %v3090 = vpop.f32.mrf.mxu0
  %3091 = vmatprep.mubr.f32.mxu0 0.0
  %3092 = vmatmul.mubr.f32.gmra.mxu0 %v2834
  %v3093 = vpop.f32.mrf.mxu0
  %v3094 = vadd.f32 0.0, %v3093
  %v3095 = vpop.f32.mrf.mxu0
  %3096 = vmatprep.mubr.f32.mxu0 0.0
  %3097 = vmatmul.mubr.f32.gmra.mxu0 %v2837
  %v3098 = vpop.f32.mrf.mxu0
  %v3099 = vadd.f32 0.0, %v3098
  %v3100 = vpop.f32.mrf.mxu0
  %3101 = vmatprep.mubr.f32.mxu0 0.0
  %3102 = vmatmul.mubr.f32.gmra.mxu0 %v2840
  %v3103 = vpop.f32.mrf.mxu0
  %v3104 = vadd.f32 0.0, %v3103
  %v3105 = vpop.f32.mrf.mxu0
  %3106 = vmatprep.mubr.f32.mxu0 0.0
  %3107 = vmatmul.mubr.f32.gmra.mxu0 %v2843
  %v3108 = vpop.f32.mrf.mxu0
  %v3109 = vadd.f32 0.0, %v3108
  %v3110 = vpop.f32.mrf.mxu0
  %3111 = vmatprep.mubr.f32.mxu0 0.0
  %3112 = vmatmul.mubr.f32.gmra.mxu0 %v2846
  %v3113 = vpop.f32.mrf.mxu0
  %v3114 = vadd.f32 0.0, %v3113
  %v3115 = vpop.f32.mrf.mxu0
  %3116 = vmatprep.mubr.f32.mxu0 0.0
  %3117 = vmatmul.mubr.f32.gmra.mxu0 %v2849
  %v3118 = vpop.f32.mrf.mxu0
  %v3119 = vadd.f32 0.0, %v3118
  %v3120 = vpop.f32.mrf.mxu0
  %3121 = vmatprep.mubr.f32.mxu0 0.0
  %3122 = vmatmul.mubr.f32.gmra.mxu0 %v2852
  %v3123 = vpop.f32.mrf.mxu0
  %v3124 = vadd.f32 0.0, %v3123
  %v3125 = vpop.f32.mrf.mxu0
  %3126 = vmatprep.mubr.f32.mxu0 0.0
  %3127 = vmatmul.mubr.f32.gmra.mxu0 %v2855
  %v3128 = vpop.f32.mrf.mxu0
  %v3129 = vadd.f32 0.0, %v3128
  %v3130 = vpop.f32.mrf.mxu0
  %3131 = vmatprep.mubr.f32.mxu0 0.0
  %3132 = vmatmul.mubr.f32.gmra.mxu0 %v2858
  %v3133 = vpop.f32.mrf.mxu0
  %v3134 = vadd.f32 0.0, %v3133
  %v3135 = vpop.f32.mrf.mxu0
  %3136 = vmatprep.mubr.f32.mxu0 0.0
  %3137 = vmatmul.mubr.f32.gmra.mxu0 %v2861
  %v3138 = vpop.f32.mrf.mxu0
  %v3139 = vadd.f32 0.0, %v3138
  %v3140 = vpop.f32.mrf.mxu0
  %3141 = vmatprep.mubr.f32.mxu0 0.0
  %3142 = vmatmul.mubr.f32.gmra.mxu0 %v2864
  %v3143 = vpop.f32.mrf.mxu0
  %v3144 = vadd.f32 0.0, %v3143
  %v3145 = vpop.f32.mrf.mxu0
  %3146 = vmatprep.mubr.f32.mxu0 0.0
  %3147 = vmatmul.mubr.f32.gmra.mxu0 %v2867
  %v3148 = vpop.f32.mrf.mxu0
  %v3149 = vadd.f32 0.0, %v3148
  %v3150 = vpop.f32.mrf.mxu0
  %3151 = vmatprep.mubr.f32.mxu0 0.0
  %3152 = vmatmul.mubr.f32.gmra.mxu0 %v2870
  %v3153 = vpop.f32.mrf.mxu0
  %v3154 = vadd.f32 0.0, %v3153
  %v3155 = vpop.f32.mrf.mxu0
  %3156 = vmatprep.mubr.f32.mxu0 0.0
  %3157 = vmatmul.mubr.f32.gmra.mxu0 %v2873
  %v3158 = vpop.f32.mrf.mxu0
  %v3159 = vadd.f32 0.0, %v3158
  %v3160 = vpop.f32.mrf.mxu0
  %3161 = vmatprep.mubr.f32.mxu0 0.0
  %3162 = vmatmul.mubr.f32.gmra.mxu0 %v2876
  %v3163 = vpop.f32.mrf.mxu0
  %v3164 = vadd.f32 0.0, %v3163
  %v3165 = vpop.f32.mrf.mxu0
  %3166 = vmatprep.mubr.f32.mxu0 0.0
  %3167 = vmatmul.mubr.f32.gmra.mxu0 %v2879
  %v3168 = vpop.f32.mrf.mxu0
  %v3169 = vadd.f32 0.0, %v3168
  %v3170 = vpop.f32.mrf.mxu0
  %3171 = vmatprep.mubr.f32.mxu0 0.0
  %3172 = vmatmul.mubr.f32.gmra.mxu0 %v2882
  %v3173 = vpop.f32.mrf.mxu0
  %v3174 = vadd.f32 0.0, %v3173
  %v3175 = vpop.f32.mrf.mxu0
  %3176 = vmatprep.mubr.f32.mxu0 0.0
  %3177 = vmatmul.mubr.f32.gmra.mxu0 %v2885
  %v3178 = vpop.f32.mrf.mxu0
  %v3179 = vadd.f32 0.0, %v3178
  %v3180 = vpop.f32.mrf.mxu0
  %3181 = vmatprep.mubr.f32.mxu0 0.0
  %3182 = vmatmul.mubr.f32.gmra.mxu0 %v2888
  %v3183 = vpop.f32.mrf.mxu0
  %v3184 = vadd.f32 0.0, %v3183
  %v3185 = vpop.f32.mrf.mxu0
  %3186 = vmatprep.mubr.f32.mxu0 0.0
  %3187 = vmatmul.mubr.f32.gmra.mxu0 %v2891
  %v3188 = vpop.f32.mrf.mxu0
  %v3189 = vadd.f32 0.0, %v3188
  %v3190 = vpop.f32.mrf.mxu0
  %3191 = vmatprep.mubr.f32.mxu0 0.0
  %3192 = vmatmul.mubr.f32.gmra.mxu0 %v2894
  %v3193 = vpop.f32.mrf.mxu0
  %v3194 = vadd.f32 0.0, %v3193
  %v3195 = vpop.f32.mrf.mxu0
  %3196 = vmatprep.mubr.f32.mxu0 0.0
  %3197 = vmatmul.mubr.f32.gmra.mxu0 %v2897
  %v3198 = vpop.f32.mrf.mxu0
  %v3199 = vadd.f32 0.0, %v3198
  %v3200 = vpop.f32.mrf.mxu0
  %3201 = vmatprep.mubr.f32.mxu0 0.0
  %3202 = vmatmul.mubr.f32.gmra.mxu0 %v2900
  %v3203 = vpop.f32.mrf.mxu0
  %v3204 = vadd.f32 0.0, %v3203
  %v3205 = vpop.f32.mrf.mxu0
  %3206 = vmatprep.mubr.f32.mxu0 0.0
  %3207 = vmatmul.mubr.f32.gmra.mxu0 %v2903
  %v3208 = vpop.f32.mrf.mxu0
  %v3209 = vadd.f32 0.0, %v3208
  %v3210 = vpop.f32.mrf.mxu0
  %3211 = vmatprep.mubr.f32.mxu0 0.0
  %3212 = vmatmul.mubr.f32.gmra.mxu0 %v2906
  %v3213 = vpop.f32.mrf.mxu0
  %v3214 = vadd.f32 0.0, %v3213
  %v3215 = vpop.f32.mrf.mxu0
  %3216 = vmatprep.mubr.f32.mxu0 0.0
  %3217 = vmatmul.mubr.f32.gmra.mxu0 %v2909
  %v3218 = vpop.f32.mrf.mxu0
  %v3219 = vadd.f32 0.0, %v3218
  %v3220 = vpop.f32.mrf.mxu0
  %3221 = vmatprep.mubr.f32.mxu0 0.0
  %3222 = vmatmul.mubr.f32.gmra.mxu0 %v2912
  %v3223 = vpop.f32.mrf.mxu0
  %v3224 = vadd.f32 0.0, %v3223
  %v3225 = vpop.f32.mrf.mxu0
  %3226 = vmatprep.mubr.f32.mxu0 0.0
  %3227 = vmatmul.mubr.f32.gmra.mxu0 %v2915
  %v3228 = vpop.f32.mrf.mxu0
  %v3229 = vadd.f32 0.0, %v3228
  %v3230 = vpop.f32.mrf.mxu0
  %3231 = vmatprep.mubr.f32.mxu0 0.0
  %3232 = vmatmul.mubr.f32.gmra.mxu0 %v2918
  %v3233 = vpop.f32.mrf.mxu0
  %v3234 = vadd.f32 0.0, %v3233
  %v3235 = vpop.f32.mrf.mxu0
  %3236 = vmatprep.mubr.f32.mxu0 0.0
  %3237 = vmatmul.mubr.f32.gmra.mxu0 %v2921
  %v3238 = vpop.f32.mrf.mxu0
  %v3239 = vadd.f32 0.0, %v3238
  %v3240 = vpop.f32.mrf.mxu0
  %3241 = vmatprep.mubr.f32.mxu0 0.0
  %3242 = vmatmul.mubr.f32.gmra.mxu0 %v2924
  %v3243 = vpop.f32.mrf.mxu0
  %v3244 = vadd.f32 0.0, %v3243
  %v3245 = vpop.f32.mrf.mxu0
  %3246 = vmatprep.mubr.f32.mxu0 0.0
  %3247 = vmatmul.mubr.f32.gmra.mxu0 %v2927
  %v3248 = vpop.f32.mrf.mxu0
  %v3249 = vadd.f32 0.0, %v3248
  %v3250 = vpop.f32.mrf.mxu0
  %3251 = vmatprep.mubr.f32.mxu0 0.0
  %3252 = vmatmul.mubr.f32.gmra.mxu0 %v2930
  %v3253 = vpop.f32.mrf.mxu0
  %v3254 = vadd.f32 0.0, %v3253
  %v3255 = vpop.f32.mrf.mxu0
  %3256 = vmatprep.mubr.f32.mxu0 0.0
  %3257 = vmatmul.mubr.f32.gmra.mxu0 %v2933
  %v3258 = vpop.f32.mrf.mxu0
  %v3259 = vadd.f32 0.0, %v3258
  %v3260 = vpop.f32.mrf.mxu0
  %3261 = vmatprep.mubr.f32.mxu0 0.0
  %3262 = vmatmul.mubr.f32.gmra.mxu0 %v2936
  %v3263 = vpop.f32.mrf.mxu0
  %v3264 = vadd.f32 0.0, %v3263
  %v3265 = vpop.f32.mrf.mxu0
  %3266 = vmatprep.mubr.f32.mxu0 0.0
  %3267 = vmatmul.mubr.f32.gmra.mxu0 %v2939
  %v3268 = vpop.f32.mrf.mxu0
  %v3269 = vadd.f32 0.0, %v3268
  %v3270 = vpop.f32.mrf.mxu0
  %3271 = vmatprep.mubr.f32.mxu0 0.0
  %3272 = vmatmul.mubr.f32.gmra.mxu0 %v2942
  %v3273 = vpop.f32.mrf.mxu0
  %v3274 = vadd.f32 0.0, %v3273
  %v3275 = vpop.f32.mrf.mxu0
  %3276 = vmatprep.mubr.f32.mxu0 0.0
  %3277 = vmatmul.mubr.f32.gmra.mxu0 %v2945
  %v3278 = vpop.f32.mrf.mxu0
  %v3279 = vadd.f32 0.0, %v3278
  %v3280 = vpop.f32.mrf.mxu0
  %3281 = vmatprep.mubr.f32.mxu0 0.0
  %3282 = vmatmul.mubr.f32.gmra.mxu0 %v2948
  %v3283 = vpop.f32.mrf.mxu0
  %v3284 = vadd.f32 0.0, %v3283
  %v3285 = vpop.f32.mrf.mxu0
  %3286 = vmatprep.mubr.f32.mxu0 0.0
  %3287 = vmatmul.mubr.f32.gmra.mxu0 %v2951
  %v3288 = vpop.f32.mrf.mxu0
  %v3289 = vadd.f32 0.0, %v3288
  %v3290 = vpop.f32.mrf.mxu0
  %3291 = vmatprep.mubr.f32.mxu0 0.0
  %3292 = vmatmul.mubr.f32.gmra.mxu0 %v2954
  %v3293 = vpop.f32.mrf.mxu0
  %v3294 = vadd.f32 0.0, %v3293
  %v3295 = vpop.f32.mrf.mxu0
  %3296 = vmatprep.mubr.f32.mxu0 0.0
  %3297 = vmatmul.mubr.f32.gmra.mxu0 %v2957
  %v3298 = vpop.f32.mrf.mxu0
  %v3299 = vadd.f32 0.0, %v3298
  %v3300 = vpop.f32.mrf.mxu0
  %3301 = vmatprep.mubr.f32.mxu0 0.0
  %3302 = vmatmul.mubr.f32.gmra.mxu0 %v2960
  %v3303 = vpop.f32.mrf.mxu0
  %v3304 = vadd.f32 0.0, %v3303
  %v3305 = vpop.f32.mrf.mxu0
  %3306 = vmatprep.mubr.f32.mxu0 0.0
  %3307 = vmatmul.mubr.f32.gmra.mxu0 %v2963
  %v3308 = vpop.f32.mrf.mxu0
  %v3309 = vadd.f32 0.0, %v3308
  %v3310 = vpop.f32.mrf.mxu0
  %3311 = vmatprep.mubr.f32.mxu0 0.0
  %3312 = vmatmul.mubr.f32.gmra.mxu0 %v2966
  %v3313 = vpop.f32.mrf.mxu0
  %v3314 = vadd.f32 0.0, %v3313
  %v3315 = vpop.f32.mrf.mxu0
  %3316 = vmatprep.mubr.f32.mxu0 0.0
  %3317 = vmatmul.mubr.f32.gmra.mxu0 %v2969
  %v3318 = vpop.f32.mrf.mxu0
  %v3319 = vadd.f32 0.0, %v3318
  %v3320 = vpop.f32.mrf.mxu0
  %3321 = vmatprep.mubr.f32.mxu0 0.0
  %3322 = vmatmul.mubr.f32.gmra.mxu0 %v2972
  %v3323 = vpop.f32.mrf.mxu0
  %v3324 = vadd.f32 0.0, %v3323
  %v3325 = vpop.f32.mrf.mxu0
  %3326 = vmatprep.mubr.f32.mxu0 0.0
  %3327 = vmatmul.mubr.f32.gmra.mxu0 %v2975
  %v3328 = vpop.f32.mrf.mxu0
  %v3329 = vadd.f32 0.0, %v3328
  %v3330 = vpop.f32.mrf.mxu0
  %3331 = vmatprep.mubr.f32.mxu0 0.0
  %3332 = vmatmul.mubr.f32.gmra.mxu0 %v2978
  %v3333 = vpop.f32.mrf.mxu0
  %v3334 = vadd.f32 0.0, %v3333
  %v3335 = vpop.f32.mrf.mxu0
  %3336 = vmatprep.mubr.f32.mxu0 0.0
  %3337 = vmatmul.mubr.f32.gmra.mxu0 %v2981
  %v3338 = vpop.f32.mrf.mxu0
  %v3339 = vadd.f32 0.0, %v3338
  %v3340 = vpop.f32.mrf.mxu0
  %3341 = vmatprep.mubr.f32.mxu0 0.0
  %3342 = vmatmul.mubr.f32.gmra.mxu0 %v2984
  %v3343 = vpop.f32.mrf.mxu0
  %v3344 = vadd.f32 0.0, %v3343
  %v3345 = vpop.f32.mrf.mxu0
  %3346 = vmatprep.mubr.f32.mxu0 0.0
  %3347 = vmatmul.mubr.f32.gmra.mxu0 %v2987
  %v3348 = vpop.f32.mrf.mxu0
  %v3349 = vadd.f32 0.0, %v3348
  %v3350 = vpop.f32.mrf.mxu0
  %3351 = vmatprep.mubr.f32.mxu0 0.0
  %3352 = vmatmul.mubr.f32.gmra.mxu0 %v2990
  %v3353 = vpop.f32.mrf.mxu0
  %v3354 = vadd.f32 0.0, %v3353
  %v3355 = vpop.f32.mrf.mxu0
  %3356 = vmatprep.mubr.f32.mxu0 0.0
  %3357 = vmatmul.mubr.f32.gmra.mxu0 %v2993
  %v3358 = vpop.f32.mrf.mxu0
  %v3359 = vadd.f32 0.0, %v3358
  %v3360 = vpop.f32.mrf.mxu0
  %3361 = vmatprep.mubr.f32.mxu0 0.0
  %3362 = vmatmul.mubr.f32.gmra.mxu0 %v2996
  %v3363 = vpop.f32.mrf.mxu0
  %v3364 = vadd.f32 0.0, %v3363
  %v3365 = vpop.f32.mrf.mxu0
  %3366 = vmatprep.mubr.f32.mxu0 0.0
  %3367 = vmatmul.mubr.f32.gmra.mxu0 %v2999
  %v3368 = vpop.f32.mrf.mxu0
  %v3369 = vadd.f32 0.0, %v3368
  %v3370 = vpop.f32.mrf.mxu0
  %3371 = vmatprep.mubr.f32.mxu0 0.0
  %3372 = vmatmul.mubr.f32.gmra.mxu0 %v3002
  %v3373 = vpop.f32.mrf.mxu0
  %v3374 = vadd.f32 0.0, %v3373
  %v3375 = vpop.f32.mrf.mxu0
  %3376 = vmatprep.mubr.f32.mxu0 0.0
  %3377 = vmatmul.mubr.f32.gmra.mxu0 %v3005
  %v3378 = vpop.f32.mrf.mxu0
  %v3379 = vadd.f32 0.0, %v3378
  %v3380 = vpop.f32.mrf.mxu0
  %3381 = vmatprep.mubr.f32.mxu0 0.0
  %3382 = vmatmul.mubr.f32.gmra.mxu0 %v3008
  %v3383 = vpop.f32.mrf.mxu0
  %v3384 = vadd.f32 0.0, %v3383
  %v3385 = vpop.f32.mrf.mxu0
  %3386 = vmatprep.mubr.f32.mxu0 0.0
  %3387 = vmatmul.mubr.f32.gmra.mxu0 %v3011
  %v3388 = vpop.f32.mrf.mxu0
  %v3389 = vadd.f32 0.0, %v3388
  %v3390 = vpop.f32.mrf.mxu0
  %3391 = vmatprep.mubr.f32.mxu0 0.0
  %3392 = vmatmul.mubr.f32.gmra.mxu0 %v3014
  %v3393 = vpop.f32.mrf.mxu0
  %v3394 = vadd.f32 0.0, %v3393
  %v3395 = vpop.f32.mrf.mxu0
  %3396 = vmatprep.mubr.f32.mxu0 0.0
  %3397 = vmatmul.mubr.f32.gmra.mxu0 %v3017
  %v3398 = vpop.f32.mrf.mxu0
  %v3399 = vadd.f32 0.0, %v3398
  %v3400 = vpop.f32.mrf.mxu0
  %3401 = vmatprep.mubr.f32.mxu0 0.0
  %3402 = vmatmul.mubr.f32.gmra.mxu0 %v3020
  %v3403 = vpop.f32.mrf.mxu0
  %v3404 = vadd.f32 0.0, %v3403
  %v3405 = vpop.f32.mrf.mxu0
  %3406 = vdwg.mxu0
  %v3407 = vadd.f32 %v2691, %v3089
  %v3408 = vadd.f32 %v2692, %v3094
  %v3409 = vadd.f32 %v2693, %v3099
  %v3410 = vadd.f32 %v2694, %v3104
  %v3411 = vadd.f32 %v2695, %v3109
  %v3412 = vadd.f32 %v2696, %v3114
  %v3413 = vadd.f32 %v2697, %v3119
  %v3414 = vadd.f32 %v2698, %v3124
  %v3415 = vadd.f32 %v2699, %v3129
  %v3416 = vadd.f32 %v2700, %v3134
  %v3417 = vadd.f32 %v2701, %v3139
  %v3418 = vadd.f32 %v2702, %v3144
  %v3419 = vadd.f32 %v2703, %v3149
  %v3420 = vadd.f32 %v2704, %v3154
  %v3421 = vadd.f32 %v2705, %v3159
  %v3422 = vadd.f32 %v2706, %v3164
  %v3423 = vadd.f32 %v2707, %v3169
  %v3424 = vadd.f32 %v2708, %v3174
  %v3425 = vadd.f32 %v2709, %v3179
  %v3426 = vadd.f32 %v2710, %v3184
  %v3427 = vadd.f32 %v2711, %v3189
  %v3428 = vadd.f32 %v2712, %v3194
  %v3429 = vadd.f32 %v2713, %v3199
  %v3430 = vadd.f32 %v2714, %v3204
  %v3431 = vadd.f32 %v2715, %v3209
  %v3432 = vadd.f32 %v2716, %v3214
  %v3433 = vadd.f32 %v2717, %v3219
  %v3434 = vadd.f32 %v2718, %v3224
  %v3435 = vadd.f32 %v2719, %v3229
  %v3436 = vadd.f32 %v2720, %v3234
  %v3437 = vadd.f32 %v2721, %v3239
  %v3438 = vadd.f32 %v2722, %v3244
  %v3439 = vadd.f32 %v2723, %v3249
  %v3440 = vadd.f32 %v2724, %v3254
  %v3441 = vadd.f32 %v2725, %v3259
  %v3442 = vadd.f32 %v2726, %v3264
  %v3443 = vadd.f32 %v2727, %v3269
  %v3444 = vadd.f32 %v2728, %v3274
  %v3445 = vadd.f32 %v2729, %v3279
  %v3446 = vadd.f32 %v2730, %v3284
  %v3447 = vadd.f32 %v2731, %v3289
  %v3448 = vadd.f32 %v2732, %v3294
  %v3449 = vadd.f32 %v2733, %v3299
  %v3450 = vadd.f32 %v2734, %v3304
  %v3451 = vadd.f32 %v2735, %v3309
  %v3452 = vadd.f32 %v2736, %v3314
  %v3453 = vadd.f32 %v2737, %v3319
  %v3454 = vadd.f32 %v2738, %v3324
  %v3455 = vadd.f32 %v2739, %v3329
  %v3456 = vadd.f32 %v2740, %v3334
  %v3457 = vadd.f32 %v2741, %v3339
  %v3458 = vadd.f32 %v2742, %v3344
  %v3459 = vadd.f32 %v2743, %v3349
  %v3460 = vadd.f32 %v2744, %v3354
  %v3461 = vadd.f32 %v2745, %v3359
  %v3462 = vadd.f32 %v2746, %v3364
  %v3463 = vadd.f32 %v2747, %v3369
  %v3464 = vadd.f32 %v2748, %v3374
  %v3465 = vadd.f32 %v2749, %v3379
  %v3466 = vadd.f32 %v2750, %v3384
  %v3467 = vadd.f32 %v2751, %v3389
  %v3468 = vadd.f32 %v2752, %v3394
  %v3469 = vadd.f32 %v2753, %v3399
  %v3470 = vadd.f32 %v2754, %v3404
  %s3471 = scalar_lea.vmem %s0, 2560
  %v3472 = vld [vmem:[%s3471] sm:$0xff]
  %v3473 = vld [vmem:[%s3471 + $0x8] sm:$0xff]
  %v3474 = vld [vmem:[%s3471 + $0x10] sm:$0xff]
  %v3475 = vld [vmem:[%s3471 + $0x18] sm:$0xff]
  %v3476 = vld [vmem:[%s3471 + $0x20] sm:$0xff]
  %v3477 = vld [vmem:[%s3471 + $0x28] sm:$0xff]
  %v3478 = vld [vmem:[%s3471 + $0x30] sm:$0xff]
  %v3479 = vld [vmem:[%s3471 + $0x38] sm:$0xff]
  %v3480 = vld [vmem:[%s3471 + $0x40] sm:$0xff]
  %v3481 = vld [vmem:[%s3471 + $0x48] sm:$0xff]
  %v3482 = vld [vmem:[%s3471 + $0x50] sm:$0xff]
  %v3483 = vld [vmem:[%s3471 + $0x58] sm:$0xff]
  %v3484 = vld [vmem:[%s3471 + $0x60] sm:$0xff]
  %v3485 = vld [vmem:[%s3471 + $0x68] sm:$0xff]
  %v3486 = vld [vmem:[%s3471 + $0x70] sm:$0xff]
  %v3487 = vld [vmem:[%s3471 + $0x78] sm:$0xff]
  %v3488 = vld [vmem:[%s3471 + $0x80] sm:$0xff]
  %v3489 = vld [vmem:[%s3471 + $0x88] sm:$0xff]
  %v3490 = vld [vmem:[%s3471 + $0x90] sm:$0xff]
  %v3491 = vld [vmem:[%s3471 + $0x98] sm:$0xff]
  %v3492 = vld [vmem:[%s3471 + $0xa0] sm:$0xff]
  %v3493 = vld [vmem:[%s3471 + $0xa8] sm:$0xff]
  %v3494 = vld [vmem:[%s3471 + $0xb0] sm:$0xff]
  %v3495 = vld [vmem:[%s3471 + $0xb8] sm:$0xff]
  %v3496 = vld [vmem:[%s3471 + $0xc0] sm:$0xff]
  %v3497 = vld [vmem:[%s3471 + $0xc8] sm:$0xff]
  %v3498 = vld [vmem:[%s3471 + $0xd0] sm:$0xff]
  %v3499 = vld [vmem:[%s3471 + $0xd8] sm:$0xff]
  %v3500 = vld [vmem:[%s3471 + $0xe0] sm:$0xff]
  %v3501 = vld [vmem:[%s3471 + $0xe8] sm:$0xff]
  %v3502 = vld [vmem:[%s3471 + $0xf0] sm:$0xff]
  %v3503 = vld [vmem:[%s3471 + $0xf8] sm:$0xff]
  %v3504 = vld [vmem:[%s3471 + $0x100] sm:$0xff]
  %v3505 = vld [vmem:[%s3471 + $0x108] sm:$0xff]
  %v3506 = vld [vmem:[%s3471 + $0x110] sm:$0xff]
  %v3507 = vld [vmem:[%s3471 + $0x118] sm:$0xff]
  %v3508 = vld [vmem:[%s3471 + $0x120] sm:$0xff]
  %v3509 = vld [vmem:[%s3471 + $0x128] sm:$0xff]
  %v3510 = vld [vmem:[%s3471 + $0x130] sm:$0xff]
  %v3511 = vld [vmem:[%s3471 + $0x138] sm:$0xff]
  %v3512 = vld [vmem:[%s3471 + $0x140] sm:$0xff]
  %v3513 = vld [vmem:[%s3471 + $0x148] sm:$0xff]
  %v3514 = vld [vmem:[%s3471 + $0x150] sm:$0xff]
  %v3515 = vld [vmem:[%s3471 + $0x158] sm:$0xff]
  %v3516 = vld [vmem:[%s3471 + $0x160] sm:$0xff]
  %v3517 = vld [vmem:[%s3471 + $0x168] sm:$0xff]
  %v3518 = vld [vmem:[%s3471 + $0x170] sm:$0xff]
  %v3519 = vld [vmem:[%s3471 + $0x178] sm:$0xff]
  %v3520 = vld [vmem:[%s3471 + $0x180] sm:$0xff]
  %v3521 = vld [vmem:[%s3471 + $0x188] sm:$0xff]
  %v3522 = vld [vmem:[%s3471 + $0x190] sm:$0xff]
  %v3523 = vld [vmem:[%s3471 + $0x198] sm:$0xff]
  %v3524 = vld [vmem:[%s3471 + $0x1a0] sm:$0xff]
  %v3525 = vld [vmem:[%s3471 + $0x1a8] sm:$0xff]
  %v3526 = vld [vmem:[%s3471 + $0x1b0] sm:$0xff]
  %v3527 = vld [vmem:[%s3471 + $0x1b8] sm:$0xff]
  %v3528 = vld [vmem:[%s3471 + $0x1c0] sm:$0xff]
  %v3529 = vld [vmem:[%s3471 + $0x1c8] sm:$0xff]
  %v3530 = vld [vmem:[%s3471 + $0x1d0] sm:$0xff]
  %v3531 = vld [vmem:[%s3471 + $0x1d8] sm:$0xff]
  %v3532 = vld [vmem:[%s3471 + $0x1e0] sm:$0xff]
  %v3533 = vld [vmem:[%s3471 + $0x1e8] sm:$0xff]
  %v3534 = vld [vmem:[%s3471 + $0x1f0] sm:$0xff]
  %v3535 = vld [vmem:[%s3471 + $0x1f8] sm:$0xff]
  %s3536 = scalar_lea.vmem %s1, 360
  %v3537 = vld [vmem:[%s3536] sm:$0xff]
  %v3538 = vld [vmem:[%s3536 + $0x8] sm:$0xff]
  %v3539 = vld [vmem:[%s3536 + $0x10] sm:$0xff]
  %v3540 = vld [vmem:[%s3536 + $0x18] sm:$0xff]
  %v3541 = vld [vmem:[%s3536 + $0x20] sm:$0xff]
  %v3542 = vld [vmem:[%s3536 + $0x28] sm:$0xff]
  %v3543 = vld [vmem:[%s3536 + $0x30] sm:$0xff]
  %v3544 = vld [vmem:[%s3536 + $0x38] sm:$0xff]
  %v3545 = vld [vmem:[%s3536 + $0x40] sm:$0xff]
  %v3547 = vsel %vm168, %v3472, 0
  %v3550 = vsel %vm168, %v3473, 0
  %v3553 = vsel %vm168, %v3474, 0
  %v3556 = vsel %vm168, %v3475, 0
  %v3559 = vsel %vm168, %v3476, 0
  %v3562 = vsel %vm168, %v3477, 0
  %v3565 = vsel %vm168, %v3478, 0
  %v3568 = vsel %vm168, %v3479, 0
  %v3571 = vsel %vm168, %v3480, 0
  %v3574 = vsel %vm168, %v3481, 0
  %v3577 = vsel %vm168, %v3482, 0
  %v3580 = vsel %vm168, %v3483, 0
  %v3583 = vsel %vm168, %v3484, 0
  %v3586 = vsel %vm168, %v3485, 0
  %v3589 = vsel %vm168, %v3486, 0
  %v3592 = vsel %vm168, %v3487, 0
  %v3595 = vsel %vm168, %v3488, 0
  %v3598 = vsel %vm168, %v3489, 0
  %v3601 = vsel %vm168, %v3490, 0
  %v3604 = vsel %vm168, %v3491, 0
  %v3607 = vsel %vm168, %v3492, 0
  %v3610 = vsel %vm168, %v3493, 0
  %v3613 = vsel %vm168, %v3494, 0
  %v3616 = vsel %vm168, %v3495, 0
  %v3619 = vsel %vm168, %v3496, 0
  %v3622 = vsel %vm168, %v3497, 0
  %v3625 = vsel %vm168, %v3498, 0
  %v3628 = vsel %vm168, %v3499, 0
  %v3631 = vsel %vm168, %v3500, 0
  %v3634 = vsel %vm168, %v3501, 0
  %v3637 = vsel %vm168, %v3502, 0
  %v3640 = vsel %vm168, %v3503, 0
  %v3643 = vsel %vm168, %v3504, 0
  %v3646 = vsel %vm168, %v3505, 0
  %v3649 = vsel %vm168, %v3506, 0
  %v3652 = vsel %vm168, %v3507, 0
  %v3655 = vsel %vm168, %v3508, 0
  %v3658 = vsel %vm168, %v3509, 0
  %v3661 = vsel %vm168, %v3510, 0
  %v3664 = vsel %vm168, %v3511, 0
  %v3667 = vsel %vm168, %v3512, 0
  %v3670 = vsel %vm168, %v3513, 0
  %v3673 = vsel %vm168, %v3514, 0
  %v3676 = vsel %vm168, %v3515, 0
  %v3679 = vsel %vm168, %v3516, 0
  %v3682 = vsel %vm168, %v3517, 0
  %v3685 = vsel %vm168, %v3518, 0
  %v3688 = vsel %vm168, %v3519, 0
  %v3691 = vsel %vm168, %v3520, 0
  %v3694 = vsel %vm168, %v3521, 0
  %v3697 = vsel %vm168, %v3522, 0
  %v3700 = vsel %vm168, %v3523, 0
  %v3703 = vsel %vm168, %v3524, 0
  %v3706 = vsel %vm168, %v3525, 0
  %v3709 = vsel %vm168, %v3526, 0
  %v3712 = vsel %vm168, %v3527, 0
  %v3715 = vsel %vm168, %v3528, 0
  %v3718 = vsel %vm168, %v3529, 0
  %v3721 = vsel %vm168, %v3530, 0
  %v3724 = vsel %vm168, %v3531, 0
  %v3727 = vsel %vm168, %v3532, 0
  %v3730 = vsel %vm168, %v3533, 0
  %v3733 = vsel %vm168, %v3534, 0
  %v3736 = vsel %vm168, %v3535, 0
  %3738 = vmatprep.subr.mxu0 0.0
  %3739 = vmatpush1.msra.mxu0 0.0
  %3740 = vmatprep.subr.mxu0 0.0
  %3741 = vmatpush1.msra.mxu0 0.0
  %3742 = vmatprep.subr.mxu0 0.0
  %3743 = vmatpush1.msra.mxu0 0.0
  %3744 = vmatprep.subr.mxu0 0.0
  %3745 = vmatpush1.msra.mxu0 0.0
  %3746 = vmatprep.subr.mxu0 0.0
  %3747 = vmatpush1.msra.mxu0 0.0
  %3748 = vmatprep.subr.mxu0 0.0
  %3749 = vmatpush1.msra.mxu0 0.0
  %3750 = vmatprep.subr.mxu0 0.0
  %3751 = vmatpush1.msra.mxu0 0.0
  %3752 = vmatprep.subr.mxu0 0.0
  %3753 = vmatpush1.msra.mxu0 %v3545
  %3754 = vmatprep.subr.mxu0 0.0
  %3755 = vmatpush1.msra.mxu0 %v3544
  %3756 = vmatprep.subr.mxu0 0.0
  %3757 = vmatpush1.msra.mxu0 %v3543
  %3758 = vmatprep.subr.mxu0 0.0
  %3759 = vmatpush1.msra.mxu0 %v3542
  %3760 = vmatprep.subr.mxu0 0.0
  %3761 = vmatpush1.msra.mxu0 %v3541
  %3762 = vmatprep.subr.mxu0 0.0
  %3763 = vmatpush1.msra.mxu0 %v3540
  %3764 = vmatprep.subr.mxu0 0.0
  %3765 = vmatpush1.msra.mxu0 %v3539
  %3766 = vmatprep.subr.mxu0 0.0
  %3767 = vmatpush1.msra.mxu0 %v3538
  %3768 = vmatprep.subr.mxu0 0.0
  %3769 = vmatpush1.msra.mxu0 %v3537
  %3770 = vmatprep.subr.mxu0 0.0
  %3771 = vmatpush2.msra.mxu0 0.0
  %3772 = vmatprep.subr.mxu0 0.0
  %3773 = vmatpush2.msra.mxu0 0.0
  %3774 = vmatprep.subr.mxu0 0.0
  %3775 = vmatpush2.msra.mxu0 0.0
  %3776 = vmatprep.subr.mxu0 0.0
  %3777 = vmatpush2.msra.mxu0 0.0
  %3778 = vmatprep.subr.mxu0 0.0
  %3779 = vmatpush2.msra.mxu0 0.0
  %3780 = vmatprep.subr.mxu0 0.0
  %3781 = vmatpush2.msra.mxu0 0.0
  %3782 = vmatprep.subr.mxu0 0.0
  %3783 = vmatpush2.msra.mxu0 0.0
  %3784 = vmatprep.subr.mxu0 0.0
  %3785 = vmatpush2.msra.mxu0 0.0
  %3786 = vmatprep.subr.mxu0 0.0
  %3787 = vmatpush2.msra.mxu0 0.0
  %3788 = vmatprep.subr.mxu0 0.0
  %3789 = vmatpush2.msra.mxu0 0.0
  %3790 = vmatprep.subr.mxu0 0.0
  %3791 = vmatpush2.msra.mxu0 0.0
  %3792 = vmatprep.subr.mxu0 0.0
  %3793 = vmatpush2.msra.mxu0 0.0
  %3794 = vmatprep.subr.mxu0 0.0
  %3795 = vmatpush2.msra.mxu0 0.0
  %3796 = vmatprep.subr.mxu0 0.0
  %3797 = vmatpush2.msra.mxu0 0.0
  %3798 = vmatprep.subr.mxu0 0.0
  %3799 = vmatpush2.msra.mxu0 0.0
  %3800 = vmatprep.subr.mxu0 0.0
  %3801 = vmatpush2.msra.mxu0 0.0
  %3802 = vmatprep.mubr.f32.mxu0 0.0
  %3803 = vmatmul.mubr.f32.gmra.mxu0 %v3547
  %v3804 = vpop.f32.mrf.mxu0
  %v3805 = vadd.f32 0.0, %v3804
  %v3806 = vpop.f32.mrf.mxu0
  %3807 = vmatprep.mubr.f32.mxu0 0.0
  %3808 = vmatmul.mubr.f32.gmra.mxu0 %v3550
  %v3809 = vpop.f32.mrf.mxu0
  %v3810 = vadd.f32 0.0, %v3809
  %v3811 = vpop.f32.mrf.mxu0
  %3812 = vmatprep.mubr.f32.mxu0 0.0
  %3813 = vmatmul.mubr.f32.gmra.mxu0 %v3553
  %v3814 = vpop.f32.mrf.mxu0
  %v3815 = vadd.f32 0.0, %v3814
  %v3816 = vpop.f32.mrf.mxu0
  %3817 = vmatprep.mubr.f32.mxu0 0.0
  %3818 = vmatmul.mubr.f32.gmra.mxu0 %v3556
  %v3819 = vpop.f32.mrf.mxu0
  %v3820 = vadd.f32 0.0, %v3819
  %v3821 = vpop.f32.mrf.mxu0
  %3822 = vmatprep.mubr.f32.mxu0 0.0
  %3823 = vmatmul.mubr.f32.gmra.mxu0 %v3559
  %v3824 = vpop.f32.mrf.mxu0
  %v3825 = vadd.f32 0.0, %v3824
  %v3826 = vpop.f32.mrf.mxu0
  %3827 = vmatprep.mubr.f32.mxu0 0.0
  %3828 = vmatmul.mubr.f32.gmra.mxu0 %v3562
  %v3829 = vpop.f32.mrf.mxu0
  %v3830 = vadd.f32 0.0, %v3829
  %v3831 = vpop.f32.mrf.mxu0
  %3832 = vmatprep.mubr.f32.mxu0 0.0
  %3833 = vmatmul.mubr.f32.gmra.mxu0 %v3565
  %v3834 = vpop.f32.mrf.mxu0
  %v3835 = vadd.f32 0.0, %v3834
  %v3836 = vpop.f32.mrf.mxu0
  %3837 = vmatprep.mubr.f32.mxu0 0.0
  %3838 = vmatmul.mubr.f32.gmra.mxu0 %v3568
  %v3839 = vpop.f32.mrf.mxu0
  %v3840 = vadd.f32 0.0, %v3839
  %v3841 = vpop.f32.mrf.mxu0
  %3842 = vmatprep.mubr.f32.mxu0 0.0
  %3843 = vmatmul.mubr.f32.gmra.mxu0 %v3571
  %v3844 = vpop.f32.mrf.mxu0
  %v3845 = vadd.f32 0.0, %v3844
  %v3846 = vpop.f32.mrf.mxu0
  %3847 = vmatprep.mubr.f32.mxu0 0.0
  %3848 = vmatmul.mubr.f32.gmra.mxu0 %v3574
  %v3849 = vpop.f32.mrf.mxu0
  %v3850 = vadd.f32 0.0, %v3849
  %v3851 = vpop.f32.mrf.mxu0
  %3852 = vmatprep.mubr.f32.mxu0 0.0
  %3853 = vmatmul.mubr.f32.gmra.mxu0 %v3577
  %v3854 = vpop.f32.mrf.mxu0
  %v3855 = vadd.f32 0.0, %v3854
  %v3856 = vpop.f32.mrf.mxu0
  %3857 = vmatprep.mubr.f32.mxu0 0.0
  %3858 = vmatmul.mubr.f32.gmra.mxu0 %v3580
  %v3859 = vpop.f32.mrf.mxu0
  %v3860 = vadd.f32 0.0, %v3859
  %v3861 = vpop.f32.mrf.mxu0
  %3862 = vmatprep.mubr.f32.mxu0 0.0
  %3863 = vmatmul.mubr.f32.gmra.mxu0 %v3583
  %v3864 = vpop.f32.mrf.mxu0
  %v3865 = vadd.f32 0.0, %v3864
  %v3866 = vpop.f32.mrf.mxu0
  %3867 = vmatprep.mubr.f32.mxu0 0.0
  %3868 = vmatmul.mubr.f32.gmra.mxu0 %v3586
  %v3869 = vpop.f32.mrf.mxu0
  %v3870 = vadd.f32 0.0, %v3869
  %v3871 = vpop.f32.mrf.mxu0
  %3872 = vmatprep.mubr.f32.mxu0 0.0
  %3873 = vmatmul.mubr.f32.gmra.mxu0 %v3589
  %v3874 = vpop.f32.mrf.mxu0
  %v3875 = vadd.f32 0.0, %v3874
  %v3876 = vpop.f32.mrf.mxu0
  %3877 = vmatprep.mubr.f32.mxu0 0.0
  %3878 = vmatmul.mubr.f32.gmra.mxu0 %v3592
  %v3879 = vpop.f32.mrf.mxu0
  %v3880 = vadd.f32 0.0, %v3879
  %v3881 = vpop.f32.mrf.mxu0
  %3882 = vmatprep.mubr.f32.mxu0 0.0
  %3883 = vmatmul.mubr.f32.gmra.mxu0 %v3595
  %v3884 = vpop.f32.mrf.mxu0
  %v3885 = vadd.f32 0.0, %v3884
  %v3886 = vpop.f32.mrf.mxu0
  %3887 = vmatprep.mubr.f32.mxu0 0.0
  %3888 = vmatmul.mubr.f32.gmra.mxu0 %v3598
  %v3889 = vpop.f32.mrf.mxu0
  %v3890 = vadd.f32 0.0, %v3889
  %v3891 = vpop.f32.mrf.mxu0
  %3892 = vmatprep.mubr.f32.mxu0 0.0
  %3893 = vmatmul.mubr.f32.gmra.mxu0 %v3601
  %v3894 = vpop.f32.mrf.mxu0
  %v3895 = vadd.f32 0.0, %v3894
  %v3896 = vpop.f32.mrf.mxu0
  %3897 = vmatprep.mubr.f32.mxu0 0.0
  %3898 = vmatmul.mubr.f32.gmra.mxu0 %v3604
  %v3899 = vpop.f32.mrf.mxu0
  %v3900 = vadd.f32 0.0, %v3899
  %v3901 = vpop.f32.mrf.mxu0
  %3902 = vmatprep.mubr.f32.mxu0 0.0
  %3903 = vmatmul.mubr.f32.gmra.mxu0 %v3607
  %v3904 = vpop.f32.mrf.mxu0
  %v3905 = vadd.f32 0.0, %v3904
  %v3906 = vpop.f32.mrf.mxu0
  %3907 = vmatprep.mubr.f32.mxu0 0.0
  %3908 = vmatmul.mubr.f32.gmra.mxu0 %v3610
  %v3909 = vpop.f32.mrf.mxu0
  %v3910 = vadd.f32 0.0, %v3909
  %v3911 = vpop.f32.mrf.mxu0
  %3912 = vmatprep.mubr.f32.mxu0 0.0
  %3913 = vmatmul.mubr.f32.gmra.mxu0 %v3613
  %v3914 = vpop.f32.mrf.mxu0
  %v3915 = vadd.f32 0.0, %v3914
  %v3916 = vpop.f32.mrf.mxu0
  %3917 = vmatprep.mubr.f32.mxu0 0.0
  %3918 = vmatmul.mubr.f32.gmra.mxu0 %v3616
  %v3919 = vpop.f32.mrf.mxu0
  %v3920 = vadd.f32 0.0, %v3919
  %v3921 = vpop.f32.mrf.mxu0
  %3922 = vmatprep.mubr.f32.mxu0 0.0
  %3923 = vmatmul.mubr.f32.gmra.mxu0 %v3619
  %v3924 = vpop.f32.mrf.mxu0
  %v3925 = vadd.f32 0.0, %v3924
  %v3926 = vpop.f32.mrf.mxu0
  %3927 = vmatprep.mubr.f32.mxu0 0.0
  %3928 = vmatmul.mubr.f32.gmra.mxu0 %v3622
  %v3929 = vpop.f32.mrf.mxu0
  %v3930 = vadd.f32 0.0, %v3929
  %v3931 = vpop.f32.mrf.mxu0
  %3932 = vmatprep.mubr.f32.mxu0 0.0
  %3933 = vmatmul.mubr.f32.gmra.mxu0 %v3625
  %v3934 = vpop.f32.mrf.mxu0
  %v3935 = vadd.f32 0.0, %v3934
  %v3936 = vpop.f32.mrf.mxu0
  %3937 = vmatprep.mubr.f32.mxu0 0.0
  %3938 = vmatmul.mubr.f32.gmra.mxu0 %v3628
  %v3939 = vpop.f32.mrf.mxu0
  %v3940 = vadd.f32 0.0, %v3939
  %v3941 = vpop.f32.mrf.mxu0
  %3942 = vmatprep.mubr.f32.mxu0 0.0
  %3943 = vmatmul.mubr.f32.gmra.mxu0 %v3631
  %v3944 = vpop.f32.mrf.mxu0
  %v3945 = vadd.f32 0.0, %v3944
  %v3946 = vpop.f32.mrf.mxu0
  %3947 = vmatprep.mubr.f32.mxu0 0.0
  %3948 = vmatmul.mubr.f32.gmra.mxu0 %v3634
  %v3949 = vpop.f32.mrf.mxu0
  %v3950 = vadd.f32 0.0, %v3949
  %v3951 = vpop.f32.mrf.mxu0
  %3952 = vmatprep.mubr.f32.mxu0 0.0
  %3953 = vmatmul.mubr.f32.gmra.mxu0 %v3637
  %v3954 = vpop.f32.mrf.mxu0
  %v3955 = vadd.f32 0.0, %v3954
  %v3956 = vpop.f32.mrf.mxu0
  %3957 = vmatprep.mubr.f32.mxu0 0.0
  %3958 = vmatmul.mubr.f32.gmra.mxu0 %v3640
  %v3959 = vpop.f32.mrf.mxu0
  %v3960 = vadd.f32 0.0, %v3959
  %v3961 = vpop.f32.mrf.mxu0
  %3962 = vmatprep.mubr.f32.mxu0 0.0
  %3963 = vmatmul.mubr.f32.gmra.mxu0 %v3643
  %v3964 = vpop.f32.mrf.mxu0
  %v3965 = vadd.f32 0.0, %v3964
  %v3966 = vpop.f32.mrf.mxu0
  %3967 = vmatprep.mubr.f32.mxu0 0.0
  %3968 = vmatmul.mubr.f32.gmra.mxu0 %v3646
  %v3969 = vpop.f32.mrf.mxu0
  %v3970 = vadd.f32 0.0, %v3969
  %v3971 = vpop.f32.mrf.mxu0
  %3972 = vmatprep.mubr.f32.mxu0 0.0
  %3973 = vmatmul.mubr.f32.gmra.mxu0 %v3649
  %v3974 = vpop.f32.mrf.mxu0
  %v3975 = vadd.f32 0.0, %v3974
  %v3976 = vpop.f32.mrf.mxu0
  %3977 = vmatprep.mubr.f32.mxu0 0.0
  %3978 = vmatmul.mubr.f32.gmra.mxu0 %v3652
  %v3979 = vpop.f32.mrf.mxu0
  %v3980 = vadd.f32 0.0, %v3979
  %v3981 = vpop.f32.mrf.mxu0
  %3982 = vmatprep.mubr.f32.mxu0 0.0
  %3983 = vmatmul.mubr.f32.gmra.mxu0 %v3655
  %v3984 = vpop.f32.mrf.mxu0
  %v3985 = vadd.f32 0.0, %v3984
  %v3986 = vpop.f32.mrf.mxu0
  %3987 = vmatprep.mubr.f32.mxu0 0.0
  %3988 = vmatmul.mubr.f32.gmra.mxu0 %v3658
  %v3989 = vpop.f32.mrf.mxu0
  %v3990 = vadd.f32 0.0, %v3989
  %v3991 = vpop.f32.mrf.mxu0
  %3992 = vmatprep.mubr.f32.mxu0 0.0
  %3993 = vmatmul.mubr.f32.gmra.mxu0 %v3661
  %v3994 = vpop.f32.mrf.mxu0
  %v3995 = vadd.f32 0.0, %v3994
  %v3996 = vpop.f32.mrf.mxu0
  %3997 = vmatprep.mubr.f32.mxu0 0.0
  %3998 = vmatmul.mubr.f32.gmra.mxu0 %v3664
  %v3999 = vpop.f32.mrf.mxu0
  %v4000 = vadd.f32 0.0, %v3999
  %v4001 = vpop.f32.mrf.mxu0
  %4002 = vmatprep.mubr.f32.mxu0 0.0
  %4003 = vmatmul.mubr.f32.gmra.mxu0 %v3667
  %v4004 = vpop.f32.mrf.mxu0
  %v4005 = vadd.f32 0.0, %v4004
  %v4006 = vpop.f32.mrf.mxu0
  %4007 = vmatprep.mubr.f32.mxu0 0.0
  %4008 = vmatmul.mubr.f32.gmra.mxu0 %v3670
  %v4009 = vpop.f32.mrf.mxu0
  %v4010 = vadd.f32 0.0, %v4009
  %v4011 = vpop.f32.mrf.mxu0
  %4012 = vmatprep.mubr.f32.mxu0 0.0
  %4013 = vmatmul.mubr.f32.gmra.mxu0 %v3673
  %v4014 = vpop.f32.mrf.mxu0
  %v4015 = vadd.f32 0.0, %v4014
  %v4016 = vpop.f32.mrf.mxu0
  %4017 = vmatprep.mubr.f32.mxu0 0.0
  %4018 = vmatmul.mubr.f32.gmra.mxu0 %v3676
  %v4019 = vpop.f32.mrf.mxu0
  %v4020 = vadd.f32 0.0, %v4019
  %v4021 = vpop.f32.mrf.mxu0
  %4022 = vmatprep.mubr.f32.mxu0 0.0
  %4023 = vmatmul.mubr.f32.gmra.mxu0 %v3679
  %v4024 = vpop.f32.mrf.mxu0
  %v4025 = vadd.f32 0.0, %v4024
  %v4026 = vpop.f32.mrf.mxu0
  %4027 = vmatprep.mubr.f32.mxu0 0.0
  %4028 = vmatmul.mubr.f32.gmra.mxu0 %v3682
  %v4029 = vpop.f32.mrf.mxu0
  %v4030 = vadd.f32 0.0, %v4029
  %v4031 = vpop.f32.mrf.mxu0
  %4032 = vmatprep.mubr.f32.mxu0 0.0
  %4033 = vmatmul.mubr.f32.gmra.mxu0 %v3685
  %v4034 = vpop.f32.mrf.mxu0
  %v4035 = vadd.f32 0.0, %v4034
  %v4036 = vpop.f32.mrf.mxu0
  %4037 = vmatprep.mubr.f32.mxu0 0.0
  %4038 = vmatmul.mubr.f32.gmra.mxu0 %v3688
  %v4039 = vpop.f32.mrf.mxu0
  %v4040 = vadd.f32 0.0, %v4039
  %v4041 = vpop.f32.mrf.mxu0
  %4042 = vmatprep.mubr.f32.mxu0 0.0
  %4043 = vmatmul.mubr.f32.gmra.mxu0 %v3691
  %v4044 = vpop.f32.mrf.mxu0
  %v4045 = vadd.f32 0.0, %v4044
  %v4046 = vpop.f32.mrf.mxu0
  %4047 = vmatprep.mubr.f32.mxu0 0.0
  %4048 = vmatmul.mubr.f32.gmra.mxu0 %v3694
  %v4049 = vpop.f32.mrf.mxu0
  %v4050 = vadd.f32 0.0, %v4049
  %v4051 = vpop.f32.mrf.mxu0
  %4052 = vmatprep.mubr.f32.mxu0 0.0
  %4053 = vmatmul.mubr.f32.gmra.mxu0 %v3697
  %v4054 = vpop.f32.mrf.mxu0
  %v4055 = vadd.f32 0.0, %v4054
  %v4056 = vpop.f32.mrf.mxu0
  %4057 = vmatprep.mubr.f32.mxu0 0.0
  %4058 = vmatmul.mubr.f32.gmra.mxu0 %v3700
  %v4059 = vpop.f32.mrf.mxu0
  %v4060 = vadd.f32 0.0, %v4059
  %v4061 = vpop.f32.mrf.mxu0
  %4062 = vmatprep.mubr.f32.mxu0 0.0
  %4063 = vmatmul.mubr.f32.gmra.mxu0 %v3703
  %v4064 = vpop.f32.mrf.mxu0
  %v4065 = vadd.f32 0.0, %v4064
  %v4066 = vpop.f32.mrf.mxu0
  %4067 = vmatprep.mubr.f32.mxu0 0.0
  %4068 = vmatmul.mubr.f32.gmra.mxu0 %v3706
  %v4069 = vpop.f32.mrf.mxu0
  %v4070 = vadd.f32 0.0, %v4069
  %v4071 = vpop.f32.mrf.mxu0
  %4072 = vmatprep.mubr.f32.mxu0 0.0
  %4073 = vmatmul.mubr.f32.gmra.mxu0 %v3709
  %v4074 = vpop.f32.mrf.mxu0
  %v4075 = vadd.f32 0.0, %v4074
  %v4076 = vpop.f32.mrf.mxu0
  %4077 = vmatprep.mubr.f32.mxu0 0.0
  %4078 = vmatmul.mubr.f32.gmra.mxu0 %v3712
  %v4079 = vpop.f32.mrf.mxu0
  %v4080 = vadd.f32 0.0, %v4079
  %v4081 = vpop.f32.mrf.mxu0
  %4082 = vmatprep.mubr.f32.mxu0 0.0
  %4083 = vmatmul.mubr.f32.gmra.mxu0 %v3715
  %v4084 = vpop.f32.mrf.mxu0
  %v4085 = vadd.f32 0.0, %v4084
  %v4086 = vpop.f32.mrf.mxu0
  %4087 = vmatprep.mubr.f32.mxu0 0.0
  %4088 = vmatmul.mubr.f32.gmra.mxu0 %v3718
  %v4089 = vpop.f32.mrf.mxu0
  %v4090 = vadd.f32 0.0, %v4089
  %v4091 = vpop.f32.mrf.mxu0
  %4092 = vmatprep.mubr.f32.mxu0 0.0
  %4093 = vmatmul.mubr.f32.gmra.mxu0 %v3721
  %v4094 = vpop.f32.mrf.mxu0
  %v4095 = vadd.f32 0.0, %v4094
  %v4096 = vpop.f32.mrf.mxu0
  %4097 = vmatprep.mubr.f32.mxu0 0.0
  %4098 = vmatmul.mubr.f32.gmra.mxu0 %v3724
  %v4099 = vpop.f32.mrf.mxu0
  %v4100 = vadd.f32 0.0, %v4099
  %v4101 = vpop.f32.mrf.mxu0
  %4102 = vmatprep.mubr.f32.mxu0 0.0
  %4103 = vmatmul.mubr.f32.gmra.mxu0 %v3727
  %v4104 = vpop.f32.mrf.mxu0
  %v4105 = vadd.f32 0.0, %v4104
  %v4106 = vpop.f32.mrf.mxu0
  %4107 = vmatprep.mubr.f32.mxu0 0.0
  %4108 = vmatmul.mubr.f32.gmra.mxu0 %v3730
  %v4109 = vpop.f32.mrf.mxu0
  %v4110 = vadd.f32 0.0, %v4109
  %v4111 = vpop.f32.mrf.mxu0
  %4112 = vmatprep.mubr.f32.mxu0 0.0
  %4113 = vmatmul.mubr.f32.gmra.mxu0 %v3733
  %v4114 = vpop.f32.mrf.mxu0
  %v4115 = vadd.f32 0.0, %v4114
  %v4116 = vpop.f32.mrf.mxu0
  %4117 = vmatprep.mubr.f32.mxu0 0.0
  %4118 = vmatmul.mubr.f32.gmra.mxu0 %v3736
  %v4119 = vpop.f32.mrf.mxu0
  %v4120 = vadd.f32 0.0, %v4119
  %v4121 = vpop.f32.mrf.mxu0
  %4122 = vdwg.mxu0
  %v4123 = vadd.f32 %v3407, %v3805
  %v4124 = vadd.f32 %v3408, %v3810
  %v4125 = vadd.f32 %v3409, %v3815
  %v4126 = vadd.f32 %v3410, %v3820
  %v4127 = vadd.f32 %v3411, %v3825
  %v4128 = vadd.f32 %v3412, %v3830
  %v4129 = vadd.f32 %v3413, %v3835
  %v4130 = vadd.f32 %v3414, %v3840
  %v4131 = vadd.f32 %v3415, %v3845
  %v4132 = vadd.f32 %v3416, %v3850
  %v4133 = vadd.f32 %v3417, %v3855
  %v4134 = vadd.f32 %v3418, %v3860
  %v4135 = vadd.f32 %v3419, %v3865
  %v4136 = vadd.f32 %v3420, %v3870
  %v4137 = vadd.f32 %v3421, %v3875
  %v4138 = vadd.f32 %v3422, %v3880
  %v4139 = vadd.f32 %v3423, %v3885
  %v4140 = vadd.f32 %v3424, %v3890
  %v4141 = vadd.f32 %v3425, %v3895
  %v4142 = vadd.f32 %v3426, %v3900
  %v4143 = vadd.f32 %v3427, %v3905
  %v4144 = vadd.f32 %v3428, %v3910
  %v4145 = vadd.f32 %v3429, %v3915
  %v4146 = vadd.f32 %v3430, %v3920
  %v4147 = vadd.f32 %v3431, %v3925
  %v4148 = vadd.f32 %v3432, %v3930
  %v4149 = vadd.f32 %v3433, %v3935
  %v4150 = vadd.f32 %v3434, %v3940
  %v4151 = vadd.f32 %v3435, %v3945
  %v4152 = vadd.f32 %v3436, %v3950
  %v4153 = vadd.f32 %v3437, %v3955
  %v4154 = vadd.f32 %v3438, %v3960
  %v4155 = vadd.f32 %v3439, %v3965
  %v4156 = vadd.f32 %v3440, %v3970
  %v4157 = vadd.f32 %v3441, %v3975
  %v4158 = vadd.f32 %v3442, %v3980
  %v4159 = vadd.f32 %v3443, %v3985
  %v4160 = vadd.f32 %v3444, %v3990
  %v4161 = vadd.f32 %v3445, %v3995
  %v4162 = vadd.f32 %v3446, %v4000
  %v4163 = vadd.f32 %v3447, %v4005
  %v4164 = vadd.f32 %v3448, %v4010
  %v4165 = vadd.f32 %v3449, %v4015
  %v4166 = vadd.f32 %v3450, %v4020
  %v4167 = vadd.f32 %v3451, %v4025
  %v4168 = vadd.f32 %v3452, %v4030
  %v4169 = vadd.f32 %v3453, %v4035
  %v4170 = vadd.f32 %v3454, %v4040
  %v4171 = vadd.f32 %v3455, %v4045
  %v4172 = vadd.f32 %v3456, %v4050
  %v4173 = vadd.f32 %v3457, %v4055
  %v4174 = vadd.f32 %v3458, %v4060
  %v4175 = vadd.f32 %v3459, %v4065
  %v4176 = vadd.f32 %v3460, %v4070
  %v4177 = vadd.f32 %v3461, %v4075
  %v4178 = vadd.f32 %v3462, %v4080
  %v4179 = vadd.f32 %v3463, %v4085
  %v4180 = vadd.f32 %v3464, %v4090
  %v4181 = vadd.f32 %v3465, %v4095
  %v4182 = vadd.f32 %v3466, %v4100
  %v4183 = vadd.f32 %v3467, %v4105
  %v4184 = vadd.f32 %v3468, %v4110
  %v4185 = vadd.f32 %v3469, %v4115
  %v4186 = vadd.f32 %v3470, %v4120
  %s4187 = scalar_lea.vmem %s0, 3072
  %v4188 = vld [vmem:[%s4187] sm:$0xff]
  %v4189 = vld [vmem:[%s4187 + $0x8] sm:$0xff]
  %v4190 = vld [vmem:[%s4187 + $0x10] sm:$0xff]
  %v4191 = vld [vmem:[%s4187 + $0x18] sm:$0xff]
  %v4192 = vld [vmem:[%s4187 + $0x20] sm:$0xff]
  %v4193 = vld [vmem:[%s4187 + $0x28] sm:$0xff]
  %v4194 = vld [vmem:[%s4187 + $0x30] sm:$0xff]
  %v4195 = vld [vmem:[%s4187 + $0x38] sm:$0xff]
  %v4196 = vld [vmem:[%s4187 + $0x40] sm:$0xff]
  %v4197 = vld [vmem:[%s4187 + $0x48] sm:$0xff]
  %v4198 = vld [vmem:[%s4187 + $0x50] sm:$0xff]
  %v4199 = vld [vmem:[%s4187 + $0x58] sm:$0xff]
  %v4200 = vld [vmem:[%s4187 + $0x60] sm:$0xff]
  %v4201 = vld [vmem:[%s4187 + $0x68] sm:$0xff]
  %v4202 = vld [vmem:[%s4187 + $0x70] sm:$0xff]
  %v4203 = vld [vmem:[%s4187 + $0x78] sm:$0xff]
  %v4204 = vld [vmem:[%s4187 + $0x80] sm:$0xff]
  %v4205 = vld [vmem:[%s4187 + $0x88] sm:$0xff]
  %v4206 = vld [vmem:[%s4187 + $0x90] sm:$0xff]
  %v4207 = vld [vmem:[%s4187 + $0x98] sm:$0xff]
  %v4208 = vld [vmem:[%s4187 + $0xa0] sm:$0xff]
  %v4209 = vld [vmem:[%s4187 + $0xa8] sm:$0xff]
  %v4210 = vld [vmem:[%s4187 + $0xb0] sm:$0xff]
  %v4211 = vld [vmem:[%s4187 + $0xb8] sm:$0xff]
  %v4212 = vld [vmem:[%s4187 + $0xc0] sm:$0xff]
  %v4213 = vld [vmem:[%s4187 + $0xc8] sm:$0xff]
  %v4214 = vld [vmem:[%s4187 + $0xd0] sm:$0xff]
  %v4215 = vld [vmem:[%s4187 + $0xd8] sm:$0xff]
  %v4216 = vld [vmem:[%s4187 + $0xe0] sm:$0xff]
  %v4217 = vld [vmem:[%s4187 + $0xe8] sm:$0xff]
  %v4218 = vld [vmem:[%s4187 + $0xf0] sm:$0xff]
  %v4219 = vld [vmem:[%s4187 + $0xf8] sm:$0xff]
  %v4220 = vld [vmem:[%s4187 + $0x100] sm:$0xff]
  %v4221 = vld [vmem:[%s4187 + $0x108] sm:$0xff]
  %v4222 = vld [vmem:[%s4187 + $0x110] sm:$0xff]
  %v4223 = vld [vmem:[%s4187 + $0x118] sm:$0xff]
  %v4224 = vld [vmem:[%s4187 + $0x120] sm:$0xff]
  %v4225 = vld [vmem:[%s4187 + $0x128] sm:$0xff]
  %v4226 = vld [vmem:[%s4187 + $0x130] sm:$0xff]
  %v4227 = vld [vmem:[%s4187 + $0x138] sm:$0xff]
  %v4228 = vld [vmem:[%s4187 + $0x140] sm:$0xff]
  %v4229 = vld [vmem:[%s4187 + $0x148] sm:$0xff]
  %v4230 = vld [vmem:[%s4187 + $0x150] sm:$0xff]
  %v4231 = vld [vmem:[%s4187 + $0x158] sm:$0xff]
  %v4232 = vld [vmem:[%s4187 + $0x160] sm:$0xff]
  %v4233 = vld [vmem:[%s4187 + $0x168] sm:$0xff]
  %v4234 = vld [vmem:[%s4187 + $0x170] sm:$0xff]
  %v4235 = vld [vmem:[%s4187 + $0x178] sm:$0xff]
  %v4236 = vld [vmem:[%s4187 + $0x180] sm:$0xff]
  %v4237 = vld [vmem:[%s4187 + $0x188] sm:$0xff]
  %v4238 = vld [vmem:[%s4187 + $0x190] sm:$0xff]
  %v4239 = vld [vmem:[%s4187 + $0x198] sm:$0xff]
  %v4240 = vld [vmem:[%s4187 + $0x1a0] sm:$0xff]
  %v4241 = vld [vmem:[%s4187 + $0x1a8] sm:$0xff]
  %v4242 = vld [vmem:[%s4187 + $0x1b0] sm:$0xff]
  %v4243 = vld [vmem:[%s4187 + $0x1b8] sm:$0xff]
  %v4244 = vld [vmem:[%s4187 + $0x1c0] sm:$0xff]
  %v4245 = vld [vmem:[%s4187 + $0x1c8] sm:$0xff]
  %v4246 = vld [vmem:[%s4187 + $0x1d0] sm:$0xff]
  %v4247 = vld [vmem:[%s4187 + $0x1d8] sm:$0xff]
  %v4248 = vld [vmem:[%s4187 + $0x1e0] sm:$0xff]
  %v4249 = vld [vmem:[%s4187 + $0x1e8] sm:$0xff]
  %v4250 = vld [vmem:[%s4187 + $0x1f0] sm:$0xff]
  %v4251 = vld [vmem:[%s4187 + $0x1f8] sm:$0xff]
  %s4252 = scalar_lea.vmem %s1, 432
  %v4253 = vld [vmem:[%s4252] sm:$0xff]
  %v4254 = vld [vmem:[%s4252 + $0x8] sm:$0xff]
  %v4255 = vld [vmem:[%s4252 + $0x10] sm:$0xff]
  %v4256 = vld [vmem:[%s4252 + $0x18] sm:$0xff]
  %v4257 = vld [vmem:[%s4252 + $0x20] sm:$0xff]
  %v4258 = vld [vmem:[%s4252 + $0x28] sm:$0xff]
  %v4259 = vld [vmem:[%s4252 + $0x30] sm:$0xff]
  %v4260 = vld [vmem:[%s4252 + $0x38] sm:$0xff]
  %v4261 = vld [vmem:[%s4252 + $0x40] sm:$0xff]
  %v4263 = vsel %vm168, %v4188, 0
  %v4266 = vsel %vm168, %v4189, 0
  %v4269 = vsel %vm168, %v4190, 0
  %v4272 = vsel %vm168, %v4191, 0
  %v4275 = vsel %vm168, %v4192, 0
  %v4278 = vsel %vm168, %v4193, 0
  %v4281 = vsel %vm168, %v4194, 0
  %v4284 = vsel %vm168, %v4195, 0
  %v4287 = vsel %vm168, %v4196, 0
  %v4290 = vsel %vm168, %v4197, 0
  %v4293 = vsel %vm168, %v4198, 0
  %v4296 = vsel %vm168, %v4199, 0
  %v4299 = vsel %vm168, %v4200, 0
  %v4302 = vsel %vm168, %v4201, 0
  %v4305 = vsel %vm168, %v4202, 0
  %v4308 = vsel %vm168, %v4203, 0
  %v4311 = vsel %vm168, %v4204, 0
  %v4314 = vsel %vm168, %v4205, 0
  %v4317 = vsel %vm168, %v4206, 0
  %v4320 = vsel %vm168, %v4207, 0
  %v4323 = vsel %vm168, %v4208, 0
  %v4326 = vsel %vm168, %v4209, 0
  %v4329 = vsel %vm168, %v4210, 0
  %v4332 = vsel %vm168, %v4211, 0
  %v4335 = vsel %vm168, %v4212, 0
  %v4338 = vsel %vm168, %v4213, 0
  %v4341 = vsel %vm168, %v4214, 0
  %v4344 = vsel %vm168, %v4215, 0
  %v4347 = vsel %vm168, %v4216, 0
  %v4350 = vsel %vm168, %v4217, 0
  %v4353 = vsel %vm168, %v4218, 0
  %v4356 = vsel %vm168, %v4219, 0
  %v4359 = vsel %vm168, %v4220, 0
  %v4362 = vsel %vm168, %v4221, 0
  %v4365 = vsel %vm168, %v4222, 0
  %v4368 = vsel %vm168, %v4223, 0
  %v4371 = vsel %vm168, %v4224, 0
  %v4374 = vsel %vm168, %v4225, 0
  %v4377 = vsel %vm168, %v4226, 0
  %v4380 = vsel %vm168, %v4227, 0
  %v4383 = vsel %vm168, %v4228, 0
  %v4386 = vsel %vm168, %v4229, 0
  %v4389 = vsel %vm168, %v4230, 0
  %v4392 = vsel %vm168, %v4231, 0
  %v4395 = vsel %vm168, %v4232, 0
  %v4398 = vsel %vm168, %v4233, 0
  %v4401 = vsel %vm168, %v4234, 0
  %v4404 = vsel %vm168, %v4235, 0
  %v4407 = vsel %vm168, %v4236, 0
  %v4410 = vsel %vm168, %v4237, 0
  %v4413 = vsel %vm168, %v4238, 0
  %v4416 = vsel %vm168, %v4239, 0
  %v4419 = vsel %vm168, %v4240, 0
  %v4422 = vsel %vm168, %v4241, 0
  %v4425 = vsel %vm168, %v4242, 0
  %v4428 = vsel %vm168, %v4243, 0
  %v4431 = vsel %vm168, %v4244, 0
  %v4434 = vsel %vm168, %v4245, 0
  %v4437 = vsel %vm168, %v4246, 0
  %v4440 = vsel %vm168, %v4247, 0
  %v4443 = vsel %vm168, %v4248, 0
  %v4446 = vsel %vm168, %v4249, 0
  %v4449 = vsel %vm168, %v4250, 0
  %v4452 = vsel %vm168, %v4251, 0
  %4454 = vmatprep.subr.mxu0 0.0
  %4455 = vmatpush1.msra.mxu0 0.0
  %4456 = vmatprep.subr.mxu0 0.0
  %4457 = vmatpush1.msra.mxu0 0.0
  %4458 = vmatprep.subr.mxu0 0.0
  %4459 = vmatpush1.msra.mxu0 0.0
  %4460 = vmatprep.subr.mxu0 0.0
  %4461 = vmatpush1.msra.mxu0 0.0
  %4462 = vmatprep.subr.mxu0 0.0
  %4463 = vmatpush1.msra.mxu0 0.0
  %4464 = vmatprep.subr.mxu0 0.0
  %4465 = vmatpush1.msra.mxu0 0.0
  %4466 = vmatprep.subr.mxu0 0.0
  %4467 = vmatpush1.msra.mxu0 0.0
  %4468 = vmatprep.subr.mxu0 0.0
  %4469 = vmatpush1.msra.mxu0 %v4261
  %4470 = vmatprep.subr.mxu0 0.0
  %4471 = vmatpush1.msra.mxu0 %v4260
  %4472 = vmatprep.subr.mxu0 0.0
  %4473 = vmatpush1.msra.mxu0 %v4259
  %4474 = vmatprep.subr.mxu0 0.0
  %4475 = vmatpush1.msra.mxu0 %v4258
  %4476 = vmatprep.subr.mxu0 0.0
  %4477 = vmatpush1.msra.mxu0 %v4257
  %4478 = vmatprep.subr.mxu0 0.0
  %4479 = vmatpush1.msra.mxu0 %v4256
  %4480 = vmatprep.subr.mxu0 0.0
  %4481 = vmatpush1.msra.mxu0 %v4255
  %4482 = vmatprep.subr.mxu0 0.0
  %4483 = vmatpush1.msra.mxu0 %v4254
  %4484 = vmatprep.subr.mxu0 0.0
  %4485 = vmatpush1.msra.mxu0 %v4253
  %4486 = vmatprep.subr.mxu0 0.0
  %4487 = vmatpush2.msra.mxu0 0.0
  %4488 = vmatprep.subr.mxu0 0.0
  %4489 = vmatpush2.msra.mxu0 0.0
  %4490 = vmatprep.subr.mxu0 0.0
  %4491 = vmatpush2.msra.mxu0 0.0
  %4492 = vmatprep.subr.mxu0 0.0
  %4493 = vmatpush2.msra.mxu0 0.0
  %4494 = vmatprep.subr.mxu0 0.0
  %4495 = vmatpush2.msra.mxu0 0.0
  %4496 = vmatprep.subr.mxu0 0.0
  %4497 = vmatpush2.msra.mxu0 0.0
  %4498 = vmatprep.subr.mxu0 0.0
  %4499 = vmatpush2.msra.mxu0 0.0
  %4500 = vmatprep.subr.mxu0 0.0
  %4501 = vmatpush2.msra.mxu0 0.0
  %4502 = vmatprep.subr.mxu0 0.0
  %4503 = vmatpush2.msra.mxu0 0.0
  %4504 = vmatprep.subr.mxu0 0.0
  %4505 = vmatpush2.msra.mxu0 0.0
  %4506 = vmatprep.subr.mxu0 0.0
  %4507 = vmatpush2.msra.mxu0 0.0
  %4508 = vmatprep.subr.mxu0 0.0
  %4509 = vmatpush2.msra.mxu0 0.0
  %4510 = vmatprep.subr.mxu0 0.0
  %4511 = vmatpush2.msra.mxu0 0.0
  %4512 = vmatprep.subr.mxu0 0.0
  %4513 = vmatpush2.msra.mxu0 0.0
  %4514 = vmatprep.subr.mxu0 0.0
  %4515 = vmatpush2.msra.mxu0 0.0
  %4516 = vmatprep.subr.mxu0 0.0
  %4517 = vmatpush2.msra.mxu0 0.0
  %4518 = vmatprep.mubr.f32.mxu0 0.0
  %4519 = vmatmul.mubr.f32.gmra.mxu0 %v4263
  %v4520 = vpop.f32.mrf.mxu0
  %v4521 = vadd.f32 0.0, %v4520
  %v4522 = vpop.f32.mrf.mxu0
  %4523 = vmatprep.mubr.f32.mxu0 0.0
  %4524 = vmatmul.mubr.f32.gmra.mxu0 %v4266
  %v4525 = vpop.f32.mrf.mxu0
  %v4526 = vadd.f32 0.0, %v4525
  %v4527 = vpop.f32.mrf.mxu0
  %4528 = vmatprep.mubr.f32.mxu0 0.0
  %4529 = vmatmul.mubr.f32.gmra.mxu0 %v4269
  %v4530 = vpop.f32.mrf.mxu0
  %v4531 = vadd.f32 0.0, %v4530
  %v4532 = vpop.f32.mrf.mxu0
  %4533 = vmatprep.mubr.f32.mxu0 0.0
  %4534 = vmatmul.mubr.f32.gmra.mxu0 %v4272
  %v4535 = vpop.f32.mrf.mxu0
  %v4536 = vadd.f32 0.0, %v4535
  %v4537 = vpop.f32.mrf.mxu0
  %4538 = vmatprep.mubr.f32.mxu0 0.0
  %4539 = vmatmul.mubr.f32.gmra.mxu0 %v4275
  %v4540 = vpop.f32.mrf.mxu0
  %v4541 = vadd.f32 0.0, %v4540
  %v4542 = vpop.f32.mrf.mxu0
  %4543 = vmatprep.mubr.f32.mxu0 0.0
  %4544 = vmatmul.mubr.f32.gmra.mxu0 %v4278
  %v4545 = vpop.f32.mrf.mxu0
  %v4546 = vadd.f32 0.0, %v4545
  %v4547 = vpop.f32.mrf.mxu0
  %4548 = vmatprep.mubr.f32.mxu0 0.0
  %4549 = vmatmul.mubr.f32.gmra.mxu0 %v4281
  %v4550 = vpop.f32.mrf.mxu0
  %v4551 = vadd.f32 0.0, %v4550
  %v4552 = vpop.f32.mrf.mxu0
  %4553 = vmatprep.mubr.f32.mxu0 0.0
  %4554 = vmatmul.mubr.f32.gmra.mxu0 %v4284
  %v4555 = vpop.f32.mrf.mxu0
  %v4556 = vadd.f32 0.0, %v4555
  %v4557 = vpop.f32.mrf.mxu0
  %4558 = vmatprep.mubr.f32.mxu0 0.0
  %4559 = vmatmul.mubr.f32.gmra.mxu0 %v4287
  %v4560 = vpop.f32.mrf.mxu0
  %v4561 = vadd.f32 0.0, %v4560
  %v4562 = vpop.f32.mrf.mxu0
  %4563 = vmatprep.mubr.f32.mxu0 0.0
  %4564 = vmatmul.mubr.f32.gmra.mxu0 %v4290
  %v4565 = vpop.f32.mrf.mxu0
  %v4566 = vadd.f32 0.0, %v4565
  %v4567 = vpop.f32.mrf.mxu0
  %4568 = vmatprep.mubr.f32.mxu0 0.0
  %4569 = vmatmul.mubr.f32.gmra.mxu0 %v4293
  %v4570 = vpop.f32.mrf.mxu0
  %v4571 = vadd.f32 0.0, %v4570
  %v4572 = vpop.f32.mrf.mxu0
  %4573 = vmatprep.mubr.f32.mxu0 0.0
  %4574 = vmatmul.mubr.f32.gmra.mxu0 %v4296
  %v4575 = vpop.f32.mrf.mxu0
  %v4576 = vadd.f32 0.0, %v4575
  %v4577 = vpop.f32.mrf.mxu0
  %4578 = vmatprep.mubr.f32.mxu0 0.0
  %4579 = vmatmul.mubr.f32.gmra.mxu0 %v4299
  %v4580 = vpop.f32.mrf.mxu0
  %v4581 = vadd.f32 0.0, %v4580
  %v4582 = vpop.f32.mrf.mxu0
  %4583 = vmatprep.mubr.f32.mxu0 0.0
  %4584 = vmatmul.mubr.f32.gmra.mxu0 %v4302
  %v4585 = vpop.f32.mrf.mxu0
  %v4586 = vadd.f32 0.0, %v4585
  %v4587 = vpop.f32.mrf.mxu0
  %4588 = vmatprep.mubr.f32.mxu0 0.0
  %4589 = vmatmul.mubr.f32.gmra.mxu0 %v4305
  %v4590 = vpop.f32.mrf.mxu0
  %v4591 = vadd.f32 0.0, %v4590
  %v4592 = vpop.f32.mrf.mxu0
  %4593 = vmatprep.mubr.f32.mxu0 0.0
  %4594 = vmatmul.mubr.f32.gmra.mxu0 %v4308
  %v4595 = vpop.f32.mrf.mxu0
  %v4596 = vadd.f32 0.0, %v4595
  %v4597 = vpop.f32.mrf.mxu0
  %4598 = vmatprep.mubr.f32.mxu0 0.0
  %4599 = vmatmul.mubr.f32.gmra.mxu0 %v4311
  %v4600 = vpop.f32.mrf.mxu0
  %v4601 = vadd.f32 0.0, %v4600
  %v4602 = vpop.f32.mrf.mxu0
  %4603 = vmatprep.mubr.f32.mxu0 0.0
  %4604 = vmatmul.mubr.f32.gmra.mxu0 %v4314
  %v4605 = vpop.f32.mrf.mxu0
  %v4606 = vadd.f32 0.0, %v4605
  %v4607 = vpop.f32.mrf.mxu0
  %4608 = vmatprep.mubr.f32.mxu0 0.0
  %4609 = vmatmul.mubr.f32.gmra.mxu0 %v4317
  %v4610 = vpop.f32.mrf.mxu0
  %v4611 = vadd.f32 0.0, %v4610
  %v4612 = vpop.f32.mrf.mxu0
  %4613 = vmatprep.mubr.f32.mxu0 0.0
  %4614 = vmatmul.mubr.f32.gmra.mxu0 %v4320
  %v4615 = vpop.f32.mrf.mxu0
  %v4616 = vadd.f32 0.0, %v4615
  %v4617 = vpop.f32.mrf.mxu0
  %4618 = vmatprep.mubr.f32.mxu0 0.0
  %4619 = vmatmul.mubr.f32.gmra.mxu0 %v4323
  %v4620 = vpop.f32.mrf.mxu0
  %v4621 = vadd.f32 0.0, %v4620
  %v4622 = vpop.f32.mrf.mxu0
  %4623 = vmatprep.mubr.f32.mxu0 0.0
  %4624 = vmatmul.mubr.f32.gmra.mxu0 %v4326
  %v4625 = vpop.f32.mrf.mxu0
  %v4626 = vadd.f32 0.0, %v4625
  %v4627 = vpop.f32.mrf.mxu0
  %4628 = vmatprep.mubr.f32.mxu0 0.0
  %4629 = vmatmul.mubr.f32.gmra.mxu0 %v4329
  %v4630 = vpop.f32.mrf.mxu0
  %v4631 = vadd.f32 0.0, %v4630
  %v4632 = vpop.f32.mrf.mxu0
  %4633 = vmatprep.mubr.f32.mxu0 0.0
  %4634 = vmatmul.mubr.f32.gmra.mxu0 %v4332
  %v4635 = vpop.f32.mrf.mxu0
  %v4636 = vadd.f32 0.0, %v4635
  %v4637 = vpop.f32.mrf.mxu0
  %4638 = vmatprep.mubr.f32.mxu0 0.0
  %4639 = vmatmul.mubr.f32.gmra.mxu0 %v4335
  %v4640 = vpop.f32.mrf.mxu0
  %v4641 = vadd.f32 0.0, %v4640
  %v4642 = vpop.f32.mrf.mxu0
  %4643 = vmatprep.mubr.f32.mxu0 0.0
  %4644 = vmatmul.mubr.f32.gmra.mxu0 %v4338
  %v4645 = vpop.f32.mrf.mxu0
  %v4646 = vadd.f32 0.0, %v4645
  %v4647 = vpop.f32.mrf.mxu0
  %4648 = vmatprep.mubr.f32.mxu0 0.0
  %4649 = vmatmul.mubr.f32.gmra.mxu0 %v4341
  %v4650 = vpop.f32.mrf.mxu0
  %v4651 = vadd.f32 0.0, %v4650
  %v4652 = vpop.f32.mrf.mxu0
  %4653 = vmatprep.mubr.f32.mxu0 0.0
  %4654 = vmatmul.mubr.f32.gmra.mxu0 %v4344
  %v4655 = vpop.f32.mrf.mxu0
  %v4656 = vadd.f32 0.0, %v4655
  %v4657 = vpop.f32.mrf.mxu0
  %4658 = vmatprep.mubr.f32.mxu0 0.0
  %4659 = vmatmul.mubr.f32.gmra.mxu0 %v4347
  %v4660 = vpop.f32.mrf.mxu0
  %v4661 = vadd.f32 0.0, %v4660
  %v4662 = vpop.f32.mrf.mxu0
  %4663 = vmatprep.mubr.f32.mxu0 0.0
  %4664 = vmatmul.mubr.f32.gmra.mxu0 %v4350
  %v4665 = vpop.f32.mrf.mxu0
  %v4666 = vadd.f32 0.0, %v4665
  %v4667 = vpop.f32.mrf.mxu0
  %4668 = vmatprep.mubr.f32.mxu0 0.0
  %4669 = vmatmul.mubr.f32.gmra.mxu0 %v4353
  %v4670 = vpop.f32.mrf.mxu0
  %v4671 = vadd.f32 0.0, %v4670
  %v4672 = vpop.f32.mrf.mxu0
  %4673 = vmatprep.mubr.f32.mxu0 0.0
  %4674 = vmatmul.mubr.f32.gmra.mxu0 %v4356
  %v4675 = vpop.f32.mrf.mxu0
  %v4676 = vadd.f32 0.0, %v4675
  %v4677 = vpop.f32.mrf.mxu0
  %4678 = vmatprep.mubr.f32.mxu0 0.0
  %4679 = vmatmul.mubr.f32.gmra.mxu0 %v4359
  %v4680 = vpop.f32.mrf.mxu0
  %v4681 = vadd.f32 0.0, %v4680
  %v4682 = vpop.f32.mrf.mxu0
  %4683 = vmatprep.mubr.f32.mxu0 0.0
  %4684 = vmatmul.mubr.f32.gmra.mxu0 %v4362
  %v4685 = vpop.f32.mrf.mxu0
  %v4686 = vadd.f32 0.0, %v4685
  %v4687 = vpop.f32.mrf.mxu0
  %4688 = vmatprep.mubr.f32.mxu0 0.0
  %4689 = vmatmul.mubr.f32.gmra.mxu0 %v4365
  %v4690 = vpop.f32.mrf.mxu0
  %v4691 = vadd.f32 0.0, %v4690
  %v4692 = vpop.f32.mrf.mxu0
  %4693 = vmatprep.mubr.f32.mxu0 0.0
  %4694 = vmatmul.mubr.f32.gmra.mxu0 %v4368
  %v4695 = vpop.f32.mrf.mxu0
  %v4696 = vadd.f32 0.0, %v4695
  %v4697 = vpop.f32.mrf.mxu0
  %4698 = vmatprep.mubr.f32.mxu0 0.0
  %4699 = vmatmul.mubr.f32.gmra.mxu0 %v4371
  %v4700 = vpop.f32.mrf.mxu0
  %v4701 = vadd.f32 0.0, %v4700
  %v4702 = vpop.f32.mrf.mxu0
  %4703 = vmatprep.mubr.f32.mxu0 0.0
  %4704 = vmatmul.mubr.f32.gmra.mxu0 %v4374
  %v4705 = vpop.f32.mrf.mxu0
  %v4706 = vadd.f32 0.0, %v4705
  %v4707 = vpop.f32.mrf.mxu0
  %4708 = vmatprep.mubr.f32.mxu0 0.0
  %4709 = vmatmul.mubr.f32.gmra.mxu0 %v4377
  %v4710 = vpop.f32.mrf.mxu0
  %v4711 = vadd.f32 0.0, %v4710
  %v4712 = vpop.f32.mrf.mxu0
  %4713 = vmatprep.mubr.f32.mxu0 0.0
  %4714 = vmatmul.mubr.f32.gmra.mxu0 %v4380
  %v4715 = vpop.f32.mrf.mxu0
  %v4716 = vadd.f32 0.0, %v4715
  %v4717 = vpop.f32.mrf.mxu0
  %4718 = vmatprep.mubr.f32.mxu0 0.0
  %4719 = vmatmul.mubr.f32.gmra.mxu0 %v4383
  %v4720 = vpop.f32.mrf.mxu0
  %v4721 = vadd.f32 0.0, %v4720
  %v4722 = vpop.f32.mrf.mxu0
  %4723 = vmatprep.mubr.f32.mxu0 0.0
  %4724 = vmatmul.mubr.f32.gmra.mxu0 %v4386
  %v4725 = vpop.f32.mrf.mxu0
  %v4726 = vadd.f32 0.0, %v4725
  %v4727 = vpop.f32.mrf.mxu0
  %4728 = vmatprep.mubr.f32.mxu0 0.0
  %4729 = vmatmul.mubr.f32.gmra.mxu0 %v4389
  %v4730 = vpop.f32.mrf.mxu0
  %v4731 = vadd.f32 0.0, %v4730
  %v4732 = vpop.f32.mrf.mxu0
  %4733 = vmatprep.mubr.f32.mxu0 0.0
  %4734 = vmatmul.mubr.f32.gmra.mxu0 %v4392
  %v4735 = vpop.f32.mrf.mxu0
  %v4736 = vadd.f32 0.0, %v4735
  %v4737 = vpop.f32.mrf.mxu0
  %4738 = vmatprep.mubr.f32.mxu0 0.0
  %4739 = vmatmul.mubr.f32.gmra.mxu0 %v4395
  %v4740 = vpop.f32.mrf.mxu0
  %v4741 = vadd.f32 0.0, %v4740
  %v4742 = vpop.f32.mrf.mxu0
  %4743 = vmatprep.mubr.f32.mxu0 0.0
  %4744 = vmatmul.mubr.f32.gmra.mxu0 %v4398
  %v4745 = vpop.f32.mrf.mxu0
  %v4746 = vadd.f32 0.0, %v4745
  %v4747 = vpop.f32.mrf.mxu0
  %4748 = vmatprep.mubr.f32.mxu0 0.0
  %4749 = vmatmul.mubr.f32.gmra.mxu0 %v4401
  %v4750 = vpop.f32.mrf.mxu0
  %v4751 = vadd.f32 0.0, %v4750
  %v4752 = vpop.f32.mrf.mxu0
  %4753 = vmatprep.mubr.f32.mxu0 0.0
  %4754 = vmatmul.mubr.f32.gmra.mxu0 %v4404
  %v4755 = vpop.f32.mrf.mxu0
  %v4756 = vadd.f32 0.0, %v4755
  %v4757 = vpop.f32.mrf.mxu0
  %4758 = vmatprep.mubr.f32.mxu0 0.0
  %4759 = vmatmul.mubr.f32.gmra.mxu0 %v4407
  %v4760 = vpop.f32.mrf.mxu0
  %v4761 = vadd.f32 0.0, %v4760
  %v4762 = vpop.f32.mrf.mxu0
  %4763 = vmatprep.mubr.f32.mxu0 0.0
  %4764 = vmatmul.mubr.f32.gmra.mxu0 %v4410
  %v4765 = vpop.f32.mrf.mxu0
  %v4766 = vadd.f32 0.0, %v4765
  %v4767 = vpop.f32.mrf.mxu0
  %4768 = vmatprep.mubr.f32.mxu0 0.0
  %4769 = vmatmul.mubr.f32.gmra.mxu0 %v4413
  %v4770 = vpop.f32.mrf.mxu0
  %v4771 = vadd.f32 0.0, %v4770
  %v4772 = vpop.f32.mrf.mxu0
  %4773 = vmatprep.mubr.f32.mxu0 0.0
  %4774 = vmatmul.mubr.f32.gmra.mxu0 %v4416
  %v4775 = vpop.f32.mrf.mxu0
  %v4776 = vadd.f32 0.0, %v4775
  %v4777 = vpop.f32.mrf.mxu0
  %4778 = vmatprep.mubr.f32.mxu0 0.0
  %4779 = vmatmul.mubr.f32.gmra.mxu0 %v4419
  %v4780 = vpop.f32.mrf.mxu0
  %v4781 = vadd.f32 0.0, %v4780
  %v4782 = vpop.f32.mrf.mxu0
  %4783 = vmatprep.mubr.f32.mxu0 0.0
  %4784 = vmatmul.mubr.f32.gmra.mxu0 %v4422
  %v4785 = vpop.f32.mrf.mxu0
  %v4786 = vadd.f32 0.0, %v4785
  %v4787 = vpop.f32.mrf.mxu0
  %4788 = vmatprep.mubr.f32.mxu0 0.0
  %4789 = vmatmul.mubr.f32.gmra.mxu0 %v4425
  %v4790 = vpop.f32.mrf.mxu0
  %v4791 = vadd.f32 0.0, %v4790
  %v4792 = vpop.f32.mrf.mxu0
  %4793 = vmatprep.mubr.f32.mxu0 0.0
  %4794 = vmatmul.mubr.f32.gmra.mxu0 %v4428
  %v4795 = vpop.f32.mrf.mxu0
  %v4796 = vadd.f32 0.0, %v4795
  %v4797 = vpop.f32.mrf.mxu0
  %4798 = vmatprep.mubr.f32.mxu0 0.0
  %4799 = vmatmul.mubr.f32.gmra.mxu0 %v4431
  %v4800 = vpop.f32.mrf.mxu0
  %v4801 = vadd.f32 0.0, %v4800
  %v4802 = vpop.f32.mrf.mxu0
  %4803 = vmatprep.mubr.f32.mxu0 0.0
  %4804 = vmatmul.mubr.f32.gmra.mxu0 %v4434
  %v4805 = vpop.f32.mrf.mxu0
  %v4806 = vadd.f32 0.0, %v4805
  %v4807 = vpop.f32.mrf.mxu0
  %4808 = vmatprep.mubr.f32.mxu0 0.0
  %4809 = vmatmul.mubr.f32.gmra.mxu0 %v4437
  %v4810 = vpop.f32.mrf.mxu0
  %v4811 = vadd.f32 0.0, %v4810
  %v4812 = vpop.f32.mrf.mxu0
  %4813 = vmatprep.mubr.f32.mxu0 0.0
  %4814 = vmatmul.mubr.f32.gmra.mxu0 %v4440
  %v4815 = vpop.f32.mrf.mxu0
  %v4816 = vadd.f32 0.0, %v4815
  %v4817 = vpop.f32.mrf.mxu0
  %4818 = vmatprep.mubr.f32.mxu0 0.0
  %4819 = vmatmul.mubr.f32.gmra.mxu0 %v4443
  %v4820 = vpop.f32.mrf.mxu0
  %v4821 = vadd.f32 0.0, %v4820
  %v4822 = vpop.f32.mrf.mxu0
  %4823 = vmatprep.mubr.f32.mxu0 0.0
  %4824 = vmatmul.mubr.f32.gmra.mxu0 %v4446
  %v4825 = vpop.f32.mrf.mxu0
  %v4826 = vadd.f32 0.0, %v4825
  %v4827 = vpop.f32.mrf.mxu0
  %4828 = vmatprep.mubr.f32.mxu0 0.0
  %4829 = vmatmul.mubr.f32.gmra.mxu0 %v4449
  %v4830 = vpop.f32.mrf.mxu0
  %v4831 = vadd.f32 0.0, %v4830
  %v4832 = vpop.f32.mrf.mxu0
  %4833 = vmatprep.mubr.f32.mxu0 0.0
  %4834 = vmatmul.mubr.f32.gmra.mxu0 %v4452
  %v4835 = vpop.f32.mrf.mxu0
  %v4836 = vadd.f32 0.0, %v4835
  %v4837 = vpop.f32.mrf.mxu0
  %4838 = vdwg.mxu0
  %v4839 = vadd.f32 %v4123, %v4521
  %v4840 = vadd.f32 %v4124, %v4526
  %v4841 = vadd.f32 %v4125, %v4531
  %v4842 = vadd.f32 %v4126, %v4536
  %v4843 = vadd.f32 %v4127, %v4541
  %v4844 = vadd.f32 %v4128, %v4546
  %v4845 = vadd.f32 %v4129, %v4551
  %v4846 = vadd.f32 %v4130, %v4556
  %v4847 = vadd.f32 %v4131, %v4561
  %v4848 = vadd.f32 %v4132, %v4566
  %v4849 = vadd.f32 %v4133, %v4571
  %v4850 = vadd.f32 %v4134, %v4576
  %v4851 = vadd.f32 %v4135, %v4581
  %v4852 = vadd.f32 %v4136, %v4586
  %v4853 = vadd.f32 %v4137, %v4591
  %v4854 = vadd.f32 %v4138, %v4596
  %v4855 = vadd.f32 %v4139, %v4601
  %v4856 = vadd.f32 %v4140, %v4606
  %v4857 = vadd.f32 %v4141, %v4611
  %v4858 = vadd.f32 %v4142, %v4616
  %v4859 = vadd.f32 %v4143, %v4621
  %v4860 = vadd.f32 %v4144, %v4626
  %v4861 = vadd.f32 %v4145, %v4631
  %v4862 = vadd.f32 %v4146, %v4636
  %v4863 = vadd.f32 %v4147, %v4641
  %v4864 = vadd.f32 %v4148, %v4646
  %v4865 = vadd.f32 %v4149, %v4651
  %v4866 = vadd.f32 %v4150, %v4656
  %v4867 = vadd.f32 %v4151, %v4661
  %v4868 = vadd.f32 %v4152, %v4666
  %v4869 = vadd.f32 %v4153, %v4671
  %v4870 = vadd.f32 %v4154, %v4676
  %v4871 = vadd.f32 %v4155, %v4681
  %v4872 = vadd.f32 %v4156, %v4686
  %v4873 = vadd.f32 %v4157, %v4691
  %v4874 = vadd.f32 %v4158, %v4696
  %v4875 = vadd.f32 %v4159, %v4701
  %v4876 = vadd.f32 %v4160, %v4706
  %v4877 = vadd.f32 %v4161, %v4711
  %v4878 = vadd.f32 %v4162, %v4716
  %v4879 = vadd.f32 %v4163, %v4721
  %v4880 = vadd.f32 %v4164, %v4726
  %v4881 = vadd.f32 %v4165, %v4731
  %v4882 = vadd.f32 %v4166, %v4736
  %v4883 = vadd.f32 %v4167, %v4741
  %v4884 = vadd.f32 %v4168, %v4746
  %v4885 = vadd.f32 %v4169, %v4751
  %v4886 = vadd.f32 %v4170, %v4756
  %v4887 = vadd.f32 %v4171, %v4761
  %v4888 = vadd.f32 %v4172, %v4766
  %v4889 = vadd.f32 %v4173, %v4771
  %v4890 = vadd.f32 %v4174, %v4776
  %v4891 = vadd.f32 %v4175, %v4781
  %v4892 = vadd.f32 %v4176, %v4786
  %v4893 = vadd.f32 %v4177, %v4791
  %v4894 = vadd.f32 %v4178, %v4796
  %v4895 = vadd.f32 %v4179, %v4801
  %v4896 = vadd.f32 %v4180, %v4806
  %v4897 = vadd.f32 %v4181, %v4811
  %v4898 = vadd.f32 %v4182, %v4816
  %v4899 = vadd.f32 %v4183, %v4821
  %v4900 = vadd.f32 %v4184, %v4826
  %v4901 = vadd.f32 %v4185, %v4831
  %v4902 = vadd.f32 %v4186, %v4836
  %s4903 = scalar_lea.vmem %s0, 3584
  %v4904 = vld [vmem:[%s4903] sm:$0xff]
  %v4905 = vld [vmem:[%s4903 + $0x8] sm:$0xff]
  %v4906 = vld [vmem:[%s4903 + $0x10] sm:$0xff]
  %v4907 = vld [vmem:[%s4903 + $0x18] sm:$0xff]
  %v4908 = vld [vmem:[%s4903 + $0x20] sm:$0xff]
  %v4909 = vld [vmem:[%s4903 + $0x28] sm:$0xff]
  %v4910 = vld [vmem:[%s4903 + $0x30] sm:$0xff]
  %v4911 = vld [vmem:[%s4903 + $0x38] sm:$0xff]
  %v4912 = vld [vmem:[%s4903 + $0x40] sm:$0xff]
  %v4913 = vld [vmem:[%s4903 + $0x48] sm:$0xff]
  %v4914 = vld [vmem:[%s4903 + $0x50] sm:$0xff]
  %v4915 = vld [vmem:[%s4903 + $0x58] sm:$0xff]
  %v4916 = vld [vmem:[%s4903 + $0x60] sm:$0xff]
  %v4917 = vld [vmem:[%s4903 + $0x68] sm:$0xff]
  %v4918 = vld [vmem:[%s4903 + $0x70] sm:$0xff]
  %v4919 = vld [vmem:[%s4903 + $0x78] sm:$0xff]
  %v4920 = vld [vmem:[%s4903 + $0x80] sm:$0xff]
  %v4921 = vld [vmem:[%s4903 + $0x88] sm:$0xff]
  %v4922 = vld [vmem:[%s4903 + $0x90] sm:$0xff]
  %v4923 = vld [vmem:[%s4903 + $0x98] sm:$0xff]
  %v4924 = vld [vmem:[%s4903 + $0xa0] sm:$0xff]
  %v4925 = vld [vmem:[%s4903 + $0xa8] sm:$0xff]
  %v4926 = vld [vmem:[%s4903 + $0xb0] sm:$0xff]
  %v4927 = vld [vmem:[%s4903 + $0xb8] sm:$0xff]
  %v4928 = vld [vmem:[%s4903 + $0xc0] sm:$0xff]
  %v4929 = vld [vmem:[%s4903 + $0xc8] sm:$0xff]
  %v4930 = vld [vmem:[%s4903 + $0xd0] sm:$0xff]
  %v4931 = vld [vmem:[%s4903 + $0xd8] sm:$0xff]
  %v4932 = vld [vmem:[%s4903 + $0xe0] sm:$0xff]
  %v4933 = vld [vmem:[%s4903 + $0xe8] sm:$0xff]
  %v4934 = vld [vmem:[%s4903 + $0xf0] sm:$0xff]
  %v4935 = vld [vmem:[%s4903 + $0xf8] sm:$0xff]
  %v4936 = vld [vmem:[%s4903 + $0x100] sm:$0xff]
  %v4937 = vld [vmem:[%s4903 + $0x108] sm:$0xff]
  %v4938 = vld [vmem:[%s4903 + $0x110] sm:$0xff]
  %v4939 = vld [vmem:[%s4903 + $0x118] sm:$0xff]
  %v4940 = vld [vmem:[%s4903 + $0x120] sm:$0xff]
  %v4941 = vld [vmem:[%s4903 + $0x128] sm:$0xff]
  %v4942 = vld [vmem:[%s4903 + $0x130] sm:$0xff]
  %v4943 = vld [vmem:[%s4903 + $0x138] sm:$0xff]
  %v4944 = vld [vmem:[%s4903 + $0x140] sm:$0xff]
  %v4945 = vld [vmem:[%s4903 + $0x148] sm:$0xff]
  %v4946 = vld [vmem:[%s4903 + $0x150] sm:$0xff]
  %v4947 = vld [vmem:[%s4903 + $0x158] sm:$0xff]
  %v4948 = vld [vmem:[%s4903 + $0x160] sm:$0xff]
  %v4949 = vld [vmem:[%s4903 + $0x168] sm:$0xff]
  %v4950 = vld [vmem:[%s4903 + $0x170] sm:$0xff]
  %v4951 = vld [vmem:[%s4903 + $0x178] sm:$0xff]
  %v4952 = vld [vmem:[%s4903 + $0x180] sm:$0xff]
  %v4953 = vld [vmem:[%s4903 + $0x188] sm:$0xff]
  %v4954 = vld [vmem:[%s4903 + $0x190] sm:$0xff]
  %v4955 = vld [vmem:[%s4903 + $0x198] sm:$0xff]
  %v4956 = vld [vmem:[%s4903 + $0x1a0] sm:$0xff]
  %v4957 = vld [vmem:[%s4903 + $0x1a8] sm:$0xff]
  %v4958 = vld [vmem:[%s4903 + $0x1b0] sm:$0xff]
  %v4959 = vld [vmem:[%s4903 + $0x1b8] sm:$0xff]
  %v4960 = vld [vmem:[%s4903 + $0x1c0] sm:$0xff]
  %v4961 = vld [vmem:[%s4903 + $0x1c8] sm:$0xff]
  %v4962 = vld [vmem:[%s4903 + $0x1d0] sm:$0xff]
  %v4963 = vld [vmem:[%s4903 + $0x1d8] sm:$0xff]
  %v4964 = vld [vmem:[%s4903 + $0x1e0] sm:$0xff]
  %v4965 = vld [vmem:[%s4903 + $0x1e8] sm:$0xff]
  %v4966 = vld [vmem:[%s4903 + $0x1f0] sm:$0xff]
  %v4967 = vld [vmem:[%s4903 + $0x1f8] sm:$0xff]
  %s4968 = scalar_lea.vmem %s1, 504
  %v4969 = vld [vmem:[%s4968] sm:$0xff]
  %v4970 = vld [vmem:[%s4968 + $0x8] sm:$0xff]
  %v4971 = vld [vmem:[%s4968 + $0x10] sm:$0xff]
  %v4972 = vld [vmem:[%s4968 + $0x18] sm:$0xff]
  %v4973 = vld [vmem:[%s4968 + $0x20] sm:$0xff]
  %v4974 = vld [vmem:[%s4968 + $0x28] sm:$0xff]
  %v4975 = vld [vmem:[%s4968 + $0x30] sm:$0xff]
  %v4976 = vld [vmem:[%s4968 + $0x38] sm:$0xff]
  %v4977 = vld [vmem:[%s4968 + $0x40] sm:$0xff]
  %v4979 = vsel %vm168, %v4904, 0
  %v4982 = vsel %vm168, %v4905, 0
  %v4985 = vsel %vm168, %v4906, 0
  %v4988 = vsel %vm168, %v4907, 0
  %v4991 = vsel %vm168, %v4908, 0
  %v4994 = vsel %vm168, %v4909, 0
  %v4997 = vsel %vm168, %v4910, 0
  %v5000 = vsel %vm168, %v4911, 0
  %v5003 = vsel %vm168, %v4912, 0
  %v5006 = vsel %vm168, %v4913, 0
  %v5009 = vsel %vm168, %v4914, 0
  %v5012 = vsel %vm168, %v4915, 0
  %v5015 = vsel %vm168, %v4916, 0
  %v5018 = vsel %vm168, %v4917, 0
  %v5021 = vsel %vm168, %v4918, 0
  %v5024 = vsel %vm168, %v4919, 0
  %v5027 = vsel %vm168, %v4920, 0
  %v5030 = vsel %vm168, %v4921, 0
  %v5033 = vsel %vm168, %v4922, 0
  %v5036 = vsel %vm168, %v4923, 0
  %v5039 = vsel %vm168, %v4924, 0
  %v5042 = vsel %vm168, %v4925, 0
  %v5045 = vsel %vm168, %v4926, 0
  %v5048 = vsel %vm168, %v4927, 0
  %v5051 = vsel %vm168, %v4928, 0
  %v5054 = vsel %vm168, %v4929, 0
  %v5057 = vsel %vm168, %v4930, 0
  %v5060 = vsel %vm168, %v4931, 0
  %v5063 = vsel %vm168, %v4932, 0
  %v5066 = vsel %vm168, %v4933, 0
  %v5069 = vsel %vm168, %v4934, 0
  %v5072 = vsel %vm168, %v4935, 0
  %v5075 = vsel %vm168, %v4936, 0
  %v5078 = vsel %vm168, %v4937, 0
  %v5081 = vsel %vm168, %v4938, 0
  %v5084 = vsel %vm168, %v4939, 0
  %v5087 = vsel %vm168, %v4940, 0
  %v5090 = vsel %vm168, %v4941, 0
  %v5093 = vsel %vm168, %v4942, 0
  %v5096 = vsel %vm168, %v4943, 0
  %v5099 = vsel %vm168, %v4944, 0
  %v5102 = vsel %vm168, %v4945, 0
  %v5105 = vsel %vm168, %v4946, 0
  %v5108 = vsel %vm168, %v4947, 0
  %v5111 = vsel %vm168, %v4948, 0
  %v5114 = vsel %vm168, %v4949, 0
  %v5117 = vsel %vm168, %v4950, 0
  %v5120 = vsel %vm168, %v4951, 0
  %v5123 = vsel %vm168, %v4952, 0
  %v5126 = vsel %vm168, %v4953, 0
  %v5129 = vsel %vm168, %v4954, 0
  %v5132 = vsel %vm168, %v4955, 0
  %v5135 = vsel %vm168, %v4956, 0
  %v5138 = vsel %vm168, %v4957, 0
  %v5141 = vsel %vm168, %v4958, 0
  %v5144 = vsel %vm168, %v4959, 0
  %v5147 = vsel %vm168, %v4960, 0
  %v5150 = vsel %vm168, %v4961, 0
  %v5153 = vsel %vm168, %v4962, 0
  %v5156 = vsel %vm168, %v4963, 0
  %v5159 = vsel %vm168, %v4964, 0
  %v5162 = vsel %vm168, %v4965, 0
  %v5165 = vsel %vm168, %v4966, 0
  %v5168 = vsel %vm168, %v4967, 0
  %5170 = vmatprep.subr.mxu0 0.0
  %5171 = vmatpush1.msra.mxu0 0.0
  %5172 = vmatprep.subr.mxu0 0.0
  %5173 = vmatpush1.msra.mxu0 0.0
  %5174 = vmatprep.subr.mxu0 0.0
  %5175 = vmatpush1.msra.mxu0 0.0
  %5176 = vmatprep.subr.mxu0 0.0
  %5177 = vmatpush1.msra.mxu0 0.0
  %5178 = vmatprep.subr.mxu0 0.0
  %5179 = vmatpush1.msra.mxu0 0.0
  %5180 = vmatprep.subr.mxu0 0.0
  %5181 = vmatpush1.msra.mxu0 0.0
  %5182 = vmatprep.subr.mxu0 0.0
  %5183 = vmatpush1.msra.mxu0 0.0
  %5184 = vmatprep.subr.mxu0 0.0
  %5185 = vmatpush1.msra.mxu0 %v4977
  %5186 = vmatprep.subr.mxu0 0.0
  %5187 = vmatpush1.msra.mxu0 %v4976
  %5188 = vmatprep.subr.mxu0 0.0
  %5189 = vmatpush1.msra.mxu0 %v4975
  %5190 = vmatprep.subr.mxu0 0.0
  %5191 = vmatpush1.msra.mxu0 %v4974
  %5192 = vmatprep.subr.mxu0 0.0
  %5193 = vmatpush1.msra.mxu0 %v4973
  %5194 = vmatprep.subr.mxu0 0.0
  %5195 = vmatpush1.msra.mxu0 %v4972
  %5196 = vmatprep.subr.mxu0 0.0
  %5197 = vmatpush1.msra.mxu0 %v4971
  %5198 = vmatprep.subr.mxu0 0.0
  %5199 = vmatpush1.msra.mxu0 %v4970
  %5200 = vmatprep.subr.mxu0 0.0
  %5201 = vmatpush1.msra.mxu0 %v4969
  %5202 = vmatprep.subr.mxu0 0.0
  %5203 = vmatpush2.msra.mxu0 0.0
  %5204 = vmatprep.subr.mxu0 0.0
  %5205 = vmatpush2.msra.mxu0 0.0
  %5206 = vmatprep.subr.mxu0 0.0
  %5207 = vmatpush2.msra.mxu0 0.0
  %5208 = vmatprep.subr.mxu0 0.0
  %5209 = vmatpush2.msra.mxu0 0.0
  %5210 = vmatprep.subr.mxu0 0.0
  %5211 = vmatpush2.msra.mxu0 0.0
  %5212 = vmatprep.subr.mxu0 0.0
  %5213 = vmatpush2.msra.mxu0 0.0
  %5214 = vmatprep.subr.mxu0 0.0
  %5215 = vmatpush2.msra.mxu0 0.0
  %5216 = vmatprep.subr.mxu0 0.0
  %5217 = vmatpush2.msra.mxu0 0.0
  %5218 = vmatprep.subr.mxu0 0.0
  %5219 = vmatpush2.msra.mxu0 0.0
  %5220 = vmatprep.subr.mxu0 0.0
  %5221 = vmatpush2.msra.mxu0 0.0
  %5222 = vmatprep.subr.mxu0 0.0
  %5223 = vmatpush2.msra.mxu0 0.0
  %5224 = vmatprep.subr.mxu0 0.0
  %5225 = vmatpush2.msra.mxu0 0.0
  %5226 = vmatprep.subr.mxu0 0.0
  %5227 = vmatpush2.msra.mxu0 0.0
  %5228 = vmatprep.subr.mxu0 0.0
  %5229 = vmatpush2.msra.mxu0 0.0
  %5230 = vmatprep.subr.mxu0 0.0
  %5231 = vmatpush2.msra.mxu0 0.0
  %5232 = vmatprep.subr.mxu0 0.0
  %5233 = vmatpush2.msra.mxu0 0.0
  %5234 = vmatprep.mubr.f32.mxu0 0.0
  %5235 = vmatmul.mubr.f32.gmra.mxu0 %v4979
  %v5236 = vpop.f32.mrf.mxu0
  %v5237 = vadd.f32 0.0, %v5236
  %v5238 = vpop.f32.mrf.mxu0
  %5239 = vmatprep.mubr.f32.mxu0 0.0
  %5240 = vmatmul.mubr.f32.gmra.mxu0 %v4982
  %v5241 = vpop.f32.mrf.mxu0
  %v5242 = vadd.f32 0.0, %v5241
  %v5243 = vpop.f32.mrf.mxu0
  %5244 = vmatprep.mubr.f32.mxu0 0.0
  %5245 = vmatmul.mubr.f32.gmra.mxu0 %v4985
  %v5246 = vpop.f32.mrf.mxu0
  %v5247 = vadd.f32 0.0, %v5246
  %v5248 = vpop.f32.mrf.mxu0
  %5249 = vmatprep.mubr.f32.mxu0 0.0
  %5250 = vmatmul.mubr.f32.gmra.mxu0 %v4988
  %v5251 = vpop.f32.mrf.mxu0
  %v5252 = vadd.f32 0.0, %v5251
  %v5253 = vpop.f32.mrf.mxu0
  %5254 = vmatprep.mubr.f32.mxu0 0.0
  %5255 = vmatmul.mubr.f32.gmra.mxu0 %v4991
  %v5256 = vpop.f32.mrf.mxu0
  %v5257 = vadd.f32 0.0, %v5256
  %v5258 = vpop.f32.mrf.mxu0
  %5259 = vmatprep.mubr.f32.mxu0 0.0
  %5260 = vmatmul.mubr.f32.gmra.mxu0 %v4994
  %v5261 = vpop.f32.mrf.mxu0
  %v5262 = vadd.f32 0.0, %v5261
  %v5263 = vpop.f32.mrf.mxu0
  %5264 = vmatprep.mubr.f32.mxu0 0.0
  %5265 = vmatmul.mubr.f32.gmra.mxu0 %v4997
  %v5266 = vpop.f32.mrf.mxu0
  %v5267 = vadd.f32 0.0, %v5266
  %v5268 = vpop.f32.mrf.mxu0
  %5269 = vmatprep.mubr.f32.mxu0 0.0
  %5270 = vmatmul.mubr.f32.gmra.mxu0 %v5000
  %v5271 = vpop.f32.mrf.mxu0
  %v5272 = vadd.f32 0.0, %v5271
  %v5273 = vpop.f32.mrf.mxu0
  %5274 = vmatprep.mubr.f32.mxu0 0.0
  %5275 = vmatmul.mubr.f32.gmra.mxu0 %v5003
  %v5276 = vpop.f32.mrf.mxu0
  %v5277 = vadd.f32 0.0, %v5276
  %v5278 = vpop.f32.mrf.mxu0
  %5279 = vmatprep.mubr.f32.mxu0 0.0
  %5280 = vmatmul.mubr.f32.gmra.mxu0 %v5006
  %v5281 = vpop.f32.mrf.mxu0
  %v5282 = vadd.f32 0.0, %v5281
  %v5283 = vpop.f32.mrf.mxu0
  %5284 = vmatprep.mubr.f32.mxu0 0.0
  %5285 = vmatmul.mubr.f32.gmra.mxu0 %v5009
  %v5286 = vpop.f32.mrf.mxu0
  %v5287 = vadd.f32 0.0, %v5286
  %v5288 = vpop.f32.mrf.mxu0
  %5289 = vmatprep.mubr.f32.mxu0 0.0
  %5290 = vmatmul.mubr.f32.gmra.mxu0 %v5012
  %v5291 = vpop.f32.mrf.mxu0
  %v5292 = vadd.f32 0.0, %v5291
  %v5293 = vpop.f32.mrf.mxu0
  %5294 = vmatprep.mubr.f32.mxu0 0.0
  %5295 = vmatmul.mubr.f32.gmra.mxu0 %v5015
  %v5296 = vpop.f32.mrf.mxu0
  %v5297 = vadd.f32 0.0, %v5296
  %v5298 = vpop.f32.mrf.mxu0
  %5299 = vmatprep.mubr.f32.mxu0 0.0
  %5300 = vmatmul.mubr.f32.gmra.mxu0 %v5018
  %v5301 = vpop.f32.mrf.mxu0
  %v5302 = vadd.f32 0.0, %v5301
  %v5303 = vpop.f32.mrf.mxu0
  %5304 = vmatprep.mubr.f32.mxu0 0.0
  %5305 = vmatmul.mubr.f32.gmra.mxu0 %v5021
  %v5306 = vpop.f32.mrf.mxu0
  %v5307 = vadd.f32 0.0, %v5306
  %v5308 = vpop.f32.mrf.mxu0
  %5309 = vmatprep.mubr.f32.mxu0 0.0
  %5310 = vmatmul.mubr.f32.gmra.mxu0 %v5024
  %v5311 = vpop.f32.mrf.mxu0
  %v5312 = vadd.f32 0.0, %v5311
  %v5313 = vpop.f32.mrf.mxu0
  %5314 = vmatprep.mubr.f32.mxu0 0.0
  %5315 = vmatmul.mubr.f32.gmra.mxu0 %v5027
  %v5316 = vpop.f32.mrf.mxu0
  %v5317 = vadd.f32 0.0, %v5316
  %v5318 = vpop.f32.mrf.mxu0
  %5319 = vmatprep.mubr.f32.mxu0 0.0
  %5320 = vmatmul.mubr.f32.gmra.mxu0 %v5030
  %v5321 = vpop.f32.mrf.mxu0
  %v5322 = vadd.f32 0.0, %v5321
  %v5323 = vpop.f32.mrf.mxu0
  %5324 = vmatprep.mubr.f32.mxu0 0.0
  %5325 = vmatmul.mubr.f32.gmra.mxu0 %v5033
  %v5326 = vpop.f32.mrf.mxu0
  %v5327 = vadd.f32 0.0, %v5326
  %v5328 = vpop.f32.mrf.mxu0
  %5329 = vmatprep.mubr.f32.mxu0 0.0
  %5330 = vmatmul.mubr.f32.gmra.mxu0 %v5036
  %v5331 = vpop.f32.mrf.mxu0
  %v5332 = vadd.f32 0.0, %v5331
  %v5333 = vpop.f32.mrf.mxu0
  %5334 = vmatprep.mubr.f32.mxu0 0.0
  %5335 = vmatmul.mubr.f32.gmra.mxu0 %v5039
  %v5336 = vpop.f32.mrf.mxu0
  %v5337 = vadd.f32 0.0, %v5336
  %v5338 = vpop.f32.mrf.mxu0
  %5339 = vmatprep.mubr.f32.mxu0 0.0
  %5340 = vmatmul.mubr.f32.gmra.mxu0 %v5042
  %v5341 = vpop.f32.mrf.mxu0
  %v5342 = vadd.f32 0.0, %v5341
  %v5343 = vpop.f32.mrf.mxu0
  %5344 = vmatprep.mubr.f32.mxu0 0.0
  %5345 = vmatmul.mubr.f32.gmra.mxu0 %v5045
  %v5346 = vpop.f32.mrf.mxu0
  %v5347 = vadd.f32 0.0, %v5346
  %v5348 = vpop.f32.mrf.mxu0
  %5349 = vmatprep.mubr.f32.mxu0 0.0
  %5350 = vmatmul.mubr.f32.gmra.mxu0 %v5048
  %v5351 = vpop.f32.mrf.mxu0
  %v5352 = vadd.f32 0.0, %v5351
  %v5353 = vpop.f32.mrf.mxu0
  %5354 = vmatprep.mubr.f32.mxu0 0.0
  %5355 = vmatmul.mubr.f32.gmra.mxu0 %v5051
  %v5356 = vpop.f32.mrf.mxu0
  %v5357 = vadd.f32 0.0, %v5356
  %v5358 = vpop.f32.mrf.mxu0
  %5359 = vmatprep.mubr.f32.mxu0 0.0
  %5360 = vmatmul.mubr.f32.gmra.mxu0 %v5054
  %v5361 = vpop.f32.mrf.mxu0
  %v5362 = vadd.f32 0.0, %v5361
  %v5363 = vpop.f32.mrf.mxu0
  %5364 = vmatprep.mubr.f32.mxu0 0.0
  %5365 = vmatmul.mubr.f32.gmra.mxu0 %v5057
  %v5366 = vpop.f32.mrf.mxu0
  %v5367 = vadd.f32 0.0, %v5366
  %v5368 = vpop.f32.mrf.mxu0
  %5369 = vmatprep.mubr.f32.mxu0 0.0
  %5370 = vmatmul.mubr.f32.gmra.mxu0 %v5060
  %v5371 = vpop.f32.mrf.mxu0
  %v5372 = vadd.f32 0.0, %v5371
  %v5373 = vpop.f32.mrf.mxu0
  %5374 = vmatprep.mubr.f32.mxu0 0.0
  %5375 = vmatmul.mubr.f32.gmra.mxu0 %v5063
  %v5376 = vpop.f32.mrf.mxu0
  %v5377 = vadd.f32 0.0, %v5376
  %v5378 = vpop.f32.mrf.mxu0
  %5379 = vmatprep.mubr.f32.mxu0 0.0
  %5380 = vmatmul.mubr.f32.gmra.mxu0 %v5066
  %v5381 = vpop.f32.mrf.mxu0
  %v5382 = vadd.f32 0.0, %v5381
  %v5383 = vpop.f32.mrf.mxu0
  %5384 = vmatprep.mubr.f32.mxu0 0.0
  %5385 = vmatmul.mubr.f32.gmra.mxu0 %v5069
  %v5386 = vpop.f32.mrf.mxu0
  %v5387 = vadd.f32 0.0, %v5386
  %v5388 = vpop.f32.mrf.mxu0
  %5389 = vmatprep.mubr.f32.mxu0 0.0
  %5390 = vmatmul.mubr.f32.gmra.mxu0 %v5072
  %v5391 = vpop.f32.mrf.mxu0
  %v5392 = vadd.f32 0.0, %v5391
  %v5393 = vpop.f32.mrf.mxu0
  %5394 = vmatprep.mubr.f32.mxu0 0.0
  %5395 = vmatmul.mubr.f32.gmra.mxu0 %v5075
  %v5396 = vpop.f32.mrf.mxu0
  %v5397 = vadd.f32 0.0, %v5396
  %v5398 = vpop.f32.mrf.mxu0
  %5399 = vmatprep.mubr.f32.mxu0 0.0
  %5400 = vmatmul.mubr.f32.gmra.mxu0 %v5078
  %v5401 = vpop.f32.mrf.mxu0
  %v5402 = vadd.f32 0.0, %v5401
  %v5403 = vpop.f32.mrf.mxu0
  %5404 = vmatprep.mubr.f32.mxu0 0.0
  %5405 = vmatmul.mubr.f32.gmra.mxu0 %v5081
  %v5406 = vpop.f32.mrf.mxu0
  %v5407 = vadd.f32 0.0, %v5406
  %v5408 = vpop.f32.mrf.mxu0
  %5409 = vmatprep.mubr.f32.mxu0 0.0
  %5410 = vmatmul.mubr.f32.gmra.mxu0 %v5084
  %v5411 = vpop.f32.mrf.mxu0
  %v5412 = vadd.f32 0.0, %v5411
  %v5413 = vpop.f32.mrf.mxu0
  %5414 = vmatprep.mubr.f32.mxu0 0.0
  %5415 = vmatmul.mubr.f32.gmra.mxu0 %v5087
  %v5416 = vpop.f32.mrf.mxu0
  %v5417 = vadd.f32 0.0, %v5416
  %v5418 = vpop.f32.mrf.mxu0
  %5419 = vmatprep.mubr.f32.mxu0 0.0
  %5420 = vmatmul.mubr.f32.gmra.mxu0 %v5090
  %v5421 = vpop.f32.mrf.mxu0
  %v5422 = vadd.f32 0.0, %v5421
  %v5423 = vpop.f32.mrf.mxu0
  %5424 = vmatprep.mubr.f32.mxu0 0.0
  %5425 = vmatmul.mubr.f32.gmra.mxu0 %v5093
  %v5426 = vpop.f32.mrf.mxu0
  %v5427 = vadd.f32 0.0, %v5426
  %v5428 = vpop.f32.mrf.mxu0
  %5429 = vmatprep.mubr.f32.mxu0 0.0
  %5430 = vmatmul.mubr.f32.gmra.mxu0 %v5096
  %v5431 = vpop.f32.mrf.mxu0
  %v5432 = vadd.f32 0.0, %v5431
  %v5433 = vpop.f32.mrf.mxu0
  %5434 = vmatprep.mubr.f32.mxu0 0.0
  %5435 = vmatmul.mubr.f32.gmra.mxu0 %v5099
  %v5436 = vpop.f32.mrf.mxu0
  %v5437 = vadd.f32 0.0, %v5436
  %v5438 = vpop.f32.mrf.mxu0
  %5439 = vmatprep.mubr.f32.mxu0 0.0
  %5440 = vmatmul.mubr.f32.gmra.mxu0 %v5102
  %v5441 = vpop.f32.mrf.mxu0
  %v5442 = vadd.f32 0.0, %v5441
  %v5443 = vpop.f32.mrf.mxu0
  %5444 = vmatprep.mubr.f32.mxu0 0.0
  %5445 = vmatmul.mubr.f32.gmra.mxu0 %v5105
  %v5446 = vpop.f32.mrf.mxu0
  %v5447 = vadd.f32 0.0, %v5446
  %v5448 = vpop.f32.mrf.mxu0
  %5449 = vmatprep.mubr.f32.mxu0 0.0
  %5450 = vmatmul.mubr.f32.gmra.mxu0 %v5108
  %v5451 = vpop.f32.mrf.mxu0
  %v5452 = vadd.f32 0.0, %v5451
  %v5453 = vpop.f32.mrf.mxu0
  %5454 = vmatprep.mubr.f32.mxu0 0.0
  %5455 = vmatmul.mubr.f32.gmra.mxu0 %v5111
  %v5456 = vpop.f32.mrf.mxu0
  %v5457 = vadd.f32 0.0, %v5456
  %v5458 = vpop.f32.mrf.mxu0
  %5459 = vmatprep.mubr.f32.mxu0 0.0
  %5460 = vmatmul.mubr.f32.gmra.mxu0 %v5114
  %v5461 = vpop.f32.mrf.mxu0
  %v5462 = vadd.f32 0.0, %v5461
  %v5463 = vpop.f32.mrf.mxu0
  %5464 = vmatprep.mubr.f32.mxu0 0.0
  %5465 = vmatmul.mubr.f32.gmra.mxu0 %v5117
  %v5466 = vpop.f32.mrf.mxu0
  %v5467 = vadd.f32 0.0, %v5466
  %v5468 = vpop.f32.mrf.mxu0
  %5469 = vmatprep.mubr.f32.mxu0 0.0
  %5470 = vmatmul.mubr.f32.gmra.mxu0 %v5120
  %v5471 = vpop.f32.mrf.mxu0
  %v5472 = vadd.f32 0.0, %v5471
  %v5473 = vpop.f32.mrf.mxu0
  %5474 = vmatprep.mubr.f32.mxu0 0.0
  %5475 = vmatmul.mubr.f32.gmra.mxu0 %v5123
  %v5476 = vpop.f32.mrf.mxu0
  %v5477 = vadd.f32 0.0, %v5476
  %v5478 = vpop.f32.mrf.mxu0
  %5479 = vmatprep.mubr.f32.mxu0 0.0
  %5480 = vmatmul.mubr.f32.gmra.mxu0 %v5126
  %v5481 = vpop.f32.mrf.mxu0
  %v5482 = vadd.f32 0.0, %v5481
  %v5483 = vpop.f32.mrf.mxu0
  %5484 = vmatprep.mubr.f32.mxu0 0.0
  %5485 = vmatmul.mubr.f32.gmra.mxu0 %v5129
  %v5486 = vpop.f32.mrf.mxu0
  %v5487 = vadd.f32 0.0, %v5486
  %v5488 = vpop.f32.mrf.mxu0
  %5489 = vmatprep.mubr.f32.mxu0 0.0
  %5490 = vmatmul.mubr.f32.gmra.mxu0 %v5132
  %v5491 = vpop.f32.mrf.mxu0
  %v5492 = vadd.f32 0.0, %v5491
  %v5493 = vpop.f32.mrf.mxu0
  %5494 = vmatprep.mubr.f32.mxu0 0.0
  %5495 = vmatmul.mubr.f32.gmra.mxu0 %v5135
  %v5496 = vpop.f32.mrf.mxu0
  %v5497 = vadd.f32 0.0, %v5496
  %v5498 = vpop.f32.mrf.mxu0
  %5499 = vmatprep.mubr.f32.mxu0 0.0
  %5500 = vmatmul.mubr.f32.gmra.mxu0 %v5138
  %v5501 = vpop.f32.mrf.mxu0
  %v5502 = vadd.f32 0.0, %v5501
  %v5503 = vpop.f32.mrf.mxu0
  %5504 = vmatprep.mubr.f32.mxu0 0.0
  %5505 = vmatmul.mubr.f32.gmra.mxu0 %v5141
  %v5506 = vpop.f32.mrf.mxu0
  %v5507 = vadd.f32 0.0, %v5506
  %v5508 = vpop.f32.mrf.mxu0
  %5509 = vmatprep.mubr.f32.mxu0 0.0
  %5510 = vmatmul.mubr.f32.gmra.mxu0 %v5144
  %v5511 = vpop.f32.mrf.mxu0
  %v5512 = vadd.f32 0.0, %v5511
  %v5513 = vpop.f32.mrf.mxu0
  %5514 = vmatprep.mubr.f32.mxu0 0.0
  %5515 = vmatmul.mubr.f32.gmra.mxu0 %v5147
  %v5516 = vpop.f32.mrf.mxu0
  %v5517 = vadd.f32 0.0, %v5516
  %v5518 = vpop.f32.mrf.mxu0
  %5519 = vmatprep.mubr.f32.mxu0 0.0
  %5520 = vmatmul.mubr.f32.gmra.mxu0 %v5150
  %v5521 = vpop.f32.mrf.mxu0
  %v5522 = vadd.f32 0.0, %v5521
  %v5523 = vpop.f32.mrf.mxu0
  %5524 = vmatprep.mubr.f32.mxu0 0.0
  %5525 = vmatmul.mubr.f32.gmra.mxu0 %v5153
  %v5526 = vpop.f32.mrf.mxu0
  %v5527 = vadd.f32 0.0, %v5526
  %v5528 = vpop.f32.mrf.mxu0
  %5529 = vmatprep.mubr.f32.mxu0 0.0
  %5530 = vmatmul.mubr.f32.gmra.mxu0 %v5156
  %v5531 = vpop.f32.mrf.mxu0
  %v5532 = vadd.f32 0.0, %v5531
  %v5533 = vpop.f32.mrf.mxu0
  %5534 = vmatprep.mubr.f32.mxu0 0.0
  %5535 = vmatmul.mubr.f32.gmra.mxu0 %v5159
  %v5536 = vpop.f32.mrf.mxu0
  %v5537 = vadd.f32 0.0, %v5536
  %v5538 = vpop.f32.mrf.mxu0
  %5539 = vmatprep.mubr.f32.mxu0 0.0
  %5540 = vmatmul.mubr.f32.gmra.mxu0 %v5162
  %v5541 = vpop.f32.mrf.mxu0
  %v5542 = vadd.f32 0.0, %v5541
  %v5543 = vpop.f32.mrf.mxu0
  %5544 = vmatprep.mubr.f32.mxu0 0.0
  %5545 = vmatmul.mubr.f32.gmra.mxu0 %v5165
  %v5546 = vpop.f32.mrf.mxu0
  %v5547 = vadd.f32 0.0, %v5546
  %v5548 = vpop.f32.mrf.mxu0
  %5549 = vmatprep.mubr.f32.mxu0 0.0
  %5550 = vmatmul.mubr.f32.gmra.mxu0 %v5168
  %v5551 = vpop.f32.mrf.mxu0
  %v5552 = vadd.f32 0.0, %v5551
  %v5553 = vpop.f32.mrf.mxu0
  %5554 = vdwg.mxu0
  %v5555 = vadd.f32 %v4839, %v5237
  %v5556 = vadd.f32 %v4840, %v5242
  %v5557 = vadd.f32 %v4841, %v5247
  %v5558 = vadd.f32 %v4842, %v5252
  %v5559 = vadd.f32 %v4843, %v5257
  %v5560 = vadd.f32 %v4844, %v5262
  %v5561 = vadd.f32 %v4845, %v5267
  %v5562 = vadd.f32 %v4846, %v5272
  %v5563 = vadd.f32 %v4847, %v5277
  %v5564 = vadd.f32 %v4848, %v5282
  %v5565 = vadd.f32 %v4849, %v5287
  %v5566 = vadd.f32 %v4850, %v5292
  %v5567 = vadd.f32 %v4851, %v5297
  %v5568 = vadd.f32 %v4852, %v5302
  %v5569 = vadd.f32 %v4853, %v5307
  %v5570 = vadd.f32 %v4854, %v5312
  %v5571 = vadd.f32 %v4855, %v5317
  %v5572 = vadd.f32 %v4856, %v5322
  %v5573 = vadd.f32 %v4857, %v5327
  %v5574 = vadd.f32 %v4858, %v5332
  %v5575 = vadd.f32 %v4859, %v5337
  %v5576 = vadd.f32 %v4860, %v5342
  %v5577 = vadd.f32 %v4861, %v5347
  %v5578 = vadd.f32 %v4862, %v5352
  %v5579 = vadd.f32 %v4863, %v5357
  %v5580 = vadd.f32 %v4864, %v5362
  %v5581 = vadd.f32 %v4865, %v5367
  %v5582 = vadd.f32 %v4866, %v5372
  %v5583 = vadd.f32 %v4867, %v5377
  %v5584 = vadd.f32 %v4868, %v5382
  %v5585 = vadd.f32 %v4869, %v5387
  %v5586 = vadd.f32 %v4870, %v5392
  %v5587 = vadd.f32 %v4871, %v5397
  %v5588 = vadd.f32 %v4872, %v5402
  %v5589 = vadd.f32 %v4873, %v5407
  %v5590 = vadd.f32 %v4874, %v5412
  %v5591 = vadd.f32 %v4875, %v5417
  %v5592 = vadd.f32 %v4876, %v5422
  %v5593 = vadd.f32 %v4877, %v5427
  %v5594 = vadd.f32 %v4878, %v5432
  %v5595 = vadd.f32 %v4879, %v5437
  %v5596 = vadd.f32 %v4880, %v5442
  %v5597 = vadd.f32 %v4881, %v5447
  %v5598 = vadd.f32 %v4882, %v5452
  %v5599 = vadd.f32 %v4883, %v5457
  %v5600 = vadd.f32 %v4884, %v5462
  %v5601 = vadd.f32 %v4885, %v5467
  %v5602 = vadd.f32 %v4886, %v5472
  %v5603 = vadd.f32 %v4887, %v5477
  %v5604 = vadd.f32 %v4888, %v5482
  %v5605 = vadd.f32 %v4889, %v5487
  %v5606 = vadd.f32 %v4890, %v5492
  %v5607 = vadd.f32 %v4891, %v5497
  %v5608 = vadd.f32 %v4892, %v5502
  %v5609 = vadd.f32 %v4893, %v5507
  %v5610 = vadd.f32 %v4894, %v5512
  %v5611 = vadd.f32 %v4895, %v5517
  %v5612 = vadd.f32 %v4896, %v5522
  %v5613 = vadd.f32 %v4897, %v5527
  %v5614 = vadd.f32 %v4898, %v5532
  %v5615 = vadd.f32 %v4899, %v5537
  %v5616 = vadd.f32 %v4900, %v5542
  %v5617 = vadd.f32 %v4901, %v5547
  %v5618 = vadd.f32 %v4902, %v5552
  %s5619 = scalar_lea.vmem %s0, 4096
  %v5620 = vld [vmem:[%s5619] sm:$0xff]
  %v5621 = vld [vmem:[%s5619 + $0x8] sm:$0xff]
  %v5622 = vld [vmem:[%s5619 + $0x10] sm:$0xff]
  %v5623 = vld [vmem:[%s5619 + $0x18] sm:$0xff]
  %v5624 = vld [vmem:[%s5619 + $0x20] sm:$0xff]
  %v5625 = vld [vmem:[%s5619 + $0x28] sm:$0xff]
  %v5626 = vld [vmem:[%s5619 + $0x30] sm:$0xff]
  %v5627 = vld [vmem:[%s5619 + $0x38] sm:$0xff]
  %v5628 = vld [vmem:[%s5619 + $0x40] sm:$0xff]
  %v5629 = vld [vmem:[%s5619 + $0x48] sm:$0xff]
  %v5630 = vld [vmem:[%s5619 + $0x50] sm:$0xff]
  %v5631 = vld [vmem:[%s5619 + $0x58] sm:$0xff]
  %v5632 = vld [vmem:[%s5619 + $0x60] sm:$0xff]
  %v5633 = vld [vmem:[%s5619 + $0x68] sm:$0xff]
  %v5634 = vld [vmem:[%s5619 + $0x70] sm:$0xff]
  %v5635 = vld [vmem:[%s5619 + $0x78] sm:$0xff]
  %v5636 = vld [vmem:[%s5619 + $0x80] sm:$0xff]
  %v5637 = vld [vmem:[%s5619 + $0x88] sm:$0xff]
  %v5638 = vld [vmem:[%s5619 + $0x90] sm:$0xff]
  %v5639 = vld [vmem:[%s5619 + $0x98] sm:$0xff]
  %v5640 = vld [vmem:[%s5619 + $0xa0] sm:$0xff]
  %v5641 = vld [vmem:[%s5619 + $0xa8] sm:$0xff]
  %v5642 = vld [vmem:[%s5619 + $0xb0] sm:$0xff]
  %v5643 = vld [vmem:[%s5619 + $0xb8] sm:$0xff]
  %v5644 = vld [vmem:[%s5619 + $0xc0] sm:$0xff]
  %v5645 = vld [vmem:[%s5619 + $0xc8] sm:$0xff]
  %v5646 = vld [vmem:[%s5619 + $0xd0] sm:$0xff]
  %v5647 = vld [vmem:[%s5619 + $0xd8] sm:$0xff]
  %v5648 = vld [vmem:[%s5619 + $0xe0] sm:$0xff]
  %v5649 = vld [vmem:[%s5619 + $0xe8] sm:$0xff]
  %v5650 = vld [vmem:[%s5619 + $0xf0] sm:$0xff]
  %v5651 = vld [vmem:[%s5619 + $0xf8] sm:$0xff]
  %v5652 = vld [vmem:[%s5619 + $0x100] sm:$0xff]
  %v5653 = vld [vmem:[%s5619 + $0x108] sm:$0xff]
  %v5654 = vld [vmem:[%s5619 + $0x110] sm:$0xff]
  %v5655 = vld [vmem:[%s5619 + $0x118] sm:$0xff]
  %v5656 = vld [vmem:[%s5619 + $0x120] sm:$0xff]
  %v5657 = vld [vmem:[%s5619 + $0x128] sm:$0xff]
  %v5658 = vld [vmem:[%s5619 + $0x130] sm:$0xff]
  %v5659 = vld [vmem:[%s5619 + $0x138] sm:$0xff]
  %v5660 = vld [vmem:[%s5619 + $0x140] sm:$0xff]
  %v5661 = vld [vmem:[%s5619 + $0x148] sm:$0xff]
  %v5662 = vld [vmem:[%s5619 + $0x150] sm:$0xff]
  %v5663 = vld [vmem:[%s5619 + $0x158] sm:$0xff]
  %v5664 = vld [vmem:[%s5619 + $0x160] sm:$0xff]
  %v5665 = vld [vmem:[%s5619 + $0x168] sm:$0xff]
  %v5666 = vld [vmem:[%s5619 + $0x170] sm:$0xff]
  %v5667 = vld [vmem:[%s5619 + $0x178] sm:$0xff]
  %v5668 = vld [vmem:[%s5619 + $0x180] sm:$0xff]
  %v5669 = vld [vmem:[%s5619 + $0x188] sm:$0xff]
  %v5670 = vld [vmem:[%s5619 + $0x190] sm:$0xff]
  %v5671 = vld [vmem:[%s5619 + $0x198] sm:$0xff]
  %v5672 = vld [vmem:[%s5619 + $0x1a0] sm:$0xff]
  %v5673 = vld [vmem:[%s5619 + $0x1a8] sm:$0xff]
  %v5674 = vld [vmem:[%s5619 + $0x1b0] sm:$0xff]
  %v5675 = vld [vmem:[%s5619 + $0x1b8] sm:$0xff]
  %v5676 = vld [vmem:[%s5619 + $0x1c0] sm:$0xff]
  %v5677 = vld [vmem:[%s5619 + $0x1c8] sm:$0xff]
  %v5678 = vld [vmem:[%s5619 + $0x1d0] sm:$0xff]
  %v5679 = vld [vmem:[%s5619 + $0x1d8] sm:$0xff]
  %v5680 = vld [vmem:[%s5619 + $0x1e0] sm:$0xff]
  %v5681 = vld [vmem:[%s5619 + $0x1e8] sm:$0xff]
  %v5682 = vld [vmem:[%s5619 + $0x1f0] sm:$0xff]
  %v5683 = vld [vmem:[%s5619 + $0x1f8] sm:$0xff]
  %s5684 = scalar_lea.vmem %s1, 576
  %v5685 = vld [vmem:[%s5684] sm:$0xff]
  %v5686 = vld [vmem:[%s5684 + $0x8] sm:$0xff]
  %v5687 = vld [vmem:[%s5684 + $0x10] sm:$0xff]
  %v5688 = vld [vmem:[%s5684 + $0x18] sm:$0xff]
  %v5689 = vld [vmem:[%s5684 + $0x20] sm:$0xff]
  %v5690 = vld [vmem:[%s5684 + $0x28] sm:$0xff]
  %v5691 = vld [vmem:[%s5684 + $0x30] sm:$0xff]
  %v5692 = vld [vmem:[%s5684 + $0x38] sm:$0xff]
  %v5693 = vld [vmem:[%s5684 + $0x40] sm:$0xff]
  %v5695 = vsel %vm168, %v5620, 0
  %v5698 = vsel %vm168, %v5621, 0
  %v5701 = vsel %vm168, %v5622, 0
  %v5704 = vsel %vm168, %v5623, 0
  %v5707 = vsel %vm168, %v5624, 0
  %v5710 = vsel %vm168, %v5625, 0
  %v5713 = vsel %vm168, %v5626, 0
  %v5716 = vsel %vm168, %v5627, 0
  %v5719 = vsel %vm168, %v5628, 0
  %v5722 = vsel %vm168, %v5629, 0
  %v5725 = vsel %vm168, %v5630, 0
  %v5728 = vsel %vm168, %v5631, 0
  %v5731 = vsel %vm168, %v5632, 0
  %v5734 = vsel %vm168, %v5633, 0
  %v5737 = vsel %vm168, %v5634, 0
  %v5740 = vsel %vm168, %v5635, 0
  %v5743 = vsel %vm168, %v5636, 0
  %v5746 = vsel %vm168, %v5637, 0
  %v5749 = vsel %vm168, %v5638, 0
  %v5752 = vsel %vm168, %v5639, 0
  %v5755 = vsel %vm168, %v5640, 0
  %v5758 = vsel %vm168, %v5641, 0
  %v5761 = vsel %vm168, %v5642, 0
  %v5764 = vsel %vm168, %v5643, 0
  %v5767 = vsel %vm168, %v5644, 0
  %v5770 = vsel %vm168, %v5645, 0
  %v5773 = vsel %vm168, %v5646, 0
  %v5776 = vsel %vm168, %v5647, 0
  %v5779 = vsel %vm168, %v5648, 0
  %v5782 = vsel %vm168, %v5649, 0
  %v5785 = vsel %vm168, %v5650, 0
  %v5788 = vsel %vm168, %v5651, 0
  %v5791 = vsel %vm168, %v5652, 0
  %v5794 = vsel %vm168, %v5653, 0
  %v5797 = vsel %vm168, %v5654, 0
  %v5800 = vsel %vm168, %v5655, 0
  %v5803 = vsel %vm168, %v5656, 0
  %v5806 = vsel %vm168, %v5657, 0
  %v5809 = vsel %vm168, %v5658, 0
  %v5812 = vsel %vm168, %v5659, 0
  %v5815 = vsel %vm168, %v5660, 0
  %v5818 = vsel %vm168, %v5661, 0
  %v5821 = vsel %vm168, %v5662, 0
  %v5824 = vsel %vm168, %v5663, 0
  %v5827 = vsel %vm168, %v5664, 0
  %v5830 = vsel %vm168, %v5665, 0
  %v5833 = vsel %vm168, %v5666, 0
  %v5836 = vsel %vm168, %v5667, 0
  %v5839 = vsel %vm168, %v5668, 0
  %v5842 = vsel %vm168, %v5669, 0
  %v5845 = vsel %vm168, %v5670, 0
  %v5848 = vsel %vm168, %v5671, 0
  %v5851 = vsel %vm168, %v5672, 0
  %v5854 = vsel %vm168, %v5673, 0
  %v5857 = vsel %vm168, %v5674, 0
  %v5860 = vsel %vm168, %v5675, 0
  %v5863 = vsel %vm168, %v5676, 0
  %v5866 = vsel %vm168, %v5677, 0
  %v5869 = vsel %vm168, %v5678, 0
  %v5872 = vsel %vm168, %v5679, 0
  %v5875 = vsel %vm168, %v5680, 0
  %v5878 = vsel %vm168, %v5681, 0
  %v5881 = vsel %vm168, %v5682, 0
  %v5884 = vsel %vm168, %v5683, 0
  %5886 = vmatprep.subr.mxu0 0.0
  %5887 = vmatpush1.msra.mxu0 0.0
  %5888 = vmatprep.subr.mxu0 0.0
  %5889 = vmatpush1.msra.mxu0 0.0
  %5890 = vmatprep.subr.mxu0 0.0
  %5891 = vmatpush1.msra.mxu0 0.0
  %5892 = vmatprep.subr.mxu0 0.0
  %5893 = vmatpush1.msra.mxu0 0.0
  %5894 = vmatprep.subr.mxu0 0.0
  %5895 = vmatpush1.msra.mxu0 0.0
  %5896 = vmatprep.subr.mxu0 0.0
  %5897 = vmatpush1.msra.mxu0 0.0
  %5898 = vmatprep.subr.mxu0 0.0
  %5899 = vmatpush1.msra.mxu0 0.0
  %5900 = vmatprep.subr.mxu0 0.0
  %5901 = vmatpush1.msra.mxu0 %v5693
  %5902 = vmatprep.subr.mxu0 0.0
  %5903 = vmatpush1.msra.mxu0 %v5692
  %5904 = vmatprep.subr.mxu0 0.0
  %5905 = vmatpush1.msra.mxu0 %v5691
  %5906 = vmatprep.subr.mxu0 0.0
  %5907 = vmatpush1.msra.mxu0 %v5690
  %5908 = vmatprep.subr.mxu0 0.0
  %5909 = vmatpush1.msra.mxu0 %v5689
  %5910 = vmatprep.subr.mxu0 0.0
  %5911 = vmatpush1.msra.mxu0 %v5688
  %5912 = vmatprep.subr.mxu0 0.0
  %5913 = vmatpush1.msra.mxu0 %v5687
  %5914 = vmatprep.subr.mxu0 0.0
  %5915 = vmatpush1.msra.mxu0 %v5686
  %5916 = vmatprep.subr.mxu0 0.0
  %5917 = vmatpush1.msra.mxu0 %v5685
  %5918 = vmatprep.subr.mxu0 0.0
  %5919 = vmatpush2.msra.mxu0 0.0
  %5920 = vmatprep.subr.mxu0 0.0
  %5921 = vmatpush2.msra.mxu0 0.0
  %5922 = vmatprep.subr.mxu0 0.0
  %5923 = vmatpush2.msra.mxu0 0.0
  %5924 = vmatprep.subr.mxu0 0.0
  %5925 = vmatpush2.msra.mxu0 0.0
  %5926 = vmatprep.subr.mxu0 0.0
  %5927 = vmatpush2.msra.mxu0 0.0
  %5928 = vmatprep.subr.mxu0 0.0
  %5929 = vmatpush2.msra.mxu0 0.0
  %5930 = vmatprep.subr.mxu0 0.0
  %5931 = vmatpush2.msra.mxu0 0.0
  %5932 = vmatprep.subr.mxu0 0.0
  %5933 = vmatpush2.msra.mxu0 0.0
  %5934 = vmatprep.subr.mxu0 0.0
  %5935 = vmatpush2.msra.mxu0 0.0
  %5936 = vmatprep.subr.mxu0 0.0
  %5937 = vmatpush2.msra.mxu0 0.0
  %5938 = vmatprep.subr.mxu0 0.0
  %5939 = vmatpush2.msra.mxu0 0.0
  %5940 = vmatprep.subr.mxu0 0.0
  %5941 = vmatpush2.msra.mxu0 0.0
  %5942 = vmatprep.subr.mxu0 0.0
  %5943 = vmatpush2.msra.mxu0 0.0
  %5944 = vmatprep.subr.mxu0 0.0
  %5945 = vmatpush2.msra.mxu0 0.0
  %5946 = vmatprep.subr.mxu0 0.0
  %5947 = vmatpush2.msra.mxu0 0.0
  %5948 = vmatprep.subr.mxu0 0.0
  %5949 = vmatpush2.msra.mxu0 0.0
  %5950 = vmatprep.mubr.f32.mxu0 0.0
  %5951 = vmatmul.mubr.f32.gmra.mxu0 %v5695
  %v5952 = vpop.f32.mrf.mxu0
  %v5953 = vadd.f32 0.0, %v5952
  %v5954 = vpop.f32.mrf.mxu0
  %5955 = vmatprep.mubr.f32.mxu0 0.0
  %5956 = vmatmul.mubr.f32.gmra.mxu0 %v5698
  %v5957 = vpop.f32.mrf.mxu0
  %v5958 = vadd.f32 0.0, %v5957
  %v5959 = vpop.f32.mrf.mxu0
  %5960 = vmatprep.mubr.f32.mxu0 0.0
  %5961 = vmatmul.mubr.f32.gmra.mxu0 %v5701
  %v5962 = vpop.f32.mrf.mxu0
  %v5963 = vadd.f32 0.0, %v5962
  %v5964 = vpop.f32.mrf.mxu0
  %5965 = vmatprep.mubr.f32.mxu0 0.0
  %5966 = vmatmul.mubr.f32.gmra.mxu0 %v5704
  %v5967 = vpop.f32.mrf.mxu0
  %v5968 = vadd.f32 0.0, %v5967
  %v5969 = vpop.f32.mrf.mxu0
  %5970 = vmatprep.mubr.f32.mxu0 0.0
  %5971 = vmatmul.mubr.f32.gmra.mxu0 %v5707
  %v5972 = vpop.f32.mrf.mxu0
  %v5973 = vadd.f32 0.0, %v5972
  %v5974 = vpop.f32.mrf.mxu0
  %5975 = vmatprep.mubr.f32.mxu0 0.0
  %5976 = vmatmul.mubr.f32.gmra.mxu0 %v5710
  %v5977 = vpop.f32.mrf.mxu0
  %v5978 = vadd.f32 0.0, %v5977
  %v5979 = vpop.f32.mrf.mxu0
  %5980 = vmatprep.mubr.f32.mxu0 0.0
  %5981 = vmatmul.mubr.f32.gmra.mxu0 %v5713
  %v5982 = vpop.f32.mrf.mxu0
  %v5983 = vadd.f32 0.0, %v5982
  %v5984 = vpop.f32.mrf.mxu0
  %5985 = vmatprep.mubr.f32.mxu0 0.0
  %5986 = vmatmul.mubr.f32.gmra.mxu0 %v5716
  %v5987 = vpop.f32.mrf.mxu0
  %v5988 = vadd.f32 0.0, %v5987
  %v5989 = vpop.f32.mrf.mxu0
  %5990 = vmatprep.mubr.f32.mxu0 0.0
  %5991 = vmatmul.mubr.f32.gmra.mxu0 %v5719
  %v5992 = vpop.f32.mrf.mxu0
  %v5993 = vadd.f32 0.0, %v5992
  %v5994 = vpop.f32.mrf.mxu0
  %5995 = vmatprep.mubr.f32.mxu0 0.0
  %5996 = vmatmul.mubr.f32.gmra.mxu0 %v5722
  %v5997 = vpop.f32.mrf.mxu0
  %v5998 = vadd.f32 0.0, %v5997
  %v5999 = vpop.f32.mrf.mxu0
  %6000 = vmatprep.mubr.f32.mxu0 0.0
  %6001 = vmatmul.mubr.f32.gmra.mxu0 %v5725
  %v6002 = vpop.f32.mrf.mxu0
  %v6003 = vadd.f32 0.0, %v6002
  %v6004 = vpop.f32.mrf.mxu0
  %6005 = vmatprep.mubr.f32.mxu0 0.0
  %6006 = vmatmul.mubr.f32.gmra.mxu0 %v5728
  %v6007 = vpop.f32.mrf.mxu0
  %v6008 = vadd.f32 0.0, %v6007
  %v6009 = vpop.f32.mrf.mxu0
  %6010 = vmatprep.mubr.f32.mxu0 0.0
  %6011 = vmatmul.mubr.f32.gmra.mxu0 %v5731
  %v6012 = vpop.f32.mrf.mxu0
  %v6013 = vadd.f32 0.0, %v6012
  %v6014 = vpop.f32.mrf.mxu0
  %6015 = vmatprep.mubr.f32.mxu0 0.0
  %6016 = vmatmul.mubr.f32.gmra.mxu0 %v5734
  %v6017 = vpop.f32.mrf.mxu0
  %v6018 = vadd.f32 0.0, %v6017
  %v6019 = vpop.f32.mrf.mxu0
  %6020 = vmatprep.mubr.f32.mxu0 0.0
  %6021 = vmatmul.mubr.f32.gmra.mxu0 %v5737
  %v6022 = vpop.f32.mrf.mxu0
  %v6023 = vadd.f32 0.0, %v6022
  %v6024 = vpop.f32.mrf.mxu0
  %6025 = vmatprep.mubr.f32.mxu0 0.0
  %6026 = vmatmul.mubr.f32.gmra.mxu0 %v5740
  %v6027 = vpop.f32.mrf.mxu0
  %v6028 = vadd.f32 0.0, %v6027
  %v6029 = vpop.f32.mrf.mxu0
  %6030 = vmatprep.mubr.f32.mxu0 0.0
  %6031 = vmatmul.mubr.f32.gmra.mxu0 %v5743
  %v6032 = vpop.f32.mrf.mxu0
  %v6033 = vadd.f32 0.0, %v6032
  %v6034 = vpop.f32.mrf.mxu0
  %6035 = vmatprep.mubr.f32.mxu0 0.0
  %6036 = vmatmul.mubr.f32.gmra.mxu0 %v5746
  %v6037 = vpop.f32.mrf.mxu0
  %v6038 = vadd.f32 0.0, %v6037
  %v6039 = vpop.f32.mrf.mxu0
  %6040 = vmatprep.mubr.f32.mxu0 0.0
  %6041 = vmatmul.mubr.f32.gmra.mxu0 %v5749
  %v6042 = vpop.f32.mrf.mxu0
  %v6043 = vadd.f32 0.0, %v6042
  %v6044 = vpop.f32.mrf.mxu0
  %6045 = vmatprep.mubr.f32.mxu0 0.0
  %6046 = vmatmul.mubr.f32.gmra.mxu0 %v5752
  %v6047 = vpop.f32.mrf.mxu0
  %v6048 = vadd.f32 0.0, %v6047
  %v6049 = vpop.f32.mrf.mxu0
  %6050 = vmatprep.mubr.f32.mxu0 0.0
  %6051 = vmatmul.mubr.f32.gmra.mxu0 %v5755
  %v6052 = vpop.f32.mrf.mxu0
  %v6053 = vadd.f32 0.0, %v6052
  %v6054 = vpop.f32.mrf.mxu0
  %6055 = vmatprep.mubr.f32.mxu0 0.0
  %6056 = vmatmul.mubr.f32.gmra.mxu0 %v5758
  %v6057 = vpop.f32.mrf.mxu0
  %v6058 = vadd.f32 0.0, %v6057
  %v6059 = vpop.f32.mrf.mxu0
  %6060 = vmatprep.mubr.f32.mxu0 0.0
  %6061 = vmatmul.mubr.f32.gmra.mxu0 %v5761
  %v6062 = vpop.f32.mrf.mxu0
  %v6063 = vadd.f32 0.0, %v6062
  %v6064 = vpop.f32.mrf.mxu0
  %6065 = vmatprep.mubr.f32.mxu0 0.0
  %6066 = vmatmul.mubr.f32.gmra.mxu0 %v5764
  %v6067 = vpop.f32.mrf.mxu0
  %v6068 = vadd.f32 0.0, %v6067
  %v6069 = vpop.f32.mrf.mxu0
  %6070 = vmatprep.mubr.f32.mxu0 0.0
  %6071 = vmatmul.mubr.f32.gmra.mxu0 %v5767
  %v6072 = vpop.f32.mrf.mxu0
  %v6073 = vadd.f32 0.0, %v6072
  %v6074 = vpop.f32.mrf.mxu0
  %6075 = vmatprep.mubr.f32.mxu0 0.0
  %6076 = vmatmul.mubr.f32.gmra.mxu0 %v5770
  %v6077 = vpop.f32.mrf.mxu0
  %v6078 = vadd.f32 0.0, %v6077
  %v6079 = vpop.f32.mrf.mxu0
  %6080 = vmatprep.mubr.f32.mxu0 0.0
  %6081 = vmatmul.mubr.f32.gmra.mxu0 %v5773
  %v6082 = vpop.f32.mrf.mxu0
  %v6083 = vadd.f32 0.0, %v6082
  %v6084 = vpop.f32.mrf.mxu0
  %6085 = vmatprep.mubr.f32.mxu0 0.0
  %6086 = vmatmul.mubr.f32.gmra.mxu0 %v5776
  %v6087 = vpop.f32.mrf.mxu0
  %v6088 = vadd.f32 0.0, %v6087
  %v6089 = vpop.f32.mrf.mxu0
  %6090 = vmatprep.mubr.f32.mxu0 0.0
  %6091 = vmatmul.mubr.f32.gmra.mxu0 %v5779
  %v6092 = vpop.f32.mrf.mxu0
  %v6093 = vadd.f32 0.0, %v6092
  %v6094 = vpop.f32.mrf.mxu0
  %6095 = vmatprep.mubr.f32.mxu0 0.0
  %6096 = vmatmul.mubr.f32.gmra.mxu0 %v5782
  %v6097 = vpop.f32.mrf.mxu0
  %v6098 = vadd.f32 0.0, %v6097
  %v6099 = vpop.f32.mrf.mxu0
  %6100 = vmatprep.mubr.f32.mxu0 0.0
  %6101 = vmatmul.mubr.f32.gmra.mxu0 %v5785
  %v6102 = vpop.f32.mrf.mxu0
  %v6103 = vadd.f32 0.0, %v6102
  %v6104 = vpop.f32.mrf.mxu0
  %6105 = vmatprep.mubr.f32.mxu0 0.0
  %6106 = vmatmul.mubr.f32.gmra.mxu0 %v5788
  %v6107 = vpop.f32.mrf.mxu0
  %v6108 = vadd.f32 0.0, %v6107
  %v6109 = vpop.f32.mrf.mxu0
  %6110 = vmatprep.mubr.f32.mxu0 0.0
  %6111 = vmatmul.mubr.f32.gmra.mxu0 %v5791
  %v6112 = vpop.f32.mrf.mxu0
  %v6113 = vadd.f32 0.0, %v6112
  %v6114 = vpop.f32.mrf.mxu0
  %6115 = vmatprep.mubr.f32.mxu0 0.0
  %6116 = vmatmul.mubr.f32.gmra.mxu0 %v5794
  %v6117 = vpop.f32.mrf.mxu0
  %v6118 = vadd.f32 0.0, %v6117
  %v6119 = vpop.f32.mrf.mxu0
  %6120 = vmatprep.mubr.f32.mxu0 0.0
  %6121 = vmatmul.mubr.f32.gmra.mxu0 %v5797
  %v6122 = vpop.f32.mrf.mxu0
  %v6123 = vadd.f32 0.0, %v6122
  %v6124 = vpop.f32.mrf.mxu0
  %6125 = vmatprep.mubr.f32.mxu0 0.0
  %6126 = vmatmul.mubr.f32.gmra.mxu0 %v5800
  %v6127 = vpop.f32.mrf.mxu0
  %v6128 = vadd.f32 0.0, %v6127
  %v6129 = vpop.f32.mrf.mxu0
  %6130 = vmatprep.mubr.f32.mxu0 0.0
  %6131 = vmatmul.mubr.f32.gmra.mxu0 %v5803
  %v6132 = vpop.f32.mrf.mxu0
  %v6133 = vadd.f32 0.0, %v6132
  %v6134 = vpop.f32.mrf.mxu0
  %6135 = vmatprep.mubr.f32.mxu0 0.0
  %6136 = vmatmul.mubr.f32.gmra.mxu0 %v5806
  %v6137 = vpop.f32.mrf.mxu0
  %v6138 = vadd.f32 0.0, %v6137
  %v6139 = vpop.f32.mrf.mxu0
  %6140 = vmatprep.mubr.f32.mxu0 0.0
  %6141 = vmatmul.mubr.f32.gmra.mxu0 %v5809
  %v6142 = vpop.f32.mrf.mxu0
  %v6143 = vadd.f32 0.0, %v6142
  %v6144 = vpop.f32.mrf.mxu0
  %6145 = vmatprep.mubr.f32.mxu0 0.0
  %6146 = vmatmul.mubr.f32.gmra.mxu0 %v5812
  %v6147 = vpop.f32.mrf.mxu0
  %v6148 = vadd.f32 0.0, %v6147
  %v6149 = vpop.f32.mrf.mxu0
  %6150 = vmatprep.mubr.f32.mxu0 0.0
  %6151 = vmatmul.mubr.f32.gmra.mxu0 %v5815
  %v6152 = vpop.f32.mrf.mxu0
  %v6153 = vadd.f32 0.0, %v6152
  %v6154 = vpop.f32.mrf.mxu0
  %6155 = vmatprep.mubr.f32.mxu0 0.0
  %6156 = vmatmul.mubr.f32.gmra.mxu0 %v5818
  %v6157 = vpop.f32.mrf.mxu0
  %v6158 = vadd.f32 0.0, %v6157
  %v6159 = vpop.f32.mrf.mxu0
  %6160 = vmatprep.mubr.f32.mxu0 0.0
  %6161 = vmatmul.mubr.f32.gmra.mxu0 %v5821
  %v6162 = vpop.f32.mrf.mxu0
  %v6163 = vadd.f32 0.0, %v6162
  %v6164 = vpop.f32.mrf.mxu0
  %6165 = vmatprep.mubr.f32.mxu0 0.0
  %6166 = vmatmul.mubr.f32.gmra.mxu0 %v5824
  %v6167 = vpop.f32.mrf.mxu0
  %v6168 = vadd.f32 0.0, %v6167
  %v6169 = vpop.f32.mrf.mxu0
  %6170 = vmatprep.mubr.f32.mxu0 0.0
  %6171 = vmatmul.mubr.f32.gmra.mxu0 %v5827
  %v6172 = vpop.f32.mrf.mxu0
  %v6173 = vadd.f32 0.0, %v6172
  %v6174 = vpop.f32.mrf.mxu0
  %6175 = vmatprep.mubr.f32.mxu0 0.0
  %6176 = vmatmul.mubr.f32.gmra.mxu0 %v5830
  %v6177 = vpop.f32.mrf.mxu0
  %v6178 = vadd.f32 0.0, %v6177
  %v6179 = vpop.f32.mrf.mxu0
  %6180 = vmatprep.mubr.f32.mxu0 0.0
  %6181 = vmatmul.mubr.f32.gmra.mxu0 %v5833
  %v6182 = vpop.f32.mrf.mxu0
  %v6183 = vadd.f32 0.0, %v6182
  %v6184 = vpop.f32.mrf.mxu0
  %6185 = vmatprep.mubr.f32.mxu0 0.0
  %6186 = vmatmul.mubr.f32.gmra.mxu0 %v5836
  %v6187 = vpop.f32.mrf.mxu0
  %v6188 = vadd.f32 0.0, %v6187
  %v6189 = vpop.f32.mrf.mxu0
  %6190 = vmatprep.mubr.f32.mxu0 0.0
  %6191 = vmatmul.mubr.f32.gmra.mxu0 %v5839
  %v6192 = vpop.f32.mrf.mxu0
  %v6193 = vadd.f32 0.0, %v6192
  %v6194 = vpop.f32.mrf.mxu0
  %6195 = vmatprep.mubr.f32.mxu0 0.0
  %6196 = vmatmul.mubr.f32.gmra.mxu0 %v5842
  %v6197 = vpop.f32.mrf.mxu0
  %v6198 = vadd.f32 0.0, %v6197
  %v6199 = vpop.f32.mrf.mxu0
  %6200 = vmatprep.mubr.f32.mxu0 0.0
  %6201 = vmatmul.mubr.f32.gmra.mxu0 %v5845
  %v6202 = vpop.f32.mrf.mxu0
  %v6203 = vadd.f32 0.0, %v6202
  %v6204 = vpop.f32.mrf.mxu0
  %6205 = vmatprep.mubr.f32.mxu0 0.0
  %6206 = vmatmul.mubr.f32.gmra.mxu0 %v5848
  %v6207 = vpop.f32.mrf.mxu0
  %v6208 = vadd.f32 0.0, %v6207
  %v6209 = vpop.f32.mrf.mxu0
  %6210 = vmatprep.mubr.f32.mxu0 0.0
  %6211 = vmatmul.mubr.f32.gmra.mxu0 %v5851
  %v6212 = vpop.f32.mrf.mxu0
  %v6213 = vadd.f32 0.0, %v6212
  %v6214 = vpop.f32.mrf.mxu0
  %6215 = vmatprep.mubr.f32.mxu0 0.0
  %6216 = vmatmul.mubr.f32.gmra.mxu0 %v5854
  %v6217 = vpop.f32.mrf.mxu0
  %v6218 = vadd.f32 0.0, %v6217
  %v6219 = vpop.f32.mrf.mxu0
  %6220 = vmatprep.mubr.f32.mxu0 0.0
  %6221 = vmatmul.mubr.f32.gmra.mxu0 %v5857
  %v6222 = vpop.f32.mrf.mxu0
  %v6223 = vadd.f32 0.0, %v6222
  %v6224 = vpop.f32.mrf.mxu0
  %6225 = vmatprep.mubr.f32.mxu0 0.0
  %6226 = vmatmul.mubr.f32.gmra.mxu0 %v5860
  %v6227 = vpop.f32.mrf.mxu0
  %v6228 = vadd.f32 0.0, %v6227
  %v6229 = vpop.f32.mrf.mxu0
  %6230 = vmatprep.mubr.f32.mxu0 0.0
  %6231 = vmatmul.mubr.f32.gmra.mxu0 %v5863
  %v6232 = vpop.f32.mrf.mxu0
  %v6233 = vadd.f32 0.0, %v6232
  %v6234 = vpop.f32.mrf.mxu0
  %6235 = vmatprep.mubr.f32.mxu0 0.0
  %6236 = vmatmul.mubr.f32.gmra.mxu0 %v5866
  %v6237 = vpop.f32.mrf.mxu0
  %v6238 = vadd.f32 0.0, %v6237
  %v6239 = vpop.f32.mrf.mxu0
  %6240 = vmatprep.mubr.f32.mxu0 0.0
  %6241 = vmatmul.mubr.f32.gmra.mxu0 %v5869
  %v6242 = vpop.f32.mrf.mxu0
  %v6243 = vadd.f32 0.0, %v6242
  %v6244 = vpop.f32.mrf.mxu0
  %6245 = vmatprep.mubr.f32.mxu0 0.0
  %6246 = vmatmul.mubr.f32.gmra.mxu0 %v5872
  %v6247 = vpop.f32.mrf.mxu0
  %v6248 = vadd.f32 0.0, %v6247
  %v6249 = vpop.f32.mrf.mxu0
  %6250 = vmatprep.mubr.f32.mxu0 0.0
  %6251 = vmatmul.mubr.f32.gmra.mxu0 %v5875
  %v6252 = vpop.f32.mrf.mxu0
  %v6253 = vadd.f32 0.0, %v6252
  %v6254 = vpop.f32.mrf.mxu0
  %6255 = vmatprep.mubr.f32.mxu0 0.0
  %6256 = vmatmul.mubr.f32.gmra.mxu0 %v5878
  %v6257 = vpop.f32.mrf.mxu0
  %v6258 = vadd.f32 0.0, %v6257
  %v6259 = vpop.f32.mrf.mxu0
  %6260 = vmatprep.mubr.f32.mxu0 0.0
  %6261 = vmatmul.mubr.f32.gmra.mxu0 %v5881
  %v6262 = vpop.f32.mrf.mxu0
  %v6263 = vadd.f32 0.0, %v6262
  %v6264 = vpop.f32.mrf.mxu0
  %6265 = vmatprep.mubr.f32.mxu0 0.0
  %6266 = vmatmul.mubr.f32.gmra.mxu0 %v5884
  %v6267 = vpop.f32.mrf.mxu0
  %v6268 = vadd.f32 0.0, %v6267
  %v6269 = vpop.f32.mrf.mxu0
  %6270 = vdwg.mxu0
  %v6271 = vadd.f32 %v5555, %v5953
  %v6272 = vadd.f32 %v5556, %v5958
  %v6273 = vadd.f32 %v5557, %v5963
  %v6274 = vadd.f32 %v5558, %v5968
  %v6275 = vadd.f32 %v5559, %v5973
  %v6276 = vadd.f32 %v5560, %v5978
  %v6277 = vadd.f32 %v5561, %v5983
  %v6278 = vadd.f32 %v5562, %v5988
  %v6279 = vadd.f32 %v5563, %v5993
  %v6280 = vadd.f32 %v5564, %v5998
  %v6281 = vadd.f32 %v5565, %v6003
  %v6282 = vadd.f32 %v5566, %v6008
  %v6283 = vadd.f32 %v5567, %v6013
  %v6284 = vadd.f32 %v5568, %v6018
  %v6285 = vadd.f32 %v5569, %v6023
  %v6286 = vadd.f32 %v5570, %v6028
  %v6287 = vadd.f32 %v5571, %v6033
  %v6288 = vadd.f32 %v5572, %v6038
  %v6289 = vadd.f32 %v5573, %v6043
  %v6290 = vadd.f32 %v5574, %v6048
  %v6291 = vadd.f32 %v5575, %v6053
  %v6292 = vadd.f32 %v5576, %v6058
  %v6293 = vadd.f32 %v5577, %v6063
  %v6294 = vadd.f32 %v5578, %v6068
  %v6295 = vadd.f32 %v5579, %v6073
  %v6296 = vadd.f32 %v5580, %v6078
  %v6297 = vadd.f32 %v5581, %v6083
  %v6298 = vadd.f32 %v5582, %v6088
  %v6299 = vadd.f32 %v5583, %v6093
  %v6300 = vadd.f32 %v5584, %v6098
  %v6301 = vadd.f32 %v5585, %v6103
  %v6302 = vadd.f32 %v5586, %v6108
  %v6303 = vadd.f32 %v5587, %v6113
  %v6304 = vadd.f32 %v5588, %v6118
  %v6305 = vadd.f32 %v5589, %v6123
  %v6306 = vadd.f32 %v5590, %v6128
  %v6307 = vadd.f32 %v5591, %v6133
  %v6308 = vadd.f32 %v5592, %v6138
  %v6309 = vadd.f32 %v5593, %v6143
  %v6310 = vadd.f32 %v5594, %v6148
  %v6311 = vadd.f32 %v5595, %v6153
  %v6312 = vadd.f32 %v5596, %v6158
  %v6313 = vadd.f32 %v5597, %v6163
  %v6314 = vadd.f32 %v5598, %v6168
  %v6315 = vadd.f32 %v5599, %v6173
  %v6316 = vadd.f32 %v5600, %v6178
  %v6317 = vadd.f32 %v5601, %v6183
  %v6318 = vadd.f32 %v5602, %v6188
  %v6319 = vadd.f32 %v5603, %v6193
  %v6320 = vadd.f32 %v5604, %v6198
  %v6321 = vadd.f32 %v5605, %v6203
  %v6322 = vadd.f32 %v5606, %v6208
  %v6323 = vadd.f32 %v5607, %v6213
  %v6324 = vadd.f32 %v5608, %v6218
  %v6325 = vadd.f32 %v5609, %v6223
  %v6326 = vadd.f32 %v5610, %v6228
  %v6327 = vadd.f32 %v5611, %v6233
  %v6328 = vadd.f32 %v5612, %v6238
  %v6329 = vadd.f32 %v5613, %v6243
  %v6330 = vadd.f32 %v5614, %v6248
  %v6331 = vadd.f32 %v5615, %v6253
  %v6332 = vadd.f32 %v5616, %v6258
  %v6333 = vadd.f32 %v5617, %v6263
  %v6334 = vadd.f32 %v5618, %v6268
  %v6335 = vld [vmem:[%s2] sm:$0x1]
  %v6337 = vlaneseq
  %v6338 = vshrl.u32 %v6337, 7
  %v6339 = vsub.s32 0, %v6338
  %v6340 = vrot.slane %v6335, %v6339
  %v6342 = vmul.f32 %v6271, %v6340
  %v6343 = vmul.f32 %v6272, %v6340
  %v6344 = vmul.f32 %v6273, %v6340
  %v6345 = vmul.f32 %v6274, %v6340
  %v6346 = vmul.f32 %v6275, %v6340
  %v6347 = vmul.f32 %v6276, %v6340
  %v6348 = vmul.f32 %v6277, %v6340
  %v6349 = vmul.f32 %v6278, %v6340
  %v6350 = vmul.f32 %v6279, %v6340
  %v6351 = vmul.f32 %v6280, %v6340
  %v6352 = vmul.f32 %v6281, %v6340
  %v6353 = vmul.f32 %v6282, %v6340
  %v6354 = vmul.f32 %v6283, %v6340
  %v6355 = vmul.f32 %v6284, %v6340
  %v6356 = vmul.f32 %v6285, %v6340
  %v6357 = vmul.f32 %v6286, %v6340
  %v6358 = vmul.f32 %v6287, %v6340
  %v6359 = vmul.f32 %v6288, %v6340
  %v6360 = vmul.f32 %v6289, %v6340
  %v6361 = vmul.f32 %v6290, %v6340
  %v6362 = vmul.f32 %v6291, %v6340
  %v6363 = vmul.f32 %v6292, %v6340
  %v6364 = vmul.f32 %v6293, %v6340
  %v6365 = vmul.f32 %v6294, %v6340
  %v6366 = vmul.f32 %v6295, %v6340
  %v6367 = vmul.f32 %v6296, %v6340
  %v6368 = vmul.f32 %v6297, %v6340
  %v6369 = vmul.f32 %v6298, %v6340
  %v6370 = vmul.f32 %v6299, %v6340
  %v6371 = vmul.f32 %v6300, %v6340
  %v6372 = vmul.f32 %v6301, %v6340
  %v6373 = vmul.f32 %v6302, %v6340
  %v6374 = vmul.f32 %v6303, %v6340
  %v6375 = vmul.f32 %v6304, %v6340
  %v6376 = vmul.f32 %v6305, %v6340
  %v6377 = vmul.f32 %v6306, %v6340
  %v6378 = vmul.f32 %v6307, %v6340
  %v6379 = vmul.f32 %v6308, %v6340
  %v6380 = vmul.f32 %v6309, %v6340
  %v6381 = vmul.f32 %v6310, %v6340
  %v6382 = vmul.f32 %v6311, %v6340
  %v6383 = vmul.f32 %v6312, %v6340
  %v6384 = vmul.f32 %v6313, %v6340
  %v6385 = vmul.f32 %v6314, %v6340
  %v6386 = vmul.f32 %v6315, %v6340
  %v6387 = vmul.f32 %v6316, %v6340
  %v6388 = vmul.f32 %v6317, %v6340
  %v6389 = vmul.f32 %v6318, %v6340
  %v6390 = vmul.f32 %v6319, %v6340
  %v6391 = vmul.f32 %v6320, %v6340
  %v6392 = vmul.f32 %v6321, %v6340
  %v6393 = vmul.f32 %v6322, %v6340
  %v6394 = vmul.f32 %v6323, %v6340
  %v6395 = vmul.f32 %v6324, %v6340
  %v6396 = vmul.f32 %v6325, %v6340
  %v6397 = vmul.f32 %v6326, %v6340
  %v6398 = vmul.f32 %v6327, %v6340
  %v6399 = vmul.f32 %v6328, %v6340
  %v6400 = vmul.f32 %v6329, %v6340
  %v6401 = vmul.f32 %v6330, %v6340
  %v6402 = vmul.f32 %v6331, %v6340
  %v6403 = vmul.f32 %v6332, %v6340
  %v6404 = vmul.f32 %v6333, %v6340
  %v6405 = vmul.f32 %v6334, %v6340
  %v6406 = vld [vmem:[%s3] sm:$0x1]
  %v6408 = vlaneseq
  %v6409 = vshrl.u32 %v6408, 7
  %v6410 = vsub.s32 0, %v6409
  %v6411 = vrot.slane %v6406, %v6410
  %v6413 = vadd.f32 %v6342, %v6411
  %v6414 = vadd.f32 %v6343, %v6411
  %v6415 = vadd.f32 %v6344, %v6411
  %v6416 = vadd.f32 %v6345, %v6411
  %v6417 = vadd.f32 %v6346, %v6411
  %v6418 = vadd.f32 %v6347, %v6411
  %v6419 = vadd.f32 %v6348, %v6411
  %v6420 = vadd.f32 %v6349, %v6411
  %v6421 = vadd.f32 %v6350, %v6411
  %v6422 = vadd.f32 %v6351, %v6411
  %v6423 = vadd.f32 %v6352, %v6411
  %v6424 = vadd.f32 %v6353, %v6411
  %v6425 = vadd.f32 %v6354, %v6411
  %v6426 = vadd.f32 %v6355, %v6411
  %v6427 = vadd.f32 %v6356, %v6411
  %v6428 = vadd.f32 %v6357, %v6411
  %v6429 = vadd.f32 %v6358, %v6411
  %v6430 = vadd.f32 %v6359, %v6411
  %v6431 = vadd.f32 %v6360, %v6411
  %v6432 = vadd.f32 %v6361, %v6411
  %v6433 = vadd.f32 %v6362, %v6411
  %v6434 = vadd.f32 %v6363, %v6411
  %v6435 = vadd.f32 %v6364, %v6411
  %v6436 = vadd.f32 %v6365, %v6411
  %v6437 = vadd.f32 %v6366, %v6411
  %v6438 = vadd.f32 %v6367, %v6411
  %v6439 = vadd.f32 %v6368, %v6411
  %v6440 = vadd.f32 %v6369, %v6411
  %v6441 = vadd.f32 %v6370, %v6411
  %v6442 = vadd.f32 %v6371, %v6411
  %v6443 = vadd.f32 %v6372, %v6411
  %v6444 = vadd.f32 %v6373, %v6411
  %v6445 = vadd.f32 %v6374, %v6411
  %v6446 = vadd.f32 %v6375, %v6411
  %v6447 = vadd.f32 %v6376, %v6411
  %v6448 = vadd.f32 %v6377, %v6411
  %v6449 = vadd.f32 %v6378, %v6411
  %v6450 = vadd.f32 %v6379, %v6411
  %v6451 = vadd.f32 %v6380, %v6411
  %v6452 = vadd.f32 %v6381, %v6411
  %v6453 = vadd.f32 %v6382, %v6411
  %v6454 = vadd.f32 %v6383, %v6411
  %v6455 = vadd.f32 %v6384, %v6411
  %v6456 = vadd.f32 %v6385, %v6411
  %v6457 = vadd.f32 %v6386, %v6411
  %v6458 = vadd.f32 %v6387, %v6411
  %v6459 = vadd.f32 %v6388, %v6411
  %v6460 = vadd.f32 %v6389, %v6411
  %v6461 = vadd.f32 %v6390, %v6411
  %v6462 = vadd.f32 %v6391, %v6411
  %v6463 = vadd.f32 %v6392, %v6411
  %v6464 = vadd.f32 %v6393, %v6411
  %v6465 = vadd.f32 %v6394, %v6411
  %v6466 = vadd.f32 %v6395, %v6411
  %v6467 = vadd.f32 %v6396, %v6411
  %v6468 = vadd.f32 %v6397, %v6411
  %v6469 = vadd.f32 %v6398, %v6411
  %v6470 = vadd.f32 %v6399, %v6411
  %v6471 = vadd.f32 %v6400, %v6411
  %v6472 = vadd.f32 %v6401, %v6411
  %v6473 = vadd.f32 %v6402, %v6411
  %v6474 = vadd.f32 %v6403, %v6411
  %v6475 = vadd.f32 %v6404, %v6411
  %v6476 = vadd.f32 %v6405, %v6411
  %v6477 = vmax.f32 %v6413, 0.0
  %v6478 = vmax.f32 %v6414, 0.0
  %v6479 = vmax.f32 %v6415, 0.0
  %v6480 = vmax.f32 %v6416, 0.0
  %v6481 = vmax.f32 %v6417, 0.0
  %v6482 = vmax.f32 %v6418, 0.0
  %v6483 = vmax.f32 %v6419, 0.0
  %v6484 = vmax.f32 %v6420, 0.0
  %v6485 = vmax.f32 %v6421, 0.0
  %v6486 = vmax.f32 %v6422, 0.0
  %v6487 = vmax.f32 %v6423, 0.0
  %v6488 = vmax.f32 %v6424, 0.0
  %v6489 = vmax.f32 %v6425, 0.0
  %v6490 = vmax.f32 %v6426, 0.0
  %v6491 = vmax.f32 %v6427, 0.0
  %v6492 = vmax.f32 %v6428, 0.0
  %v6493 = vmax.f32 %v6429, 0.0
  %v6494 = vmax.f32 %v6430, 0.0
  %v6495 = vmax.f32 %v6431, 0.0
  %v6496 = vmax.f32 %v6432, 0.0
  %v6497 = vmax.f32 %v6433, 0.0
  %v6498 = vmax.f32 %v6434, 0.0
  %v6499 = vmax.f32 %v6435, 0.0
  %v6500 = vmax.f32 %v6436, 0.0
  %v6501 = vmax.f32 %v6437, 0.0
  %v6502 = vmax.f32 %v6438, 0.0
  %v6503 = vmax.f32 %v6439, 0.0
  %v6504 = vmax.f32 %v6440, 0.0
  %v6505 = vmax.f32 %v6441, 0.0
  %v6506 = vmax.f32 %v6442, 0.0
  %v6507 = vmax.f32 %v6443, 0.0
  %v6508 = vmax.f32 %v6444, 0.0
  %v6509 = vmax.f32 %v6445, 0.0
  %v6510 = vmax.f32 %v6446, 0.0
  %v6511 = vmax.f32 %v6447, 0.0
  %v6512 = vmax.f32 %v6448, 0.0
  %v6513 = vmax.f32 %v6449, 0.0
  %v6514 = vmax.f32 %v6450, 0.0
  %v6515 = vmax.f32 %v6451, 0.0
  %v6516 = vmax.f32 %v6452, 0.0
  %v6517 = vmax.f32 %v6453, 0.0
  %v6518 = vmax.f32 %v6454, 0.0
  %v6519 = vmax.f32 %v6455, 0.0
  %v6520 = vmax.f32 %v6456, 0.0
  %v6521 = vmax.f32 %v6457, 0.0
  %v6522 = vmax.f32 %v6458, 0.0
  %v6523 = vmax.f32 %v6459, 0.0
  %v6524 = vmax.f32 %v6460, 0.0
  %v6525 = vmax.f32 %v6461, 0.0
  %v6526 = vmax.f32 %v6462, 0.0
  %v6527 = vmax.f32 %v6463, 0.0
  %v6528 = vmax.f32 %v6464, 0.0
  %v6529 = vmax.f32 %v6465, 0.0
  %v6530 = vmax.f32 %v6466, 0.0
  %v6531 = vmax.f32 %v6467, 0.0
  %v6532 = vmax.f32 %v6468, 0.0
  %v6533 = vmax.f32 %v6469, 0.0
  %v6534 = vmax.f32 %v6470, 0.0
  %v6535 = vmax.f32 %v6471, 0.0
  %v6536 = vmax.f32 %v6472, 0.0
  %v6537 = vmax.f32 %v6473, 0.0
  %v6538 = vmax.f32 %v6474, 0.0
  %v6539 = vmax.f32 %v6475, 0.0
  %v6540 = vmax.f32 %v6476, 0.0
  %v6541 = vld [vmem:[%s4] sm:$0xff]
  %v6542 = vld [vmem:[%s4 + $0x8] sm:$0xff]
  %v6543 = vld [vmem:[%s4 + $0x10] sm:$0xff]
  %v6544 = vld [vmem:[%s4 + $0x18] sm:$0xff]
  %v6545 = vld [vmem:[%s4 + $0x20] sm:$0xff]
  %v6546 = vld [vmem:[%s4 + $0x28] sm:$0xff]
  %v6547 = vld [vmem:[%s4 + $0x30] sm:$0xff]
  %v6548 = vld [vmem:[%s4 + $0x38] sm:$0xff]
  %v6549 = vld [vmem:[%s4 + $0x40] sm:$0xff]
  %v6550 = vld [vmem:[%s4 + $0x48] sm:$0xff]
  %v6551 = vld [vmem:[%s4 + $0x50] sm:$0xff]
  %v6552 = vld [vmem:[%s4 + $0x58] sm:$0xff]
  %v6553 = vld [vmem:[%s4 + $0x60] sm:$0xff]
  %v6554 = vld [vmem:[%s4 + $0x68] sm:$0xff]
  %v6555 = vld [vmem:[%s4 + $0x70] sm:$0xff]
  %v6556 = vld [vmem:[%s4 + $0x78] sm:$0xff]
  %v6557 = vld [vmem:[%s4 + $0x80] sm:$0xff]
  %v6558 = vld [vmem:[%s4 + $0x88] sm:$0xff]
  %v6559 = vld [vmem:[%s4 + $0x90] sm:$0xff]
  %v6560 = vld [vmem:[%s4 + $0x98] sm:$0xff]
  %v6561 = vld [vmem:[%s4 + $0xa0] sm:$0xff]
  %v6562 = vld [vmem:[%s4 + $0xa8] sm:$0xff]
  %v6563 = vld [vmem:[%s4 + $0xb0] sm:$0xff]
  %v6564 = vld [vmem:[%s4 + $0xb8] sm:$0xff]
  %v6565 = vld [vmem:[%s4 + $0xc0] sm:$0xff]
  %v6566 = vld [vmem:[%s4 + $0xc8] sm:$0xff]
  %v6567 = vld [vmem:[%s4 + $0xd0] sm:$0xff]
  %v6568 = vld [vmem:[%s4 + $0xd8] sm:$0xff]
  %v6569 = vld [vmem:[%s4 + $0xe0] sm:$0xff]
  %v6570 = vld [vmem:[%s4 + $0xe8] sm:$0xff]
  %v6571 = vld [vmem:[%s4 + $0xf0] sm:$0xff]
  %v6572 = vld [vmem:[%s4 + $0xf8] sm:$0xff]
  %v6573 = vld [vmem:[%s4 + $0x100] sm:$0xff]
  %v6574 = vld [vmem:[%s4 + $0x108] sm:$0xff]
  %v6575 = vld [vmem:[%s4 + $0x110] sm:$0xff]
  %v6576 = vld [vmem:[%s4 + $0x118] sm:$0xff]
  %v6577 = vld [vmem:[%s4 + $0x120] sm:$0xff]
  %v6578 = vld [vmem:[%s4 + $0x128] sm:$0xff]
  %v6579 = vld [vmem:[%s4 + $0x130] sm:$0xff]
  %v6580 = vld [vmem:[%s4 + $0x138] sm:$0xff]
  %v6581 = vld [vmem:[%s4 + $0x140] sm:$0xff]
  %v6582 = vld [vmem:[%s4 + $0x148] sm:$0xff]
  %v6583 = vld [vmem:[%s4 + $0x150] sm:$0xff]
  %v6584 = vld [vmem:[%s4 + $0x158] sm:$0xff]
  %v6585 = vld [vmem:[%s4 + $0x160] sm:$0xff]
  %v6586 = vld [vmem:[%s4 + $0x168] sm:$0xff]
  %v6587 = vld [vmem:[%s4 + $0x170] sm:$0xff]
  %v6588 = vld [vmem:[%s4 + $0x178] sm:$0xff]
  %v6589 = vld [vmem:[%s4 + $0x180] sm:$0xff]
  %v6590 = vld [vmem:[%s4 + $0x188] sm:$0xff]
  %v6591 = vld [vmem:[%s4 + $0x190] sm:$0xff]
  %v6592 = vld [vmem:[%s4 + $0x198] sm:$0xff]
  %v6593 = vld [vmem:[%s4 + $0x1a0] sm:$0xff]
  %v6594 = vld [vmem:[%s4 + $0x1a8] sm:$0xff]
  %v6595 = vld [vmem:[%s4 + $0x1b0] sm:$0xff]
  %v6596 = vld [vmem:[%s4 + $0x1b8] sm:$0xff]
  %v6597 = vld [vmem:[%s4 + $0x1c0] sm:$0xff]
  %v6598 = vld [vmem:[%s4 + $0x1c8] sm:$0xff]
  %v6599 = vld [vmem:[%s4 + $0x1d0] sm:$0xff]
  %v6600 = vld [vmem:[%s4 + $0x1d8] sm:$0xff]
  %v6601 = vld [vmem:[%s4 + $0x1e0] sm:$0xff]
  %v6602 = vld [vmem:[%s4 + $0x1e8] sm:$0xff]
  %v6603 = vld [vmem:[%s4 + $0x1f0] sm:$0xff]
  %v6604 = vld [vmem:[%s4 + $0x1f8] sm:$0xff]
  %v6605 = vadd.f32 %v6477, %v6541
  %v6606 = vadd.f32 %v6478, %v6542
  %v6607 = vadd.f32 %v6479, %v6543
  %v6608 = vadd.f32 %v6480, %v6544
  %v6609 = vadd.f32 %v6481, %v6545
  %v6610 = vadd.f32 %v6482, %v6546
  %v6611 = vadd.f32 %v6483, %v6547
  %v6612 = vadd.f32 %v6484, %v6548
  %v6613 = vadd.f32 %v6485, %v6549
  %v6614 = vadd.f32 %v6486, %v6550
  %v6615 = vadd.f32 %v6487, %v6551
  %v6616 = vadd.f32 %v6488, %v6552
  %v6617 = vadd.f32 %v6489, %v6553
  %v6618 = vadd.f32 %v6490, %v6554
  %v6619 = vadd.f32 %v6491, %v6555
  %v6620 = vadd.f32 %v6492, %v6556
  %v6621 = vadd.f32 %v6493, %v6557
  %v6622 = vadd.f32 %v6494, %v6558
  %v6623 = vadd.f32 %v6495, %v6559
  %v6624 = vadd.f32 %v6496, %v6560
  %v6625 = vadd.f32 %v6497, %v6561
  %v6626 = vadd.f32 %v6498, %v6562
  %v6627 = vadd.f32 %v6499, %v6563
  %v6628 = vadd.f32 %v6500, %v6564
  %v6629 = vadd.f32 %v6501, %v6565
  %v6630 = vadd.f32 %v6502, %v6566
  %v6631 = vadd.f32 %v6503, %v6567
  %v6632 = vadd.f32 %v6504, %v6568
  %v6633 = vadd.f32 %v6505, %v6569
  %v6634 = vadd.f32 %v6506, %v6570
  %v6635 = vadd.f32 %v6507, %v6571
  %v6636 = vadd.f32 %v6508, %v6572
  %v6637 = vadd.f32 %v6509, %v6573
  %v6638 = vadd.f32 %v6510, %v6574
  %v6639 = vadd.f32 %v6511, %v6575
  %v6640 = vadd.f32 %v6512, %v6576
  %v6641 = vadd.f32 %v6513, %v6577
  %v6642 = vadd.f32 %v6514, %v6578
  %v6643 = vadd.f32 %v6515, %v6579
  %v6644 = vadd.f32 %v6516, %v6580
  %v6645 = vadd.f32 %v6517, %v6581
  %v6646 = vadd.f32 %v6518, %v6582
  %v6647 = vadd.f32 %v6519, %v6583
  %v6648 = vadd.f32 %v6520, %v6584
  %v6649 = vadd.f32 %v6521, %v6585
  %v6650 = vadd.f32 %v6522, %v6586
  %v6651 = vadd.f32 %v6523, %v6587
  %v6652 = vadd.f32 %v6524, %v6588
  %v6653 = vadd.f32 %v6525, %v6589
  %v6654 = vadd.f32 %v6526, %v6590
  %v6655 = vadd.f32 %v6527, %v6591
  %v6656 = vadd.f32 %v6528, %v6592
  %v6657 = vadd.f32 %v6529, %v6593
  %v6658 = vadd.f32 %v6530, %v6594
  %v6659 = vadd.f32 %v6531, %v6595
  %v6660 = vadd.f32 %v6532, %v6596
  %v6661 = vadd.f32 %v6533, %v6597
  %v6662 = vadd.f32 %v6534, %v6598
  %v6663 = vadd.f32 %v6535, %v6599
  %v6664 = vadd.f32 %v6536, %v6600
  %v6665 = vadd.f32 %v6537, %v6601
  %v6666 = vadd.f32 %v6538, %v6602
  %v6667 = vadd.f32 %v6539, %v6603
  %v6668 = vadd.f32 %v6540, %v6604
  %6669 = vst.msk [vmem:[%s5] sm:$0xff] %vm168, %v6605
  %6670 = vst.msk [vmem:[%s5 + $0x8] sm:$0xff] %vm168, %v6606
  %6671 = vst.msk [vmem:[%s5 + $0x10] sm:$0xff] %vm168, %v6607
  %6672 = vst.msk [vmem:[%s5 + $0x18] sm:$0xff] %vm168, %v6608
  %6673 = vst.msk [vmem:[%s5 + $0x20] sm:$0xff] %vm168, %v6609
  %6674 = vst.msk [vmem:[%s5 + $0x28] sm:$0xff] %vm168, %v6610
  %6675 = vst.msk [vmem:[%s5 + $0x30] sm:$0xff] %vm168, %v6611
  %6676 = vst.msk [vmem:[%s5 + $0x38] sm:$0xff] %vm168, %v6612
  %6677 = vst.msk [vmem:[%s5 + $0x40] sm:$0xff] %vm168, %v6613
  %6678 = vst.msk [vmem:[%s5 + $0x48] sm:$0xff] %vm168, %v6614
  %6679 = vst.msk [vmem:[%s5 + $0x50] sm:$0xff] %vm168, %v6615
  %6680 = vst.msk [vmem:[%s5 + $0x58] sm:$0xff] %vm168, %v6616
  %6681 = vst.msk [vmem:[%s5 + $0x60] sm:$0xff] %vm168, %v6617
  %6682 = vst.msk [vmem:[%s5 + $0x68] sm:$0xff] %vm168, %v6618
  %6683 = vst.msk [vmem:[%s5 + $0x70] sm:$0xff] %vm168, %v6619
  %6684 = vst.msk [vmem:[%s5 + $0x78] sm:$0xff] %vm168, %v6620
  %6685 = vst.msk [vmem:[%s5 + $0x80] sm:$0xff] %vm168, %v6621
  %6686 = vst.msk [vmem:[%s5 + $0x88] sm:$0xff] %vm168, %v6622
  %6687 = vst.msk [vmem:[%s5 + $0x90] sm:$0xff] %vm168, %v6623
  %6688 = vst.msk [vmem:[%s5 + $0x98] sm:$0xff] %vm168, %v6624
  %6689 = vst.msk [vmem:[%s5 + $0xa0] sm:$0xff] %vm168, %v6625
  %6690 = vst.msk [vmem:[%s5 + $0xa8] sm:$0xff] %vm168, %v6626
  %6691 = vst.msk [vmem:[%s5 + $0xb0] sm:$0xff] %vm168, %v6627
  %6692 = vst.msk [vmem:[%s5 + $0xb8] sm:$0xff] %vm168, %v6628
  %6693 = vst.msk [vmem:[%s5 + $0xc0] sm:$0xff] %vm168, %v6629
  %6694 = vst.msk [vmem:[%s5 + $0xc8] sm:$0xff] %vm168, %v6630
  %6695 = vst.msk [vmem:[%s5 + $0xd0] sm:$0xff] %vm168, %v6631
  %6696 = vst.msk [vmem:[%s5 + $0xd8] sm:$0xff] %vm168, %v6632
  %6697 = vst.msk [vmem:[%s5 + $0xe0] sm:$0xff] %vm168, %v6633
  %6698 = vst.msk [vmem:[%s5 + $0xe8] sm:$0xff] %vm168, %v6634
  %6699 = vst.msk [vmem:[%s5 + $0xf0] sm:$0xff] %vm168, %v6635
  %6700 = vst.msk [vmem:[%s5 + $0xf8] sm:$0xff] %vm168, %v6636
  %6701 = vst.msk [vmem:[%s5 + $0x100] sm:$0xff] %vm168, %v6637
  %6702 = vst.msk [vmem:[%s5 + $0x108] sm:$0xff] %vm168, %v6638
  %6703 = vst.msk [vmem:[%s5 + $0x110] sm:$0xff] %vm168, %v6639
  %6704 = vst.msk [vmem:[%s5 + $0x118] sm:$0xff] %vm168, %v6640
  %6705 = vst.msk [vmem:[%s5 + $0x120] sm:$0xff] %vm168, %v6641
  %6706 = vst.msk [vmem:[%s5 + $0x128] sm:$0xff] %vm168, %v6642
  %6707 = vst.msk [vmem:[%s5 + $0x130] sm:$0xff] %vm168, %v6643
  %6708 = vst.msk [vmem:[%s5 + $0x138] sm:$0xff] %vm168, %v6644
  %6709 = vst.msk [vmem:[%s5 + $0x140] sm:$0xff] %vm168, %v6645
  %6710 = vst.msk [vmem:[%s5 + $0x148] sm:$0xff] %vm168, %v6646
  %6711 = vst.msk [vmem:[%s5 + $0x150] sm:$0xff] %vm168, %v6647
  %6712 = vst.msk [vmem:[%s5 + $0x158] sm:$0xff] %vm168, %v6648
  %6713 = vst.msk [vmem:[%s5 + $0x160] sm:$0xff] %vm168, %v6649
  %6714 = vst.msk [vmem:[%s5 + $0x168] sm:$0xff] %vm168, %v6650
  %6715 = vst.msk [vmem:[%s5 + $0x170] sm:$0xff] %vm168, %v6651
  %6716 = vst.msk [vmem:[%s5 + $0x178] sm:$0xff] %vm168, %v6652
  %6717 = vst.msk [vmem:[%s5 + $0x180] sm:$0xff] %vm168, %v6653
  %6718 = vst.msk [vmem:[%s5 + $0x188] sm:$0xff] %vm168, %v6654
  %6719 = vst.msk [vmem:[%s5 + $0x190] sm:$0xff] %vm168, %v6655
  %6720 = vst.msk [vmem:[%s5 + $0x198] sm:$0xff] %vm168, %v6656
  %6721 = vst.msk [vmem:[%s5 + $0x1a0] sm:$0xff] %vm168, %v6657
  %6722 = vst.msk [vmem:[%s5 + $0x1a8] sm:$0xff] %vm168, %v6658
  %6723 = vst.msk [vmem:[%s5 + $0x1b0] sm:$0xff] %vm168, %v6659
  %6724 = vst.msk [vmem:[%s5 + $0x1b8] sm:$0xff] %vm168, %v6660
  %6725 = vst.msk [vmem:[%s5 + $0x1c0] sm:$0xff] %vm168, %v6661
  %6726 = vst.msk [vmem:[%s5 + $0x1c8] sm:$0xff] %vm168, %v6662
  %6727 = vst.msk [vmem:[%s5 + $0x1d0] sm:$0xff] %vm168, %v6663
  %6728 = vst.msk [vmem:[%s5 + $0x1d8] sm:$0xff] %vm168, %v6664
  %6729 = vst.msk [vmem:[%s5 + $0x1e0] sm:$0xff] %vm168, %v6665
  %6730 = vst.msk [vmem:[%s5 + $0x1e8] sm:$0xff] %vm168, %v6666
  %6731 = vst.msk [vmem:[%s5 + $0x1f0] sm:$0xff] %vm168, %v6667
  %6732 = vst.msk [vmem:[%s5 + $0x1f8] sm:$0xff] %vm168, %v6668
  // Predicated region
  $region22: #{cml_forward.6} parent=0 // pred_check
    _
  $region23: #{cml_forward.6} parent=0 // pred_check_branch
    %6734 = sbr.rel (0) target = $region25
  $region24: #{cml_forward.6} parent=0 // pred_region
    _
  $region25: #{cml_forward.6} parent=0 // pred_fallthru
    _
  // Predicated region
  $region26: #{cml_forward.6} parent=0 // pred_check
    _
  $region27: #{cml_forward.6} parent=0 // pred_check_branch
    %6736 = sbr.rel (0) target = $region29
  $region28: #{cml_forward.6} parent=0 // pred_region
    _
  $region29: #{cml_forward.6} parent=0 // pred_fallthru
    _

</llo_original>
